<compile_context>
chip_gen: v6e
topology: v6e:2x2x1
jax: 0.10.0
libtpu: 0.0.40
codegen_flags: <defaults>
</compile_context>

<pallas_src>
import functools

import jax
import jax.numpy as jnp
from jax.experimental import pallas as pl
from jax.experimental.pallas import tpu as pltpu

LRELU_SLOPE = 0.01          # nn.LeakyReLU() / F.leaky_relu default (matches the spec)
ACT_DTYPE = jnp.bfloat16    # inter-layer activation storage dtype
LANE = 128
MAX_T_TILE = 512            # multiple of 128; raise for long real-audio workloads


def _round_up(v, m):
    return ((v + m - 1) // m) * m


# ------------------------------------------------------------------ fused conv kernel
def _conv1d_kernel(*refs, K, dilation, T_tile, pre_lrelu, post_tanh, has_res,
                   vpu_path):
    if has_res:
        x_ref, w_ref, b_ref, res_ref, o_ref = refs
    else:
        x_ref, w_ref, b_ref, o_ref = refs
        res_ref = None

    # (C_in, T_tile + halo); elementwise math kept in f32 (v5e-safe).
    x = x_ref[...].astype(jnp.float32)
    if pre_lrelu:
        # leaky_relu(0) == 0, so applying it after zero-padding is exact.
        x = jnp.where(x >= 0, x, LRELU_SLOPE * x)

    # im2col: single (K*C_in, T_tile) slab -> one big contraction instead of K dots.
    cols = [x[:, k * dilation: k * dilation + T_tile] for k in range(K)]
    x_cat = cols[0] if K == 1 else jnp.concatenate(cols, axis=0)

    if vpu_path:
        # C_out == 1: skip the MXU; broadcast-multiply + sublane reduction.
        acc = jnp.sum(x_cat * w_ref[...], axis=0, keepdims=True)       # (1, T_tile)
    else:
        acc = jnp.dot(w_ref[...], x_cat.astype(jnp.bfloat16),          # bf16 MXU
                      preferred_element_type=jnp.float32)              # f32 accum

    acc = acc + b_ref[...]                                             # bias
    if has_res:
        acc = acc + res_ref[...].astype(jnp.float32)                   # fused residual
    if post_tanh:
        acc = jnp.tanh(acc)
    o_ref[...] = acc.astype(o_ref.dtype)


# ------------------------------------------------------------------ conv1d wrapper
def conv1d(x, layer, *, dilation=1, pad_left=0, pad_right=0,
           pre_lrelu=False, post_tanh=False, residual=None, out_dtype=None):
    """x: (B, C_in, T).  layer['w'] is pre-flattened:
         MXU path : (C_out, K*C_in) bf16   (row = out-channel, col = k*C_in + c)
         VPU path : (K*C_in, 1)    f32     (only used when C_out == 1)
       layer['b']: (C_out, 1) f32."""
    B, C_in, T = x.shape
    w, b = layer["w"], layer["b"]
    C_out = b.shape[0]
    vpu_path = (C_out == 1)
    K = (w.shape[0] // C_in) if vpu_path else (w.shape[1] // C_in)
    out_dtype = ACT_DTYPE if out_dtype is None else out_dtype

    halo = (K - 1) * dilation
    T_out_valid = T + pad_left + pad_right - halo

    # Lane-dense time tiling (multiple of 128), bounded per-block VMEM.
    T_tile = min(_round_up(T_out_valid, LANE), MAX_T_TILE)
    n_tiles = -(-T_out_valid // T_tile)
    T_tile = _round_up(-(-T_out_valid // n_tiles), LANE)
    T_out_pad = n_tiles * T_tile
    win = T_tile + halo

    x_pad = jnp.pad(x, ((0, 0), (0, 0),
                        (pad_left, pad_right + (T_out_pad - T_out_valid))))
    if n_tiles == 1:
        x_win = x_pad[:, None]                                    # (B,1,C_in,win)
    else:                                                         # overlapping halo windows
        x_win = jnp.stack([x_pad[:, :, j * T_tile: j * T_tile + win]
                           for j in range(n_tiles)], axis=1)      # (B,n,C_in,win)

    has_res = residual is not None
    operands = [x_win, w, b]
    in_specs = [
        pl.BlockSpec((None, None, C_in, win), lambda bi, ti: (bi, ti, 0, 0)),
        pl.BlockSpec(w.shape, lambda bi, ti: (0, 0)),
        pl.BlockSpec((C_out, 1), lambda bi, ti: (0, 0)),
    ]
    if has_res:
        assert residual.shape == (B, C_out, T_out_valid), residual.shape
        res_pad = jnp.pad(residual,
                          ((0, 0), (0, 0), (0, T_out_pad - T_out_valid)))
        operands.append(res_pad)
        in_specs.append(pl.BlockSpec((None, C_out, T_tile),
                                     lambda bi, ti: (bi, 0, ti)))

    kernel = functools.partial(_conv1d_kernel, K=K, dilation=dilation,
                               T_tile=T_tile, pre_lrelu=pre_lrelu,
                               post_tanh=post_tanh, has_res=has_res,
                               vpu_path=vpu_path)
    out = pl.pallas_call(
        kernel,
        out_shape=jax.ShapeDtypeStruct((B, C_out, T_out_pad), out_dtype),
        grid_spec=pltpu.PrefetchScalarGridSpec(
            num_scalar_prefetch=0,
            grid=(B, n_tiles),
            in_specs=in_specs,
            out_specs=pl.BlockSpec((None, C_out, T_tile),
                                   lambda bi, ti: (bi, 0, ti)),
        ),
        compiler_params=pltpu.CompilerParams(
            dimension_semantics=("parallel", "parallel")),
    )(*operands)
    if T_out_pad != T_out_valid:
        out = out[:, :, :T_out_valid]
    return out


# ------------------------------------------------------------------ polyphase conv-transpose
def _transpose_offsets(stride, padding, K):
    offs = [(r + padding - k) // stride
            for r in range(stride) for k in range(K)
            if (r + padding - k) % stride == 0]
    return min(offs), max(offs)


def conv_transpose1d(x, layer, *, stride, padding, kernel_size, pre_lrelu=True):
    """PyTorch ConvTranspose1d via polyphase dense conv (weights pre-built)."""
    B, C_in, T = x.shape
    s, pad, K = stride, padding, kernel_size
    C_out = layer["b"].shape[0] // s
    o_min, o_max = _transpose_offsets(s, pad, K)

    T_out = (T - 1) * s - 2 * pad + K
    Q = -(-T_out // s)                               # frames per phase
    if o_min > 0:
        x = x[:, :, o_min:]
        pl_left = 0
    else:
        pl_left = -o_min
    pr_right = max(0, Q + o_max - T)

    y = conv1d(x, layer, dilation=1, pad_left=pl_left, pad_right=pr_right,
               pre_lrelu=pre_lrelu)                  # (B, s*C_out, >=Q)
    y = y[:, :, :Q]
    # interleave phases: row r*C_out + o, frame q  ->  output sample q*s + r
    y = y.reshape(B, s, C_out, Q).transpose(0, 2, 3, 1).reshape(B, C_out, Q * s)
    return y[:, :, :T_out]


# ------------------------------------------------------------------ model glue
def conv_block(x, blk, kernel_size, dilation, residual):
    p1 = (kernel_size - 1) * dilation // 2
    h = conv1d(x, blk["c1"], dilation=dilation, pad_left=p1, pad_right=p1,
               pre_lrelu=True)
    p2 = (kernel_size - 1) // 2
    h = conv1d(h, blk["c2"], dilation=1, pad_left=p2, pad_right=p2,
               pre_lrelu=True, residual=residual)    # fused "+ x"
    return h


def res_block(x, rb_params, kernel_size, dilations):
    for blk, d in zip(rb_params, dilations):
        x = conv_block(x, blk, kernel_size, d, residual=x)
    return x


def mrf(x, stage_params, kernel_sizes, dilation_sizes):
    xs = None
    for rb_params, kk, dils in zip(stage_params, kernel_sizes, dilation_sizes):
        y = res_block(x, rb_params, kk, dils)
        xs = y if xs is None else xs + y
    return xs / float(len(stage_params))


def generator_forward(params, x, config):
    x = conv1d(x, params["conv_pre"], pad_left=3, pad_right=3)
    for i, (uk, ur) in enumerate(zip(config.upsample_kernel_sizes,
                                     config.upsample_rates)):
        x = conv_transpose1d(x, params["convs"][i], stride=ur,
                             padding=(uk - ur) // 2, kernel_size=uk,
                             pre_lrelu=True)
        x = mrf(x, params["mrfs"][i], config.resblock_kernel_sizes,
                config.resblock_dilation_sizes)
    x = conv1d(x, params["fc"], pad_left=3, pad_right=3,
               pre_lrelu=True, post_tanh=True, out_dtype=jnp.float32)
    return x


# ------------------------------------------------------------------ params (raw + prepared)
class Config:
    first_hidden_size = 32
    upsample_rates = (2, 2)
    upsample_kernel_sizes = (4, 4)
    resblock_kernel_sizes = (3, 5)
    resblock_dilation_sizes = ((1, 3), (1, 3))


def init_generator_params(key, config):
    """Raw parameters in PyTorch layouts."""
    keys = iter(jax.random.split(key, 256))

    def conv_p(c_out, c_in, k):      # Conv1d: (C_out, C_in, K)
        return {"w": jax.random.normal(next(keys), (c_out, c_in, k), jnp.float32) * 0.1,
                "b": jax.random.normal(next(keys), (c_out,), jnp.float32) * 0.05}

    def convT_p(c_in, c_out, k):     # ConvTranspose1d: (C_in, C_out, K)
        return {"w": jax.random.normal(next(keys), (c_in, c_out, k), jnp.float32) * 0.1,
                "b": jax.random.normal(next(keys), (c_out,), jnp.float32) * 0.05}

    raw = {"conv_pre": conv_p(config.first_hidden_size, 80, 7),
           "convs": [], "mrfs": []}
    for i, (uk, ur) in enumerate(zip(config.upsample_kernel_sizes,
                                     config.upsample_rates)):
        c_in = config.first_hidden_size // 2 ** i
        c_out = config.first_hidden_size // 2 ** (i + 1)
        raw["convs"].append(convT_p(c_in, c_out, uk))
        stage = []
        for kk, dils in zip(config.resblock_kernel_sizes,
                            config.resblock_dilation_sizes):
            stage.append({"blocks": [{"c1": conv_p(c_out, c_out, kk),
                                      "c2": conv_p(c_out, c_out, kk)}
                                     for _ in dils]})
        raw["mrfs"].append(stage)
    final_c = config.first_hidden_size // 2 ** len(config.upsample_rates)
    raw["fc"] = conv_p(1, final_c, 7)
    return raw


def _prep_conv(p):
    """(C_out, C_in, K) torch conv weight -> flattened kernel layout (once, at init)."""
    w = p["w"]
    C_out, C_in, K = w.shape
    b2 = jnp.asarray(p["b"], jnp.float32).reshape(C_out, 1)
    w_flat = jnp.transpose(w, (0, 2, 1)).reshape(C_out, K * C_in)  # col = k*C_in + c
    if C_out == 1:   # VPU path: column layout, keep f32
        return {"w": w_flat.astype(jnp.float32).reshape(K * C_in, 1), "b": b2}
    return {"w": w_flat.astype(jnp.bfloat16), "b": b2}


def _prep_convT(p, stride, padding):
    """(C_in, C_out, K) ConvTranspose1d weight -> polyphase dense-conv weight."""
    w = p["w"]
    C_in, C_out, K = w.shape
    o_min, o_max = _transpose_offsets(stride, padding, K)
    KK = o_max - o_min + 1
    rows = []
    for r in range(stride):
        blocks = []
        for j in range(KK):
            k = r + padding - stride * (o_min + j)
            if 0 <= k < K:
                blocks.append(jnp.transpose(w[:, :, k]))             # (C_out, C_in)
            else:
                blocks.append(jnp.zeros((C_out, C_in), w.dtype))
        rows.append(jnp.concatenate(blocks, axis=1))                 # (C_out, KK*C_in)
    w_poly = jnp.concatenate(rows, axis=0).astype(jnp.bfloat16)      # (s*C_out, KK*C_in)
    b_poly = jnp.tile(jnp.asarray(p["b"], jnp.float32),
                      stride).reshape(stride * C_out, 1)
    return {"w": w_poly, "b": b_poly}


def prepare_generator_params(raw, config):
    params = {"conv_pre": _prep_conv(raw["conv_pre"]),
              "convs": [], "mrfs": [],
              "fc": _prep_conv(raw["fc"])}
    for i, (uk, ur) in enumerate(zip(config.upsample_kernel_sizes,
                                     config.upsample_rates)):
        params["convs"].append(_prep_convT(raw["convs"][i], stride=ur,
                                           padding=(uk - ur) // 2))
        stage = []
        for rb in raw["mrfs"][i]:
            stage.append([{"c1": _prep_conv(blk["c1"]),
                           "c2": _prep_conv(blk["c2"])} for blk in rb["blocks"]])
        params["mrfs"].append(stage)
    return params


# ------------------------------------------------------------------ main
if __name__ == "__main__":
    config = Config()
    key = jax.random.PRNGKey(0)
    pkey, xkey = jax.random.split(key)
    raw = init_generator_params(pkey, config)
    params = prepare_generator_params(raw, config)   # weight layout conversion done once

    B, C_mel, T = 2, 80, 256                          # small mel chunk; final T = 1024
    x = jax.random.normal(xkey, (B, C_mel, T), jnp.float32)

    fwd = jax.jit(lambda p, inp: generator_forward(p, inp, config))
    out = jax.block_until_ready(fwd(params, x))

    total_up = 1
    for r in config.upsample_rates:
        total_up *= r
    assert out.shape == (B, 1, T * total_up), out.shape
    assert bool(jnp.all(jnp.isfinite(out)))
    print("KERNEL_OK")
</pallas_src>

<mosaic_0001>
module attributes {stable_mosaic.version = 11 : i64} {
  func.func @_conv1d_kernel(%arg0: i32, %arg1: i32, %arg2: memref<1x1x80x262xf32, #tpu.memory_space<vmem>>, %arg3: memref<32x560xbf16, #tpu.memory_space<vmem>>, %arg4: memref<32x1xf32, #tpu.memory_space<vmem>>, %arg5: memref<1x32x256xbf16, #tpu.memory_space<vmem>>) attributes {dimension_semantics = [#tpu.dimension_semantics<parallel>, #tpu.dimension_semantics<parallel>], iteration_bounds = array<i64: 2, 1>, scalar_prefetch = 0 : i64, scratch_operands = 0 : i64, tpu.core_type = #tpu.core_type<tc>, window_params = [{transform_indices = @transform_0, window_bounds = array<i64: 1, 1, 80, 262>}, {pipeline_mode = #tpu.pipeline_mode<synchronous>, transform_indices = @transform_1, window_bounds = array<i64: 32, 560>}, {pipeline_mode = #tpu.pipeline_mode<synchronous>, transform_indices = @transform_2, window_bounds = array<i64: 32, 1>}, {transform_indices = @transform_3, window_bounds = array<i64: 1, 32, 256>}]} {
    %c0 = arith.constant 0 : index
    %c0_0 = arith.constant 0 : index
    %c0_1 = arith.constant 0 : index
    %c0_2 = arith.constant 0 : index
    %0 = vector.load %arg2[%c0, %c0_0, %c0_1, %c0_2] : memref<1x1x80x262xf32, #tpu.memory_space<vmem>>, vector<1x1x80x262xf32>
    %1 = vector.shape_cast %0 : vector<1x1x80x262xf32> to vector<80x262xf32>
    %2 = vector.extract_strided_slice %1 {offsets = [0, 0], sizes = [80, 256], strides = [1, 1]} : vector<80x262xf32> to vector<80x256xf32>
    %3 = vector.extract_strided_slice %1 {offsets = [0, 1], sizes = [80, 256], strides = [1, 1]} : vector<80x262xf32> to vector<80x256xf32>
    %4 = vector.extract_strided_slice %1 {offsets = [0, 2], sizes = [80, 256], strides = [1, 1]} : vector<80x262xf32> to vector<80x256xf32>
    %5 = vector.extract_strided_slice %1 {offsets = [0, 3], sizes = [80, 256], strides = [1, 1]} : vector<80x262xf32> to vector<80x256xf32>
    %6 = vector.extract_strided_slice %1 {offsets = [0, 4], sizes = [80, 256], strides = [1, 1]} : vector<80x262xf32> to vector<80x256xf32>
    %7 = vector.extract_strided_slice %1 {offsets = [0, 5], sizes = [80, 256], strides = [1, 1]} : vector<80x262xf32> to vector<80x256xf32>
    %8 = vector.extract_strided_slice %1 {offsets = [0, 6], sizes = [80, 256], strides = [1, 1]} : vector<80x262xf32> to vector<80x256xf32>
    %9 = tpu.concatenate %2, %3, %4, %5, %6, %7, %8 in 0 : vector<80x256xf32>, vector<80x256xf32>, vector<80x256xf32>, vector<80x256xf32>, vector<80x256xf32>, vector<80x256xf32>, vector<80x256xf32> -> vector<560x256xf32>
    %c0_3 = arith.constant 0 : index
    %c0_4 = arith.constant 0 : index
    %10 = vector.load %arg3[%c0_3, %c0_4] : memref<32x560xbf16, #tpu.memory_space<vmem>>, vector<32x560xbf16>
    %11 = arith.truncf %9 : vector<560x256xf32> to vector<560x256xbf16>
    %cst = arith.constant dense<0.000000e+00> : vector<32x256xf32>
    %12 = tpu.matmul %10, %11, %cst {dimension_numbers = #tpu.dot_dimension_numbers<[1], [0], [0], [1], [0, 0, 1, 1], [], []>} : vector<32x560xbf16>, vector<560x256xbf16>, vector<32x256xf32> -> vector<32x256xf32>
    %c0_5 = arith.constant 0 : index
    %c0_6 = arith.constant 0 : index
    %13 = vector.load %arg4[%c0_5, %c0_6] : memref<32x1xf32, #tpu.memory_space<vmem>>, vector<32x1xf32>
    %14 = vector.broadcast %13 : vector<32x1xf32> to vector<32x256xf32>
    %15 = arith.addf %12, %14 : vector<32x256xf32>
    %16 = arith.truncf %15 : vector<32x256xf32> to vector<32x256xbf16>
    %c0_7 = arith.constant 0 : index
    %c0_8 = arith.constant 0 : index
    %c0_9 = arith.constant 0 : index
    %17 = vector.load %arg5[%c0_7, %c0_8, %c0_9] : memref<1x32x256xbf16, #tpu.memory_space<vmem>>, vector<1x32x256xbf16>
    %18 = vector.shape_cast %17 : vector<1x32x256xbf16> to vector<32x256xbf16>
    %19 = vector.shape_cast %16 : vector<32x256xbf16> to vector<1x32x256xbf16>
    tpu.vector_store %arg5[%c0_7, %c0_8, %c0_9], %19 {strides = array<i32>} : memref<1x32x256xbf16, #tpu.memory_space<vmem>>, vector<1x32x256xbf16>,
    return
  }
  func.func @transform_0(%arg0: i32, %arg1: i32) -> (i32, i32, i32, i32) {
    %c0_i32 = arith.constant 0 : i32
    %c0_i32_0 = arith.constant 0 : i32
    %c0_i32_1 = arith.constant 0 : i32
    return %arg0, %arg1, %c0_i32, %c0_i32_0 : i32, i32, i32, i32
  }
  func.func @transform_1(%arg0: i32, %arg1: i32) -> (i32, i32) {
    %c0_i32 = arith.constant 0 : i32
    %c0_i32_0 = arith.constant 0 : i32
    %c0_i32_1 = arith.constant 0 : i32
    return %c0_i32, %c0_i32_0 : i32, i32
  }
  func.func @transform_2(%arg0: i32, %arg1: i32) -> (i32, i32) {
    %c0_i32 = arith.constant 0 : i32
    %c0_i32_0 = arith.constant 0 : i32
    %c0_i32_1 = arith.constant 0 : i32
    return %c0_i32, %c0_i32_0 : i32, i32
  }
  func.func @transform_3(%arg0: i32, %arg1: i32) -> (i32, i32, i32) {
    %c0_i32 = arith.constant 0 : i32
    %c0_i32_0 = arith.constant 0 : i32
    return %arg0, %c0_i32, %arg1 : i32, i32, i32
  }
}

module attributes {stable_mosaic.version = 11 : i64} {
  func.func @_conv1d_kernel(%arg0: i32, %arg1: i32, %arg2: memref<1x1x32x258xbf16, #tpu.memory_space<vmem>>, %arg3: memref<32x96xbf16, #tpu.memory_space<vmem>>, %arg4: memref<32x1xf32, #tpu.memory_space<vmem>>, %arg5: memref<1x32x256xbf16, #tpu.memory_space<vmem>>) attributes {dimension_semantics = [#tpu.dimension_semantics<parallel>, #tpu.dimension_semantics<parallel>], iteration_bounds = array<i64: 2, 1>, scalar_prefetch = 0 : i64, scratch_operands = 0 : i64, tpu.core_type = #tpu.core_type<tc>, window_params = [{transform_indices = @transform_0, window_bounds = array<i64: 1, 1, 32, 258>}, {pipeline_mode = #tpu.pipeline_mode<synchronous>, transform_indices = @transform_1, window_bounds = array<i64: 32, 96>}, {pipeline_mode = #tpu.pipeline_mode<synchronous>, transform_indices = @transform_2, window_bounds = array<i64: 32, 1>}, {transform_indices = @transform_3, window_bounds = array<i64: 1, 32, 256>}]} {
    %c0 = arith.constant 0 : index
    %c0_0 = arith.constant 0 : index
    %c0_1 = arith.constant 0 : index
    %c0_2 = arith.constant 0 : index
    %0 = vector.load %arg2[%c0, %c0_0, %c0_1, %c0_2] : memref<1x1x32x258xbf16, #tpu.memory_space<vmem>>, vector<1x1x32x258xbf16>
    %1 = vector.shape_cast %0 : vector<1x1x32x258xbf16> to vector<32x258xbf16>
    %2 = arith.extf %1 : vector<32x258xbf16> to vector<32x258xf32>
    %cst = arith.constant 0.000000e+00 : f32
    %3 = vector.broadcast %cst : f32 to vector<32x258xf32>
    %4 = arith.cmpf oge, %2, %3 : vector<32x258xf32>
    %cst_3 = arith.constant 0.00999999977 : f32
    %5 = vector.broadcast %cst_3 : f32 to vector<32x258xf32>
    %6 = arith.mulf %5, %2 : vector<32x258xf32>
    %7 = arith.select %4, %2, %6 : vector<32x258xi1>, vector<32x258xf32>
    %8 = vector.extract_strided_slice %7 {offsets = [0, 0], sizes = [32, 256], strides = [1, 1]} : vector<32x258xf32> to vector<32x256xf32>
    %9 = vector.extract_strided_slice %7 {offsets = [0, 1], sizes = [32, 256], strides = [1, 1]} : vector<32x258xf32> to vector<32x256xf32>
    %10 = vector.extract_strided_slice %7 {offsets = [0, 2], sizes = [32, 256], strides = [1, 1]} : vector<32x258xf32> to vector<32x256xf32>
    %11 = tpu.concatenate %8, %9, %10 in 0 : vector<32x256xf32>, vector<32x256xf32>, vector<32x256xf32> -> vector<96x256xf32>
    %c0_4 = arith.constant 0 : index
    %c0_5 = arith.constant 0 : index
    %12 = vector.load %arg3[%c0_4, %c0_5] : memref<32x96xbf16, #tpu.memory_space<vmem>>, vector<32x96xbf16>
    %13 = arith.truncf %11 : vector<96x256xf32> to vector<96x256xbf16>
    %cst_6 = arith.constant dense<0.000000e+00> : vector<32x256xf32>
    %14 = tpu.matmul %12, %13, %cst_6 {dimension_numbers = #tpu.dot_dimension_numbers<[1], [0], [0], [1], [0, 0, 1, 1], [], []>} : vector<32x96xbf16>, vector<96x256xbf16>, vector<32x256xf32> -> vector<32x256xf32>
    %c0_7 = arith.constant 0 : index
    %c0_8 = arith.constant 0 : index
    %15 = vector.load %arg4[%c0_7, %c0_8] : memref<32x1xf32, #tpu.memory_space<vmem>>, vector<32x1xf32>
    %16 = vector.broadcast %15 : vector<32x1xf32> to vector<32x256xf32>
    %17 = arith.addf %14, %16 : vector<32x256xf32>
    %18 = arith.truncf %17 : vector<32x256xf32> to vector<32x256xbf16>
    %c0_9 = arith.constant 0 : index
    %c0_10 = arith.constant 0 : index
    %c0_11 = arith.constant 0 : index
    %19 = vector.load %arg5[%c0_9, %c0_10, %c0_11] : memref<1x32x256xbf16, #tpu.memory_space<vmem>>, vector<1x32x256xbf16>
    %20 = vector.shape_cast %19 : vector<1x32x256xbf16> to vector<32x256xbf16>
    %21 = vector.shape_cast %18 : vector<32x256xbf16> to vector<1x32x256xbf16>
    tpu.vector_store %arg5[%c0_9, %c0_10, %c0_11], %21 {strides = array<i32>} : memref<1x32x256xbf16, #tpu.memory_space<vmem>>, vector<1x32x256xbf16>,
    return
  }
  func.func @transform_0(%arg0: i32, %arg1: i32) -> (i32, i32, i32, i32) {
    %c0_i32 = arith.constant 0 : i32
    %c0_i32_0 = arith.constant 0 : i32
    %c0_i32_1 = arith.constant 0 : i32
    return %arg0, %arg1, %c0_i32, %c0_i32_0 : i32, i32, i32, i32
  }
  func.func @transform_1(%arg0: i32, %arg1: i32) -> (i32, i32) {
    %c0_i32 = arith.constant 0 : i32
    %c0_i32_0 = arith.constant 0 : i32
    %c0_i32_1 = arith.constant 0 : i32
    return %c0_i32, %c0_i32_0 : i32, i32
  }
  func.func @transform_2(%arg0: i32, %arg1: i32) -> (i32, i32) {
    %c0_i32 = arith.constant 0 : i32
    %c0_i32_0 = arith.constant 0 : i32
    %c0_i32_1 = arith.constant 0 : i32
    return %c0_i32, %c0_i32_0 : i32, i32
  }
  func.func @transform_3(%arg0: i32, %arg1: i32) -> (i32, i32, i32) {
    %c0_i32 = arith.constant 0 : i32
    %c0_i32_0 = arith.constant 0 : i32
    return %arg0, %c0_i32, %arg1 : i32, i32, i32
  }
}

module attributes {stable_mosaic.version = 11 : i64} {
  func.func @_conv1d_kernel(%arg0: i32, %arg1: i32, %arg2: memref<1x1x16x516xbf16, #tpu.memory_space<vmem>>, %arg3: memref<16x80xbf16, #tpu.memory_space<vmem>>, %arg4: memref<16x1xf32, #tpu.memory_space<vmem>>, %arg5: memref<1x16x512xbf16, #tpu.memory_space<vmem>>) attributes {dimension_semantics = [#tpu.dimension_semantics<parallel>, #tpu.dimension_semantics<parallel>], iteration_bounds = array<i64: 2, 1>, scalar_prefetch = 0 : i64, scratch_operands = 0 : i64, tpu.core_type = #tpu.core_type<tc>, window_params = [{transform_indices = @transform_0, window_bounds = array<i64: 1, 1, 16, 516>}, {pipeline_mode = #tpu.pipeline_mode<synchronous>, transform_indices = @transform_1, window_bounds = array<i64: 16, 80>}, {pipeline_mode = #tpu.pipeline_mode<synchronous>, transform_indices = @transform_2, window_bounds = array<i64: 16, 1>}, {transform_indices = @transform_3, window_bounds = array<i64: 1, 16, 512>}]} {
    %c0 = arith.constant 0 : index
    %c0_0 = arith.constant 0 : index
    %c0_1 = arith.constant 0 : index
    %c0_2 = arith.constant 0 : index
    %0 = vector.load %arg2[%c0, %c0_0, %c0_1, %c0_2] : memref<1x1x16x516xbf16, #tpu.memory_space<vmem>>, vector<1x1x16x516xbf16>
    %1 = vector.shape_cast %0 : vector<1x1x16x516xbf16> to vector<16x516xbf16>
    %2 = arith.extf %1 : vector<16x516xbf16> to vector<16x516xf32>
    %cst = arith.constant 0.000000e+00 : f32
    %3 = vector.broadcast %cst : f32 to vector<16x516xf32>
    %4 = arith.cmpf oge, %2, %3 : vector<16x516xf32>
    %cst_3 = arith.constant 0.00999999977 : f32
    %5 = vector.broadcast %cst_3 : f32 to vector<16x516xf32>
    %6 = arith.mulf %5, %2 : vector<16x516xf32>
    %7 = arith.select %4, %2, %6 : vector<16x516xi1>, vector<16x516xf32>
    %8 = vector.extract_strided_slice %7 {offsets = [0, 0], sizes = [16, 512], strides = [1, 1]} : vector<16x516xf32> to vector<16x512xf32>
    %9 = vector.extract_strided_slice %7 {offsets = [0, 1], sizes = [16, 512], strides = [1, 1]} : vector<16x516xf32> to vector<16x512xf32>
    %10 = vector.extract_strided_slice %7 {offsets = [0, 2], sizes = [16, 512], strides = [1, 1]} : vector<16x516xf32> to vector<16x512xf32>
    %11 = vector.extract_strided_slice %7 {offsets = [0, 3], sizes = [16, 512], strides = [1, 1]} : vector<16x516xf32> to vector<16x512xf32>
    %12 = vector.extract_strided_slice %7 {offsets = [0, 4], sizes = [16, 512], strides = [1, 1]} : vector<16x516xf32> to vector<16x512xf32>
    %13 = tpu.concatenate %8, %9, %10, %11, %12 in 0 : vector<16x512xf32>, vector<16x512xf32>, vector<16x512xf32>, vector<16x512xf32>, vector<16x512xf32> -> vector<80x512xf32>
    %c0_4 = arith.constant 0 : index
    %c0_5 = arith.constant 0 : index
    %14 = vector.load %arg3[%c0_4, %c0_5] : memref<16x80xbf16, #tpu.memory_space<vmem>>, vector<16x80xbf16>
    %15 = arith.truncf %13 : vector<80x512xf32> to vector<80x512xbf16>
    %cst_6 = arith.constant dense<0.000000e+00> : vector<16x512xf32>
    %16 = tpu.matmul %14, %15, %cst_6 {dimension_numbers = #tpu.dot_dimension_numbers<[1], [0], [0], [1], [0, 0, 1, 1], [], []>} : vector<16x80xbf16>, vector<80x512xbf16>, vector<16x512xf32> -> vector<16x512xf32>
    %c0_7 = arith.constant 0 : index
    %c0_8 = arith.constant 0 : index
    %17 = vector.load %arg4[%c0_7, %c0_8] : memref<16x1xf32, #tpu.memory_space<vmem>>, vector<16x1xf32>
    %18 = vector.broadcast %17 : vector<16x1xf32> to vector<16x512xf32>
    %19 = arith.addf %16, %18 : vector<16x512xf32>
    %20 = arith.truncf %19 : vector<16x512xf32> to vector<16x512xbf16>
    %c0_9 = arith.constant 0 : index
    %c0_10 = arith.constant 0 : index
    %c0_11 = arith.constant 0 : index
    %21 = vector.load %arg5[%c0_9, %c0_10, %c0_11] : memref<1x16x512xbf16, #tpu.memory_space<vmem>>, vector<1x16x512xbf16>
    %22 = vector.shape_cast %21 : vector<1x16x512xbf16> to vector<16x512xbf16>
    %23 = vector.shape_cast %20 : vector<16x512xbf16> to vector<1x16x512xbf16>
    tpu.vector_store %arg5[%c0_9, %c0_10, %c0_11], %23 {strides = array<i32>} : memref<1x16x512xbf16, #tpu.memory_space<vmem>>, vector<1x16x512xbf16>,
    return
  }
  func.func @transform_0(%arg0: i32, %arg1: i32) -> (i32, i32, i32, i32) {
    %c0_i32 = arith.constant 0 : i32
    %c0_i32_0 = arith.constant 0 : i32
    %c0_i32_1 = arith.constant 0 : i32
    return %arg0, %arg1, %c0_i32, %c0_i32_0 : i32, i32, i32, i32
  }
  func.func @transform_1(%arg0: i32, %arg1: i32) -> (i32, i32) {
    %c0_i32 = arith.constant 0 : i32
    %c0_i32_0 = arith.constant 0 : i32
    %c0_i32_1 = arith.constant 0 : i32
    return %c0_i32, %c0_i32_0 : i32, i32
  }
  func.func @transform_2(%arg0: i32, %arg1: i32) -> (i32, i32) {
    %c0_i32 = arith.constant 0 : i32
    %c0_i32_0 = arith.constant 0 : i32
    %c0_i32_1 = arith.constant 0 : i32
    return %c0_i32, %c0_i32_0 : i32, i32
  }
  func.func @transform_3(%arg0: i32, %arg1: i32) -> (i32, i32, i32) {
    %c0_i32 = arith.constant 0 : i32
    %c0_i32_0 = arith.constant 0 : i32
    return %arg0, %c0_i32, %arg1 : i32, i32, i32
  }
}

module attributes {stable_mosaic.version = 11 : i64} {
  func.func @_conv1d_kernel(%arg0: i32, %arg1: i32, %arg2: memref<1x1x16x516xbf16, #tpu.memory_space<vmem>>, %arg3: memref<16x80xbf16, #tpu.memory_space<vmem>>, %arg4: memref<16x1xf32, #tpu.memory_space<vmem>>, %arg5: memref<1x16x512xbf16, #tpu.memory_space<vmem>>, %arg6: memref<1x16x512xbf16, #tpu.memory_space<vmem>>) attributes {dimension_semantics = [#tpu.dimension_semantics<parallel>, #tpu.dimension_semantics<parallel>], iteration_bounds = array<i64: 2, 1>, scalar_prefetch = 0 : i64, scratch_operands = 0 : i64, tpu.core_type = #tpu.core_type<tc>, window_params = [{transform_indices = @transform_0, window_bounds = array<i64: 1, 1, 16, 516>}, {pipeline_mode = #tpu.pipeline_mode<synchronous>, transform_indices = @transform_1, window_bounds = array<i64: 16, 80>}, {pipeline_mode = #tpu.pipeline_mode<synchronous>, transform_indices = @transform_2, window_bounds = array<i64: 16, 1>}, {transform_indices = @transform_3, window_bounds = array<i64: 1, 16, 512>}, {transform_indices = @transform_4, window_bounds = array<i64: 1, 16, 512>}]} {
    %c0 = arith.constant 0 : index
    %c0_0 = arith.constant 0 : index
    %c0_1 = arith.constant 0 : index
    %c0_2 = arith.constant 0 : index
    %0 = vector.load %arg2[%c0, %c0_0, %c0_1, %c0_2] : memref<1x1x16x516xbf16, #tpu.memory_space<vmem>>, vector<1x1x16x516xbf16>
    %1 = vector.shape_cast %0 : vector<1x1x16x516xbf16> to vector<16x516xbf16>
    %2 = arith.extf %1 : vector<16x516xbf16> to vector<16x516xf32>
    %cst = arith.constant 0.000000e+00 : f32
    %3 = vector.broadcast %cst : f32 to vector<16x516xf32>
    %4 = arith.cmpf oge, %2, %3 : vector<16x516xf32>
    %cst_3 = arith.constant 0.00999999977 : f32
    %5 = vector.broadcast %cst_3 : f32 to vector<16x516xf32>
    %6 = arith.mulf %5, %2 : vector<16x516xf32>
    %7 = arith.select %4, %2, %6 : vector<16x516xi1>, vector<16x516xf32>
    %8 = vector.extract_strided_slice %7 {offsets = [0, 0], sizes = [16, 512], strides = [1, 1]} : vector<16x516xf32> to vector<16x512xf32>
    %9 = vector.extract_strided_slice %7 {offsets = [0, 1], sizes = [16, 512], strides = [1, 1]} : vector<16x516xf32> to vector<16x512xf32>
    %10 = vector.extract_strided_slice %7 {offsets = [0, 2], sizes = [16, 512], strides = [1, 1]} : vector<16x516xf32> to vector<16x512xf32>
    %11 = vector.extract_strided_slice %7 {offsets = [0, 3], sizes = [16, 512], strides = [1, 1]} : vector<16x516xf32> to vector<16x512xf32>
    %12 = vector.extract_strided_slice %7 {offsets = [0, 4], sizes = [16, 512], strides = [1, 1]} : vector<16x516xf32> to vector<16x512xf32>
    %13 = tpu.concatenate %8, %9, %10, %11, %12 in 0 : vector<16x512xf32>, vector<16x512xf32>, vector<16x512xf32>, vector<16x512xf32>, vector<16x512xf32> -> vector<80x512xf32>
    %c0_4 = arith.constant 0 : index
    %c0_5 = arith.constant 0 : index
    %14 = vector.load %arg3[%c0_4, %c0_5] : memref<16x80xbf16, #tpu.memory_space<vmem>>, vector<16x80xbf16>
    %15 = arith.truncf %13 : vector<80x512xf32> to vector<80x512xbf16>
    %cst_6 = arith.constant dense<0.000000e+00> : vector<16x512xf32>
    %16 = tpu.matmul %14, %15, %cst_6 {dimension_numbers = #tpu.dot_dimension_numbers<[1], [0], [0], [1], [0, 0, 1, 1], [], []>} : vector<16x80xbf16>, vector<80x512xbf16>, vector<16x512xf32> -> vector<16x512xf32>
    %c0_7 = arith.constant 0 : index
    %c0_8 = arith.constant 0 : index
    %17 = vector.load %arg4[%c0_7, %c0_8] : memref<16x1xf32, #tpu.memory_space<vmem>>, vector<16x1xf32>
    %18 = vector.broadcast %17 : vector<16x1xf32> to vector<16x512xf32>
    %19 = arith.addf %16, %18 : vector<16x512xf32>
    %c0_9 = arith.constant 0 : index
    %c0_10 = arith.constant 0 : index
    %c0_11 = arith.constant 0 : index
    %20 = vector.load %arg5[%c0_9, %c0_10, %c0_11] : memref<1x16x512xbf16, #tpu.memory_space<vmem>>, vector<1x16x512xbf16>
    %21 = vector.shape_cast %20 : vector<1x16x512xbf16> to vector<16x512xbf16>
    %22 = arith.extf %21 : vector<16x512xbf16> to vector<16x512xf32>
    %23 = arith.addf %19, %22 : vector<16x512xf32>
    %24 = arith.truncf %23 : vector<16x512xf32> to vector<16x512xbf16>
    %c0_12 = arith.constant 0 : index
    %c0_13 = arith.constant 0 : index
    %c0_14 = arith.constant 0 : index
    %25 = vector.load %arg6[%c0_12, %c0_13, %c0_14] : memref<1x16x512xbf16, #tpu.memory_space<vmem>>, vector<1x16x512xbf16>
    %26 = vector.shape_cast %25 : vector<1x16x512xbf16> to vector<16x512xbf16>
    %27 = vector.shape_cast %24 : vector<16x512xbf16> to vector<1x16x512xbf16>
    tpu.vector_store %arg6[%c0_12, %c0_13, %c0_14], %27 {strides = array<i32>} : memref<1x16x512xbf16, #tpu.memory_space<vmem>>, vector<1x16x512xbf16>,
    return
  }
  func.func @transform_0(%arg0: i32, %arg1: i32) -> (i32, i32, i32, i32) {
    %c0_i32 = arith.constant 0 : i32
    %c0_i32_0 = arith.constant 0 : i32
    %c0_i32_1 = arith.constant 0 : i32
    return %arg0, %arg1, %c0_i32, %c0_i32_0 : i32, i32, i32, i32
  }
  func.func @transform_1(%arg0: i32, %arg1: i32) -> (i32, i32) {
    %c0_i32 = arith.constant 0 : i32
    %c0_i32_0 = arith.constant 0 : i32
    %c0_i32_1 = arith.constant 0 : i32
    return %c0_i32, %c0_i32_0 : i32, i32
  }
  func.func @transform_2(%arg0: i32, %arg1: i32) -> (i32, i32) {
    %c0_i32 = arith.constant 0 : i32
    %c0_i32_0 = arith.constant 0 : i32
    %c0_i32_1 = arith.constant 0 : i32
    return %c0_i32, %c0_i32_0 : i32, i32
  }
  func.func @transform_3(%arg0: i32, %arg1: i32) -> (i32, i32, i32) {
    %c0_i32 = arith.constant 0 : i32
    %c0_i32_0 = arith.constant 0 : i32
    return %arg0, %c0_i32, %arg1 : i32, i32, i32
  }
  func.func @transform_4(%arg0: i32, %arg1: i32) -> (i32, i32, i32) {
    %c0_i32 = arith.constant 0 : i32
    %c0_i32_0 = arith.constant 0 : i32
    return %arg0, %c0_i32, %arg1 : i32, i32, i32
  }
}

module attributes {stable_mosaic.version = 11 : i64} {
  func.func @_conv1d_kernel(%arg0: i32, %arg1: i32, %arg2: memref<1x1x16x524xbf16, #tpu.memory_space<vmem>>, %arg3: memref<16x80xbf16, #tpu.memory_space<vmem>>, %arg4: memref<16x1xf32, #tpu.memory_space<vmem>>, %arg5: memref<1x16x512xbf16, #tpu.memory_space<vmem>>) attributes {dimension_semantics = [#tpu.dimension_semantics<parallel>, #tpu.dimension_semantics<parallel>], iteration_bounds = array<i64: 2, 1>, scalar_prefetch = 0 : i64, scratch_operands = 0 : i64, tpu.core_type = #tpu.core_type<tc>, window_params = [{transform_indices = @transform_0, window_bounds = array<i64: 1, 1, 16, 524>}, {pipeline_mode = #tpu.pipeline_mode<synchronous>, transform_indices = @transform_1, window_bounds = array<i64: 16, 80>}, {pipeline_mode = #tpu.pipeline_mode<synchronous>, transform_indices = @transform_2, window_bounds = array<i64: 16, 1>}, {transform_indices = @transform_3, window_bounds = array<i64: 1, 16, 512>}]} {
    %c0 = arith.constant 0 : index
    %c0_0 = arith.constant 0 : index
    %c0_1 = arith.constant 0 : index
    %c0_2 = arith.constant 0 : index
    %0 = vector.load %arg2[%c0, %c0_0, %c0_1, %c0_2] : memref<1x1x16x524xbf16, #tpu.memory_space<vmem>>, vector<1x1x16x524xbf16>
    %1 = vector.shape_cast %0 : vector<1x1x16x524xbf16> to vector<16x524xbf16>
    %2 = arith.extf %1 : vector<16x524xbf16> to vector<16x524xf32>
    %cst = arith.constant 0.000000e+00 : f32
    %3 = vector.broadcast %cst : f32 to vector<16x524xf32>
    %4 = arith.cmpf oge, %2, %3 : vector<16x524xf32>
    %cst_3 = arith.constant 0.00999999977 : f32
    %5 = vector.broadcast %cst_3 : f32 to vector<16x524xf32>
    %6 = arith.mulf %5, %2 : vector<16x524xf32>
    %7 = arith.select %4, %2, %6 : vector<16x524xi1>, vector<16x524xf32>
    %8 = vector.extract_strided_slice %7 {offsets = [0, 0], sizes = [16, 512], strides = [1, 1]} : vector<16x524xf32> to vector<16x512xf32>
    %9 = vector.extract_strided_slice %7 {offsets = [0, 3], sizes = [16, 512], strides = [1, 1]} : vector<16x524xf32> to vector<16x512xf32>
    %10 = vector.extract_strided_slice %7 {offsets = [0, 6], sizes = [16, 512], strides = [1, 1]} : vector<16x524xf32> to vector<16x512xf32>
    %11 = vector.extract_strided_slice %7 {offsets = [0, 9], sizes = [16, 512], strides = [1, 1]} : vector<16x524xf32> to vector<16x512xf32>
    %12 = vector.extract_strided_slice %7 {offsets = [0, 12], sizes = [16, 512], strides = [1, 1]} : vector<16x524xf32> to vector<16x512xf32>
    %13 = tpu.concatenate %8, %9, %10, %11, %12 in 0 : vector<16x512xf32>, vector<16x512xf32>, vector<16x512xf32>, vector<16x512xf32>, vector<16x512xf32> -> vector<80x512xf32>
    %c0_4 = arith.constant 0 : index
    %c0_5 = arith.constant 0 : index
    %14 = vector.load %arg3[%c0_4, %c0_5] : memref<16x80xbf16, #tpu.memory_space<vmem>>, vector<16x80xbf16>
    %15 = arith.truncf %13 : vector<80x512xf32> to vector<80x512xbf16>
    %cst_6 = arith.constant dense<0.000000e+00> : vector<16x512xf32>
    %16 = tpu.matmul %14, %15, %cst_6 {dimension_numbers = #tpu.dot_dimension_numbers<[1], [0], [0], [1], [0, 0, 1, 1], [], []>} : vector<16x80xbf16>, vector<80x512xbf16>, vector<16x512xf32> -> vector<16x512xf32>
    %c0_7 = arith.constant 0 : index
    %c0_8 = arith.constant 0 : index
    %17 = vector.load %arg4[%c0_7, %c0_8] : memref<16x1xf32, #tpu.memory_space<vmem>>, vector<16x1xf32>
    %18 = vector.broadcast %17 : vector<16x1xf32> to vector<16x512xf32>
    %19 = arith.addf %16, %18 : vector<16x512xf32>
    %20 = arith.truncf %19 : vector<16x512xf32> to vector<16x512xbf16>
    %c0_9 = arith.constant 0 : index
    %c0_10 = arith.constant 0 : index
    %c0_11 = arith.constant 0 : index
    %21 = vector.load %arg5[%c0_9, %c0_10, %c0_11] : memref<1x16x512xbf16, #tpu.memory_space<vmem>>, vector<1x16x512xbf16>
    %22 = vector.shape_cast %21 : vector<1x16x512xbf16> to vector<16x512xbf16>
    %23 = vector.shape_cast %20 : vector<16x512xbf16> to vector<1x16x512xbf16>
    tpu.vector_store %arg5[%c0_9, %c0_10, %c0_11], %23 {strides = array<i32>} : memref<1x16x512xbf16, #tpu.memory_space<vmem>>, vector<1x16x512xbf16>,
    return
  }
  func.func @transform_0(%arg0: i32, %arg1: i32) -> (i32, i32, i32, i32) {
    %c0_i32 = arith.constant 0 : i32
    %c0_i32_0 = arith.constant 0 : i32
    %c0_i32_1 = arith.constant 0 : i32
    return %arg0, %arg1, %c0_i32, %c0_i32_0 : i32, i32, i32, i32
  }
  func.func @transform_1(%arg0: i32, %arg1: i32) -> (i32, i32) {
    %c0_i32 = arith.constant 0 : i32
    %c0_i32_0 = arith.constant 0 : i32
    %c0_i32_1 = arith.constant 0 : i32
    return %c0_i32, %c0_i32_0 : i32, i32
  }
  func.func @transform_2(%arg0: i32, %arg1: i32) -> (i32, i32) {
    %c0_i32 = arith.constant 0 : i32
    %c0_i32_0 = arith.constant 0 : i32
    %c0_i32_1 = arith.constant 0 : i32
    return %c0_i32, %c0_i32_0 : i32, i32
  }
  func.func @transform_3(%arg0: i32, %arg1: i32) -> (i32, i32, i32) {
    %c0_i32 = arith.constant 0 : i32
    %c0_i32_0 = arith.constant 0 : i32
    return %arg0, %c0_i32, %arg1 : i32, i32, i32
  }
}

module attributes {stable_mosaic.version = 11 : i64} {
  func.func @_conv1d_kernel(%arg0: i32, %arg1: i32, %arg2: memref<1x1x16x514xbf16, #tpu.memory_space<vmem>>, %arg3: memref<16x48xbf16, #tpu.memory_space<vmem>>, %arg4: memref<16x1xf32, #tpu.memory_space<vmem>>, %arg5: memref<1x16x512xbf16, #tpu.memory_space<vmem>>) attributes {dimension_semantics = [#tpu.dimension_semantics<parallel>, #tpu.dimension_semantics<parallel>], iteration_bounds = array<i64: 2, 1>, scalar_prefetch = 0 : i64, scratch_operands = 0 : i64, tpu.core_type = #tpu.core_type<tc>, window_params = [{transform_indices = @transform_0, window_bounds = array<i64: 1, 1, 16, 514>}, {pipeline_mode = #tpu.pipeline_mode<synchronous>, transform_indices = @transform_1, window_bounds = array<i64: 16, 48>}, {pipeline_mode = #tpu.pipeline_mode<synchronous>, transform_indices = @transform_2, window_bounds = array<i64: 16, 1>}, {transform_indices = @transform_3, window_bounds = array<i64: 1, 16, 512>}]} {
    %c0 = arith.constant 0 : index
    %c0_0 = arith.constant 0 : index
    %c0_1 = arith.constant 0 : index
    %c0_2 = arith.constant 0 : index
    %0 = vector.load %arg2[%c0, %c0_0, %c0_1, %c0_2] : memref<1x1x16x514xbf16, #tpu.memory_space<vmem>>, vector<1x1x16x514xbf16>
    %1 = vector.shape_cast %0 : vector<1x1x16x514xbf16> to vector<16x514xbf16>
    %2 = arith.extf %1 : vector<16x514xbf16> to vector<16x514xf32>
    %cst = arith.constant 0.000000e+00 : f32
    %3 = vector.broadcast %cst : f32 to vector<16x514xf32>
    %4 = arith.cmpf oge, %2, %3 : vector<16x514xf32>
    %cst_3 = arith.constant 0.00999999977 : f32
    %5 = vector.broadcast %cst_3 : f32 to vector<16x514xf32>
    %6 = arith.mulf %5, %2 : vector<16x514xf32>
    %7 = arith.select %4, %2, %6 : vector<16x514xi1>, vector<16x514xf32>
    %8 = vector.extract_strided_slice %7 {offsets = [0, 0], sizes = [16, 512], strides = [1, 1]} : vector<16x514xf32> to vector<16x512xf32>
    %9 = vector.extract_strided_slice %7 {offsets = [0, 1], sizes = [16, 512], strides = [1, 1]} : vector<16x514xf32> to vector<16x512xf32>
    %10 = vector.extract_strided_slice %7 {offsets = [0, 2], sizes = [16, 512], strides = [1, 1]} : vector<16x514xf32> to vector<16x512xf32>
    %11 = tpu.concatenate %8, %9, %10 in 0 : vector<16x512xf32>, vector<16x512xf32>, vector<16x512xf32> -> vector<48x512xf32>
    %c0_4 = arith.constant 0 : index
    %c0_5 = arith.constant 0 : index
    %12 = vector.load %arg3[%c0_4, %c0_5] : memref<16x48xbf16, #tpu.memory_space<vmem>>, vector<16x48xbf16>
    %13 = arith.truncf %11 : vector<48x512xf32> to vector<48x512xbf16>
    %cst_6 = arith.constant dense<0.000000e+00> : vector<16x512xf32>
    %14 = tpu.matmul %12, %13, %cst_6 {dimension_numbers = #tpu.dot_dimension_numbers<[1], [0], [0], [1], [0, 0, 1, 1], [], []>} : vector<16x48xbf16>, vector<48x512xbf16>, vector<16x512xf32> -> vector<16x512xf32>
    %c0_7 = arith.constant 0 : index
    %c0_8 = arith.constant 0 : index
    %15 = vector.load %arg4[%c0_7, %c0_8] : memref<16x1xf32, #tpu.memory_space<vmem>>, vector<16x1xf32>
    %16 = vector.broadcast %15 : vector<16x1xf32> to vector<16x512xf32>
    %17 = arith.addf %14, %16 : vector<16x512xf32>
    %18 = arith.truncf %17 : vector<16x512xf32> to vector<16x512xbf16>
    %c0_9 = arith.constant 0 : index
    %c0_10 = arith.constant 0 : index
    %c0_11 = arith.constant 0 : index
    %19 = vector.load %arg5[%c0_9, %c0_10, %c0_11] : memref<1x16x512xbf16, #tpu.memory_space<vmem>>, vector<1x16x512xbf16>
    %20 = vector.shape_cast %19 : vector<1x16x512xbf16> to vector<16x512xbf16>
    %21 = vector.shape_cast %18 : vector<16x512xbf16> to vector<1x16x512xbf16>
    tpu.vector_store %arg5[%c0_9, %c0_10, %c0_11], %21 {strides = array<i32>} : memref<1x16x512xbf16, #tpu.memory_space<vmem>>, vector<1x16x512xbf16>,
    return
  }
  func.func @transform_0(%arg0: i32, %arg1: i32) -> (i32, i32, i32, i32) {
    %c0_i32 = arith.constant 0 : i32
    %c0_i32_0 = arith.constant 0 : i32
    %c0_i32_1 = arith.constant 0 : i32
    return %arg0, %arg1, %c0_i32, %c0_i32_0 : i32, i32, i32, i32
  }
  func.func @transform_1(%arg0: i32, %arg1: i32) -> (i32, i32) {
    %c0_i32 = arith.constant 0 : i32
    %c0_i32_0 = arith.constant 0 : i32
    %c0_i32_1 = arith.constant 0 : i32
    return %c0_i32, %c0_i32_0 : i32, i32
  }
  func.func @transform_2(%arg0: i32, %arg1: i32) -> (i32, i32) {
    %c0_i32 = arith.constant 0 : i32
    %c0_i32_0 = arith.constant 0 : i32
    %c0_i32_1 = arith.constant 0 : i32
    return %c0_i32, %c0_i32_0 : i32, i32
  }
  func.func @transform_3(%arg0: i32, %arg1: i32) -> (i32, i32, i32) {
    %c0_i32 = arith.constant 0 : i32
    %c0_i32_0 = arith.constant 0 : i32
    return %arg0, %c0_i32, %arg1 : i32, i32, i32
  }
}

module attributes {stable_mosaic.version = 11 : i64} {
  func.func @_conv1d_kernel(%arg0: i32, %arg1: i32, %arg2: memref<1x1x16x514xbf16, #tpu.memory_space<vmem>>, %arg3: memref<16x48xbf16, #tpu.memory_space<vmem>>, %arg4: memref<16x1xf32, #tpu.memory_space<vmem>>, %arg5: memref<1x16x512xbf16, #tpu.memory_space<vmem>>, %arg6: memref<1x16x512xbf16, #tpu.memory_space<vmem>>) attributes {dimension_semantics = [#tpu.dimension_semantics<parallel>, #tpu.dimension_semantics<parallel>], iteration_bounds = array<i64: 2, 1>, scalar_prefetch = 0 : i64, scratch_operands = 0 : i64, tpu.core_type = #tpu.core_type<tc>, window_params = [{transform_indices = @transform_0, window_bounds = array<i64: 1, 1, 16, 514>}, {pipeline_mode = #tpu.pipeline_mode<synchronous>, transform_indices = @transform_1, window_bounds = array<i64: 16, 48>}, {pipeline_mode = #tpu.pipeline_mode<synchronous>, transform_indices = @transform_2, window_bounds = array<i64: 16, 1>}, {transform_indices = @transform_3, window_bounds = array<i64: 1, 16, 512>}, {transform_indices = @transform_4, window_bounds = array<i64: 1, 16, 512>}]} {
    %c0 = arith.constant 0 : index
    %c0_0 = arith.constant 0 : index
    %c0_1 = arith.constant 0 : index
    %c0_2 = arith.constant 0 : index
    %0 = vector.load %arg2[%c0, %c0_0, %c0_1, %c0_2] : memref<1x1x16x514xbf16, #tpu.memory_space<vmem>>, vector<1x1x16x514xbf16>
    %1 = vector.shape_cast %0 : vector<1x1x16x514xbf16> to vector<16x514xbf16>
    %2 = arith.extf %1 : vector<16x514xbf16> to vector<16x514xf32>
    %cst = arith.constant 0.000000e+00 : f32
    %3 = vector.broadcast %cst : f32 to vector<16x514xf32>
    %4 = arith.cmpf oge, %2, %3 : vector<16x514xf32>
    %cst_3 = arith.constant 0.00999999977 : f32
    %5 = vector.broadcast %cst_3 : f32 to vector<16x514xf32>
    %6 = arith.mulf %5, %2 : vector<16x514xf32>
    %7 = arith.select %4, %2, %6 : vector<16x514xi1>, vector<16x514xf32>
    %8 = vector.extract_strided_slice %7 {offsets = [0, 0], sizes = [16, 512], strides = [1, 1]} : vector<16x514xf32> to vector<16x512xf32>
    %9 = vector.extract_strided_slice %7 {offsets = [0, 1], sizes = [16, 512], strides = [1, 1]} : vector<16x514xf32> to vector<16x512xf32>
    %10 = vector.extract_strided_slice %7 {offsets = [0, 2], sizes = [16, 512], strides = [1, 1]} : vector<16x514xf32> to vector<16x512xf32>
    %11 = tpu.concatenate %8, %9, %10 in 0 : vector<16x512xf32>, vector<16x512xf32>, vector<16x512xf32> -> vector<48x512xf32>
    %c0_4 = arith.constant 0 : index
    %c0_5 = arith.constant 0 : index
    %12 = vector.load %arg3[%c0_4, %c0_5] : memref<16x48xbf16, #tpu.memory_space<vmem>>, vector<16x48xbf16>
    %13 = arith.truncf %11 : vector<48x512xf32> to vector<48x512xbf16>
    %cst_6 = arith.constant dense<0.000000e+00> : vector<16x512xf32>
    %14 = tpu.matmul %12, %13, %cst_6 {dimension_numbers = #tpu.dot_dimension_numbers<[1], [0], [0], [1], [0, 0, 1, 1], [], []>} : vector<16x48xbf16>, vector<48x512xbf16>, vector<16x512xf32> -> vector<16x512xf32>
    %c0_7 = arith.constant 0 : index
    %c0_8 = arith.constant 0 : index
    %15 = vector.load %arg4[%c0_7, %c0_8] : memref<16x1xf32, #tpu.memory_space<vmem>>, vector<16x1xf32>
    %16 = vector.broadcast %15 : vector<16x1xf32> to vector<16x512xf32>
    %17 = arith.addf %14, %16 : vector<16x512xf32>
    %c0_9 = arith.constant 0 : index
    %c0_10 = arith.constant 0 : index
    %c0_11 = arith.constant 0 : index
    %18 = vector.load %arg5[%c0_9, %c0_10, %c0_11] : memref<1x16x512xbf16, #tpu.memory_space<vmem>>, vector<1x16x512xbf16>
    %19 = vector.shape_cast %18 : vector<1x16x512xbf16> to vector<16x512xbf16>
    %20 = arith.extf %19 : vector<16x512xbf16> to vector<16x512xf32>
    %21 = arith.addf %17, %20 : vector<16x512xf32>
    %22 = arith.truncf %21 : vector<16x512xf32> to vector<16x512xbf16>
    %c0_12 = arith.constant 0 : index
    %c0_13 = arith.constant 0 : index
    %c0_14 = arith.constant 0 : index
    %23 = vector.load %arg6[%c0_12, %c0_13, %c0_14] : memref<1x16x512xbf16, #tpu.memory_space<vmem>>, vector<1x16x512xbf16>
    %24 = vector.shape_cast %23 : vector<1x16x512xbf16> to vector<16x512xbf16>
    %25 = vector.shape_cast %22 : vector<16x512xbf16> to vector<1x16x512xbf16>
    tpu.vector_store %arg6[%c0_12, %c0_13, %c0_14], %25 {strides = array<i32>} : memref<1x16x512xbf16, #tpu.memory_space<vmem>>, vector<1x16x512xbf16>,
    return
  }
  func.func @transform_0(%arg0: i32, %arg1: i32) -> (i32, i32, i32, i32) {
    %c0_i32 = arith.constant 0 : i32
    %c0_i32_0 = arith.constant 0 : i32
    %c0_i32_1 = arith.constant 0 : i32
    return %arg0, %arg1, %c0_i32, %c0_i32_0 : i32, i32, i32, i32
  }
  func.func @transform_1(%arg0: i32, %arg1: i32) -> (i32, i32) {
    %c0_i32 = arith.constant 0 : i32
    %c0_i32_0 = arith.constant 0 : i32
    %c0_i32_1 = arith.constant 0 : i32
    return %c0_i32, %c0_i32_0 : i32, i32
  }
  func.func @transform_2(%arg0: i32, %arg1: i32) -> (i32, i32) {
    %c0_i32 = arith.constant 0 : i32
    %c0_i32_0 = arith.constant 0 : i32
    %c0_i32_1 = arith.constant 0 : i32
    return %c0_i32, %c0_i32_0 : i32, i32
  }
  func.func @transform_3(%arg0: i32, %arg1: i32) -> (i32, i32, i32) {
    %c0_i32 = arith.constant 0 : i32
    %c0_i32_0 = arith.constant 0 : i32
    return %arg0, %c0_i32, %arg1 : i32, i32, i32
  }
  func.func @transform_4(%arg0: i32, %arg1: i32) -> (i32, i32, i32) {
    %c0_i32 = arith.constant 0 : i32
    %c0_i32_0 = arith.constant 0 : i32
    return %arg0, %c0_i32, %arg1 : i32, i32, i32
  }
}

module attributes {stable_mosaic.version = 11 : i64} {
  func.func @_conv1d_kernel(%arg0: i32, %arg1: i32, %arg2: memref<1x1x16x518xbf16, #tpu.memory_space<vmem>>, %arg3: memref<16x48xbf16, #tpu.memory_space<vmem>>, %arg4: memref<16x1xf32, #tpu.memory_space<vmem>>, %arg5: memref<1x16x512xbf16, #tpu.memory_space<vmem>>) attributes {dimension_semantics = [#tpu.dimension_semantics<parallel>, #tpu.dimension_semantics<parallel>], iteration_bounds = array<i64: 2, 1>, scalar_prefetch = 0 : i64, scratch_operands = 0 : i64, tpu.core_type = #tpu.core_type<tc>, window_params = [{transform_indices = @transform_0, window_bounds = array<i64: 1, 1, 16, 518>}, {pipeline_mode = #tpu.pipeline_mode<synchronous>, transform_indices = @transform_1, window_bounds = array<i64: 16, 48>}, {pipeline_mode = #tpu.pipeline_mode<synchronous>, transform_indices = @transform_2, window_bounds = array<i64: 16, 1>}, {transform_indices = @transform_3, window_bounds = array<i64: 1, 16, 512>}]} {
    %c0 = arith.constant 0 : index
    %c0_0 = arith.constant 0 : index
    %c0_1 = arith.constant 0 : index
    %c0_2 = arith.constant 0 : index
    %0 = vector.load %arg2[%c0, %c0_0, %c0_1, %c0_2] : memref<1x1x16x518xbf16, #tpu.memory_space<vmem>>, vector<1x1x16x518xbf16>
    %1 = vector.shape_cast %0 : vector<1x1x16x518xbf16> to vector<16x518xbf16>
    %2 = arith.extf %1 : vector<16x518xbf16> to vector<16x518xf32>
    %cst = arith.constant 0.000000e+00 : f32
    %3 = vector.broadcast %cst : f32 to vector<16x518xf32>
    %4 = arith.cmpf oge, %2, %3 : vector<16x518xf32>
    %cst_3 = arith.constant 0.00999999977 : f32
    %5 = vector.broadcast %cst_3 : f32 to vector<16x518xf32>
    %6 = arith.mulf %5, %2 : vector<16x518xf32>
    %7 = arith.select %4, %2, %6 : vector<16x518xi1>, vector<16x518xf32>
    %8 = vector.extract_strided_slice %7 {offsets = [0, 0], sizes = [16, 512], strides = [1, 1]} : vector<16x518xf32> to vector<16x512xf32>
    %9 = vector.extract_strided_slice %7 {offsets = [0, 3], sizes = [16, 512], strides = [1, 1]} : vector<16x518xf32> to vector<16x512xf32>
    %10 = vector.extract_strided_slice %7 {offsets = [0, 6], sizes = [16, 512], strides = [1, 1]} : vector<16x518xf32> to vector<16x512xf32>
    %11 = tpu.concatenate %8, %9, %10 in 0 : vector<16x512xf32>, vector<16x512xf32>, vector<16x512xf32> -> vector<48x512xf32>
    %c0_4 = arith.constant 0 : index
    %c0_5 = arith.constant 0 : index
    %12 = vector.load %arg3[%c0_4, %c0_5] : memref<16x48xbf16, #tpu.memory_space<vmem>>, vector<16x48xbf16>
    %13 = arith.truncf %11 : vector<48x512xf32> to vector<48x512xbf16>
    %cst_6 = arith.constant dense<0.000000e+00> : vector<16x512xf32>
    %14 = tpu.matmul %12, %13, %cst_6 {dimension_numbers = #tpu.dot_dimension_numbers<[1], [0], [0], [1], [0, 0, 1, 1], [], []>} : vector<16x48xbf16>, vector<48x512xbf16>, vector<16x512xf32> -> vector<16x512xf32>
    %c0_7 = arith.constant 0 : index
    %c0_8 = arith.constant 0 : index
    %15 = vector.load %arg4[%c0_7, %c0_8] : memref<16x1xf32, #tpu.memory_space<vmem>>, vector<16x1xf32>
    %16 = vector.broadcast %15 : vector<16x1xf32> to vector<16x512xf32>
    %17 = arith.addf %14, %16 : vector<16x512xf32>
    %18 = arith.truncf %17 : vector<16x512xf32> to vector<16x512xbf16>
    %c0_9 = arith.constant 0 : index
    %c0_10 = arith.constant 0 : index
    %c0_11 = arith.constant 0 : index
    %19 = vector.load %arg5[%c0_9, %c0_10, %c0_11] : memref<1x16x512xbf16, #tpu.memory_space<vmem>>, vector<1x16x512xbf16>
    %20 = vector.shape_cast %19 : vector<1x16x512xbf16> to vector<16x512xbf16>
    %21 = vector.shape_cast %18 : vector<16x512xbf16> to vector<1x16x512xbf16>
    tpu.vector_store %arg5[%c0_9, %c0_10, %c0_11], %21 {strides = array<i32>} : memref<1x16x512xbf16, #tpu.memory_space<vmem>>, vector<1x16x512xbf16>,
    return
  }
  func.func @transform_0(%arg0: i32, %arg1: i32) -> (i32, i32, i32, i32) {
    %c0_i32 = arith.constant 0 : i32
    %c0_i32_0 = arith.constant 0 : i32
    %c0_i32_1 = arith.constant 0 : i32
    return %arg0, %arg1, %c0_i32, %c0_i32_0 : i32, i32, i32, i32
  }
  func.func @transform_1(%arg0: i32, %arg1: i32) -> (i32, i32) {
    %c0_i32 = arith.constant 0 : i32
    %c0_i32_0 = arith.constant 0 : i32
    %c0_i32_1 = arith.constant 0 : i32
    return %c0_i32, %c0_i32_0 : i32, i32
  }
  func.func @transform_2(%arg0: i32, %arg1: i32) -> (i32, i32) {
    %c0_i32 = arith.constant 0 : i32
    %c0_i32_0 = arith.constant 0 : i32
    %c0_i32_1 = arith.constant 0 : i32
    return %c0_i32, %c0_i32_0 : i32, i32
  }
  func.func @transform_3(%arg0: i32, %arg1: i32) -> (i32, i32, i32) {
    %c0_i32 = arith.constant 0 : i32
    %c0_i32_0 = arith.constant 0 : i32
    return %arg0, %c0_i32, %arg1 : i32, i32, i32
  }
}

module attributes {stable_mosaic.version = 11 : i64} {
  func.func @_conv1d_kernel(%arg0: i32, %arg1: i32, %arg2: memref<1x1x8x516xbf16, #tpu.memory_space<vmem>>, %arg3: memref<8x40xbf16, #tpu.memory_space<vmem>>, %arg4: memref<8x1xf32, #tpu.memory_space<vmem>>, %arg5: memref<1x8x512xbf16, #tpu.memory_space<vmem>>, %arg6: memref<1x8x512xbf16, #tpu.memory_space<vmem>>) attributes {dimension_semantics = [#tpu.dimension_semantics<parallel>, #tpu.dimension_semantics<parallel>], iteration_bounds = array<i64: 2, 2>, scalar_prefetch = 0 : i64, scratch_operands = 0 : i64, tpu.core_type = #tpu.core_type<tc>, window_params = [{transform_indices = @transform_0, window_bounds = array<i64: 1, 1, 8, 516>}, {pipeline_mode = #tpu.pipeline_mode<synchronous>, transform_indices = @transform_1, window_bounds = array<i64: 8, 40>}, {pipeline_mode = #tpu.pipeline_mode<synchronous>, transform_indices = @transform_2, window_bounds = array<i64: 8, 1>}, {transform_indices = @transform_3, window_bounds = array<i64: 1, 8, 512>}, {transform_indices = @transform_4, window_bounds = array<i64: 1, 8, 512>}]} {
    %c0 = arith.constant 0 : index
    %c0_0 = arith.constant 0 : index
    %c0_1 = arith.constant 0 : index
    %c0_2 = arith.constant 0 : index
    %0 = vector.load %arg2[%c0, %c0_0, %c0_1, %c0_2] : memref<1x1x8x516xbf16, #tpu.memory_space<vmem>>, vector<1x1x8x516xbf16>
    %1 = vector.shape_cast %0 : vector<1x1x8x516xbf16> to vector<8x516xbf16>
    %2 = arith.extf %1 : vector<8x516xbf16> to vector<8x516xf32>
    %cst = arith.constant 0.000000e+00 : f32
    %3 = vector.broadcast %cst : f32 to vector<8x516xf32>
    %4 = arith.cmpf oge, %2, %3 : vector<8x516xf32>
    %cst_3 = arith.constant 0.00999999977 : f32
    %5 = vector.broadcast %cst_3 : f32 to vector<8x516xf32>
    %6 = arith.mulf %5, %2 : vector<8x516xf32>
    %7 = arith.select %4, %2, %6 : vector<8x516xi1>, vector<8x516xf32>
    %8 = vector.extract_strided_slice %7 {offsets = [0, 0], sizes = [8, 512], strides = [1, 1]} : vector<8x516xf32> to vector<8x512xf32>
    %9 = vector.extract_strided_slice %7 {offsets = [0, 1], sizes = [8, 512], strides = [1, 1]} : vector<8x516xf32> to vector<8x512xf32>
    %10 = vector.extract_strided_slice %7 {offsets = [0, 2], sizes = [8, 512], strides = [1, 1]} : vector<8x516xf32> to vector<8x512xf32>
    %11 = vector.extract_strided_slice %7 {offsets = [0, 3], sizes = [8, 512], strides = [1, 1]} : vector<8x516xf32> to vector<8x512xf32>
    %12 = vector.extract_strided_slice %7 {offsets = [0, 4], sizes = [8, 512], strides = [1, 1]} : vector<8x516xf32> to vector<8x512xf32>
    %13 = tpu.concatenate %8, %9, %10, %11, %12 in 0 : vector<8x512xf32>, vector<8x512xf32>, vector<8x512xf32>, vector<8x512xf32>, vector<8x512xf32> -> vector<40x512xf32>
    %c0_4 = arith.constant 0 : index
    %c0_5 = arith.constant 0 : index
    %14 = vector.load %arg3[%c0_4, %c0_5] : memref<8x40xbf16, #tpu.memory_space<vmem>>, vector<8x40xbf16>
    %15 = arith.truncf %13 : vector<40x512xf32> to vector<40x512xbf16>
    %cst_6 = arith.constant dense<0.000000e+00> : vector<8x512xf32>
    %16 = tpu.matmul %14, %15, %cst_6 {dimension_numbers = #tpu.dot_dimension_numbers<[1], [0], [0], [1], [0, 0, 1, 1], [], []>} : vector<8x40xbf16>, vector<40x512xbf16>, vector<8x512xf32> -> vector<8x512xf32>
    %c0_7 = arith.constant 0 : index
    %c0_8 = arith.constant 0 : index
    %17 = vector.load %arg4[%c0_7, %c0_8] : memref<8x1xf32, #tpu.memory_space<vmem>>, vector<8x1xf32>
    %18 = vector.broadcast %17 : vector<8x1xf32> to vector<8x512xf32>
    %19 = arith.addf %16, %18 : vector<8x512xf32>
    %c0_9 = arith.constant 0 : index
    %c0_10 = arith.constant 0 : index
    %c0_11 = arith.constant 0 : index
    %20 = vector.load %arg5[%c0_9, %c0_10, %c0_11] : memref<1x8x512xbf16, #tpu.memory_space<vmem>>, vector<1x8x512xbf16>
    %21 = vector.shape_cast %20 : vector<1x8x512xbf16> to vector<8x512xbf16>
    %22 = arith.extf %21 : vector<8x512xbf16> to vector<8x512xf32>
    %23 = arith.addf %19, %22 : vector<8x512xf32>
    %24 = arith.truncf %23 : vector<8x512xf32> to vector<8x512xbf16>
    %c0_12 = arith.constant 0 : index
    %c0_13 = arith.constant 0 : index
    %c0_14 = arith.constant 0 : index
    %25 = vector.load %arg6[%c0_12, %c0_13, %c0_14] : memref<1x8x512xbf16, #tpu.memory_space<vmem>>, vector<1x8x512xbf16>
    %26 = vector.shape_cast %25 : vector<1x8x512xbf16> to vector<8x512xbf16>
    %27 = vector.shape_cast %24 : vector<8x512xbf16> to vector<1x8x512xbf16>
    tpu.vector_store %arg6[%c0_12, %c0_13, %c0_14], %27 {strides = array<i32>} : memref<1x8x512xbf16, #tpu.memory_space<vmem>>, vector<1x8x512xbf16>,
    return
  }
  func.func @transform_0(%arg0: i32, %arg1: i32) -> (i32, i32, i32, i32) {
    %c0_i32 = arith.constant 0 : i32
    %c0_i32_0 = arith.constant 0 : i32
    %c0_i32_1 = arith.constant 0 : i32
    return %arg0, %arg1, %c0_i32, %c0_i32_0 : i32, i32, i32, i32
  }
  func.func @transform_1(%arg0: i32, %arg1: i32) -> (i32, i32) {
    %c0_i32 = arith.constant 0 : i32
    %c0_i32_0 = arith.constant 0 : i32
    %c0_i32_1 = arith.constant 0 : i32
    return %c0_i32, %c0_i32_0 : i32, i32
  }
  func.func @transform_2(%arg0: i32, %arg1: i32) -> (i32, i32) {
    %c0_i32 = arith.constant 0 : i32
    %c0_i32_0 = arith.constant 0 : i32
    %c0_i32_1 = arith.constant 0 : i32
    return %c0_i32, %c0_i32_0 : i32, i32
  }
  func.func @transform_3(%arg0: i32, %arg1: i32) -> (i32, i32, i32) {
    %c0_i32 = arith.constant 0 : i32
    %c0_i32_0 = arith.constant 0 : i32
    return %arg0, %c0_i32, %arg1 : i32, i32, i32
  }
  func.func @transform_4(%arg0: i32, %arg1: i32) -> (i32, i32, i32) {
    %c0_i32 = arith.constant 0 : i32
    %c0_i32_0 = arith.constant 0 : i32
    return %arg0, %c0_i32, %arg1 : i32, i32, i32
  }
}

module attributes {stable_mosaic.version = 11 : i64} {
  func.func @_conv1d_kernel(%arg0: i32, %arg1: i32, %arg2: memref<1x1x8x516xbf16, #tpu.memory_space<vmem>>, %arg3: memref<8x40xbf16, #tpu.memory_space<vmem>>, %arg4: memref<8x1xf32, #tpu.memory_space<vmem>>, %arg5: memref<1x8x512xbf16, #tpu.memory_space<vmem>>) attributes {dimension_semantics = [#tpu.dimension_semantics<parallel>, #tpu.dimension_semantics<parallel>], iteration_bounds = array<i64: 2, 2>, scalar_prefetch = 0 : i64, scratch_operands = 0 : i64, tpu.core_type = #tpu.core_type<tc>, window_params = [{transform_indices = @transform_0, window_bounds = array<i64: 1, 1, 8, 516>}, {pipeline_mode = #tpu.pipeline_mode<synchronous>, transform_indices = @transform_1, window_bounds = array<i64: 8, 40>}, {pipeline_mode = #tpu.pipeline_mode<synchronous>, transform_indices = @transform_2, window_bounds = array<i64: 8, 1>}, {transform_indices = @transform_3, window_bounds = array<i64: 1, 8, 512>}]} {
    %c0 = arith.constant 0 : index
    %c0_0 = arith.constant 0 : index
    %c0_1 = arith.constant 0 : index
    %c0_2 = arith.constant 0 : index
    %0 = vector.load %arg2[%c0, %c0_0, %c0_1, %c0_2] : memref<1x1x8x516xbf16, #tpu.memory_space<vmem>>, vector<1x1x8x516xbf16>
    %1 = vector.shape_cast %0 : vector<1x1x8x516xbf16> to vector<8x516xbf16>
    %2 = arith.extf %1 : vector<8x516xbf16> to vector<8x516xf32>
    %cst = arith.constant 0.000000e+00 : f32
    %3 = vector.broadcast %cst : f32 to vector<8x516xf32>
    %4 = arith.cmpf oge, %2, %3 : vector<8x516xf32>
    %cst_3 = arith.constant 0.00999999977 : f32
    %5 = vector.broadcast %cst_3 : f32 to vector<8x516xf32>
    %6 = arith.mulf %5, %2 : vector<8x516xf32>
    %7 = arith.select %4, %2, %6 : vector<8x516xi1>, vector<8x516xf32>
    %8 = vector.extract_strided_slice %7 {offsets = [0, 0], sizes = [8, 512], strides = [1, 1]} : vector<8x516xf32> to vector<8x512xf32>
    %9 = vector.extract_strided_slice %7 {offsets = [0, 1], sizes = [8, 512], strides = [1, 1]} : vector<8x516xf32> to vector<8x512xf32>
    %10 = vector.extract_strided_slice %7 {offsets = [0, 2], sizes = [8, 512], strides = [1, 1]} : vector<8x516xf32> to vector<8x512xf32>
    %11 = vector.extract_strided_slice %7 {offsets = [0, 3], sizes = [8, 512], strides = [1, 1]} : vector<8x516xf32> to vector<8x512xf32>
    %12 = vector.extract_strided_slice %7 {offsets = [0, 4], sizes = [8, 512], strides = [1, 1]} : vector<8x516xf32> to vector<8x512xf32>
    %13 = tpu.concatenate %8, %9, %10, %11, %12 in 0 : vector<8x512xf32>, vector<8x512xf32>, vector<8x512xf32>, vector<8x512xf32>, vector<8x512xf32> -> vector<40x512xf32>
    %c0_4 = arith.constant 0 : index
    %c0_5 = arith.constant 0 : index
    %14 = vector.load %arg3[%c0_4, %c0_5] : memref<8x40xbf16, #tpu.memory_space<vmem>>, vector<8x40xbf16>
    %15 = arith.truncf %13 : vector<40x512xf32> to vector<40x512xbf16>
    %cst_6 = arith.constant dense<0.000000e+00> : vector<8x512xf32>
    %16 = tpu.matmul %14, %15, %cst_6 {dimension_numbers = #tpu.dot_dimension_numbers<[1], [0], [0], [1], [0, 0, 1, 1], [], []>} : vector<8x40xbf16>, vector<40x512xbf16>, vector<8x512xf32> -> vector<8x512xf32>
    %c0_7 = arith.constant 0 : index
    %c0_8 = arith.constant 0 : index
    %17 = vector.load %arg4[%c0_7, %c0_8] : memref<8x1xf32, #tpu.memory_space<vmem>>, vector<8x1xf32>
    %18 = vector.broadcast %17 : vector<8x1xf32> to vector<8x512xf32>
    %19 = arith.addf %16, %18 : vector<8x512xf32>
    %20 = arith.truncf %19 : vector<8x512xf32> to vector<8x512xbf16>
    %c0_9 = arith.constant 0 : index
    %c0_10 = arith.constant 0 : index
    %c0_11 = arith.constant 0 : index
    %21 = vector.load %arg5[%c0_9, %c0_10, %c0_11] : memref<1x8x512xbf16, #tpu.memory_space<vmem>>, vector<1x8x512xbf16>
    %22 = vector.shape_cast %21 : vector<1x8x512xbf16> to vector<8x512xbf16>
    %23 = vector.shape_cast %20 : vector<8x512xbf16> to vector<1x8x512xbf16>
    tpu.vector_store %arg5[%c0_9, %c0_10, %c0_11], %23 {strides = array<i32>} : memref<1x8x512xbf16, #tpu.memory_space<vmem>>, vector<1x8x512xbf16>,
    return
  }
  func.func @transform_0(%arg0: i32, %arg1: i32) -> (i32, i32, i32, i32) {
    %c0_i32 = arith.constant 0 : i32
    %c0_i32_0 = arith.constant 0 : i32
    %c0_i32_1 = arith.constant 0 : i32
    return %arg0, %arg1, %c0_i32, %c0_i32_0 : i32, i32, i32, i32
  }
  func.func @transform_1(%arg0: i32, %arg1: i32) -> (i32, i32) {
    %c0_i32 = arith.constant 0 : i32
    %c0_i32_0 = arith.constant 0 : i32
    %c0_i32_1 = arith.constant 0 : i32
    return %c0_i32, %c0_i32_0 : i32, i32
  }
  func.func @transform_2(%arg0: i32, %arg1: i32) -> (i32, i32) {
    %c0_i32 = arith.constant 0 : i32
    %c0_i32_0 = arith.constant 0 : i32
    %c0_i32_1 = arith.constant 0 : i32
    return %c0_i32, %c0_i32_0 : i32, i32
  }
  func.func @transform_3(%arg0: i32, %arg1: i32) -> (i32, i32, i32) {
    %c0_i32 = arith.constant 0 : i32
    %c0_i32_0 = arith.constant 0 : i32
    return %arg0, %c0_i32, %arg1 : i32, i32, i32
  }
}

module attributes {stable_mosaic.version = 11 : i64} {
  func.func @_conv1d_kernel(%arg0: i32, %arg1: i32, %arg2: memref<1x1x8x524xbf16, #tpu.memory_space<vmem>>, %arg3: memref<8x40xbf16, #tpu.memory_space<vmem>>, %arg4: memref<8x1xf32, #tpu.memory_space<vmem>>, %arg5: memref<1x8x512xbf16, #tpu.memory_space<vmem>>) attributes {dimension_semantics = [#tpu.dimension_semantics<parallel>, #tpu.dimension_semantics<parallel>], iteration_bounds = array<i64: 2, 2>, scalar_prefetch = 0 : i64, scratch_operands = 0 : i64, tpu.core_type = #tpu.core_type<tc>, window_params = [{transform_indices = @transform_0, window_bounds = array<i64: 1, 1, 8, 524>}, {pipeline_mode = #tpu.pipeline_mode<synchronous>, transform_indices = @transform_1, window_bounds = array<i64: 8, 40>}, {pipeline_mode = #tpu.pipeline_mode<synchronous>, transform_indices = @transform_2, window_bounds = array<i64: 8, 1>}, {transform_indices = @transform_3, window_bounds = array<i64: 1, 8, 512>}]} {
    %c0 = arith.constant 0 : index
    %c0_0 = arith.constant 0 : index
    %c0_1 = arith.constant 0 : index
    %c0_2 = arith.constant 0 : index
    %0 = vector.load %arg2[%c0, %c0_0, %c0_1, %c0_2] : memref<1x1x8x524xbf16, #tpu.memory_space<vmem>>, vector<1x1x8x524xbf16>
    %1 = vector.shape_cast %0 : vector<1x1x8x524xbf16> to vector<8x524xbf16>
    %2 = arith.extf %1 : vector<8x524xbf16> to vector<8x524xf32>
    %cst = arith.constant 0.000000e+00 : f32
    %3 = vector.broadcast %cst : f32 to vector<8x524xf32>
    %4 = arith.cmpf oge, %2, %3 : vector<8x524xf32>
    %cst_3 = arith.constant 0.00999999977 : f32
    %5 = vector.broadcast %cst_3 : f32 to vector<8x524xf32>
    %6 = arith.mulf %5, %2 : vector<8x524xf32>
    %7 = arith.select %4, %2, %6 : vector<8x524xi1>, vector<8x524xf32>
    %8 = vector.extract_strided_slice %7 {offsets = [0, 0], sizes = [8, 512], strides = [1, 1]} : vector<8x524xf32> to vector<8x512xf32>
    %9 = vector.extract_strided_slice %7 {offsets = [0, 3], sizes = [8, 512], strides = [1, 1]} : vector<8x524xf32> to vector<8x512xf32>
    %10 = vector.extract_strided_slice %7 {offsets = [0, 6], sizes = [8, 512], strides = [1, 1]} : vector<8x524xf32> to vector<8x512xf32>
    %11 = vector.extract_strided_slice %7 {offsets = [0, 9], sizes = [8, 512], strides = [1, 1]} : vector<8x524xf32> to vector<8x512xf32>
    %12 = vector.extract_strided_slice %7 {offsets = [0, 12], sizes = [8, 512], strides = [1, 1]} : vector<8x524xf32> to vector<8x512xf32>
    %13 = tpu.concatenate %8, %9, %10, %11, %12 in 0 : vector<8x512xf32>, vector<8x512xf32>, vector<8x512xf32>, vector<8x512xf32>, vector<8x512xf32> -> vector<40x512xf32>
    %c0_4 = arith.constant 0 : index
    %c0_5 = arith.constant 0 : index
    %14 = vector.load %arg3[%c0_4, %c0_5] : memref<8x40xbf16, #tpu.memory_space<vmem>>, vector<8x40xbf16>
    %15 = arith.truncf %13 : vector<40x512xf32> to vector<40x512xbf16>
    %cst_6 = arith.constant dense<0.000000e+00> : vector<8x512xf32>
    %16 = tpu.matmul %14, %15, %cst_6 {dimension_numbers = #tpu.dot_dimension_numbers<[1], [0], [0], [1], [0, 0, 1, 1], [], []>} : vector<8x40xbf16>, vector<40x512xbf16>, vector<8x512xf32> -> vector<8x512xf32>
    %c0_7 = arith.constant 0 : index
    %c0_8 = arith.constant 0 : index
    %17 = vector.load %arg4[%c0_7, %c0_8] : memref<8x1xf32, #tpu.memory_space<vmem>>, vector<8x1xf32>
    %18 = vector.broadcast %17 : vector<8x1xf32> to vector<8x512xf32>
    %19 = arith.addf %16, %18 : vector<8x512xf32>
    %20 = arith.truncf %19 : vector<8x512xf32> to vector<8x512xbf16>
    %c0_9 = arith.constant 0 : index
    %c0_10 = arith.constant 0 : index
    %c0_11 = arith.constant 0 : index
    %21 = vector.load %arg5[%c0_9, %c0_10, %c0_11] : memref<1x8x512xbf16, #tpu.memory_space<vmem>>, vector<1x8x512xbf16>
    %22 = vector.shape_cast %21 : vector<1x8x512xbf16> to vector<8x512xbf16>
    %23 = vector.shape_cast %20 : vector<8x512xbf16> to vector<1x8x512xbf16>
    tpu.vector_store %arg5[%c0_9, %c0_10, %c0_11], %23 {strides = array<i32>} : memref<1x8x512xbf16, #tpu.memory_space<vmem>>, vector<1x8x512xbf16>,
    return
  }
  func.func @transform_0(%arg0: i32, %arg1: i32) -> (i32, i32, i32, i32) {
    %c0_i32 = arith.constant 0 : i32
    %c0_i32_0 = arith.constant 0 : i32
    %c0_i32_1 = arith.constant 0 : i32
    return %arg0, %arg1, %c0_i32, %c0_i32_0 : i32, i32, i32, i32
  }
  func.func @transform_1(%arg0: i32, %arg1: i32) -> (i32, i32) {
    %c0_i32 = arith.constant 0 : i32
    %c0_i32_0 = arith.constant 0 : i32
    %c0_i32_1 = arith.constant 0 : i32
    return %c0_i32, %c0_i32_0 : i32, i32
  }
  func.func @transform_2(%arg0: i32, %arg1: i32) -> (i32, i32) {
    %c0_i32 = arith.constant 0 : i32
    %c0_i32_0 = arith.constant 0 : i32
    %c0_i32_1 = arith.constant 0 : i32
    return %c0_i32, %c0_i32_0 : i32, i32
  }
  func.func @transform_3(%arg0: i32, %arg1: i32) -> (i32, i32, i32) {
    %c0_i32 = arith.constant 0 : i32
    %c0_i32_0 = arith.constant 0 : i32
    return %arg0, %c0_i32, %arg1 : i32, i32, i32
  }
}

module attributes {stable_mosaic.version = 11 : i64} {
  func.func @_conv1d_kernel(%arg0: i32, %arg1: i32, %arg2: memref<1x1x8x514xbf16, #tpu.memory_space<vmem>>, %arg3: memref<8x24xbf16, #tpu.memory_space<vmem>>, %arg4: memref<8x1xf32, #tpu.memory_space<vmem>>, %arg5: memref<1x8x512xbf16, #tpu.memory_space<vmem>>) attributes {dimension_semantics = [#tpu.dimension_semantics<parallel>, #tpu.dimension_semantics<parallel>], iteration_bounds = array<i64: 2, 2>, scalar_prefetch = 0 : i64, scratch_operands = 0 : i64, tpu.core_type = #tpu.core_type<tc>, window_params = [{transform_indices = @transform_0, window_bounds = array<i64: 1, 1, 8, 514>}, {pipeline_mode = #tpu.pipeline_mode<synchronous>, transform_indices = @transform_1, window_bounds = array<i64: 8, 24>}, {pipeline_mode = #tpu.pipeline_mode<synchronous>, transform_indices = @transform_2, window_bounds = array<i64: 8, 1>}, {transform_indices = @transform_3, window_bounds = array<i64: 1, 8, 512>}]} {
    %c0 = arith.constant 0 : index
    %c0_0 = arith.constant 0 : index
    %c0_1 = arith.constant 0 : index
    %c0_2 = arith.constant 0 : index
    %0 = vector.load %arg2[%c0, %c0_0, %c0_1, %c0_2] : memref<1x1x8x514xbf16, #tpu.memory_space<vmem>>, vector<1x1x8x514xbf16>
    %1 = vector.shape_cast %0 : vector<1x1x8x514xbf16> to vector<8x514xbf16>
    %2 = arith.extf %1 : vector<8x514xbf16> to vector<8x514xf32>
    %cst = arith.constant 0.000000e+00 : f32
    %3 = vector.broadcast %cst : f32 to vector<8x514xf32>
    %4 = arith.cmpf oge, %2, %3 : vector<8x514xf32>
    %cst_3 = arith.constant 0.00999999977 : f32
    %5 = vector.broadcast %cst_3 : f32 to vector<8x514xf32>
    %6 = arith.mulf %5, %2 : vector<8x514xf32>
    %7 = arith.select %4, %2, %6 : vector<8x514xi1>, vector<8x514xf32>
    %8 = vector.extract_strided_slice %7 {offsets = [0, 0], sizes = [8, 512], strides = [1, 1]} : vector<8x514xf32> to vector<8x512xf32>
    %9 = vector.extract_strided_slice %7 {offsets = [0, 1], sizes = [8, 512], strides = [1, 1]} : vector<8x514xf32> to vector<8x512xf32>
    %10 = vector.extract_strided_slice %7 {offsets = [0, 2], sizes = [8, 512], strides = [1, 1]} : vector<8x514xf32> to vector<8x512xf32>
    %11 = tpu.concatenate %8, %9, %10 in 0 : vector<8x512xf32>, vector<8x512xf32>, vector<8x512xf32> -> vector<24x512xf32>
    %c0_4 = arith.constant 0 : index
    %c0_5 = arith.constant 0 : index
    %12 = vector.load %arg3[%c0_4, %c0_5] : memref<8x24xbf16, #tpu.memory_space<vmem>>, vector<8x24xbf16>
    %13 = arith.truncf %11 : vector<24x512xf32> to vector<24x512xbf16>
    %cst_6 = arith.constant dense<0.000000e+00> : vector<8x512xf32>
    %14 = tpu.matmul %12, %13, %cst_6 {dimension_numbers = #tpu.dot_dimension_numbers<[1], [0], [0], [1], [0, 0, 1, 1], [], []>} : vector<8x24xbf16>, vector<24x512xbf16>, vector<8x512xf32> -> vector<8x512xf32>
    %c0_7 = arith.constant 0 : index
    %c0_8 = arith.constant 0 : index
    %15 = vector.load %arg4[%c0_7, %c0_8] : memref<8x1xf32, #tpu.memory_space<vmem>>, vector<8x1xf32>
    %16 = vector.broadcast %15 : vector<8x1xf32> to vector<8x512xf32>
    %17 = arith.addf %14, %16 : vector<8x512xf32>
    %18 = arith.truncf %17 : vector<8x512xf32> to vector<8x512xbf16>
    %c0_9 = arith.constant 0 : index
    %c0_10 = arith.constant 0 : index
    %c0_11 = arith.constant 0 : index
    %19 = vector.load %arg5[%c0_9, %c0_10, %c0_11] : memref<1x8x512xbf16, #tpu.memory_space<vmem>>, vector<1x8x512xbf16>
    %20 = vector.shape_cast %19 : vector<1x8x512xbf16> to vector<8x512xbf16>
    %21 = vector.shape_cast %18 : vector<8x512xbf16> to vector<1x8x512xbf16>
    tpu.vector_store %arg5[%c0_9, %c0_10, %c0_11], %21 {strides = array<i32>} : memref<1x8x512xbf16, #tpu.memory_space<vmem>>, vector<1x8x512xbf16>,
    return
  }
  func.func @transform_0(%arg0: i32, %arg1: i32) -> (i32, i32, i32, i32) {
    %c0_i32 = arith.constant 0 : i32
    %c0_i32_0 = arith.constant 0 : i32
    %c0_i32_1 = arith.constant 0 : i32
    return %arg0, %arg1, %c0_i32, %c0_i32_0 : i32, i32, i32, i32
  }
  func.func @transform_1(%arg0: i32, %arg1: i32) -> (i32, i32) {
    %c0_i32 = arith.constant 0 : i32
    %c0_i32_0 = arith.constant 0 : i32
    %c0_i32_1 = arith.constant 0 : i32
    return %c0_i32, %c0_i32_0 : i32, i32
  }
  func.func @transform_2(%arg0: i32, %arg1: i32) -> (i32, i32) {
    %c0_i32 = arith.constant 0 : i32
    %c0_i32_0 = arith.constant 0 : i32
    %c0_i32_1 = arith.constant 0 : i32
    return %c0_i32, %c0_i32_0 : i32, i32
  }
  func.func @transform_3(%arg0: i32, %arg1: i32) -> (i32, i32, i32) {
    %c0_i32 = arith.constant 0 : i32
    %c0_i32_0 = arith.constant 0 : i32
    return %arg0, %c0_i32, %arg1 : i32, i32, i32
  }
}

module attributes {stable_mosaic.version = 11 : i64} {
  func.func @_conv1d_kernel(%arg0: i32, %arg1: i32, %arg2: memref<1x1x8x514xbf16, #tpu.memory_space<vmem>>, %arg3: memref<8x24xbf16, #tpu.memory_space<vmem>>, %arg4: memref<8x1xf32, #tpu.memory_space<vmem>>, %arg5: memref<1x8x512xbf16, #tpu.memory_space<vmem>>, %arg6: memref<1x8x512xbf16, #tpu.memory_space<vmem>>) attributes {dimension_semantics = [#tpu.dimension_semantics<parallel>, #tpu.dimension_semantics<parallel>], iteration_bounds = array<i64: 2, 2>, scalar_prefetch = 0 : i64, scratch_operands = 0 : i64, tpu.core_type = #tpu.core_type<tc>, window_params = [{transform_indices = @transform_0, window_bounds = array<i64: 1, 1, 8, 514>}, {pipeline_mode = #tpu.pipeline_mode<synchronous>, transform_indices = @transform_1, window_bounds = array<i64: 8, 24>}, {pipeline_mode = #tpu.pipeline_mode<synchronous>, transform_indices = @transform_2, window_bounds = array<i64: 8, 1>}, {transform_indices = @transform_3, window_bounds = array<i64: 1, 8, 512>}, {transform_indices = @transform_4, window_bounds = array<i64: 1, 8, 512>}]} {
    %c0 = arith.constant 0 : index
    %c0_0 = arith.constant 0 : index
    %c0_1 = arith.constant 0 : index
    %c0_2 = arith.constant 0 : index
    %0 = vector.load %arg2[%c0, %c0_0, %c0_1, %c0_2] : memref<1x1x8x514xbf16, #tpu.memory_space<vmem>>, vector<1x1x8x514xbf16>
    %1 = vector.shape_cast %0 : vector<1x1x8x514xbf16> to vector<8x514xbf16>
    %2 = arith.extf %1 : vector<8x514xbf16> to vector<8x514xf32>
    %cst = arith.constant 0.000000e+00 : f32
    %3 = vector.broadcast %cst : f32 to vector<8x514xf32>
    %4 = arith.cmpf oge, %2, %3 : vector<8x514xf32>
    %cst_3 = arith.constant 0.00999999977 : f32
    %5 = vector.broadcast %cst_3 : f32 to vector<8x514xf32>
    %6 = arith.mulf %5, %2 : vector<8x514xf32>
    %7 = arith.select %4, %2, %6 : vector<8x514xi1>, vector<8x514xf32>
    %8 = vector.extract_strided_slice %7 {offsets = [0, 0], sizes = [8, 512], strides = [1, 1]} : vector<8x514xf32> to vector<8x512xf32>
    %9 = vector.extract_strided_slice %7 {offsets = [0, 1], sizes = [8, 512], strides = [1, 1]} : vector<8x514xf32> to vector<8x512xf32>
    %10 = vector.extract_strided_slice %7 {offsets = [0, 2], sizes = [8, 512], strides = [1, 1]} : vector<8x514xf32> to vector<8x512xf32>
    %11 = tpu.concatenate %8, %9, %10 in 0 : vector<8x512xf32>, vector<8x512xf32>, vector<8x512xf32> -> vector<24x512xf32>
    %c0_4 = arith.constant 0 : index
    %c0_5 = arith.constant 0 : index
    %12 = vector.load %arg3[%c0_4, %c0_5] : memref<8x24xbf16, #tpu.memory_space<vmem>>, vector<8x24xbf16>
    %13 = arith.truncf %11 : vector<24x512xf32> to vector<24x512xbf16>
    %cst_6 = arith.constant dense<0.000000e+00> : vector<8x512xf32>
    %14 = tpu.matmul %12, %13, %cst_6 {dimension_numbers = #tpu.dot_dimension_numbers<[1], [0], [0], [1], [0, 0, 1, 1], [], []>} : vector<8x24xbf16>, vector<24x512xbf16>, vector<8x512xf32> -> vector<8x512xf32>
    %c0_7 = arith.constant 0 : index
    %c0_8 = arith.constant 0 : index
    %15 = vector.load %arg4[%c0_7, %c0_8] : memref<8x1xf32, #tpu.memory_space<vmem>>, vector<8x1xf32>
    %16 = vector.broadcast %15 : vector<8x1xf32> to vector<8x512xf32>
    %17 = arith.addf %14, %16 : vector<8x512xf32>
    %c0_9 = arith.constant 0 : index
    %c0_10 = arith.constant 0 : index
    %c0_11 = arith.constant 0 : index
    %18 = vector.load %arg5[%c0_9, %c0_10, %c0_11] : memref<1x8x512xbf16, #tpu.memory_space<vmem>>, vector<1x8x512xbf16>
    %19 = vector.shape_cast %18 : vector<1x8x512xbf16> to vector<8x512xbf16>
    %20 = arith.extf %19 : vector<8x512xbf16> to vector<8x512xf32>
    %21 = arith.addf %17, %20 : vector<8x512xf32>
    %22 = arith.truncf %21 : vector<8x512xf32> to vector<8x512xbf16>
    %c0_12 = arith.constant 0 : index
    %c0_13 = arith.constant 0 : index
    %c0_14 = arith.constant 0 : index
    %23 = vector.load %arg6[%c0_12, %c0_13, %c0_14] : memref<1x8x512xbf16, #tpu.memory_space<vmem>>, vector<1x8x512xbf16>
    %24 = vector.shape_cast %23 : vector<1x8x512xbf16> to vector<8x512xbf16>
    %25 = vector.shape_cast %22 : vector<8x512xbf16> to vector<1x8x512xbf16>
    tpu.vector_store %arg6[%c0_12, %c0_13, %c0_14], %25 {strides = array<i32>} : memref<1x8x512xbf16, #tpu.memory_space<vmem>>, vector<1x8x512xbf16>,
    return
  }
  func.func @transform_0(%arg0: i32, %arg1: i32) -> (i32, i32, i32, i32) {
    %c0_i32 = arith.constant 0 : i32
    %c0_i32_0 = arith.constant 0 : i32
    %c0_i32_1 = arith.constant 0 : i32
    return %arg0, %arg1, %c0_i32, %c0_i32_0 : i32, i32, i32, i32
  }
  func.func @transform_1(%arg0: i32, %arg1: i32) -> (i32, i32) {
    %c0_i32 = arith.constant 0 : i32
    %c0_i32_0 = arith.constant 0 : i32
    %c0_i32_1 = arith.constant 0 : i32
    return %c0_i32, %c0_i32_0 : i32, i32
  }
  func.func @transform_2(%arg0: i32, %arg1: i32) -> (i32, i32) {
    %c0_i32 = arith.constant 0 : i32
    %c0_i32_0 = arith.constant 0 : i32
    %c0_i32_1 = arith.constant 0 : i32
    return %c0_i32, %c0_i32_0 : i32, i32
  }
  func.func @transform_3(%arg0: i32, %arg1: i32) -> (i32, i32, i32) {
    %c0_i32 = arith.constant 0 : i32
    %c0_i32_0 = arith.constant 0 : i32
    return %arg0, %c0_i32, %arg1 : i32, i32, i32
  }
  func.func @transform_4(%arg0: i32, %arg1: i32) -> (i32, i32, i32) {
    %c0_i32 = arith.constant 0 : i32
    %c0_i32_0 = arith.constant 0 : i32
    return %arg0, %c0_i32, %arg1 : i32, i32, i32
  }
}

module attributes {stable_mosaic.version = 11 : i64} {
  func.func @_conv1d_kernel(%arg0: i32, %arg1: i32, %arg2: memref<1x1x8x518xbf16, #tpu.memory_space<vmem>>, %arg3: memref<8x24xbf16, #tpu.memory_space<vmem>>, %arg4: memref<8x1xf32, #tpu.memory_space<vmem>>, %arg5: memref<1x8x512xbf16, #tpu.memory_space<vmem>>) attributes {dimension_semantics = [#tpu.dimension_semantics<parallel>, #tpu.dimension_semantics<parallel>], iteration_bounds = array<i64: 2, 2>, scalar_prefetch = 0 : i64, scratch_operands = 0 : i64, tpu.core_type = #tpu.core_type<tc>, window_params = [{transform_indices = @transform_0, window_bounds = array<i64: 1, 1, 8, 518>}, {pipeline_mode = #tpu.pipeline_mode<synchronous>, transform_indices = @transform_1, window_bounds = array<i64: 8, 24>}, {pipeline_mode = #tpu.pipeline_mode<synchronous>, transform_indices = @transform_2, window_bounds = array<i64: 8, 1>}, {transform_indices = @transform_3, window_bounds = array<i64: 1, 8, 512>}]} {
    %c0 = arith.constant 0 : index
    %c0_0 = arith.constant 0 : index
    %c0_1 = arith.constant 0 : index
    %c0_2 = arith.constant 0 : index
    %0 = vector.load %arg2[%c0, %c0_0, %c0_1, %c0_2] : memref<1x1x8x518xbf16, #tpu.memory_space<vmem>>, vector<1x1x8x518xbf16>
    %1 = vector.shape_cast %0 : vector<1x1x8x518xbf16> to vector<8x518xbf16>
    %2 = arith.extf %1 : vector<8x518xbf16> to vector<8x518xf32>
    %cst = arith.constant 0.000000e+00 : f32
    %3 = vector.broadcast %cst : f32 to vector<8x518xf32>
    %4 = arith.cmpf oge, %2, %3 : vector<8x518xf32>
    %cst_3 = arith.constant 0.00999999977 : f32
    %5 = vector.broadcast %cst_3 : f32 to vector<8x518xf32>
    %6 = arith.mulf %5, %2 : vector<8x518xf32>
    %7 = arith.select %4, %2, %6 : vector<8x518xi1>, vector<8x518xf32>
    %8 = vector.extract_strided_slice %7 {offsets = [0, 0], sizes = [8, 512], strides = [1, 1]} : vector<8x518xf32> to vector<8x512xf32>
    %9 = vector.extract_strided_slice %7 {offsets = [0, 3], sizes = [8, 512], strides = [1, 1]} : vector<8x518xf32> to vector<8x512xf32>
    %10 = vector.extract_strided_slice %7 {offsets = [0, 6], sizes = [8, 512], strides = [1, 1]} : vector<8x518xf32> to vector<8x512xf32>
    %11 = tpu.concatenate %8, %9, %10 in 0 : vector<8x512xf32>, vector<8x512xf32>, vector<8x512xf32> -> vector<24x512xf32>
    %c0_4 = arith.constant 0 : index
    %c0_5 = arith.constant 0 : index
    %12 = vector.load %arg3[%c0_4, %c0_5] : memref<8x24xbf16, #tpu.memory_space<vmem>>, vector<8x24xbf16>
    %13 = arith.truncf %11 : vector<24x512xf32> to vector<24x512xbf16>
    %cst_6 = arith.constant dense<0.000000e+00> : vector<8x512xf32>
    %14 = tpu.matmul %12, %13, %cst_6 {dimension_numbers = #tpu.dot_dimension_numbers<[1], [0], [0], [1], [0, 0, 1, 1], [], []>} : vector<8x24xbf16>, vector<24x512xbf16>, vector<8x512xf32> -> vector<8x512xf32>
    %c0_7 = arith.constant 0 : index
    %c0_8 = arith.constant 0 : index
    %15 = vector.load %arg4[%c0_7, %c0_8] : memref<8x1xf32, #tpu.memory_space<vmem>>, vector<8x1xf32>
    %16 = vector.broadcast %15 : vector<8x1xf32> to vector<8x512xf32>
    %17 = arith.addf %14, %16 : vector<8x512xf32>
    %18 = arith.truncf %17 : vector<8x512xf32> to vector<8x512xbf16>
    %c0_9 = arith.constant 0 : index
    %c0_10 = arith.constant 0 : index
    %c0_11 = arith.constant 0 : index
    %19 = vector.load %arg5[%c0_9, %c0_10, %c0_11] : memref<1x8x512xbf16, #tpu.memory_space<vmem>>, vector<1x8x512xbf16>
    %20 = vector.shape_cast %19 : vector<1x8x512xbf16> to vector<8x512xbf16>
    %21 = vector.shape_cast %18 : vector<8x512xbf16> to vector<1x8x512xbf16>
    tpu.vector_store %arg5[%c0_9, %c0_10, %c0_11], %21 {strides = array<i32>} : memref<1x8x512xbf16, #tpu.memory_space<vmem>>, vector<1x8x512xbf16>,
    return
  }
  func.func @transform_0(%arg0: i32, %arg1: i32) -> (i32, i32, i32, i32) {
    %c0_i32 = arith.constant 0 : i32
    %c0_i32_0 = arith.constant 0 : i32
    %c0_i32_1 = arith.constant 0 : i32
    return %arg0, %arg1, %c0_i32, %c0_i32_0 : i32, i32, i32, i32
  }
  func.func @transform_1(%arg0: i32, %arg1: i32) -> (i32, i32) {
    %c0_i32 = arith.constant 0 : i32
    %c0_i32_0 = arith.constant 0 : i32
    %c0_i32_1 = arith.constant 0 : i32
    return %c0_i32, %c0_i32_0 : i32, i32
  }
  func.func @transform_2(%arg0: i32, %arg1: i32) -> (i32, i32) {
    %c0_i32 = arith.constant 0 : i32
    %c0_i32_0 = arith.constant 0 : i32
    %c0_i32_1 = arith.constant 0 : i32
    return %c0_i32, %c0_i32_0 : i32, i32
  }
  func.func @transform_3(%arg0: i32, %arg1: i32) -> (i32, i32, i32) {
    %c0_i32 = arith.constant 0 : i32
    %c0_i32_0 = arith.constant 0 : i32
    return %arg0, %c0_i32, %arg1 : i32, i32, i32
  }
}

module attributes {stable_mosaic.version = 11 : i64} {
  func.func @_conv1d_kernel(%arg0: i32, %arg1: i32, %arg2: memref<1x1x8x518xbf16, #tpu.memory_space<vmem>>, %arg3: memref<56x1xf32, #tpu.memory_space<vmem>>, %arg4: memref<1x1xf32, #tpu.memory_space<vmem>>, %arg5: memref<1x1x512xf32, #tpu.memory_space<vmem>>) attributes {dimension_semantics = [#tpu.dimension_semantics<parallel>, #tpu.dimension_semantics<parallel>], iteration_bounds = array<i64: 2, 2>, scalar_prefetch = 0 : i64, scratch_operands = 0 : i64, tpu.core_type = #tpu.core_type<tc>, window_params = [{transform_indices = @transform_0, window_bounds = array<i64: 1, 1, 8, 518>}, {pipeline_mode = #tpu.pipeline_mode<synchronous>, transform_indices = @transform_1, window_bounds = array<i64: 56, 1>}, {pipeline_mode = #tpu.pipeline_mode<synchronous>, transform_indices = @transform_2, window_bounds = array<i64: 1, 1>}, {transform_indices = @transform_3, window_bounds = array<i64: 1, 1, 512>}]} {
    %c0 = arith.constant 0 : index
    %c0_0 = arith.constant 0 : index
    %c0_1 = arith.constant 0 : index
    %c0_2 = arith.constant 0 : index
    %0 = vector.load %arg2[%c0, %c0_0, %c0_1, %c0_2] : memref<1x1x8x518xbf16, #tpu.memory_space<vmem>>, vector<1x1x8x518xbf16>
    %1 = vector.shape_cast %0 : vector<1x1x8x518xbf16> to vector<8x518xbf16>
    %2 = arith.extf %1 : vector<8x518xbf16> to vector<8x518xf32>
    %cst = arith.constant 0.000000e+00 : f32
    %3 = vector.broadcast %cst : f32 to vector<8x518xf32>
    %4 = arith.cmpf oge, %2, %3 : vector<8x518xf32>
    %cst_3 = arith.constant 0.00999999977 : f32
    %5 = vector.broadcast %cst_3 : f32 to vector<8x518xf32>
    %6 = arith.mulf %5, %2 : vector<8x518xf32>
    %7 = arith.select %4, %2, %6 : vector<8x518xi1>, vector<8x518xf32>
    %8 = vector.extract_strided_slice %7 {offsets = [0, 0], sizes = [8, 512], strides = [1, 1]} : vector<8x518xf32> to vector<8x512xf32>
    %9 = vector.extract_strided_slice %7 {offsets = [0, 1], sizes = [8, 512], strides = [1, 1]} : vector<8x518xf32> to vector<8x512xf32>
    %10 = vector.extract_strided_slice %7 {offsets = [0, 2], sizes = [8, 512], strides = [1, 1]} : vector<8x518xf32> to vector<8x512xf32>
    %11 = vector.extract_strided_slice %7 {offsets = [0, 3], sizes = [8, 512], strides = [1, 1]} : vector<8x518xf32> to vector<8x512xf32>
    %12 = vector.extract_strided_slice %7 {offsets = [0, 4], sizes = [8, 512], strides = [1, 1]} : vector<8x518xf32> to vector<8x512xf32>
    %13 = vector.extract_strided_slice %7 {offsets = [0, 5], sizes = [8, 512], strides = [1, 1]} : vector<8x518xf32> to vector<8x512xf32>
    %14 = vector.extract_strided_slice %7 {offsets = [0, 6], sizes = [8, 512], strides = [1, 1]} : vector<8x518xf32> to vector<8x512xf32>
    %15 = tpu.concatenate %8, %9, %10, %11, %12, %13, %14 in 0 : vector<8x512xf32>, vector<8x512xf32>, vector<8x512xf32>, vector<8x512xf32>, vector<8x512xf32>, vector<8x512xf32>, vector<8x512xf32> -> vector<56x512xf32>
    %c0_4 = arith.constant 0 : index
    %c0_5 = arith.constant 0 : index
    %16 = vector.load %arg3[%c0_4, %c0_5] : memref<56x1xf32, #tpu.memory_space<vmem>>, vector<56x1xf32>
    %17 = vector.broadcast %16 : vector<56x1xf32> to vector<56x512xf32>
    %18 = arith.mulf %15, %17 : vector<56x512xf32>
    %cst_6 = arith.constant dense<0.000000e+00> : vector<512xf32>
    %19 = vector.multi_reduction <add>, %18, %cst_6 [0] : vector<56x512xf32> to vector<512xf32>
    %20 = vector.shape_cast %19 : vector<512xf32> to vector<1x512xf32>
    %c0_7 = arith.constant 0 : index
    %c0_8 = arith.constant 0 : index
    %21 = vector.load %arg4[%c0_7, %c0_8] : memref<1x1xf32, #tpu.memory_space<vmem>>, vector<1x1xf32>
    %22 = vector.broadcast %21 : vector<1x1xf32> to vector<1x512xf32>
    %23 = arith.addf %20, %22 : vector<1x512xf32>
    %24 = math.tanh %23 : vector<1x512xf32>
    %c0_9 = arith.constant 0 : index
    %c0_10 = arith.constant 0 : index
    %c0_11 = arith.constant 0 : index
    %25 = vector.load %arg5[%c0_9, %c0_10, %c0_11] : memref<1x1x512xf32, #tpu.memory_space<vmem>>, vector<1x1x512xf32>
    %26 = vector.shape_cast %25 : vector<1x1x512xf32> to vector<1x512xf32>
    %27 = vector.shape_cast %24 : vector<1x512xf32> to vector<1x1x512xf32>
    tpu.vector_store %arg5[%c0_9, %c0_10, %c0_11], %27 {strides = array<i32>} : memref<1x1x512xf32, #tpu.memory_space<vmem>>, vector<1x1x512xf32>,
    return
  }
  func.func @transform_0(%arg0: i32, %arg1: i32) -> (i32, i32, i32, i32) {
    %c0_i32 = arith.constant 0 : i32
    %c0_i32_0 = arith.constant 0 : i32
    %c0_i32_1 = arith.constant 0 : i32
    return %arg0, %arg1, %c0_i32, %c0_i32_0 : i32, i32, i32, i32
  }
  func.func @transform_1(%arg0: i32, %arg1: i32) -> (i32, i32) {
    %c0_i32 = arith.constant 0 : i32
    %c0_i32_0 = arith.constant 0 : i32
    %c0_i32_1 = arith.constant 0 : i32
    return %c0_i32, %c0_i32_0 : i32, i32
  }
  func.func @transform_2(%arg0: i32, %arg1: i32) -> (i32, i32) {
    %c0_i32 = arith.constant 0 : i32
    %c0_i32_0 = arith.constant 0 : i32
    %c0_i32_1 = arith.constant 0 : i32
    return %c0_i32, %c0_i32_0 : i32, i32
  }
  func.func @transform_3(%arg0: i32, %arg1: i32) -> (i32, i32, i32) {
    %c0_i32 = arith.constant 0 : i32
    %c0_i32_0 = arith.constant 0 : i32
    return %arg0, %c0_i32, %arg1 : i32, i32, i32
  }
}

</mosaic_0001>

<llo_original>
// kernel: _lambda_.21
$region0: #{_lambda_.21}
  #allocation0 [shape = 'u32[]', space=smem, size = 0x4, offset = 0x4, fixed_abs, tag = 'smem constant byte address 0x4 - core index']
  #allocation1 [shape = 'u32[144,128]{1,0:T(1,128)}', space=vmem, size = 0x12000, scoped, tag = 'internal scratch']
  %s0 = inlined_call_operand.vmem [shape: bf16[2,1,32,258], index: 0, kind: input, shape index: {}]
  %s1 = inlined_call_operand.vmem [shape: bf16[32,96], index: 1, kind: input, shape index: {}]
  %s2 = inlined_call_operand.vmem [shape: f32[32,1], index: 2, kind: input, shape index: {}]
  %s3 = inlined_call_operand.vmem [shape: bf16[2,32,256], index: 3, kind: output, shape index: {}]
  %s4 = sld [smem:[#allocation0]]
  $region45: #{_lambda_.21} parent=0
    _
  %s6 = ssub.s32 1, %s4
  %s7 = scalar_select 0, %s6, %s4
  loop: start=0, step=1, limit=4
  $region2: #{_lambda_.21} parent=0 // loop_pre_header
    _
  $region3: #{_lambda_.21} parent=0 // loop_header
    %s9 = sphi 0, %s13
    %p10 = scmp.ge.s32.totalorder %s9, 4
    %s16 = sphi 0, %s28
    %s17 = sphi 0, %s24
    %s18 = sphi 0, %s16
    %s19 = sphi 0, %s17
    %s20 = sphi 0, %s18
    %s21 = sphi 0, %s19
    %s33 = sphi 0, %s35
    %s36 = sphi 0, %s33
    %s37 = sphi 0, %s36
    %s53 = sphi 0, %s37
    %s57 = sphi 0, %s57
    %s59 = sphi 0, %s57
    %s60 = sphi 0, %s59
    %s74 = sphi 0, %s60
    %s78 = sphi 0, %s78
    %s80 = sphi 0, %s78
    %s81 = sphi 0, %s80
    %s95 = sphi 0, %s81
    %s103 = sphi 0, %s105
    %s106 = sphi 0, %s103
    %s107 = sphi 0, %s106
    %s123 = sphi 0, %s107
  $region4: #{_lambda_.21} parent=0 // loop_header_branch
    %12 = sbr.rel (%p10) target = $region8
  $region5: #{_lambda_.21} parent=0 // loop_body
    %s14 = ssub.s32 %s9, 1
    %s15 = ssub.s32 %s9, 2
    %s22 = sadd.s32 1, %s17
    %p23 = scmp.ge.s32.totalorder %s22, 1
    %s24 = scalar_select %p23, 0, %s22
    %s25 = sadd.s32 1, %s16
    %s26 = scalar_select %p23, %s25, %s16
    %p27 = scmp.ge.s32.totalorder %s26, 2
    %s28 = scalar_select %p27, 0, %s26
    %s29 = ssub.s32 %s16, %s28
    %s30 = ssub.s32 %s17, %s24
    %s31 = sor.u32 %s29, %s30
    %p32 = scmp.eq.s32.totalorder %s31, 0
    %s34 = sadd.s32 %s33, 1
    %s35 = scalar_select %p32, %s33, %s34
    %p38 = pneg %p32
    %p39 = scmp.eq.s32.totalorder %s9, 1
    %p40 = por %p38, %p39
    %p41 = scmp.ne.s32.totalorder %s33, %s36
    %p42 = scmp.eq.s32.totalorder %s9, 0
    %p43 = por %p41, %p42
    %p44 = scmp.ne.s32.totalorder %s33, %s36
    %p45 = scmp.eq.s32.totalorder %s14, 1
    %p46 = por %p44, %p45
    %p47 = scmp.ne.s32.totalorder %s36, %s37
    %p48 = scmp.eq.s32.totalorder %s14, 0
    %p49 = por %p47, %p48
    %p50 = scmp.ne.s32.totalorder %s36, %s37
    %p51 = scmp.eq.s32.totalorder %s15, 1
    %p52 = por %p50, %p51
    %p54 = scmp.ne.s32.totalorder %s37, %s53
    %p55 = scmp.eq.s32.totalorder %s15, 0
    %p56 = por %p54, %p55
    %s58 = sadd.s32 %s57, 1
    %p61 = scmp.eq.s32.totalorder %s9, 1
    %p62 = scmp.ne.s32.totalorder %s57, %s59
    %p63 = scmp.eq.s32.totalorder %s9, 0
    %p64 = por %p62, %p63
    %p65 = scmp.ne.s32.totalorder %s57, %s59
    %p66 = scmp.eq.s32.totalorder %s14, 1
    %p67 = por %p65, %p66
    %p68 = scmp.ne.s32.totalorder %s59, %s60
    %p69 = scmp.eq.s32.totalorder %s14, 0
    %p70 = por %p68, %p69
    %p71 = scmp.ne.s32.totalorder %s59, %s60
    %p72 = scmp.eq.s32.totalorder %s15, 1
    %p73 = por %p71, %p72
    %p75 = scmp.ne.s32.totalorder %s60, %s74
    %p76 = scmp.eq.s32.totalorder %s15, 0
    %p77 = por %p75, %p76
    %s79 = sadd.s32 %s78, 1
    %p82 = scmp.eq.s32.totalorder %s9, 1
    %p83 = scmp.ne.s32.totalorder %s78, %s80
    %p84 = scmp.eq.s32.totalorder %s9, 0
    %p85 = por %p83, %p84
    %p86 = scmp.ne.s32.totalorder %s78, %s80
    %p87 = scmp.eq.s32.totalorder %s14, 1
    %p88 = por %p86, %p87
    %p89 = scmp.ne.s32.totalorder %s80, %s81
    %p90 = scmp.eq.s32.totalorder %s14, 0
    %p91 = por %p89, %p90
    %p92 = scmp.ne.s32.totalorder %s80, %s81
    %p93 = scmp.eq.s32.totalorder %s15, 1
    %p94 = por %p92, %p93
    %p96 = scmp.ne.s32.totalorder %s81, %s95
    %p97 = scmp.eq.s32.totalorder %s15, 0
    %p98 = por %p96, %p97
    %s99 = ssub.s32 %s16, %s28
    %s100 = ssub.s32 %s17, %s24
    %s101 = sor.u32 %s99, %s100
    %p102 = scmp.eq.s32.totalorder %s101, 0
    %s104 = sadd.s32 %s103, 1
    %s105 = scalar_select %p102, %s103, %s104
    %p108 = pneg %p102
    %p109 = scmp.eq.s32.totalorder %s9, 1
    %p110 = por %p108, %p109
    %p111 = scmp.ne.s32.totalorder %s103, %s106
    %p112 = scmp.eq.s32.totalorder %s9, 0
    %p113 = por %p111, %p112
    %p114 = scmp.ne.s32.totalorder %s103, %s106
    %p115 = scmp.eq.s32.totalorder %s14, 1
    %p116 = por %p114, %p115
    %p117 = scmp.ne.s32.totalorder %s106, %s107
    %p118 = scmp.eq.s32.totalorder %s14, 0
    %p119 = por %p117, %p118
    %p120 = scmp.ne.s32.totalorder %s106, %s107
    %p121 = scmp.eq.s32.totalorder %s15, 1
    %p122 = por %p120, %p121
    %p124 = scmp.ne.s32.totalorder %s107, %s123
    %p125 = scmp.eq.s32.totalorder %s15, 0
    %p126 = por %p124, %p125
    %p127 = scmp.le.s32.totalorder 1, %s9
    %p128 = scmp.lt.s32.totalorder %s9, 3
    %p129 = pnand %p127, %p128
    %p130 = pneg %p129
    // Predicated region
    $region9: #{_lambda_.21} parent=5 // pred_check
      _
    $region10: #{_lambda_.21} parent=5 // pred_check_branch
      %132 = sbr.rel (%p129) target = $region12
    $region11: #{_lambda_.21} parent=5 // pred_region
      %s133 = ssub.s32 %s9, 1
      // Predicated region
      $region13: #{_lambda_.21} parent=11 // pred_check
        %p134 = pneg %p70
      $region14: #{_lambda_.21} parent=11 // pred_check_branch
        %136 = sbr.rel (%p134) target = $region16
      $region15: #{_lambda_.21} parent=11 // pred_region
        _
      $region16: #{_lambda_.21} parent=11 // pred_fallthru
        _
      // Predicated region
      $region17: #{_lambda_.21} parent=11 // pred_check
        %p137 = pneg %p91
      $region18: #{_lambda_.21} parent=11 // pred_check_branch
        %139 = sbr.rel (%p137) target = $region20
      $region19: #{_lambda_.21} parent=11 // pred_region
        _
      $region20: #{_lambda_.21} parent=11 // pred_fallthru
        _
    $region12: #{_lambda_.21} parent=5 // pred_fallthru
      _
    %p140 = scmp.lt.s32.totalorder %s9, 2
    // Predicated region
    $region21: #{_lambda_.21} parent=5 // pred_check
      %p141 = pneg %p140
    $region22: #{_lambda_.21} parent=5 // pred_check_branch
      %143 = sbr.rel (%p141) target = $region24
    $region23: #{_lambda_.21} parent=5 // pred_region
      // Predicated region
      $region25: #{_lambda_.21} parent=23 // pred_check
        %p144 = pneg %p43
      $region26: #{_lambda_.21} parent=23 // pred_check_branch
        %146 = sbr.rel (%p144) target = $region28
      $region27: #{_lambda_.21} parent=23 // pred_region
        %p147 = scmp.lt.s32.totalorder %s16, 1
        %s148 = scalar_select %p147, %s16, 1
        %p149 = scmp.lt.s32.totalorder %s17, 0
        %s150 = scalar_select %p149, %s17, 0
        %s151 = smul.addr %s150, 12
        %s152 = smul.addr %s148, 12
        %s153 = sadd.s32 %s151, %s152
        %s154 = smul.addr %s153, 4
        %s155 = scalar_lea.vmem %s0, %s154
      $region28: #{_lambda_.21} parent=23 // pred_fallthru
        _
    $region24: #{_lambda_.21} parent=5 // pred_fallthru
      _
    %p156 = scmp.le.s32.totalorder 1, %s9
    %p157 = scmp.lt.s32.totalorder %s9, 3
    %p158 = pnand %p156, %p157
    %p159 = pneg %p158
    // Predicated region
    $region29: #{_lambda_.21} parent=5 // pred_check
      _
    $region30: #{_lambda_.21} parent=5 // pred_check_branch
      %161 = sbr.rel (%p158) target = $region32
    $region31: #{_lambda_.21} parent=5 // pred_region
      %s162 = ssub.s32 %s9, 1
      %p163 = scmp.lt.s32.totalorder %s18, 1
      %s164 = scalar_select %p163, %s18, 1
      %p165 = scmp.lt.s32.totalorder %s19, 0
      %s166 = scalar_select %p165, %s19, 0
      %s167 = smul.addr %s166, 12
      %s168 = smul.addr %s164, 12
      %s169 = sadd.s32 %s167, %s168
      %s170 = smul.addr %s169, 4
      %s171 = scalar_lea.vmem %s0, %s170
      %p172 = pneg %p49
      %p173 = pneg %p46
      %p174 = pneg %p70
      %p175 = pneg %p67
      %p176 = pneg %p91
      %p177 = pneg %p88
      %p178 = pneg %p119
      %p179 = pneg %p116
      %s180 = smul.u32 2, %s19
      %p181 = scmp.lt.s32.totalorder %s18, 1
      %s182 = scalar_select %p181, %s18, 1
      %p183 = scmp.lt.s32.totalorder %s180, 1
      %s184 = scalar_select %p183, %s180, 1
      %s185 = smul.addr %s182, 8
      %s186 = sadd.s32 %s184, %s185
      %s187 = smul.addr %s186, 4
      %s188 = scalar_lea.vmem %s3, %s187
      %p189 = scmp.lt.s32.totalorder %s18, 1
      %s190 = scalar_select %p189, %s18, 1
      %p191 = scmp.lt.s32.totalorder %s19, 0
      %s192 = scalar_select %p191, %s19, 0
      %s193 = smul.addr %s192, 12
      %s194 = smul.addr %s190, 12
      %s195 = sadd.s32 %s193, %s194
      %s196 = smul.addr %s195, 4
      %s197 = scalar_lea.vmem %s0, %s196
      %s198 = smul.u32 2, %s19
      %p199 = scmp.lt.s32.totalorder %s18, 1
      %s200 = scalar_select %p199, %s18, 1
      %p201 = scmp.lt.s32.totalorder %s198, 1
      %s202 = scalar_select %p201, %s198, 1
      %s203 = smul.addr %s200, 8
      %s204 = sadd.s32 %s202, %s203
      %s205 = smul.addr %s204, 4
      %s206 = scalar_lea.vmem %s3, %s205
      %s207 = smul.u32 2, %s19
      %v209 = vld [vmem:[%s197] sm:$0xff]
      %v210 = vld [vmem:[%s197 + $0x8] sm:$0xf]
      %v211 = vld [vmem:[%s197 + $0xc] sm:$0xff]
      %v212 = vld [vmem:[%s197 + $0x14] sm:$0xf]
      %v213 = vld [vmem:[%s197 + $0x18] sm:$0xff]
      %v214 = vld [vmem:[%s197 + $0x20] sm:$0xf]
      %v215 = vld [vmem:[%s197 + $0x24] sm:$0xff]
      %v216 = vld [vmem:[%s197 + $0x2c] sm:$0xf]
      %v217 = vunpack.c.l.bf16 %v209
      %v218 = vunpack.c.h.bf16 %v209
      %v219 = vunpack.c.l.bf16 %v210
      %v220 = vunpack.c.l.bf16 %v211
      %v221 = vunpack.c.h.bf16 %v211
      %v222 = vunpack.c.l.bf16 %v212
      %v223 = vunpack.c.l.bf16 %v213
      %v224 = vunpack.c.h.bf16 %v213
      %v225 = vunpack.c.l.bf16 %v214
      %v226 = vunpack.c.l.bf16 %v215
      %v227 = vunpack.c.h.bf16 %v215
      %v228 = vunpack.c.l.bf16 %v216
      %vm229 = vcmp.ge.f32.partialorder %v217, 0.0
      %vm230 = vcmp.ge.f32.partialorder %v218, 0.0
      %vm231 = vcmp.ge.f32.partialorder %v219, 0.0
      %vm232 = vcmp.ge.f32.partialorder %v220, 0.0
      %vm233 = vcmp.ge.f32.partialorder %v221, 0.0
      %vm234 = vcmp.ge.f32.partialorder %v222, 0.0
      %vm235 = vcmp.ge.f32.partialorder %v223, 0.0
      %vm236 = vcmp.ge.f32.partialorder %v224, 0.0
      %vm237 = vcmp.ge.f32.partialorder %v225, 0.0
      %vm238 = vcmp.ge.f32.partialorder %v226, 0.0
      %vm239 = vcmp.ge.f32.partialorder %v227, 0.0
      %vm240 = vcmp.ge.f32.partialorder %v228, 0.0
      %v241 = vmul.f32 %v217, 0.01
      %v242 = vmul.f32 %v218, 0.01
      %v243 = vmul.f32 %v219, 0.01
      %v244 = vmul.f32 %v220, 0.01
      %v245 = vmul.f32 %v221, 0.01
      %v246 = vmul.f32 %v222, 0.01
      %v247 = vmul.f32 %v223, 0.01
      %v248 = vmul.f32 %v224, 0.01
      %v249 = vmul.f32 %v225, 0.01
      %v250 = vmul.f32 %v226, 0.01
      %v251 = vmul.f32 %v227, 0.01
      %v252 = vmul.f32 %v228, 0.01
      %v253 = vsel %vm229, %v217, %v241
      %v254 = vsel %vm230, %v218, %v242
      %v255 = vsel %vm231, %v219, %v243
      %v256 = vsel %vm232, %v220, %v244
      %v257 = vsel %vm233, %v221, %v245
      %v258 = vsel %vm234, %v222, %v246
      %v259 = vsel %vm235, %v223, %v247
      %v260 = vsel %vm236, %v224, %v248
      %v261 = vsel %vm237, %v225, %v249
      %v262 = vsel %vm238, %v226, %v250
      %v263 = vsel %vm239, %v227, %v251
      %v264 = vsel %vm240, %v228, %v252
      %277 = vrot.lane.b32.xlu0 %v253, 127
      %v278 = vpop.permute.xlu0 %277
      %279 = vrot.lane.b32.xlu0 %v254, 127
      %v280 = vpop.permute.xlu0 %279
      %281 = vrot.lane.b32.xlu0 %v255, 127
      %v282 = vpop.permute.xlu0 %281
      %283 = vrot.lane.b32.xlu0 %v256, 127
      %v284 = vpop.permute.xlu0 %283
      %285 = vrot.lane.b32.xlu0 %v257, 127
      %v286 = vpop.permute.xlu0 %285
      %287 = vrot.lane.b32.xlu0 %v258, 127
      %v288 = vpop.permute.xlu0 %287
      %289 = vrot.lane.b32.xlu0 %v259, 127
      %v290 = vpop.permute.xlu0 %289
      %291 = vrot.lane.b32.xlu0 %v260, 127
      %v292 = vpop.permute.xlu0 %291
      %293 = vrot.lane.b32.xlu0 %v261, 127
      %v294 = vpop.permute.xlu0 %293
      %295 = vrot.lane.b32.xlu0 %v262, 127
      %v296 = vpop.permute.xlu0 %295
      %297 = vrot.lane.b32.xlu0 %v263, 127
      %v298 = vpop.permute.xlu0 %297
      %299 = vrot.lane.b32.xlu0 %v264, 127
      %v300 = vpop.permute.xlu0 %299
      %vm301 = vcmask 1039360
      %v302 = vsel %vm301, %v278, %v280
      %v303 = vsel %vm301, %v280, %v282
      %v304 = vsel %vm301, %v284, %v286
      %v305 = vsel %vm301, %v286, %v288
      %v306 = vsel %vm301, %v290, %v292
      %v307 = vsel %vm301, %v292, %v294
      %v308 = vsel %vm301, %v296, %v298
      %v309 = vsel %vm301, %v298, %v300
      %318 = vrot.lane.b32.xlu0 %v253, 126
      %v319 = vpop.permute.xlu0 %318
      %320 = vrot.lane.b32.xlu0 %v254, 126
      %v321 = vpop.permute.xlu0 %320
      %322 = vrot.lane.b32.xlu0 %v255, 126
      %v323 = vpop.permute.xlu0 %322
      %324 = vrot.lane.b32.xlu0 %v256, 126
      %v325 = vpop.permute.xlu0 %324
      %326 = vrot.lane.b32.xlu0 %v257, 126
      %v327 = vpop.permute.xlu0 %326
      %328 = vrot.lane.b32.xlu0 %v258, 126
      %v329 = vpop.permute.xlu0 %328
      %330 = vrot.lane.b32.xlu0 %v259, 126
      %v331 = vpop.permute.xlu0 %330
      %332 = vrot.lane.b32.xlu0 %v260, 126
      %v333 = vpop.permute.xlu0 %332
      %334 = vrot.lane.b32.xlu0 %v261, 126
      %v335 = vpop.permute.xlu0 %334
      %336 = vrot.lane.b32.xlu0 %v262, 126
      %v337 = vpop.permute.xlu0 %336
      %338 = vrot.lane.b32.xlu0 %v263, 126
      %v339 = vpop.permute.xlu0 %338
      %340 = vrot.lane.b32.xlu0 %v264, 126
      %v341 = vpop.permute.xlu0 %340
      %vm342 = vcmask 1031168
      %v343 = vsel %vm342, %v319, %v321
      %v344 = vsel %vm342, %v321, %v323
      %v345 = vsel %vm342, %v325, %v327
      %v346 = vsel %vm342, %v327, %v329
      %v347 = vsel %vm342, %v331, %v333
      %v348 = vsel %vm342, %v333, %v335
      %v349 = vsel %vm342, %v337, %v339
      %v350 = vsel %vm342, %v339, %v341
      %v359 = vld [vmem:[%s1] sm:$0xf]
      %v360 = vld [vmem:[%s1 + $0x4] sm:$0xf]
      %v361 = vld [vmem:[%s1 + $0x8] sm:$0xf]
      %v362 = vld [vmem:[%s1 + $0xc] sm:$0xf]
      %v363 = vpack.c.bf16 %v256, %v253
      %v364 = vpack.c.bf16 %v257, %v254
      %v365 = vpack.c.bf16 %v262, %v259
      %v366 = vpack.c.bf16 %v263, %v260
      %v367 = vpack.c.bf16 %v304, %v302
      %v368 = vpack.c.bf16 %v305, %v303
      %v369 = vpack.c.bf16 %v308, %v306
      %v370 = vpack.c.bf16 %v309, %v307
      %v371 = vpack.c.bf16 %v345, %v343
      %v372 = vpack.c.bf16 %v346, %v344
      %v373 = vpack.c.bf16 %v349, %v347
      %v374 = vpack.c.bf16 %v350, %v348
      %v375 = vld [vmem:[%s2] sm:$0xff]
      %v376 = vld [vmem:[%s2 + $0x8] sm:$0xff]
      %v377 = vld [vmem:[%s2 + $0x10] sm:$0xff]
      %v378 = vld [vmem:[%s2 + $0x18] sm:$0xff]
      %380 = vset.pattern.permute.xlu0 0
      %381 = vperm.xlu0 %380, %v375
      %v382 = vpop.permute.xlu0 %381
      %385 = vset.pattern.permute.xlu0 0
      %386 = vperm.xlu0 %385, %v376
      %v387 = vpop.permute.xlu0 %386
      %390 = vset.pattern.permute.xlu0 0
      %391 = vperm.xlu0 %390, %v377
      %v392 = vpop.permute.xlu0 %391
      %395 = vset.pattern.permute.xlu0 0
      %396 = vperm.xlu0 %395, %v378
      %v397 = vpop.permute.xlu0 %396
      %v403 = vunpack.c.l.b16 %v359
      %v404 = vunpack.c.l.b16 %v360
      %v405 = vunpack.c.l.b16 %v361
      %v406 = vunpack.c.l.b16 %v362
      %v407 = vpack.c.b16 %v404, %v403
      %v408 = vpack.c.b16 %v406, %v405
      %vm409 = vcmask 785408
      %v411 = vsel %vm409, %v407, 0
      %v414 = vsel %vm409, %v408, 0
      %416 = vmatprep.subr.bf16.mxu0 0
      %417 = vmatpush1.bf16.msra.mxu0 0
      %418 = vmatprep.subr.bf16.mxu0 0
      %419 = vmatpush1.bf16.msra.mxu0 0
      %420 = vmatprep.subr.bf16.mxu0 %v374
      %421 = vmatpush1.bf16.msra.mxu0 %v373
      %422 = vmatprep.subr.bf16.mxu0 %v372
      %423 = vmatpush1.bf16.msra.mxu0 %v371
      %424 = vmatprep.subr.bf16.mxu0 %v370
      %425 = vmatpush1.bf16.msra.mxu0 %v369
      %426 = vmatprep.subr.bf16.mxu0 %v368
      %427 = vmatpush1.bf16.msra.mxu0 %v367
      %428 = vmatprep.subr.bf16.mxu0 %v366
      %429 = vmatpush1.bf16.msra.mxu0 %v365
      %430 = vmatprep.subr.bf16.mxu0 %v364
      %431 = vmatpush1.bf16.msra.mxu0 %v363
      %432 = vmatprep.subr.bf16.mxu0 0
      %433 = vmatpush2.bf16.msra.mxu0 0
      %434 = vmatprep.subr.bf16.mxu0 0
      %435 = vmatpush2.bf16.msra.mxu0 0
      %436 = vmatprep.subr.bf16.mxu0 0
      %437 = vmatpush2.bf16.msra.mxu0 0
      %438 = vmatprep.subr.bf16.mxu0 0
      %439 = vmatpush2.bf16.msra.mxu0 0
      %440 = vmatprep.subr.bf16.mxu0 0
      %441 = vmatpush2.bf16.msra.mxu0 0
      %442 = vmatprep.subr.bf16.mxu0 0
      %443 = vmatpush2.bf16.msra.mxu0 0
      %444 = vmatprep.subr.bf16.mxu0 0
      %445 = vmatpush2.bf16.msra.mxu0 0
      %446 = vmatprep.subr.bf16.mxu0 0
      %447 = vmatpush2.bf16.msra.mxu0 0
      %448 = vmatprep.mubr.bf16.mxu0 0
      %449 = vmatmul.mubr.bf16.gmra.mxu0 %v411
      %v450 = vpop.f32.mrf.mxu0
      %v451 = vadd.f32 %v382, %v450
      %v452 = vpop.f32.mrf.mxu0
      %v453 = vadd.f32 %v382, %v452
      %v454 = vpop.f32.mrf.mxu0
      %v455 = vadd.f32 %v387, %v454
      %v456 = vpop.f32.mrf.mxu0
      %v457 = vadd.f32 %v387, %v456
      %458 = vmatprep.mubr.bf16.mxu0 0
      %459 = vmatmul.mubr.bf16.gmra.mxu0 %v414
      %v460 = vpop.f32.mrf.mxu0
      %v461 = vadd.f32 %v392, %v460
      %v462 = vpop.f32.mrf.mxu0
      %v463 = vadd.f32 %v392, %v462
      %v464 = vpop.f32.mrf.mxu0
      %v465 = vadd.f32 %v397, %v464
      %v466 = vpop.f32.mrf.mxu0
      %v467 = vadd.f32 %v397, %v466
      %468 = vdwg.mxu0
      %v469 = vpack.c.bf16 %v455, %v451
      %v470 = vpack.c.bf16 %v457, %v453
      %v471 = vpack.c.bf16 %v465, %v461
      %v472 = vpack.c.bf16 %v467, %v463
      %v477 = vunpack.c.l.b16 %v469
      %v478 = vunpack.c.l.b16 %v470
      %v479 = vunpack.c.h.b16 %v469
      %v480 = vunpack.c.h.b16 %v470
      %v481 = vunpack.c.l.b16 %v471
      %v482 = vunpack.c.l.b16 %v472
      %v483 = vunpack.c.h.b16 %v471
      %v484 = vunpack.c.h.b16 %v472
      %v485 = vpack.c.b16 %v478, %v477
      %v486 = vpack.c.b16 %v480, %v479
      %v487 = vpack.c.b16 %v482, %v481
      %v488 = vpack.c.b16 %v484, %v483
      %493 = vst [vmem:[%s206] sm:$0xff] %v485
      %494 = vst [vmem:[%s206 + $0x8] sm:$0xff] %v486
      %495 = vst [vmem:[%s206 + $0x10] sm:$0xff] %v487
      %496 = vst [vmem:[%s206 + $0x18] sm:$0xff] %v488
      %s497 = smul.u32 2, %s19
      %p498 = scmp.lt.s32.totalorder %s18, 1
      %s499 = scalar_select %p498, %s18, 1
      %p500 = scmp.lt.s32.totalorder %s497, 1
      %s501 = scalar_select %p500, %s497, 1
      %s502 = smul.addr %s499, 8
      %s503 = sadd.s32 %s501, %s502
      %s504 = smul.addr %s503, 4
      %s505 = scalar_lea.vmem %s3, %s504
      // Predicated region
      $region33: #{_lambda_.21} parent=31 // pred_check
        %p506 = pneg %p116
      $region34: #{_lambda_.21} parent=31 // pred_check_branch
        %508 = sbr.rel (%p506) target = $region36
      $region35: #{_lambda_.21} parent=31 // pred_region
        %s509 = smul.u32 2, %s19
      $region36: #{_lambda_.21} parent=31 // pred_fallthru
        _
    $region32: #{_lambda_.21} parent=5 // pred_fallthru
      _
    %p510 = scmp.le.s32.totalorder 2, %s9
    // Predicated region
    $region37: #{_lambda_.21} parent=5 // pred_check
      %p511 = pneg %p510
    $region38: #{_lambda_.21} parent=5 // pred_check_branch
      %513 = sbr.rel (%p511) target = $region40
    $region39: #{_lambda_.21} parent=5 // pred_region
      %s514 = ssub.s32 %s9, 2
      // Predicated region
      $region41: #{_lambda_.21} parent=39 // pred_check
        %p515 = pneg %p122
      $region42: #{_lambda_.21} parent=39 // pred_check_branch
        %517 = sbr.rel (%p515) target = $region44
      $region43: #{_lambda_.21} parent=39 // pred_region
        %s518 = smul.u32 2, %s21
        %p519 = scmp.lt.s32.totalorder %s20, 1
        %s520 = scalar_select %p519, %s20, 1
        %p521 = scmp.lt.s32.totalorder %s518, 1
        %s522 = scalar_select %p521, %s518, 1
        %s523 = smul.addr %s520, 8
        %s524 = sadd.s32 %s522, %s523
        %s525 = smul.addr %s524, 4
        %s526 = scalar_lea.vmem %s3, %s525
      $region44: #{_lambda_.21} parent=39 // pred_fallthru
        _
    $region40: #{_lambda_.21} parent=5 // pred_fallthru
      _
  $region6: #{_lambda_.21} parent=0 // loop_footer
    %s13 = sadd.s32 1, %s9
  $region7: #{_lambda_.21} parent=0 // loop_footer_branch
    %8 = sbr.rel target = $region3
  $region8: #{_lambda_.21} parent=0 // loop_exit
    _

// kernel: _lambda_.20
$region0: #{_lambda_.20}
  #allocation0 [shape = 'u32[]', space=smem, size = 0x4, offset = 0x4, fixed_abs, tag = 'smem constant byte address 0x4 - core index']
  #allocation1 [shape = 'u32[144,128]{1,0:T(1,128)}', space=vmem, size = 0x12000, scoped, tag = 'internal scratch']
  %s0 = inlined_call_operand.vmem [shape: f32[2,1,80,262], index: 0, kind: input, shape index: {}]
  %s1 = inlined_call_operand.vmem [shape: bf16[32,560], index: 1, kind: input, shape index: {}]
  %s2 = inlined_call_operand.vmem [shape: f32[32,1], index: 2, kind: input, shape index: {}]
  %s3 = inlined_call_operand.vmem [shape: bf16[2,32,256], index: 3, kind: output, shape index: {}]
  %s4 = sld [smem:[#allocation0]]
  $region45: #{_lambda_.20} parent=0
    _
  %s6 = ssub.s32 1, %s4
  %s7 = scalar_select 0, %s6, %s4
  loop: start=0, step=1, limit=4
  $region2: #{_lambda_.20} parent=0 // loop_pre_header
    _
  $region3: #{_lambda_.20} parent=0 // loop_header
    %s9 = sphi 0, %s13
    %p10 = scmp.ge.s32.totalorder %s9, 4
    %s16 = sphi 0, %s28
    %s17 = sphi 0, %s24
    %s18 = sphi 0, %s16
    %s19 = sphi 0, %s17
    %s20 = sphi 0, %s18
    %s21 = sphi 0, %s19
    %s33 = sphi 0, %s35
    %s36 = sphi 0, %s33
    %s37 = sphi 0, %s36
    %s53 = sphi 0, %s37
    %s57 = sphi 0, %s57
    %s59 = sphi 0, %s57
    %s60 = sphi 0, %s59
    %s74 = sphi 0, %s60
    %s78 = sphi 0, %s78
    %s80 = sphi 0, %s78
    %s81 = sphi 0, %s80
    %s95 = sphi 0, %s81
    %s103 = sphi 0, %s105
    %s106 = sphi 0, %s103
    %s107 = sphi 0, %s106
    %s123 = sphi 0, %s107
  $region4: #{_lambda_.20} parent=0 // loop_header_branch
    %12 = sbr.rel (%p10) target = $region8
  $region5: #{_lambda_.20} parent=0 // loop_body
    %s14 = ssub.s32 %s9, 1
    %s15 = ssub.s32 %s9, 2
    %s22 = sadd.s32 1, %s17
    %p23 = scmp.ge.s32.totalorder %s22, 1
    %s24 = scalar_select %p23, 0, %s22
    %s25 = sadd.s32 1, %s16
    %s26 = scalar_select %p23, %s25, %s16
    %p27 = scmp.ge.s32.totalorder %s26, 2
    %s28 = scalar_select %p27, 0, %s26
    %s29 = ssub.s32 %s16, %s28
    %s30 = ssub.s32 %s17, %s24
    %s31 = sor.u32 %s29, %s30
    %p32 = scmp.eq.s32.totalorder %s31, 0
    %s34 = sadd.s32 %s33, 1
    %s35 = scalar_select %p32, %s33, %s34
    %p38 = pneg %p32
    %p39 = scmp.eq.s32.totalorder %s9, 1
    %p40 = por %p38, %p39
    %p41 = scmp.ne.s32.totalorder %s33, %s36
    %p42 = scmp.eq.s32.totalorder %s9, 0
    %p43 = por %p41, %p42
    %p44 = scmp.ne.s32.totalorder %s33, %s36
    %p45 = scmp.eq.s32.totalorder %s14, 1
    %p46 = por %p44, %p45
    %p47 = scmp.ne.s32.totalorder %s36, %s37
    %p48 = scmp.eq.s32.totalorder %s14, 0
    %p49 = por %p47, %p48
    %p50 = scmp.ne.s32.totalorder %s36, %s37
    %p51 = scmp.eq.s32.totalorder %s15, 1
    %p52 = por %p50, %p51
    %p54 = scmp.ne.s32.totalorder %s37, %s53
    %p55 = scmp.eq.s32.totalorder %s15, 0
    %p56 = por %p54, %p55
    %s58 = sadd.s32 %s57, 1
    %p61 = scmp.eq.s32.totalorder %s9, 1
    %p62 = scmp.ne.s32.totalorder %s57, %s59
    %p63 = scmp.eq.s32.totalorder %s9, 0
    %p64 = por %p62, %p63
    %p65 = scmp.ne.s32.totalorder %s57, %s59
    %p66 = scmp.eq.s32.totalorder %s14, 1
    %p67 = por %p65, %p66
    %p68 = scmp.ne.s32.totalorder %s59, %s60
    %p69 = scmp.eq.s32.totalorder %s14, 0
    %p70 = por %p68, %p69
    %p71 = scmp.ne.s32.totalorder %s59, %s60
    %p72 = scmp.eq.s32.totalorder %s15, 1
    %p73 = por %p71, %p72
    %p75 = scmp.ne.s32.totalorder %s60, %s74
    %p76 = scmp.eq.s32.totalorder %s15, 0
    %p77 = por %p75, %p76
    %s79 = sadd.s32 %s78, 1
    %p82 = scmp.eq.s32.totalorder %s9, 1
    %p83 = scmp.ne.s32.totalorder %s78, %s80
    %p84 = scmp.eq.s32.totalorder %s9, 0
    %p85 = por %p83, %p84
    %p86 = scmp.ne.s32.totalorder %s78, %s80
    %p87 = scmp.eq.s32.totalorder %s14, 1
    %p88 = por %p86, %p87
    %p89 = scmp.ne.s32.totalorder %s80, %s81
    %p90 = scmp.eq.s32.totalorder %s14, 0
    %p91 = por %p89, %p90
    %p92 = scmp.ne.s32.totalorder %s80, %s81
    %p93 = scmp.eq.s32.totalorder %s15, 1
    %p94 = por %p92, %p93
    %p96 = scmp.ne.s32.totalorder %s81, %s95
    %p97 = scmp.eq.s32.totalorder %s15, 0
    %p98 = por %p96, %p97
    %s99 = ssub.s32 %s16, %s28
    %s100 = ssub.s32 %s17, %s24
    %s101 = sor.u32 %s99, %s100
    %p102 = scmp.eq.s32.totalorder %s101, 0
    %s104 = sadd.s32 %s103, 1
    %s105 = scalar_select %p102, %s103, %s104
    %p108 = pneg %p102
    %p109 = scmp.eq.s32.totalorder %s9, 1
    %p110 = por %p108, %p109
    %p111 = scmp.ne.s32.totalorder %s103, %s106
    %p112 = scmp.eq.s32.totalorder %s9, 0
    %p113 = por %p111, %p112
    %p114 = scmp.ne.s32.totalorder %s103, %s106
    %p115 = scmp.eq.s32.totalorder %s14, 1
    %p116 = por %p114, %p115
    %p117 = scmp.ne.s32.totalorder %s106, %s107
    %p118 = scmp.eq.s32.totalorder %s14, 0
    %p119 = por %p117, %p118
    %p120 = scmp.ne.s32.totalorder %s106, %s107
    %p121 = scmp.eq.s32.totalorder %s15, 1
    %p122 = por %p120, %p121
    %p124 = scmp.ne.s32.totalorder %s107, %s123
    %p125 = scmp.eq.s32.totalorder %s15, 0
    %p126 = por %p124, %p125
    %p127 = scmp.le.s32.totalorder 1, %s9
    %p128 = scmp.lt.s32.totalorder %s9, 3
    %p129 = pnand %p127, %p128
    %p130 = pneg %p129
    // Predicated region
    $region9: #{_lambda_.20} parent=5 // pred_check
      _
    $region10: #{_lambda_.20} parent=5 // pred_check_branch
      %132 = sbr.rel (%p129) target = $region12
    $region11: #{_lambda_.20} parent=5 // pred_region
      %s133 = ssub.s32 %s9, 1
      // Predicated region
      $region13: #{_lambda_.20} parent=11 // pred_check
        %p134 = pneg %p70
      $region14: #{_lambda_.20} parent=11 // pred_check_branch
        %136 = sbr.rel (%p134) target = $region16
      $region15: #{_lambda_.20} parent=11 // pred_region
        _
      $region16: #{_lambda_.20} parent=11 // pred_fallthru
        _
      // Predicated region
      $region17: #{_lambda_.20} parent=11 // pred_check
        %p137 = pneg %p91
      $region18: #{_lambda_.20} parent=11 // pred_check_branch
        %139 = sbr.rel (%p137) target = $region20
      $region19: #{_lambda_.20} parent=11 // pred_region
        _
      $region20: #{_lambda_.20} parent=11 // pred_fallthru
        _
    $region12: #{_lambda_.20} parent=5 // pred_fallthru
      _
    %p140 = scmp.lt.s32.totalorder %s9, 2
    // Predicated region
    $region21: #{_lambda_.20} parent=5 // pred_check
      %p141 = pneg %p140
    $region22: #{_lambda_.20} parent=5 // pred_check_branch
      %143 = sbr.rel (%p141) target = $region24
    $region23: #{_lambda_.20} parent=5 // pred_region
      // Predicated region
      $region25: #{_lambda_.20} parent=23 // pred_check
        %p144 = pneg %p43
      $region26: #{_lambda_.20} parent=23 // pred_check_branch
        %146 = sbr.rel (%p144) target = $region28
      $region27: #{_lambda_.20} parent=23 // pred_region
        %p147 = scmp.lt.s32.totalorder %s16, 1
        %s148 = scalar_select %p147, %s16, 1
        %p149 = scmp.lt.s32.totalorder %s17, 0
        %s150 = scalar_select %p149, %s17, 0
        %s151 = smul.addr %s150, 30
        %s152 = smul.addr %s148, 30
        %s153 = sadd.s32 %s151, %s152
        %s154 = smul.addr %s153, 8
        %s155 = scalar_lea.vmem %s0, %s154
      $region28: #{_lambda_.20} parent=23 // pred_fallthru
        _
    $region24: #{_lambda_.20} parent=5 // pred_fallthru
      _
    %p156 = scmp.le.s32.totalorder 1, %s9
    %p157 = scmp.lt.s32.totalorder %s9, 3
    %p158 = pnand %p156, %p157
    %p159 = pneg %p158
    // Predicated region
    $region29: #{_lambda_.20} parent=5 // pred_check
      _
    $region30: #{_lambda_.20} parent=5 // pred_check_branch
      %161 = sbr.rel (%p158) target = $region32
    $region31: #{_lambda_.20} parent=5 // pred_region
      %s162 = ssub.s32 %s9, 1
      %p163 = scmp.lt.s32.totalorder %s18, 1
      %s164 = scalar_select %p163, %s18, 1
      %p165 = scmp.lt.s32.totalorder %s19, 0
      %s166 = scalar_select %p165, %s19, 0
      %s167 = smul.addr %s166, 30
      %s168 = smul.addr %s164, 30
      %s169 = sadd.s32 %s167, %s168
      %s170 = smul.addr %s169, 8
      %s171 = scalar_lea.vmem %s0, %s170
      %p172 = pneg %p49
      %p173 = pneg %p46
      %p174 = pneg %p70
      %p175 = pneg %p67
      %p176 = pneg %p91
      %p177 = pneg %p88
      %p178 = pneg %p119
      %p179 = pneg %p116
      %s180 = smul.u32 2, %s19
      %p181 = scmp.lt.s32.totalorder %s18, 1
      %s182 = scalar_select %p181, %s18, 1
      %p183 = scmp.lt.s32.totalorder %s180, 1
      %s184 = scalar_select %p183, %s180, 1
      %s185 = smul.addr %s182, 8
      %s186 = sadd.s32 %s184, %s185
      %s187 = smul.addr %s186, 4
      %s188 = scalar_lea.vmem %s3, %s187
      %p189 = scmp.lt.s32.totalorder %s18, 1
      %s190 = scalar_select %p189, %s18, 1
      %p191 = scmp.lt.s32.totalorder %s19, 0
      %s192 = scalar_select %p191, %s19, 0
      %s193 = smul.addr %s192, 30
      %s194 = smul.addr %s190, 30
      %s195 = sadd.s32 %s193, %s194
      %s196 = smul.addr %s195, 8
      %s197 = scalar_lea.vmem %s0, %s196
      %s198 = smul.u32 2, %s19
      %p199 = scmp.lt.s32.totalorder %s18, 1
      %s200 = scalar_select %p199, %s18, 1
      %p201 = scmp.lt.s32.totalorder %s198, 1
      %s202 = scalar_select %p201, %s198, 1
      %s203 = smul.addr %s200, 8
      %s204 = sadd.s32 %s202, %s203
      %s205 = smul.addr %s204, 4
      %s206 = scalar_lea.vmem %s3, %s205
      %s207 = smul.u32 2, %s19
      %v209 = vld [vmem:[%s197] sm:$0xff]
      %v210 = vld [vmem:[%s197 + $0x8] sm:$0xff]
      %v211 = vld [vmem:[%s197 + $0x10] sm:$0xff]
      %v212 = vld [vmem:[%s197 + $0x18] sm:$0xff]
      %v213 = vld [vmem:[%s197 + $0x20] sm:$0xff]
      %v214 = vld [vmem:[%s197 + $0x28] sm:$0xff]
      %v215 = vld [vmem:[%s197 + $0x30] sm:$0xff]
      %v216 = vld [vmem:[%s197 + $0x38] sm:$0xff]
      %v217 = vld [vmem:[%s197 + $0x40] sm:$0xff]
      %v218 = vld [vmem:[%s197 + $0x48] sm:$0xff]
      %v219 = vld [vmem:[%s197 + $0x50] sm:$0xff]
      %v220 = vld [vmem:[%s197 + $0x58] sm:$0xff]
      %v221 = vld [vmem:[%s197 + $0x60] sm:$0xff]
      %v222 = vld [vmem:[%s197 + $0x68] sm:$0xff]
      %v223 = vld [vmem:[%s197 + $0x70] sm:$0xff]
      %v224 = vld [vmem:[%s197 + $0x78] sm:$0xff]
      %v225 = vld [vmem:[%s197 + $0x80] sm:$0xff]
      %v226 = vld [vmem:[%s197 + $0x88] sm:$0xff]
      %v227 = vld [vmem:[%s197 + $0x90] sm:$0xff]
      %v228 = vld [vmem:[%s197 + $0x98] sm:$0xff]
      %v229 = vld [vmem:[%s197 + $0xa0] sm:$0xff]
      %v230 = vld [vmem:[%s197 + $0xa8] sm:$0xff]
      %v231 = vld [vmem:[%s197 + $0xb0] sm:$0xff]
      %v232 = vld [vmem:[%s197 + $0xb8] sm:$0xff]
      %v233 = vld [vmem:[%s197 + $0xc0] sm:$0xff]
      %v234 = vld [vmem:[%s197 + $0xc8] sm:$0xff]
      %v235 = vld [vmem:[%s197 + $0xd0] sm:$0xff]
      %v236 = vld [vmem:[%s197 + $0xd8] sm:$0xff]
      %v237 = vld [vmem:[%s197 + $0xe0] sm:$0xff]
      %v238 = vld [vmem:[%s197 + $0xe8] sm:$0xff]
      %269 = vrot.lane.b32.xlu0 %v209, 127
      %v270 = vpop.permute.xlu0 %269
      %271 = vrot.lane.b32.xlu0 %v210, 127
      %v272 = vpop.permute.xlu0 %271
      %273 = vrot.lane.b32.xlu0 %v211, 127
      %v274 = vpop.permute.xlu0 %273
      %275 = vrot.lane.b32.xlu0 %v212, 127
      %v276 = vpop.permute.xlu0 %275
      %277 = vrot.lane.b32.xlu0 %v213, 127
      %v278 = vpop.permute.xlu0 %277
      %279 = vrot.lane.b32.xlu0 %v214, 127
      %v280 = vpop.permute.xlu0 %279
      %281 = vrot.lane.b32.xlu0 %v215, 127
      %v282 = vpop.permute.xlu0 %281
      %283 = vrot.lane.b32.xlu0 %v216, 127
      %v284 = vpop.permute.xlu0 %283
      %285 = vrot.lane.b32.xlu0 %v217, 127
      %v286 = vpop.permute.xlu0 %285
      %287 = vrot.lane.b32.xlu0 %v218, 127
      %v288 = vpop.permute.xlu0 %287
      %289 = vrot.lane.b32.xlu0 %v219, 127
      %v290 = vpop.permute.xlu0 %289
      %291 = vrot.lane.b32.xlu0 %v220, 127
      %v292 = vpop.permute.xlu0 %291
      %293 = vrot.lane.b32.xlu0 %v221, 127
      %v294 = vpop.permute.xlu0 %293
      %295 = vrot.lane.b32.xlu0 %v222, 127
      %v296 = vpop.permute.xlu0 %295
      %297 = vrot.lane.b32.xlu0 %v223, 127
      %v298 = vpop.permute.xlu0 %297
      %299 = vrot.lane.b32.xlu0 %v224, 127
      %v300 = vpop.permute.xlu0 %299
      %301 = vrot.lane.b32.xlu0 %v225, 127
      %v302 = vpop.permute.xlu0 %301
      %303 = vrot.lane.b32.xlu0 %v226, 127
      %v304 = vpop.permute.xlu0 %303
      %305 = vrot.lane.b32.xlu0 %v227, 127
      %v306 = vpop.permute.xlu0 %305
      %307 = vrot.lane.b32.xlu0 %v228, 127
      %v308 = vpop.permute.xlu0 %307
      %309 = vrot.lane.b32.xlu0 %v229, 127
      %v310 = vpop.permute.xlu0 %309
      %311 = vrot.lane.b32.xlu0 %v230, 127
      %v312 = vpop.permute.xlu0 %311
      %313 = vrot.lane.b32.xlu0 %v231, 127
      %v314 = vpop.permute.xlu0 %313
      %315 = vrot.lane.b32.xlu0 %v232, 127
      %v316 = vpop.permute.xlu0 %315
      %317 = vrot.lane.b32.xlu0 %v233, 127
      %v318 = vpop.permute.xlu0 %317
      %319 = vrot.lane.b32.xlu0 %v234, 127
      %v320 = vpop.permute.xlu0 %319
      %321 = vrot.lane.b32.xlu0 %v235, 127
      %v322 = vpop.permute.xlu0 %321
      %323 = vrot.lane.b32.xlu0 %v236, 127
      %v324 = vpop.permute.xlu0 %323
      %325 = vrot.lane.b32.xlu0 %v237, 127
      %v326 = vpop.permute.xlu0 %325
      %327 = vrot.lane.b32.xlu0 %v238, 127
      %v328 = vpop.permute.xlu0 %327
      %vm329 = vcmask 1039360
      %v330 = vsel %vm329, %v270, %v272
      %v331 = vsel %vm329, %v272, %v274
      %v332 = vsel %vm329, %v276, %v278
      %v333 = vsel %vm329, %v278, %v280
      %v334 = vsel %vm329, %v282, %v284
      %v335 = vsel %vm329, %v284, %v286
      %v336 = vsel %vm329, %v288, %v290
      %v337 = vsel %vm329, %v290, %v292
      %v338 = vsel %vm329, %v294, %v296
      %v339 = vsel %vm329, %v296, %v298
      %v340 = vsel %vm329, %v300, %v302
      %v341 = vsel %vm329, %v302, %v304
      %v342 = vsel %vm329, %v306, %v308
      %v343 = vsel %vm329, %v308, %v310
      %v344 = vsel %vm329, %v312, %v314
      %v345 = vsel %vm329, %v314, %v316
      %v346 = vsel %vm329, %v318, %v320
      %v347 = vsel %vm329, %v320, %v322
      %v348 = vsel %vm329, %v324, %v326
      %v349 = vsel %vm329, %v326, %v328
      %370 = vrot.lane.b32.xlu0 %v209, 126
      %v371 = vpop.permute.xlu0 %370
      %372 = vrot.lane.b32.xlu0 %v210, 126
      %v373 = vpop.permute.xlu0 %372
      %374 = vrot.lane.b32.xlu0 %v211, 126
      %v375 = vpop.permute.xlu0 %374
      %376 = vrot.lane.b32.xlu0 %v212, 126
      %v377 = vpop.permute.xlu0 %376
      %378 = vrot.lane.b32.xlu0 %v213, 126
      %v379 = vpop.permute.xlu0 %378
      %380 = vrot.lane.b32.xlu0 %v214, 126
      %v381 = vpop.permute.xlu0 %380
      %382 = vrot.lane.b32.xlu0 %v215, 126
      %v383 = vpop.permute.xlu0 %382
      %384 = vrot.lane.b32.xlu0 %v216, 126
      %v385 = vpop.permute.xlu0 %384
      %386 = vrot.lane.b32.xlu0 %v217, 126
      %v387 = vpop.permute.xlu0 %386
      %388 = vrot.lane.b32.xlu0 %v218, 126
      %v389 = vpop.permute.xlu0 %388
      %390 = vrot.lane.b32.xlu0 %v219, 126
      %v391 = vpop.permute.xlu0 %390
      %392 = vrot.lane.b32.xlu0 %v220, 126
      %v393 = vpop.permute.xlu0 %392
      %394 = vrot.lane.b32.xlu0 %v221, 126
      %v395 = vpop.permute.xlu0 %394
      %396 = vrot.lane.b32.xlu0 %v222, 126
      %v397 = vpop.permute.xlu0 %396
      %398 = vrot.lane.b32.xlu0 %v223, 126
      %v399 = vpop.permute.xlu0 %398
      %400 = vrot.lane.b32.xlu0 %v224, 126
      %v401 = vpop.permute.xlu0 %400
      %402 = vrot.lane.b32.xlu0 %v225, 126
      %v403 = vpop.permute.xlu0 %402
      %404 = vrot.lane.b32.xlu0 %v226, 126
      %v405 = vpop.permute.xlu0 %404
      %406 = vrot.lane.b32.xlu0 %v227, 126
      %v407 = vpop.permute.xlu0 %406
      %408 = vrot.lane.b32.xlu0 %v228, 126
      %v409 = vpop.permute.xlu0 %408
      %410 = vrot.lane.b32.xlu0 %v229, 126
      %v411 = vpop.permute.xlu0 %410
      %412 = vrot.lane.b32.xlu0 %v230, 126
      %v413 = vpop.permute.xlu0 %412
      %414 = vrot.lane.b32.xlu0 %v231, 126
      %v415 = vpop.permute.xlu0 %414
      %416 = vrot.lane.b32.xlu0 %v232, 126
      %v417 = vpop.permute.xlu0 %416
      %418 = vrot.lane.b32.xlu0 %v233, 126
      %v419 = vpop.permute.xlu0 %418
      %420 = vrot.lane.b32.xlu0 %v234, 126
      %v421 = vpop.permute.xlu0 %420
      %422 = vrot.lane.b32.xlu0 %v235, 126
      %v423 = vpop.permute.xlu0 %422
      %424 = vrot.lane.b32.xlu0 %v236, 126
      %v425 = vpop.permute.xlu0 %424
      %426 = vrot.lane.b32.xlu0 %v237, 126
      %v427 = vpop.permute.xlu0 %426
      %428 = vrot.lane.b32.xlu0 %v238, 126
      %v429 = vpop.permute.xlu0 %428
      %vm430 = vcmask 1031168
      %v431 = vsel %vm430, %v371, %v373
      %v432 = vsel %vm430, %v373, %v375
      %v433 = vsel %vm430, %v377, %v379
      %v434 = vsel %vm430, %v379, %v381
      %v435 = vsel %vm430, %v383, %v385
      %v436 = vsel %vm430, %v385, %v387
      %v437 = vsel %vm430, %v389, %v391
      %v438 = vsel %vm430, %v391, %v393
      %v439 = vsel %vm430, %v395, %v397
      %v440 = vsel %vm430, %v397, %v399
      %v441 = vsel %vm430, %v401, %v403
      %v442 = vsel %vm430, %v403, %v405
      %v443 = vsel %vm430, %v407, %v409
      %v444 = vsel %vm430, %v409, %v411
      %v445 = vsel %vm430, %v413, %v415
      %v446 = vsel %vm430, %v415, %v417
      %v447 = vsel %vm430, %v419, %v421
      %v448 = vsel %vm430, %v421, %v423
      %v449 = vsel %vm430, %v425, %v427
      %v450 = vsel %vm430, %v427, %v429
      %471 = vrot.lane.b32.xlu0 %v209, 125
      %v472 = vpop.permute.xlu0 %471
      %473 = vrot.lane.b32.xlu0 %v210, 125
      %v474 = vpop.permute.xlu0 %473
      %475 = vrot.lane.b32.xlu0 %v211, 125
      %v476 = vpop.permute.xlu0 %475
      %477 = vrot.lane.b32.xlu0 %v212, 125
      %v478 = vpop.permute.xlu0 %477
      %479 = vrot.lane.b32.xlu0 %v213, 125
      %v480 = vpop.permute.xlu0 %479
      %481 = vrot.lane.b32.xlu0 %v214, 125
      %v482 = vpop.permute.xlu0 %481
      %483 = vrot.lane.b32.xlu0 %v215, 125
      %v484 = vpop.permute.xlu0 %483
      %485 = vrot.lane.b32.xlu0 %v216, 125
      %v486 = vpop.permute.xlu0 %485
      %487 = vrot.lane.b32.xlu0 %v217, 125
      %v488 = vpop.permute.xlu0 %487
      %489 = vrot.lane.b32.xlu0 %v218, 125
      %v490 = vpop.permute.xlu0 %489
      %491 = vrot.lane.b32.xlu0 %v219, 125
      %v492 = vpop.permute.xlu0 %491
      %493 = vrot.lane.b32.xlu0 %v220, 125
      %v494 = vpop.permute.xlu0 %493
      %495 = vrot.lane.b32.xlu0 %v221, 125
      %v496 = vpop.permute.xlu0 %495
      %497 = vrot.lane.b32.xlu0 %v222, 125
      %v498 = vpop.permute.xlu0 %497
      %499 = vrot.lane.b32.xlu0 %v223, 125
      %v500 = vpop.permute.xlu0 %499
      %501 = vrot.lane.b32.xlu0 %v224, 125
      %v502 = vpop.permute.xlu0 %501
      %503 = vrot.lane.b32.xlu0 %v225, 125
      %v504 = vpop.permute.xlu0 %503
      %505 = vrot.lane.b32.xlu0 %v226, 125
      %v506 = vpop.permute.xlu0 %505
      %507 = vrot.lane.b32.xlu0 %v227, 125
      %v508 = vpop.permute.xlu0 %507
      %509 = vrot.lane.b32.xlu0 %v228, 125
      %v510 = vpop.permute.xlu0 %509
      %511 = vrot.lane.b32.xlu0 %v229, 125
      %v512 = vpop.permute.xlu0 %511
      %513 = vrot.lane.b32.xlu0 %v230, 125
      %v514 = vpop.permute.xlu0 %513
      %515 = vrot.lane.b32.xlu0 %v231, 125
      %v516 = vpop.permute.xlu0 %515
      %517 = vrot.lane.b32.xlu0 %v232, 125
      %v518 = vpop.permute.xlu0 %517
      %519 = vrot.lane.b32.xlu0 %v233, 125
      %v520 = vpop.permute.xlu0 %519
      %521 = vrot.lane.b32.xlu0 %v234, 125
      %v522 = vpop.permute.xlu0 %521
      %523 = vrot.lane.b32.xlu0 %v235, 125
      %v524 = vpop.permute.xlu0 %523
      %525 = vrot.lane.b32.xlu0 %v236, 125
      %v526 = vpop.permute.xlu0 %525
      %527 = vrot.lane.b32.xlu0 %v237, 125
      %v528 = vpop.permute.xlu0 %527
      %529 = vrot.lane.b32.xlu0 %v238, 125
      %v530 = vpop.permute.xlu0 %529
      %vm531 = vcmask 1022976
      %v532 = vsel %vm531, %v472, %v474
      %v533 = vsel %vm531, %v474, %v476
      %v534 = vsel %vm531, %v478, %v480
      %v535 = vsel %vm531, %v480, %v482
      %v536 = vsel %vm531, %v484, %v486
      %v537 = vsel %vm531, %v486, %v488
      %v538 = vsel %vm531, %v490, %v492
      %v539 = vsel %vm531, %v492, %v494
      %v540 = vsel %vm531, %v496, %v498
      %v541 = vsel %vm531, %v498, %v500
      %v542 = vsel %vm531, %v502, %v504
      %v543 = vsel %vm531, %v504, %v506
      %v544 = vsel %vm531, %v508, %v510
      %v545 = vsel %vm531, %v510, %v512
      %v546 = vsel %vm531, %v514, %v516
      %v547 = vsel %vm531, %v516, %v518
      %v548 = vsel %vm531, %v520, %v522
      %v549 = vsel %vm531, %v522, %v524
      %v550 = vsel %vm531, %v526, %v528
      %v551 = vsel %vm531, %v528, %v530
      %572 = vrot.lane.b32.xlu0 %v209, 124
      %v573 = vpop.permute.xlu0 %572
      %574 = vrot.lane.b32.xlu0 %v210, 124
      %v575 = vpop.permute.xlu0 %574
      %576 = vrot.lane.b32.xlu0 %v211, 124
      %v577 = vpop.permute.xlu0 %576
      %578 = vrot.lane.b32.xlu0 %v212, 124
      %v579 = vpop.permute.xlu0 %578
      %580 = vrot.lane.b32.xlu0 %v213, 124
      %v581 = vpop.permute.xlu0 %580
      %582 = vrot.lane.b32.xlu0 %v214, 124
      %v583 = vpop.permute.xlu0 %582
      %584 = vrot.lane.b32.xlu0 %v215, 124
      %v585 = vpop.permute.xlu0 %584
      %586 = vrot.lane.b32.xlu0 %v216, 124
      %v587 = vpop.permute.xlu0 %586
      %588 = vrot.lane.b32.xlu0 %v217, 124
      %v589 = vpop.permute.xlu0 %588
      %590 = vrot.lane.b32.xlu0 %v218, 124
      %v591 = vpop.permute.xlu0 %590
      %592 = vrot.lane.b32.xlu0 %v219, 124
      %v593 = vpop.permute.xlu0 %592
      %594 = vrot.lane.b32.xlu0 %v220, 124
      %v595 = vpop.permute.xlu0 %594
      %596 = vrot.lane.b32.xlu0 %v221, 124
      %v597 = vpop.permute.xlu0 %596
      %598 = vrot.lane.b32.xlu0 %v222, 124
      %v599 = vpop.permute.xlu0 %598
      %600 = vrot.lane.b32.xlu0 %v223, 124
      %v601 = vpop.permute.xlu0 %600
      %602 = vrot.lane.b32.xlu0 %v224, 124
      %v603 = vpop.permute.xlu0 %602
      %604 = vrot.lane.b32.xlu0 %v225, 124
      %v605 = vpop.permute.xlu0 %604
      %606 = vrot.lane.b32.xlu0 %v226, 124
      %v607 = vpop.permute.xlu0 %606
      %608 = vrot.lane.b32.xlu0 %v227, 124
      %v609 = vpop.permute.xlu0 %608
      %610 = vrot.lane.b32.xlu0 %v228, 124
      %v611 = vpop.permute.xlu0 %610
      %612 = vrot.lane.b32.xlu0 %v229, 124
      %v613 = vpop.permute.xlu0 %612
      %614 = vrot.lane.b32.xlu0 %v230, 124
      %v615 = vpop.permute.xlu0 %614
      %616 = vrot.lane.b32.xlu0 %v231, 124
      %v617 = vpop.permute.xlu0 %616
      %618 = vrot.lane.b32.xlu0 %v232, 124
      %v619 = vpop.permute.xlu0 %618
      %620 = vrot.lane.b32.xlu0 %v233, 124
      %v621 = vpop.permute.xlu0 %620
      %622 = vrot.lane.b32.xlu0 %v234, 124
      %v623 = vpop.permute.xlu0 %622
      %624 = vrot.lane.b32.xlu0 %v235, 124
      %v625 = vpop.permute.xlu0 %624
      %626 = vrot.lane.b32.xlu0 %v236, 124
      %v627 = vpop.permute.xlu0 %626
      %628 = vrot.lane.b32.xlu0 %v237, 124
      %v629 = vpop.permute.xlu0 %628
      %630 = vrot.lane.b32.xlu0 %v238, 124
      %v631 = vpop.permute.xlu0 %630
      %vm632 = vcmask 1014784
      %v633 = vsel %vm632, %v573, %v575
      %v634 = vsel %vm632, %v575, %v577
      %v635 = vsel %vm632, %v579, %v581
      %v636 = vsel %vm632, %v581, %v583
      %v637 = vsel %vm632, %v585, %v587
      %v638 = vsel %vm632, %v587, %v589
      %v639 = vsel %vm632, %v591, %v593
      %v640 = vsel %vm632, %v593, %v595
      %v641 = vsel %vm632, %v597, %v599
      %v642 = vsel %vm632, %v599, %v601
      %v643 = vsel %vm632, %v603, %v605
      %v644 = vsel %vm632, %v605, %v607
      %v645 = vsel %vm632, %v609, %v611
      %v646 = vsel %vm632, %v611, %v613
      %v647 = vsel %vm632, %v615, %v617
      %v648 = vsel %vm632, %v617, %v619
      %v649 = vsel %vm632, %v621, %v623
      %v650 = vsel %vm632, %v623, %v625
      %v651 = vsel %vm632, %v627, %v629
      %v652 = vsel %vm632, %v629, %v631
      %673 = vrot.lane.b32.xlu0 %v209, 123
      %v674 = vpop.permute.xlu0 %673
      %675 = vrot.lane.b32.xlu0 %v210, 123
      %v676 = vpop.permute.xlu0 %675
      %677 = vrot.lane.b32.xlu0 %v211, 123
      %v678 = vpop.permute.xlu0 %677
      %679 = vrot.lane.b32.xlu0 %v212, 123
      %v680 = vpop.permute.xlu0 %679
      %681 = vrot.lane.b32.xlu0 %v213, 123
      %v682 = vpop.permute.xlu0 %681
      %683 = vrot.lane.b32.xlu0 %v214, 123
      %v684 = vpop.permute.xlu0 %683
      %685 = vrot.lane.b32.xlu0 %v215, 123
      %v686 = vpop.permute.xlu0 %685
      %687 = vrot.lane.b32.xlu0 %v216, 123
      %v688 = vpop.permute.xlu0 %687
      %689 = vrot.lane.b32.xlu0 %v217, 123
      %v690 = vpop.permute.xlu0 %689
      %691 = vrot.lane.b32.xlu0 %v218, 123
      %v692 = vpop.permute.xlu0 %691
      %693 = vrot.lane.b32.xlu0 %v219, 123
      %v694 = vpop.permute.xlu0 %693
      %695 = vrot.lane.b32.xlu0 %v220, 123
      %v696 = vpop.permute.xlu0 %695
      %697 = vrot.lane.b32.xlu0 %v221, 123
      %v698 = vpop.permute.xlu0 %697
      %699 = vrot.lane.b32.xlu0 %v222, 123
      %v700 = vpop.permute.xlu0 %699
      %701 = vrot.lane.b32.xlu0 %v223, 123
      %v702 = vpop.permute.xlu0 %701
      %703 = vrot.lane.b32.xlu0 %v224, 123
      %v704 = vpop.permute.xlu0 %703
      %705 = vrot.lane.b32.xlu0 %v225, 123
      %v706 = vpop.permute.xlu0 %705
      %707 = vrot.lane.b32.xlu0 %v226, 123
      %v708 = vpop.permute.xlu0 %707
      %709 = vrot.lane.b32.xlu0 %v227, 123
      %v710 = vpop.permute.xlu0 %709
      %711 = vrot.lane.b32.xlu0 %v228, 123
      %v712 = vpop.permute.xlu0 %711
      %713 = vrot.lane.b32.xlu0 %v229, 123
      %v714 = vpop.permute.xlu0 %713
      %715 = vrot.lane.b32.xlu0 %v230, 123
      %v716 = vpop.permute.xlu0 %715
      %717 = vrot.lane.b32.xlu0 %v231, 123
      %v718 = vpop.permute.xlu0 %717
      %719 = vrot.lane.b32.xlu0 %v232, 123
      %v720 = vpop.permute.xlu0 %719
      %721 = vrot.lane.b32.xlu0 %v233, 123
      %v722 = vpop.permute.xlu0 %721
      %723 = vrot.lane.b32.xlu0 %v234, 123
      %v724 = vpop.permute.xlu0 %723
      %725 = vrot.lane.b32.xlu0 %v235, 123
      %v726 = vpop.permute.xlu0 %725
      %727 = vrot.lane.b32.xlu0 %v236, 123
      %v728 = vpop.permute.xlu0 %727
      %729 = vrot.lane.b32.xlu0 %v237, 123
      %v730 = vpop.permute.xlu0 %729
      %731 = vrot.lane.b32.xlu0 %v238, 123
      %v732 = vpop.permute.xlu0 %731
      %vm733 = vcmask 1006592
      %v734 = vsel %vm733, %v674, %v676
      %v735 = vsel %vm733, %v676, %v678
      %v736 = vsel %vm733, %v680, %v682
      %v737 = vsel %vm733, %v682, %v684
      %v738 = vsel %vm733, %v686, %v688
      %v739 = vsel %vm733, %v688, %v690
      %v740 = vsel %vm733, %v692, %v694
      %v741 = vsel %vm733, %v694, %v696
      %v742 = vsel %vm733, %v698, %v700
      %v743 = vsel %vm733, %v700, %v702
      %v744 = vsel %vm733, %v704, %v706
      %v745 = vsel %vm733, %v706, %v708
      %v746 = vsel %vm733, %v710, %v712
      %v747 = vsel %vm733, %v712, %v714
      %v748 = vsel %vm733, %v716, %v718
      %v749 = vsel %vm733, %v718, %v720
      %v750 = vsel %vm733, %v722, %v724
      %v751 = vsel %vm733, %v724, %v726
      %v752 = vsel %vm733, %v728, %v730
      %v753 = vsel %vm733, %v730, %v732
      %774 = vrot.lane.b32.xlu0 %v209, 122
      %v775 = vpop.permute.xlu0 %774
      %776 = vrot.lane.b32.xlu0 %v210, 122
      %v777 = vpop.permute.xlu0 %776
      %778 = vrot.lane.b32.xlu0 %v211, 122
      %v779 = vpop.permute.xlu0 %778
      %780 = vrot.lane.b32.xlu0 %v212, 122
      %v781 = vpop.permute.xlu0 %780
      %782 = vrot.lane.b32.xlu0 %v213, 122
      %v783 = vpop.permute.xlu0 %782
      %784 = vrot.lane.b32.xlu0 %v214, 122
      %v785 = vpop.permute.xlu0 %784
      %786 = vrot.lane.b32.xlu0 %v215, 122
      %v787 = vpop.permute.xlu0 %786
      %788 = vrot.lane.b32.xlu0 %v216, 122
      %v789 = vpop.permute.xlu0 %788
      %790 = vrot.lane.b32.xlu0 %v217, 122
      %v791 = vpop.permute.xlu0 %790
      %792 = vrot.lane.b32.xlu0 %v218, 122
      %v793 = vpop.permute.xlu0 %792
      %794 = vrot.lane.b32.xlu0 %v219, 122
      %v795 = vpop.permute.xlu0 %794
      %796 = vrot.lane.b32.xlu0 %v220, 122
      %v797 = vpop.permute.xlu0 %796
      %798 = vrot.lane.b32.xlu0 %v221, 122
      %v799 = vpop.permute.xlu0 %798
      %800 = vrot.lane.b32.xlu0 %v222, 122
      %v801 = vpop.permute.xlu0 %800
      %802 = vrot.lane.b32.xlu0 %v223, 122
      %v803 = vpop.permute.xlu0 %802
      %804 = vrot.lane.b32.xlu0 %v224, 122
      %v805 = vpop.permute.xlu0 %804
      %806 = vrot.lane.b32.xlu0 %v225, 122
      %v807 = vpop.permute.xlu0 %806
      %808 = vrot.lane.b32.xlu0 %v226, 122
      %v809 = vpop.permute.xlu0 %808
      %810 = vrot.lane.b32.xlu0 %v227, 122
      %v811 = vpop.permute.xlu0 %810
      %812 = vrot.lane.b32.xlu0 %v228, 122
      %v813 = vpop.permute.xlu0 %812
      %814 = vrot.lane.b32.xlu0 %v229, 122
      %v815 = vpop.permute.xlu0 %814
      %816 = vrot.lane.b32.xlu0 %v230, 122
      %v817 = vpop.permute.xlu0 %816
      %818 = vrot.lane.b32.xlu0 %v231, 122
      %v819 = vpop.permute.xlu0 %818
      %820 = vrot.lane.b32.xlu0 %v232, 122
      %v821 = vpop.permute.xlu0 %820
      %822 = vrot.lane.b32.xlu0 %v233, 122
      %v823 = vpop.permute.xlu0 %822
      %824 = vrot.lane.b32.xlu0 %v234, 122
      %v825 = vpop.permute.xlu0 %824
      %826 = vrot.lane.b32.xlu0 %v235, 122
      %v827 = vpop.permute.xlu0 %826
      %828 = vrot.lane.b32.xlu0 %v236, 122
      %v829 = vpop.permute.xlu0 %828
      %830 = vrot.lane.b32.xlu0 %v237, 122
      %v831 = vpop.permute.xlu0 %830
      %832 = vrot.lane.b32.xlu0 %v238, 122
      %v833 = vpop.permute.xlu0 %832
      %vm834 = vcmask 998400
      %v835 = vsel %vm834, %v775, %v777
      %v836 = vsel %vm834, %v777, %v779
      %v837 = vsel %vm834, %v781, %v783
      %v838 = vsel %vm834, %v783, %v785
      %v839 = vsel %vm834, %v787, %v789
      %v840 = vsel %vm834, %v789, %v791
      %v841 = vsel %vm834, %v793, %v795
      %v842 = vsel %vm834, %v795, %v797
      %v843 = vsel %vm834, %v799, %v801
      %v844 = vsel %vm834, %v801, %v803
      %v845 = vsel %vm834, %v805, %v807
      %v846 = vsel %vm834, %v807, %v809
      %v847 = vsel %vm834, %v811, %v813
      %v848 = vsel %vm834, %v813, %v815
      %v849 = vsel %vm834, %v817, %v819
      %v850 = vsel %vm834, %v819, %v821
      %v851 = vsel %vm834, %v823, %v825
      %v852 = vsel %vm834, %v825, %v827
      %v853 = vsel %vm834, %v829, %v831
      %v854 = vsel %vm834, %v831, %v833
      %v875 = vld [vmem:[%s1] sm:$0xff]
      %v876 = vld [vmem:[%s1 + $0x8] sm:$0xff]
      %v877 = vld [vmem:[%s1 + $0x10] sm:$0xf]
      %v878 = vld [vmem:[%s1 + $0x14] sm:$0xff]
      %v879 = vld [vmem:[%s1 + $0x1c] sm:$0xff]
      %v880 = vld [vmem:[%s1 + $0x24] sm:$0xf]
      %v881 = vld [vmem:[%s1 + $0x28] sm:$0xff]
      %v882 = vld [vmem:[%s1 + $0x30] sm:$0xff]
      %v883 = vld [vmem:[%s1 + $0x38] sm:$0xf]
      %v884 = vld [vmem:[%s1 + $0x3c] sm:$0xff]
      %v885 = vld [vmem:[%s1 + $0x44] sm:$0xff]
      %v886 = vld [vmem:[%s1 + $0x4c] sm:$0xf]
      %v887 = vpack.c.bf16 %v212, %v209
      %v888 = vpack.c.bf16 %v213, %v210
      %v889 = vpack.c.bf16 %v218, %v215
      %v890 = vpack.c.bf16 %v219, %v216
      %v891 = vpack.c.bf16 %v224, %v221
      %v892 = vpack.c.bf16 %v225, %v222
      %v893 = vpack.c.bf16 %v230, %v227
      %v894 = vpack.c.bf16 %v231, %v228
      %v895 = vpack.c.bf16 %v236, %v233
      %v896 = vpack.c.bf16 %v237, %v234
      %v897 = vpack.c.bf16 %v332, %v330
      %v898 = vpack.c.bf16 %v333, %v331
      %v899 = vpack.c.bf16 %v336, %v334
      %v900 = vpack.c.bf16 %v337, %v335
      %v901 = vpack.c.bf16 %v340, %v338
      %v902 = vpack.c.bf16 %v341, %v339
      %v903 = vpack.c.bf16 %v344, %v342
      %v904 = vpack.c.bf16 %v345, %v343
      %v905 = vpack.c.bf16 %v348, %v346
      %v906 = vpack.c.bf16 %v349, %v347
      %v907 = vpack.c.bf16 %v433, %v431
      %v908 = vpack.c.bf16 %v434, %v432
      %v909 = vpack.c.bf16 %v437, %v435
      %v910 = vpack.c.bf16 %v438, %v436
      %v911 = vpack.c.bf16 %v441, %v439
      %v912 = vpack.c.bf16 %v442, %v440
      %v913 = vpack.c.bf16 %v445, %v443
      %v914 = vpack.c.bf16 %v446, %v444
      %v915 = vpack.c.bf16 %v449, %v447
      %v916 = vpack.c.bf16 %v450, %v448
      %v917 = vpack.c.bf16 %v534, %v532
      %v918 = vpack.c.bf16 %v535, %v533
      %v919 = vpack.c.bf16 %v538, %v536
      %v920 = vpack.c.bf16 %v539, %v537
      %v921 = vpack.c.bf16 %v542, %v540
      %v922 = vpack.c.bf16 %v543, %v541
      %v923 = vpack.c.bf16 %v546, %v544
      %v924 = vpack.c.bf16 %v547, %v545
      %v925 = vpack.c.bf16 %v550, %v548
      %v926 = vpack.c.bf16 %v551, %v549
      %v927 = vpack.c.bf16 %v635, %v633
      %v928 = vpack.c.bf16 %v636, %v634
      %v929 = vpack.c.bf16 %v639, %v637
      %v930 = vpack.c.bf16 %v640, %v638
      %v931 = vpack.c.bf16 %v643, %v641
      %v932 = vpack.c.bf16 %v644, %v642
      %v933 = vpack.c.bf16 %v647, %v645
      %v934 = vpack.c.bf16 %v648, %v646
      %v935 = vpack.c.bf16 %v651, %v649
      %v936 = vpack.c.bf16 %v652, %v650
      %v937 = vpack.c.bf16 %v736, %v734
      %v938 = vpack.c.bf16 %v737, %v735
      %v939 = vpack.c.bf16 %v740, %v738
      %v940 = vpack.c.bf16 %v741, %v739
      %v941 = vpack.c.bf16 %v744, %v742
      %v942 = vpack.c.bf16 %v745, %v743
      %v943 = vpack.c.bf16 %v748, %v746
      %v944 = vpack.c.bf16 %v749, %v747
      %v945 = vpack.c.bf16 %v752, %v750
      %v946 = vpack.c.bf16 %v753, %v751
      %v947 = vpack.c.bf16 %v837, %v835
      %v948 = vpack.c.bf16 %v838, %v836
      %v949 = vpack.c.bf16 %v841, %v839
      %v950 = vpack.c.bf16 %v842, %v840
      %v951 = vpack.c.bf16 %v845, %v843
      %v952 = vpack.c.bf16 %v846, %v844
      %v953 = vpack.c.bf16 %v849, %v847
      %v954 = vpack.c.bf16 %v850, %v848
      %v955 = vpack.c.bf16 %v853, %v851
      %v956 = vpack.c.bf16 %v854, %v852
      %v957 = vld [vmem:[%s2] sm:$0xff]
      %v958 = vld [vmem:[%s2 + $0x8] sm:$0xff]
      %v959 = vld [vmem:[%s2 + $0x10] sm:$0xff]
      %v960 = vld [vmem:[%s2 + $0x18] sm:$0xff]
      %962 = vset.pattern.permute.xlu0 0
      %963 = vperm.xlu0 %962, %v957
      %v964 = vpop.permute.xlu0 %963
      %967 = vset.pattern.permute.xlu0 0
      %968 = vperm.xlu0 %967, %v958
      %v969 = vpop.permute.xlu0 %968
      %972 = vset.pattern.permute.xlu0 0
      %973 = vperm.xlu0 %972, %v959
      %v974 = vpop.permute.xlu0 %973
      %977 = vset.pattern.permute.xlu0 0
      %978 = vperm.xlu0 %977, %v960
      %v979 = vpop.permute.xlu0 %978
      %v993 = vunpack.c.l.b16 %v875
      %v994 = vunpack.c.h.b16 %v875
      %v995 = vunpack.c.l.b16 %v876
      %v996 = vunpack.c.h.b16 %v876
      %v997 = vunpack.c.l.b16 %v877
      %v998 = vunpack.c.l.b16 %v878
      %v999 = vunpack.c.h.b16 %v878
      %v1000 = vunpack.c.l.b16 %v879
      %v1001 = vunpack.c.h.b16 %v879
      %v1002 = vunpack.c.l.b16 %v880
      %v1003 = vunpack.c.l.b16 %v881
      %v1004 = vunpack.c.h.b16 %v881
      %v1005 = vunpack.c.l.b16 %v882
      %v1006 = vunpack.c.h.b16 %v882
      %v1007 = vunpack.c.l.b16 %v883
      %v1008 = vunpack.c.l.b16 %v884
      %v1009 = vunpack.c.h.b16 %v884
      %v1010 = vunpack.c.l.b16 %v885
      %v1011 = vunpack.c.h.b16 %v885
      %v1012 = vunpack.c.l.b16 %v886
      %v1013 = vpack.c.b16 %v998, %v993
      %v1014 = vpack.c.b16 %v999, %v994
      %v1015 = vpack.c.b16 %v1000, %v995
      %v1016 = vpack.c.b16 %v1001, %v996
      %v1017 = vpack.c.b16 %v1002, %v997
      %v1018 = vpack.c.b16 %v1008, %v1003
      %v1019 = vpack.c.b16 %v1009, %v1004
      %v1020 = vpack.c.b16 %v1010, %v1005
      %v1021 = vpack.c.b16 %v1011, %v1006
      %v1022 = vpack.c.b16 %v1012, %v1007
      %vm1031 = vcmask 392192
      %v1033 = vsel %vm1031, %v1017, 0
      %v1036 = vsel %vm1031, %v1022, 0
      %1038 = vmatprep.subr.bf16.mxu0 %v902
      %1039 = vmatpush1.bf16.msra.mxu0 %v901
      %1040 = vmatprep.subr.bf16.mxu0 %v900
      %1041 = vmatpush1.bf16.msra.mxu0 %v899
      %1042 = vmatprep.subr.bf16.mxu0 %v898
      %1043 = vmatpush1.bf16.msra.mxu0 %v897
      %1044 = vmatprep.subr.bf16.mxu0 %v896
      %1045 = vmatpush1.bf16.msra.mxu0 %v895
      %1046 = vmatprep.subr.bf16.mxu0 %v894
      %1047 = vmatpush1.bf16.msra.mxu0 %v893
      %1048 = vmatprep.subr.bf16.mxu0 %v892
      %1049 = vmatpush1.bf16.msra.mxu0 %v891
      %1050 = vmatprep.subr.bf16.mxu0 %v890
      %1051 = vmatpush1.bf16.msra.mxu0 %v889
      %1052 = vmatprep.subr.bf16.mxu0 %v888
      %1053 = vmatpush1.bf16.msra.mxu0 %v887
      %1054 = vmatprep.subr.bf16.mxu0 %v918
      %1055 = vmatpush2.bf16.msra.mxu0 %v917
      %1056 = vmatprep.subr.bf16.mxu0 %v916
      %1057 = vmatpush2.bf16.msra.mxu0 %v915
      %1058 = vmatprep.subr.bf16.mxu0 %v914
      %1059 = vmatpush2.bf16.msra.mxu0 %v913
      %1060 = vmatprep.subr.bf16.mxu0 %v912
      %1061 = vmatpush2.bf16.msra.mxu0 %v911
      %1062 = vmatprep.subr.bf16.mxu0 %v910
      %1063 = vmatpush2.bf16.msra.mxu0 %v909
      %1064 = vmatprep.subr.bf16.mxu0 %v908
      %1065 = vmatpush2.bf16.msra.mxu0 %v907
      %1066 = vmatprep.subr.bf16.mxu0 %v906
      %1067 = vmatpush2.bf16.msra.mxu0 %v905
      %1068 = vmatprep.subr.bf16.mxu0 %v904
      %1069 = vmatpush2.bf16.msra.mxu0 %v903
      %1070 = vmatprep.mubr.bf16.mxu0 %v1014
      %1071 = vmatmul.mubr.bf16.gmra.mxu0 %v1013
      %v1072 = vpop.f32.mrf.mxu0
      %v1073 = vadd.f32 %v964, %v1072
      %v1074 = vpop.f32.mrf.mxu0
      %v1075 = vadd.f32 %v964, %v1074
      %v1076 = vpop.f32.mrf.mxu0
      %v1077 = vadd.f32 %v969, %v1076
      %v1078 = vpop.f32.mrf.mxu0
      %v1079 = vadd.f32 %v969, %v1078
      %1080 = vmatprep.mubr.bf16.mxu0 %v1019
      %1081 = vmatmul.mubr.bf16.gmra.mxu0 %v1018
      %v1082 = vpop.f32.mrf.mxu0
      %v1083 = vadd.f32 %v974, %v1082
      %v1084 = vpop.f32.mrf.mxu0
      %v1085 = vadd.f32 %v974, %v1084
      %v1086 = vpop.f32.mrf.mxu0
      %v1087 = vadd.f32 %v979, %v1086
      %v1088 = vpop.f32.mrf.mxu0
      %v1089 = vadd.f32 %v979, %v1088
      %1090 = vdwg.mxu0
      %1091 = vmatprep.subr.bf16.mxu0 %v934
      %1092 = vmatpush1.bf16.msra.mxu0 %v933
      %1093 = vmatprep.subr.bf16.mxu0 %v932
      %1094 = vmatpush1.bf16.msra.mxu0 %v931
      %1095 = vmatprep.subr.bf16.mxu0 %v930
      %1096 = vmatpush1.bf16.msra.mxu0 %v929
      %1097 = vmatprep.subr.bf16.mxu0 %v928
      %1098 = vmatpush1.bf16.msra.mxu0 %v927
      %1099 = vmatprep.subr.bf16.mxu0 %v926
      %1100 = vmatpush1.bf16.msra.mxu0 %v925
      %1101 = vmatprep.subr.bf16.mxu0 %v924
      %1102 = vmatpush1.bf16.msra.mxu0 %v923
      %1103 = vmatprep.subr.bf16.mxu0 %v922
      %1104 = vmatpush1.bf16.msra.mxu0 %v921
      %1105 = vmatprep.subr.bf16.mxu0 %v920
      %1106 = vmatpush1.bf16.msra.mxu0 %v919
      %1107 = vmatprep.subr.bf16.mxu0 %v950
      %1108 = vmatpush2.bf16.msra.mxu0 %v949
      %1109 = vmatprep.subr.bf16.mxu0 %v948
      %1110 = vmatpush2.bf16.msra.mxu0 %v947
      %1111 = vmatprep.subr.bf16.mxu0 %v946
      %1112 = vmatpush2.bf16.msra.mxu0 %v945
      %1113 = vmatprep.subr.bf16.mxu0 %v944
      %1114 = vmatpush2.bf16.msra.mxu0 %v943
      %1115 = vmatprep.subr.bf16.mxu0 %v942
      %1116 = vmatpush2.bf16.msra.mxu0 %v941
      %1117 = vmatprep.subr.bf16.mxu0 %v940
      %1118 = vmatpush2.bf16.msra.mxu0 %v939
      %1119 = vmatprep.subr.bf16.mxu0 %v938
      %1120 = vmatpush2.bf16.msra.mxu0 %v937
      %1121 = vmatprep.subr.bf16.mxu0 %v936
      %1122 = vmatpush2.bf16.msra.mxu0 %v935
      %1123 = vmatprep.mubr.bf16.mxu0 %v1016
      %1124 = vmatmul.mubr.bf16.gmra.mxu0 %v1015
      %v1125 = vpop.f32.mrf.mxu0
      %v1126 = vadd.f32 %v1073, %v1125
      %v1127 = vpop.f32.mrf.mxu0
      %v1128 = vadd.f32 %v1075, %v1127
      %v1129 = vpop.f32.mrf.mxu0
      %v1130 = vadd.f32 %v1077, %v1129
      %v1131 = vpop.f32.mrf.mxu0
      %v1132 = vadd.f32 %v1079, %v1131
      %1133 = vmatprep.mubr.bf16.mxu0 %v1021
      %1134 = vmatmul.mubr.bf16.gmra.mxu0 %v1020
      %v1135 = vpop.f32.mrf.mxu0
      %v1136 = vadd.f32 %v1083, %v1135
      %v1137 = vpop.f32.mrf.mxu0
      %v1138 = vadd.f32 %v1085, %v1137
      %v1139 = vpop.f32.mrf.mxu0
      %v1140 = vadd.f32 %v1087, %v1139
      %v1141 = vpop.f32.mrf.mxu0
      %v1142 = vadd.f32 %v1089, %v1141
      %1143 = vdwg.mxu0
      %1144 = vmatprep.subr.bf16.mxu0 0
      %1145 = vmatpush1.bf16.msra.mxu0 0
      %1146 = vmatprep.subr.bf16.mxu0 0
      %1147 = vmatpush1.bf16.msra.mxu0 0
      %1148 = vmatprep.subr.bf16.mxu0 0
      %1149 = vmatpush1.bf16.msra.mxu0 0
      %1150 = vmatprep.subr.bf16.mxu0 0
      %1151 = vmatpush1.bf16.msra.mxu0 0
      %1152 = vmatprep.subr.bf16.mxu0 0
      %1153 = vmatpush1.bf16.msra.mxu0 0
      %1154 = vmatprep.subr.bf16.mxu0 %v956
      %1155 = vmatpush1.bf16.msra.mxu0 %v955
      %1156 = vmatprep.subr.bf16.mxu0 %v954
      %1157 = vmatpush1.bf16.msra.mxu0 %v953
      %1158 = vmatprep.subr.bf16.mxu0 %v952
      %1159 = vmatpush1.bf16.msra.mxu0 %v951
      %1160 = vmatprep.subr.bf16.mxu0 0
      %1161 = vmatpush2.bf16.msra.mxu0 0
      %1162 = vmatprep.subr.bf16.mxu0 0
      %1163 = vmatpush2.bf16.msra.mxu0 0
      %1164 = vmatprep.subr.bf16.mxu0 0
      %1165 = vmatpush2.bf16.msra.mxu0 0
      %1166 = vmatprep.subr.bf16.mxu0 0
      %1167 = vmatpush2.bf16.msra.mxu0 0
      %1168 = vmatprep.subr.bf16.mxu0 0
      %1169 = vmatpush2.bf16.msra.mxu0 0
      %1170 = vmatprep.subr.bf16.mxu0 0
      %1171 = vmatpush2.bf16.msra.mxu0 0
      %1172 = vmatprep.subr.bf16.mxu0 0
      %1173 = vmatpush2.bf16.msra.mxu0 0
      %1174 = vmatprep.subr.bf16.mxu0 0
      %1175 = vmatpush2.bf16.msra.mxu0 0
      %1176 = vmatprep.mubr.bf16.mxu0 0
      %1177 = vmatmul.mubr.bf16.gmra.mxu0 %v1033
      %v1178 = vpop.f32.mrf.mxu0
      %v1179 = vadd.f32 %v1126, %v1178
      %v1180 = vpop.f32.mrf.mxu0
      %v1181 = vadd.f32 %v1128, %v1180
      %v1182 = vpop.f32.mrf.mxu0
      %v1183 = vadd.f32 %v1130, %v1182
      %v1184 = vpop.f32.mrf.mxu0
      %v1185 = vadd.f32 %v1132, %v1184
      %1186 = vmatprep.mubr.bf16.mxu0 0
      %1187 = vmatmul.mubr.bf16.gmra.mxu0 %v1036
      %v1188 = vpop.f32.mrf.mxu0
      %v1189 = vadd.f32 %v1136, %v1188
      %v1190 = vpop.f32.mrf.mxu0
      %v1191 = vadd.f32 %v1138, %v1190
      %v1192 = vpop.f32.mrf.mxu0
      %v1193 = vadd.f32 %v1140, %v1192
      %v1194 = vpop.f32.mrf.mxu0
      %v1195 = vadd.f32 %v1142, %v1194
      %1196 = vdwg.mxu0
      %v1197 = vpack.c.bf16 %v1183, %v1179
      %v1198 = vpack.c.bf16 %v1185, %v1181
      %v1199 = vpack.c.bf16 %v1193, %v1189
      %v1200 = vpack.c.bf16 %v1195, %v1191
      %v1205 = vunpack.c.l.b16 %v1197
      %v1206 = vunpack.c.l.b16 %v1198
      %v1207 = vunpack.c.h.b16 %v1197
      %v1208 = vunpack.c.h.b16 %v1198
      %v1209 = vunpack.c.l.b16 %v1199
      %v1210 = vunpack.c.l.b16 %v1200
      %v1211 = vunpack.c.h.b16 %v1199
      %v1212 = vunpack.c.h.b16 %v1200
      %v1213 = vpack.c.b16 %v1206, %v1205
      %v1214 = vpack.c.b16 %v1208, %v1207
      %v1215 = vpack.c.b16 %v1210, %v1209
      %v1216 = vpack.c.b16 %v1212, %v1211
      %1221 = vst [vmem:[%s206] sm:$0xff] %v1213
      %1222 = vst [vmem:[%s206 + $0x8] sm:$0xff] %v1214
      %1223 = vst [vmem:[%s206 + $0x10] sm:$0xff] %v1215
      %1224 = vst [vmem:[%s206 + $0x18] sm:$0xff] %v1216
      %s1225 = smul.u32 2, %s19
      %p1226 = scmp.lt.s32.totalorder %s18, 1
      %s1227 = scalar_select %p1226, %s18, 1
      %p1228 = scmp.lt.s32.totalorder %s1225, 1
      %s1229 = scalar_select %p1228, %s1225, 1
      %s1230 = smul.addr %s1227, 8
      %s1231 = sadd.s32 %s1229, %s1230
      %s1232 = smul.addr %s1231, 4
      %s1233 = scalar_lea.vmem %s3, %s1232
      // Predicated region
      $region33: #{_lambda_.20} parent=31 // pred_check
        %p1234 = pneg %p116
      $region34: #{_lambda_.20} parent=31 // pred_check_branch
        %1236 = sbr.rel (%p1234) target = $region36
      $region35: #{_lambda_.20} parent=31 // pred_region
        %s1237 = smul.u32 2, %s19
      $region36: #{_lambda_.20} parent=31 // pred_fallthru
        _
    $region32: #{_lambda_.20} parent=5 // pred_fallthru
      _
    %p1238 = scmp.le.s32.totalorder 2, %s9
    // Predicated region
    $region37: #{_lambda_.20} parent=5 // pred_check
      %p1239 = pneg %p1238
    $region38: #{_lambda_.20} parent=5 // pred_check_branch
      %1241 = sbr.rel (%p1239) target = $region40
    $region39: #{_lambda_.20} parent=5 // pred_region
      %s1242 = ssub.s32 %s9, 2
      // Predicated region
      $region41: #{_lambda_.20} parent=39 // pred_check
        %p1243 = pneg %p122
      $region42: #{_lambda_.20} parent=39 // pred_check_branch
        %1245 = sbr.rel (%p1243) target = $region44
      $region43: #{_lambda_.20} parent=39 // pred_region
        %s1246 = smul.u32 2, %s21
        %p1247 = scmp.lt.s32.totalorder %s20, 1
        %s1248 = scalar_select %p1247, %s20, 1
        %p1249 = scmp.lt.s32.totalorder %s1246, 1
        %s1250 = scalar_select %p1249, %s1246, 1
        %s1251 = smul.addr %s1248, 8
        %s1252 = sadd.s32 %s1250, %s1251
        %s1253 = smul.addr %s1252, 4
        %s1254 = scalar_lea.vmem %s3, %s1253
      $region44: #{_lambda_.20} parent=39 // pred_fallthru
        _
    $region40: #{_lambda_.20} parent=5 // pred_fallthru
      _
  $region6: #{_lambda_.20} parent=0 // loop_footer
    %s13 = sadd.s32 1, %s9
  $region7: #{_lambda_.20} parent=0 // loop_footer_branch
    %8 = sbr.rel target = $region3
  $region8: #{_lambda_.20} parent=0 // loop_exit
    _

// kernel: _lambda_.26
$region0: #{_lambda_.26}
  #allocation0 [shape = 'u32[]', space=smem, size = 0x4, offset = 0x4, fixed_abs, tag = 'smem constant byte address 0x4 - core index']
  #allocation1 [shape = 'u32[144,128]{1,0:T(1,128)}', space=vmem, size = 0x12000, scoped, tag = 'internal scratch']
  %s0 = inlined_call_operand.vmem [shape: bf16[2,1,16,516], index: 0, kind: input, shape index: {}]
  %s1 = inlined_call_operand.vmem [shape: bf16[16,80], index: 1, kind: input, shape index: {}]
  %s2 = inlined_call_operand.vmem [shape: f32[16,1], index: 2, kind: input, shape index: {}]
  %s3 = inlined_call_operand.vmem [shape: bf16[2,16,512], index: 3, kind: output, shape index: {}]
  %s4 = sld [smem:[#allocation0]]
  $region45: #{_lambda_.26} parent=0
    _
  %s6 = ssub.s32 1, %s4
  %s7 = scalar_select 0, %s6, %s4
  loop: start=0, step=1, limit=4
  $region2: #{_lambda_.26} parent=0 // loop_pre_header
    _
  $region3: #{_lambda_.26} parent=0 // loop_header
    %s9 = sphi 0, %s13
    %p10 = scmp.ge.s32.totalorder %s9, 4
    %s16 = sphi 0, %s28
    %s17 = sphi 0, %s24
    %s18 = sphi 0, %s16
    %s19 = sphi 0, %s17
    %s20 = sphi 0, %s18
    %s21 = sphi 0, %s19
    %s33 = sphi 0, %s35
    %s36 = sphi 0, %s33
    %s37 = sphi 0, %s36
    %s53 = sphi 0, %s37
    %s57 = sphi 0, %s57
    %s59 = sphi 0, %s57
    %s60 = sphi 0, %s59
    %s74 = sphi 0, %s60
    %s78 = sphi 0, %s78
    %s80 = sphi 0, %s78
    %s81 = sphi 0, %s80
    %s95 = sphi 0, %s81
    %s103 = sphi 0, %s105
    %s106 = sphi 0, %s103
    %s107 = sphi 0, %s106
    %s123 = sphi 0, %s107
  $region4: #{_lambda_.26} parent=0 // loop_header_branch
    %12 = sbr.rel (%p10) target = $region8
  $region5: #{_lambda_.26} parent=0 // loop_body
    %s14 = ssub.s32 %s9, 1
    %s15 = ssub.s32 %s9, 2
    %s22 = sadd.s32 1, %s17
    %p23 = scmp.ge.s32.totalorder %s22, 1
    %s24 = scalar_select %p23, 0, %s22
    %s25 = sadd.s32 1, %s16
    %s26 = scalar_select %p23, %s25, %s16
    %p27 = scmp.ge.s32.totalorder %s26, 2
    %s28 = scalar_select %p27, 0, %s26
    %s29 = ssub.s32 %s16, %s28
    %s30 = ssub.s32 %s17, %s24
    %s31 = sor.u32 %s29, %s30
    %p32 = scmp.eq.s32.totalorder %s31, 0
    %s34 = sadd.s32 %s33, 1
    %s35 = scalar_select %p32, %s33, %s34
    %p38 = pneg %p32
    %p39 = scmp.eq.s32.totalorder %s9, 1
    %p40 = por %p38, %p39
    %p41 = scmp.ne.s32.totalorder %s33, %s36
    %p42 = scmp.eq.s32.totalorder %s9, 0
    %p43 = por %p41, %p42
    %p44 = scmp.ne.s32.totalorder %s33, %s36
    %p45 = scmp.eq.s32.totalorder %s14, 1
    %p46 = por %p44, %p45
    %p47 = scmp.ne.s32.totalorder %s36, %s37
    %p48 = scmp.eq.s32.totalorder %s14, 0
    %p49 = por %p47, %p48
    %p50 = scmp.ne.s32.totalorder %s36, %s37
    %p51 = scmp.eq.s32.totalorder %s15, 1
    %p52 = por %p50, %p51
    %p54 = scmp.ne.s32.totalorder %s37, %s53
    %p55 = scmp.eq.s32.totalorder %s15, 0
    %p56 = por %p54, %p55
    %s58 = sadd.s32 %s57, 1
    %p61 = scmp.eq.s32.totalorder %s9, 1
    %p62 = scmp.ne.s32.totalorder %s57, %s59
    %p63 = scmp.eq.s32.totalorder %s9, 0
    %p64 = por %p62, %p63
    %p65 = scmp.ne.s32.totalorder %s57, %s59
    %p66 = scmp.eq.s32.totalorder %s14, 1
    %p67 = por %p65, %p66
    %p68 = scmp.ne.s32.totalorder %s59, %s60
    %p69 = scmp.eq.s32.totalorder %s14, 0
    %p70 = por %p68, %p69
    %p71 = scmp.ne.s32.totalorder %s59, %s60
    %p72 = scmp.eq.s32.totalorder %s15, 1
    %p73 = por %p71, %p72
    %p75 = scmp.ne.s32.totalorder %s60, %s74
    %p76 = scmp.eq.s32.totalorder %s15, 0
    %p77 = por %p75, %p76
    %s79 = sadd.s32 %s78, 1
    %p82 = scmp.eq.s32.totalorder %s9, 1
    %p83 = scmp.ne.s32.totalorder %s78, %s80
    %p84 = scmp.eq.s32.totalorder %s9, 0
    %p85 = por %p83, %p84
    %p86 = scmp.ne.s32.totalorder %s78, %s80
    %p87 = scmp.eq.s32.totalorder %s14, 1
    %p88 = por %p86, %p87
    %p89 = scmp.ne.s32.totalorder %s80, %s81
    %p90 = scmp.eq.s32.totalorder %s14, 0
    %p91 = por %p89, %p90
    %p92 = scmp.ne.s32.totalorder %s80, %s81
    %p93 = scmp.eq.s32.totalorder %s15, 1
    %p94 = por %p92, %p93
    %p96 = scmp.ne.s32.totalorder %s81, %s95
    %p97 = scmp.eq.s32.totalorder %s15, 0
    %p98 = por %p96, %p97
    %s99 = ssub.s32 %s16, %s28
    %s100 = ssub.s32 %s17, %s24
    %s101 = sor.u32 %s99, %s100
    %p102 = scmp.eq.s32.totalorder %s101, 0
    %s104 = sadd.s32 %s103, 1
    %s105 = scalar_select %p102, %s103, %s104
    %p108 = pneg %p102
    %p109 = scmp.eq.s32.totalorder %s9, 1
    %p110 = por %p108, %p109
    %p111 = scmp.ne.s32.totalorder %s103, %s106
    %p112 = scmp.eq.s32.totalorder %s9, 0
    %p113 = por %p111, %p112
    %p114 = scmp.ne.s32.totalorder %s103, %s106
    %p115 = scmp.eq.s32.totalorder %s14, 1
    %p116 = por %p114, %p115
    %p117 = scmp.ne.s32.totalorder %s106, %s107
    %p118 = scmp.eq.s32.totalorder %s14, 0
    %p119 = por %p117, %p118
    %p120 = scmp.ne.s32.totalorder %s106, %s107
    %p121 = scmp.eq.s32.totalorder %s15, 1
    %p122 = por %p120, %p121
    %p124 = scmp.ne.s32.totalorder %s107, %s123
    %p125 = scmp.eq.s32.totalorder %s15, 0
    %p126 = por %p124, %p125
    %p127 = scmp.le.s32.totalorder 1, %s9
    %p128 = scmp.lt.s32.totalorder %s9, 3
    %p129 = pnand %p127, %p128
    %p130 = pneg %p129
    // Predicated region
    $region9: #{_lambda_.26} parent=5 // pred_check
      _
    $region10: #{_lambda_.26} parent=5 // pred_check_branch
      %132 = sbr.rel (%p129) target = $region12
    $region11: #{_lambda_.26} parent=5 // pred_region
      %s133 = ssub.s32 %s9, 1
      // Predicated region
      $region13: #{_lambda_.26} parent=11 // pred_check
        %p134 = pneg %p70
      $region14: #{_lambda_.26} parent=11 // pred_check_branch
        %136 = sbr.rel (%p134) target = $region16
      $region15: #{_lambda_.26} parent=11 // pred_region
        _
      $region16: #{_lambda_.26} parent=11 // pred_fallthru
        _
      // Predicated region
      $region17: #{_lambda_.26} parent=11 // pred_check
        %p137 = pneg %p91
      $region18: #{_lambda_.26} parent=11 // pred_check_branch
        %139 = sbr.rel (%p137) target = $region20
      $region19: #{_lambda_.26} parent=11 // pred_region
        _
      $region20: #{_lambda_.26} parent=11 // pred_fallthru
        _
    $region12: #{_lambda_.26} parent=5 // pred_fallthru
      _
    %p140 = scmp.lt.s32.totalorder %s9, 2
    // Predicated region
    $region21: #{_lambda_.26} parent=5 // pred_check
      %p141 = pneg %p140
    $region22: #{_lambda_.26} parent=5 // pred_check_branch
      %143 = sbr.rel (%p141) target = $region24
    $region23: #{_lambda_.26} parent=5 // pred_region
      // Predicated region
      $region25: #{_lambda_.26} parent=23 // pred_check
        %p144 = pneg %p43
      $region26: #{_lambda_.26} parent=23 // pred_check_branch
        %146 = sbr.rel (%p144) target = $region28
      $region27: #{_lambda_.26} parent=23 // pred_region
        %p147 = scmp.lt.s32.totalorder %s16, 1
        %s148 = scalar_select %p147, %s16, 1
        %p149 = scmp.lt.s32.totalorder %s17, 0
        %s150 = scalar_select %p149, %s17, 0
        %s151 = smul.addr %s150, 10
        %s152 = smul.addr %s148, 10
        %s153 = sadd.s32 %s151, %s152
        %s154 = smul.addr %s153, 4
        %s155 = scalar_lea.vmem %s0, %s154
      $region28: #{_lambda_.26} parent=23 // pred_fallthru
        _
    $region24: #{_lambda_.26} parent=5 // pred_fallthru
      _
    %p156 = scmp.le.s32.totalorder 1, %s9
    %p157 = scmp.lt.s32.totalorder %s9, 3
    %p158 = pnand %p156, %p157
    %p159 = pneg %p158
    // Predicated region
    $region29: #{_lambda_.26} parent=5 // pred_check
      _
    $region30: #{_lambda_.26} parent=5 // pred_check_branch
      %161 = sbr.rel (%p158) target = $region32
    $region31: #{_lambda_.26} parent=5 // pred_region
      %s162 = ssub.s32 %s9, 1
      %p163 = scmp.lt.s32.totalorder %s18, 1
      %s164 = scalar_select %p163, %s18, 1
      %p165 = scmp.lt.s32.totalorder %s19, 0
      %s166 = scalar_select %p165, %s19, 0
      %s167 = smul.addr %s166, 10
      %s168 = smul.addr %s164, 10
      %s169 = sadd.s32 %s167, %s168
      %s170 = smul.addr %s169, 4
      %s171 = scalar_lea.vmem %s0, %s170
      %p172 = pneg %p49
      %p173 = pneg %p46
      %p174 = pneg %p70
      %p175 = pneg %p67
      %p176 = pneg %p91
      %p177 = pneg %p88
      %p178 = pneg %p119
      %p179 = pneg %p116
      %s180 = smul.u32 4, %s19
      %p181 = scmp.lt.s32.totalorder %s18, 1
      %s182 = scalar_select %p181, %s18, 1
      %p183 = scmp.lt.s32.totalorder %s180, 3
      %s184 = scalar_select %p183, %s180, 3
      %s185 = smul.addr %s182, 8
      %s186 = sadd.s32 %s184, %s185
      %s187 = smul.addr %s186, 4
      %s188 = scalar_lea.vmem %s3, %s187
      %p189 = scmp.lt.s32.totalorder %s18, 1
      %s190 = scalar_select %p189, %s18, 1
      %p191 = scmp.lt.s32.totalorder %s19, 0
      %s192 = scalar_select %p191, %s19, 0
      %s193 = smul.addr %s192, 10
      %s194 = smul.addr %s190, 10
      %s195 = sadd.s32 %s193, %s194
      %s196 = smul.addr %s195, 4
      %s197 = scalar_lea.vmem %s0, %s196
      %s198 = smul.u32 4, %s19
      %p199 = scmp.lt.s32.totalorder %s18, 1
      %s200 = scalar_select %p199, %s18, 1
      %p201 = scmp.lt.s32.totalorder %s198, 3
      %s202 = scalar_select %p201, %s198, 3
      %s203 = smul.addr %s200, 8
      %s204 = sadd.s32 %s202, %s203
      %s205 = smul.addr %s204, 4
      %s206 = scalar_lea.vmem %s3, %s205
      %s207 = smul.u32 4, %s19
      %v209 = vld [vmem:[%s197] sm:$0xff]
      %v210 = vld [vmem:[%s197 + $0x8] sm:$0xff]
      %v211 = vld [vmem:[%s197 + $0x10] sm:$0xf]
      %v212 = vld [vmem:[%s197 + $0x14] sm:$0xff]
      %v213 = vld [vmem:[%s197 + $0x1c] sm:$0xff]
      %v214 = vld [vmem:[%s197 + $0x24] sm:$0xf]
      %v215 = vunpack.c.l.bf16 %v209
      %v216 = vunpack.c.h.bf16 %v209
      %v217 = vunpack.c.l.bf16 %v210
      %v218 = vunpack.c.h.bf16 %v210
      %v219 = vunpack.c.l.bf16 %v211
      %v220 = vunpack.c.l.bf16 %v212
      %v221 = vunpack.c.h.bf16 %v212
      %v222 = vunpack.c.l.bf16 %v213
      %v223 = vunpack.c.h.bf16 %v213
      %v224 = vunpack.c.l.bf16 %v214
      %vm225 = vcmp.ge.f32.partialorder %v215, 0.0
      %vm226 = vcmp.ge.f32.partialorder %v216, 0.0
      %vm227 = vcmp.ge.f32.partialorder %v217, 0.0
      %vm228 = vcmp.ge.f32.partialorder %v218, 0.0
      %vm229 = vcmp.ge.f32.partialorder %v219, 0.0
      %vm230 = vcmp.ge.f32.partialorder %v220, 0.0
      %vm231 = vcmp.ge.f32.partialorder %v221, 0.0
      %vm232 = vcmp.ge.f32.partialorder %v222, 0.0
      %vm233 = vcmp.ge.f32.partialorder %v223, 0.0
      %vm234 = vcmp.ge.f32.partialorder %v224, 0.0
      %v235 = vmul.f32 %v215, 0.01
      %v236 = vmul.f32 %v216, 0.01
      %v237 = vmul.f32 %v217, 0.01
      %v238 = vmul.f32 %v218, 0.01
      %v239 = vmul.f32 %v219, 0.01
      %v240 = vmul.f32 %v220, 0.01
      %v241 = vmul.f32 %v221, 0.01
      %v242 = vmul.f32 %v222, 0.01
      %v243 = vmul.f32 %v223, 0.01
      %v244 = vmul.f32 %v224, 0.01
      %v245 = vsel %vm225, %v215, %v235
      %v246 = vsel %vm226, %v216, %v236
      %v247 = vsel %vm227, %v217, %v237
      %v248 = vsel %vm228, %v218, %v238
      %v249 = vsel %vm229, %v219, %v239
      %v250 = vsel %vm230, %v220, %v240
      %v251 = vsel %vm231, %v221, %v241
      %v252 = vsel %vm232, %v222, %v242
      %v253 = vsel %vm233, %v223, %v243
      %v254 = vsel %vm234, %v224, %v244
      %265 = vrot.lane.b32.xlu0 %v245, 127
      %v266 = vpop.permute.xlu0 %265
      %267 = vrot.lane.b32.xlu0 %v246, 127
      %v268 = vpop.permute.xlu0 %267
      %269 = vrot.lane.b32.xlu0 %v247, 127
      %v270 = vpop.permute.xlu0 %269
      %271 = vrot.lane.b32.xlu0 %v248, 127
      %v272 = vpop.permute.xlu0 %271
      %273 = vrot.lane.b32.xlu0 %v249, 127
      %v274 = vpop.permute.xlu0 %273
      %275 = vrot.lane.b32.xlu0 %v250, 127
      %v276 = vpop.permute.xlu0 %275
      %277 = vrot.lane.b32.xlu0 %v251, 127
      %v278 = vpop.permute.xlu0 %277
      %279 = vrot.lane.b32.xlu0 %v252, 127
      %v280 = vpop.permute.xlu0 %279
      %281 = vrot.lane.b32.xlu0 %v253, 127
      %v282 = vpop.permute.xlu0 %281
      %283 = vrot.lane.b32.xlu0 %v254, 127
      %v284 = vpop.permute.xlu0 %283
      %vm285 = vcmask 1039360
      %v286 = vsel %vm285, %v266, %v268
      %v287 = vsel %vm285, %v268, %v270
      %v288 = vsel %vm285, %v270, %v272
      %v289 = vsel %vm285, %v272, %v274
      %v290 = vsel %vm285, %v276, %v278
      %v291 = vsel %vm285, %v278, %v280
      %v292 = vsel %vm285, %v280, %v282
      %v293 = vsel %vm285, %v282, %v284
      %302 = vrot.lane.b32.xlu0 %v245, 126
      %v303 = vpop.permute.xlu0 %302
      %304 = vrot.lane.b32.xlu0 %v246, 126
      %v305 = vpop.permute.xlu0 %304
      %306 = vrot.lane.b32.xlu0 %v247, 126
      %v307 = vpop.permute.xlu0 %306
      %308 = vrot.lane.b32.xlu0 %v248, 126
      %v309 = vpop.permute.xlu0 %308
      %310 = vrot.lane.b32.xlu0 %v249, 126
      %v311 = vpop.permute.xlu0 %310
      %312 = vrot.lane.b32.xlu0 %v250, 126
      %v313 = vpop.permute.xlu0 %312
      %314 = vrot.lane.b32.xlu0 %v251, 126
      %v315 = vpop.permute.xlu0 %314
      %316 = vrot.lane.b32.xlu0 %v252, 126
      %v317 = vpop.permute.xlu0 %316
      %318 = vrot.lane.b32.xlu0 %v253, 126
      %v319 = vpop.permute.xlu0 %318
      %320 = vrot.lane.b32.xlu0 %v254, 126
      %v321 = vpop.permute.xlu0 %320
      %vm322 = vcmask 1031168
      %v323 = vsel %vm322, %v303, %v305
      %v324 = vsel %vm322, %v305, %v307
      %v325 = vsel %vm322, %v307, %v309
      %v326 = vsel %vm322, %v309, %v311
      %v327 = vsel %vm322, %v313, %v315
      %v328 = vsel %vm322, %v315, %v317
      %v329 = vsel %vm322, %v317, %v319
      %v330 = vsel %vm322, %v319, %v321
      %339 = vrot.lane.b32.xlu0 %v245, 125
      %v340 = vpop.permute.xlu0 %339
      %341 = vrot.lane.b32.xlu0 %v246, 125
      %v342 = vpop.permute.xlu0 %341
      %343 = vrot.lane.b32.xlu0 %v247, 125
      %v344 = vpop.permute.xlu0 %343
      %345 = vrot.lane.b32.xlu0 %v248, 125
      %v346 = vpop.permute.xlu0 %345
      %347 = vrot.lane.b32.xlu0 %v249, 125
      %v348 = vpop.permute.xlu0 %347
      %349 = vrot.lane.b32.xlu0 %v250, 125
      %v350 = vpop.permute.xlu0 %349
      %351 = vrot.lane.b32.xlu0 %v251, 125
      %v352 = vpop.permute.xlu0 %351
      %353 = vrot.lane.b32.xlu0 %v252, 125
      %v354 = vpop.permute.xlu0 %353
      %355 = vrot.lane.b32.xlu0 %v253, 125
      %v356 = vpop.permute.xlu0 %355
      %357 = vrot.lane.b32.xlu0 %v254, 125
      %v358 = vpop.permute.xlu0 %357
      %vm359 = vcmask 1022976
      %v360 = vsel %vm359, %v340, %v342
      %v361 = vsel %vm359, %v342, %v344
      %v362 = vsel %vm359, %v344, %v346
      %v363 = vsel %vm359, %v346, %v348
      %v364 = vsel %vm359, %v350, %v352
      %v365 = vsel %vm359, %v352, %v354
      %v366 = vsel %vm359, %v354, %v356
      %v367 = vsel %vm359, %v356, %v358
      %376 = vrot.lane.b32.xlu0 %v245, 124
      %v377 = vpop.permute.xlu0 %376
      %378 = vrot.lane.b32.xlu0 %v246, 124
      %v379 = vpop.permute.xlu0 %378
      %380 = vrot.lane.b32.xlu0 %v247, 124
      %v381 = vpop.permute.xlu0 %380
      %382 = vrot.lane.b32.xlu0 %v248, 124
      %v383 = vpop.permute.xlu0 %382
      %384 = vrot.lane.b32.xlu0 %v249, 124
      %v385 = vpop.permute.xlu0 %384
      %386 = vrot.lane.b32.xlu0 %v250, 124
      %v387 = vpop.permute.xlu0 %386
      %388 = vrot.lane.b32.xlu0 %v251, 124
      %v389 = vpop.permute.xlu0 %388
      %390 = vrot.lane.b32.xlu0 %v252, 124
      %v391 = vpop.permute.xlu0 %390
      %392 = vrot.lane.b32.xlu0 %v253, 124
      %v393 = vpop.permute.xlu0 %392
      %394 = vrot.lane.b32.xlu0 %v254, 124
      %v395 = vpop.permute.xlu0 %394
      %vm396 = vcmask 1014784
      %v397 = vsel %vm396, %v377, %v379
      %v398 = vsel %vm396, %v379, %v381
      %v399 = vsel %vm396, %v381, %v383
      %v400 = vsel %vm396, %v383, %v385
      %v401 = vsel %vm396, %v387, %v389
      %v402 = vsel %vm396, %v389, %v391
      %v403 = vsel %vm396, %v391, %v393
      %v404 = vsel %vm396, %v393, %v395
      %v413 = vld [vmem:[%s1] sm:$0xf]
      %v414 = vld [vmem:[%s1 + $0x4] sm:$0xf]
      %v415 = vpack.c.bf16 %v250, %v245
      %v416 = vpack.c.bf16 %v251, %v246
      %v417 = vpack.c.bf16 %v252, %v247
      %v418 = vpack.c.bf16 %v253, %v248
      %v419 = vpack.c.bf16 %v290, %v286
      %v420 = vpack.c.bf16 %v291, %v287
      %v421 = vpack.c.bf16 %v292, %v288
      %v422 = vpack.c.bf16 %v293, %v289
      %v423 = vpack.c.bf16 %v327, %v323
      %v424 = vpack.c.bf16 %v328, %v324
      %v425 = vpack.c.bf16 %v329, %v325
      %v426 = vpack.c.bf16 %v330, %v326
      %v427 = vpack.c.bf16 %v364, %v360
      %v428 = vpack.c.bf16 %v365, %v361
      %v429 = vpack.c.bf16 %v366, %v362
      %v430 = vpack.c.bf16 %v367, %v363
      %v431 = vpack.c.bf16 %v401, %v397
      %v432 = vpack.c.bf16 %v402, %v398
      %v433 = vpack.c.bf16 %v403, %v399
      %v434 = vpack.c.bf16 %v404, %v400
      %v435 = vld [vmem:[%s2] sm:$0xff]
      %v436 = vld [vmem:[%s2 + $0x8] sm:$0xff]
      %438 = vset.pattern.permute.xlu0 0
      %439 = vperm.xlu0 %438, %v435
      %v440 = vpop.permute.xlu0 %439
      %443 = vset.pattern.permute.xlu0 0
      %444 = vperm.xlu0 %443, %v436
      %v445 = vpop.permute.xlu0 %444
      %v449 = vunpack.c.l.b16 %v413
      %v450 = vunpack.c.l.b16 %v414
      %v451 = vpack.c.b16 %v450, %v449
      %vm452 = vcmask 654336
      %v454 = vsel %vm452, %v451, 0
      %456 = vmatprep.subr.bf16.mxu0 0
      %457 = vmatpush1.bf16.msra.mxu0 0
      %458 = vmatprep.subr.bf16.mxu0 0
      %459 = vmatpush1.bf16.msra.mxu0 0
      %460 = vmatprep.subr.bf16.mxu0 0
      %461 = vmatpush1.bf16.msra.mxu0 0
      %462 = vmatprep.subr.bf16.mxu0 %v432
      %463 = vmatpush1.bf16.msra.mxu0 %v431
      %464 = vmatprep.subr.bf16.mxu0 %v428
      %465 = vmatpush1.bf16.msra.mxu0 %v427
      %466 = vmatprep.subr.bf16.mxu0 %v424
      %467 = vmatpush1.bf16.msra.mxu0 %v423
      %468 = vmatprep.subr.bf16.mxu0 %v420
      %469 = vmatpush1.bf16.msra.mxu0 %v419
      %470 = vmatprep.subr.bf16.mxu0 %v416
      %471 = vmatpush1.bf16.msra.mxu0 %v415
      %472 = vmatprep.subr.bf16.mxu0 0
      %473 = vmatpush2.bf16.msra.mxu0 0
      %474 = vmatprep.subr.bf16.mxu0 0
      %475 = vmatpush2.bf16.msra.mxu0 0
      %476 = vmatprep.subr.bf16.mxu0 0
      %477 = vmatpush2.bf16.msra.mxu0 0
      %478 = vmatprep.subr.bf16.mxu0 0
      %479 = vmatpush2.bf16.msra.mxu0 0
      %480 = vmatprep.subr.bf16.mxu0 0
      %481 = vmatpush2.bf16.msra.mxu0 0
      %482 = vmatprep.subr.bf16.mxu0 0
      %483 = vmatpush2.bf16.msra.mxu0 0
      %484 = vmatprep.subr.bf16.mxu0 0
      %485 = vmatpush2.bf16.msra.mxu0 0
      %486 = vmatprep.subr.bf16.mxu0 0
      %487 = vmatpush2.bf16.msra.mxu0 0
      %488 = vmatprep.mubr.bf16.mxu0 0
      %489 = vmatmul.mubr.bf16.gmra.mxu0 %v454
      %v490 = vpop.f32.mrf.mxu0
      %v491 = vadd.f32 %v440, %v490
      %v492 = vpop.f32.mrf.mxu0
      %v493 = vadd.f32 %v440, %v492
      %v494 = vpop.f32.mrf.mxu0
      %v495 = vadd.f32 %v445, %v494
      %v496 = vpop.f32.mrf.mxu0
      %v497 = vadd.f32 %v445, %v496
      %498 = vdwg.mxu0
      %499 = vmatprep.subr.bf16.mxu0 0
      %500 = vmatpush1.bf16.msra.mxu0 0
      %501 = vmatprep.subr.bf16.mxu0 0
      %502 = vmatpush1.bf16.msra.mxu0 0
      %503 = vmatprep.subr.bf16.mxu0 0
      %504 = vmatpush1.bf16.msra.mxu0 0
      %505 = vmatprep.subr.bf16.mxu0 %v434
      %506 = vmatpush1.bf16.msra.mxu0 %v433
      %507 = vmatprep.subr.bf16.mxu0 %v430
      %508 = vmatpush1.bf16.msra.mxu0 %v429
      %509 = vmatprep.subr.bf16.mxu0 %v426
      %510 = vmatpush1.bf16.msra.mxu0 %v425
      %511 = vmatprep.subr.bf16.mxu0 %v422
      %512 = vmatpush1.bf16.msra.mxu0 %v421
      %513 = vmatprep.subr.bf16.mxu0 %v418
      %514 = vmatpush1.bf16.msra.mxu0 %v417
      %515 = vmatprep.subr.bf16.mxu0 0
      %516 = vmatpush2.bf16.msra.mxu0 0
      %517 = vmatprep.subr.bf16.mxu0 0
      %518 = vmatpush2.bf16.msra.mxu0 0
      %519 = vmatprep.subr.bf16.mxu0 0
      %520 = vmatpush2.bf16.msra.mxu0 0
      %521 = vmatprep.subr.bf16.mxu0 0
      %522 = vmatpush2.bf16.msra.mxu0 0
      %523 = vmatprep.subr.bf16.mxu0 0
      %524 = vmatpush2.bf16.msra.mxu0 0
      %525 = vmatprep.subr.bf16.mxu0 0
      %526 = vmatpush2.bf16.msra.mxu0 0
      %527 = vmatprep.subr.bf16.mxu0 0
      %528 = vmatpush2.bf16.msra.mxu0 0
      %529 = vmatprep.subr.bf16.mxu0 0
      %530 = vmatpush2.bf16.msra.mxu0 0
      %531 = vmatprep.mubr.bf16.mxu0 0
      %532 = vmatmul.mubr.bf16.gmra.mxu0 %v454
      %v533 = vpop.f32.mrf.mxu0
      %v534 = vadd.f32 %v440, %v533
      %v535 = vpop.f32.mrf.mxu0
      %v536 = vadd.f32 %v440, %v535
      %v537 = vpop.f32.mrf.mxu0
      %v538 = vadd.f32 %v445, %v537
      %v539 = vpop.f32.mrf.mxu0
      %v540 = vadd.f32 %v445, %v539
      %541 = vdwg.mxu0
      %v542 = vpack.c.bf16 %v495, %v491
      %v543 = vpack.c.bf16 %v497, %v493
      %v544 = vpack.c.bf16 %v538, %v534
      %v545 = vpack.c.bf16 %v540, %v536
      %v550 = vunpack.c.l.b16 %v542
      %v551 = vunpack.c.l.b16 %v543
      %v552 = vunpack.c.l.b16 %v544
      %v553 = vunpack.c.l.b16 %v545
      %v554 = vunpack.c.h.b16 %v542
      %v555 = vunpack.c.h.b16 %v543
      %v556 = vunpack.c.h.b16 %v544
      %v557 = vunpack.c.h.b16 %v545
      %v558 = vpack.c.b16 %v551, %v550
      %v559 = vpack.c.b16 %v553, %v552
      %v560 = vpack.c.b16 %v555, %v554
      %v561 = vpack.c.b16 %v557, %v556
      %566 = vst [vmem:[%s206] sm:$0xff] %v558
      %567 = vst [vmem:[%s206 + $0x8] sm:$0xff] %v559
      %568 = vst [vmem:[%s206 + $0x10] sm:$0xff] %v560
      %569 = vst [vmem:[%s206 + $0x18] sm:$0xff] %v561
      %s570 = smul.u32 4, %s19
      %p571 = scmp.lt.s32.totalorder %s18, 1
      %s572 = scalar_select %p571, %s18, 1
      %p573 = scmp.lt.s32.totalorder %s570, 3
      %s574 = scalar_select %p573, %s570, 3
      %s575 = smul.addr %s572, 8
      %s576 = sadd.s32 %s574, %s575
      %s577 = smul.addr %s576, 4
      %s578 = scalar_lea.vmem %s3, %s577
      // Predicated region
      $region33: #{_lambda_.26} parent=31 // pred_check
        %p579 = pneg %p116
      $region34: #{_lambda_.26} parent=31 // pred_check_branch
        %581 = sbr.rel (%p579) target = $region36
      $region35: #{_lambda_.26} parent=31 // pred_region
        %s582 = smul.u32 4, %s19
      $region36: #{_lambda_.26} parent=31 // pred_fallthru
        _
    $region32: #{_lambda_.26} parent=5 // pred_fallthru
      _
    %p583 = scmp.le.s32.totalorder 2, %s9
    // Predicated region
    $region37: #{_lambda_.26} parent=5 // pred_check
      %p584 = pneg %p583
    $region38: #{_lambda_.26} parent=5 // pred_check_branch
      %586 = sbr.rel (%p584) target = $region40
    $region39: #{_lambda_.26} parent=5 // pred_region
      %s587 = ssub.s32 %s9, 2
      // Predicated region
      $region41: #{_lambda_.26} parent=39 // pred_check
        %p588 = pneg %p122
      $region42: #{_lambda_.26} parent=39 // pred_check_branch
        %590 = sbr.rel (%p588) target = $region44
      $region43: #{_lambda_.26} parent=39 // pred_region
        %s591 = smul.u32 4, %s21
        %p592 = scmp.lt.s32.totalorder %s20, 1
        %s593 = scalar_select %p592, %s20, 1
        %p594 = scmp.lt.s32.totalorder %s591, 3
        %s595 = scalar_select %p594, %s591, 3
        %s596 = smul.addr %s593, 8
        %s597 = sadd.s32 %s595, %s596
        %s598 = smul.addr %s597, 4
        %s599 = scalar_lea.vmem %s3, %s598
      $region44: #{_lambda_.26} parent=39 // pred_fallthru
        _
    $region40: #{_lambda_.26} parent=5 // pred_fallthru
      _
  $region6: #{_lambda_.26} parent=0 // loop_footer
    %s13 = sadd.s32 1, %s9
  $region7: #{_lambda_.26} parent=0 // loop_footer_branch
    %8 = sbr.rel target = $region3
  $region8: #{_lambda_.26} parent=0 // loop_exit
    _

// kernel: _lambda_.27
$region0: #{_lambda_.27}
  #allocation0 [shape = 'u32[]', space=smem, size = 0x4, offset = 0x4, fixed_abs, tag = 'smem constant byte address 0x4 - core index']
  #allocation1 [shape = 'u32[144,128]{1,0:T(1,128)}', space=vmem, size = 0x12000, scoped, tag = 'internal scratch']
  %s0 = inlined_call_operand.vmem [shape: bf16[2,1,16,516], index: 0, kind: input, shape index: {}]
  %s1 = inlined_call_operand.vmem [shape: bf16[16,80], index: 1, kind: input, shape index: {}]
  %s2 = inlined_call_operand.vmem [shape: f32[16,1], index: 2, kind: input, shape index: {}]
  %s3 = inlined_call_operand.vmem [shape: bf16[2,16,512], index: 3, kind: input, shape index: {}]
  %s4 = inlined_call_operand.vmem [shape: bf16[2,16,512], index: 4, kind: output, shape index: {}]
  %s5 = sld [smem:[#allocation0]]
  $region49: #{_lambda_.27} parent=0
    _
  %s7 = ssub.s32 1, %s5
  %s8 = scalar_select 0, %s7, %s5
  loop: start=0, step=1, limit=4
  $region2: #{_lambda_.27} parent=0 // loop_pre_header
    _
  $region3: #{_lambda_.27} parent=0 // loop_header
    %s10 = sphi 0, %s14
    %p11 = scmp.ge.s32.totalorder %s10, 4
    %s17 = sphi 0, %s29
    %s18 = sphi 0, %s25
    %s19 = sphi 0, %s17
    %s20 = sphi 0, %s18
    %s21 = sphi 0, %s19
    %s22 = sphi 0, %s20
    %s34 = sphi 0, %s36
    %s37 = sphi 0, %s34
    %s38 = sphi 0, %s37
    %s54 = sphi 0, %s38
    %s58 = sphi 0, %s58
    %s60 = sphi 0, %s58
    %s61 = sphi 0, %s60
    %s75 = sphi 0, %s61
    %s79 = sphi 0, %s79
    %s81 = sphi 0, %s79
    %s82 = sphi 0, %s81
    %s96 = sphi 0, %s82
    %s104 = sphi 0, %s106
    %s107 = sphi 0, %s104
    %s108 = sphi 0, %s107
    %s124 = sphi 0, %s108
    %s132 = sphi 0, %s134
    %s135 = sphi 0, %s132
    %s136 = sphi 0, %s135
    %s152 = sphi 0, %s136
  $region4: #{_lambda_.27} parent=0 // loop_header_branch
    %13 = sbr.rel (%p11) target = $region8
  $region5: #{_lambda_.27} parent=0 // loop_body
    %s15 = ssub.s32 %s10, 1
    %s16 = ssub.s32 %s10, 2
    %s23 = sadd.s32 1, %s18
    %p24 = scmp.ge.s32.totalorder %s23, 1
    %s25 = scalar_select %p24, 0, %s23
    %s26 = sadd.s32 1, %s17
    %s27 = scalar_select %p24, %s26, %s17
    %p28 = scmp.ge.s32.totalorder %s27, 2
    %s29 = scalar_select %p28, 0, %s27
    %s30 = ssub.s32 %s17, %s29
    %s31 = ssub.s32 %s18, %s25
    %s32 = sor.u32 %s30, %s31
    %p33 = scmp.eq.s32.totalorder %s32, 0
    %s35 = sadd.s32 %s34, 1
    %s36 = scalar_select %p33, %s34, %s35
    %p39 = pneg %p33
    %p40 = scmp.eq.s32.totalorder %s10, 1
    %p41 = por %p39, %p40
    %p42 = scmp.ne.s32.totalorder %s34, %s37
    %p43 = scmp.eq.s32.totalorder %s10, 0
    %p44 = por %p42, %p43
    %p45 = scmp.ne.s32.totalorder %s34, %s37
    %p46 = scmp.eq.s32.totalorder %s15, 1
    %p47 = por %p45, %p46
    %p48 = scmp.ne.s32.totalorder %s37, %s38
    %p49 = scmp.eq.s32.totalorder %s15, 0
    %p50 = por %p48, %p49
    %p51 = scmp.ne.s32.totalorder %s37, %s38
    %p52 = scmp.eq.s32.totalorder %s16, 1
    %p53 = por %p51, %p52
    %p55 = scmp.ne.s32.totalorder %s38, %s54
    %p56 = scmp.eq.s32.totalorder %s16, 0
    %p57 = por %p55, %p56
    %s59 = sadd.s32 %s58, 1
    %p62 = scmp.eq.s32.totalorder %s10, 1
    %p63 = scmp.ne.s32.totalorder %s58, %s60
    %p64 = scmp.eq.s32.totalorder %s10, 0
    %p65 = por %p63, %p64
    %p66 = scmp.ne.s32.totalorder %s58, %s60
    %p67 = scmp.eq.s32.totalorder %s15, 1
    %p68 = por %p66, %p67
    %p69 = scmp.ne.s32.totalorder %s60, %s61
    %p70 = scmp.eq.s32.totalorder %s15, 0
    %p71 = por %p69, %p70
    %p72 = scmp.ne.s32.totalorder %s60, %s61
    %p73 = scmp.eq.s32.totalorder %s16, 1
    %p74 = por %p72, %p73
    %p76 = scmp.ne.s32.totalorder %s61, %s75
    %p77 = scmp.eq.s32.totalorder %s16, 0
    %p78 = por %p76, %p77
    %s80 = sadd.s32 %s79, 1
    %p83 = scmp.eq.s32.totalorder %s10, 1
    %p84 = scmp.ne.s32.totalorder %s79, %s81
    %p85 = scmp.eq.s32.totalorder %s10, 0
    %p86 = por %p84, %p85
    %p87 = scmp.ne.s32.totalorder %s79, %s81
    %p88 = scmp.eq.s32.totalorder %s15, 1
    %p89 = por %p87, %p88
    %p90 = scmp.ne.s32.totalorder %s81, %s82
    %p91 = scmp.eq.s32.totalorder %s15, 0
    %p92 = por %p90, %p91
    %p93 = scmp.ne.s32.totalorder %s81, %s82
    %p94 = scmp.eq.s32.totalorder %s16, 1
    %p95 = por %p93, %p94
    %p97 = scmp.ne.s32.totalorder %s82, %s96
    %p98 = scmp.eq.s32.totalorder %s16, 0
    %p99 = por %p97, %p98
    %s100 = ssub.s32 %s17, %s29
    %s101 = ssub.s32 %s18, %s25
    %s102 = sor.u32 %s100, %s101
    %p103 = scmp.eq.s32.totalorder %s102, 0
    %s105 = sadd.s32 %s104, 1
    %s106 = scalar_select %p103, %s104, %s105
    %p109 = pneg %p103
    %p110 = scmp.eq.s32.totalorder %s10, 1
    %p111 = por %p109, %p110
    %p112 = scmp.ne.s32.totalorder %s104, %s107
    %p113 = scmp.eq.s32.totalorder %s10, 0
    %p114 = por %p112, %p113
    %p115 = scmp.ne.s32.totalorder %s104, %s107
    %p116 = scmp.eq.s32.totalorder %s15, 1
    %p117 = por %p115, %p116
    %p118 = scmp.ne.s32.totalorder %s107, %s108
    %p119 = scmp.eq.s32.totalorder %s15, 0
    %p120 = por %p118, %p119
    %p121 = scmp.ne.s32.totalorder %s107, %s108
    %p122 = scmp.eq.s32.totalorder %s16, 1
    %p123 = por %p121, %p122
    %p125 = scmp.ne.s32.totalorder %s108, %s124
    %p126 = scmp.eq.s32.totalorder %s16, 0
    %p127 = por %p125, %p126
    %s128 = ssub.s32 %s17, %s29
    %s129 = ssub.s32 %s18, %s25
    %s130 = sor.u32 %s128, %s129
    %p131 = scmp.eq.s32.totalorder %s130, 0
    %s133 = sadd.s32 %s132, 1
    %s134 = scalar_select %p131, %s132, %s133
    %p137 = pneg %p131
    %p138 = scmp.eq.s32.totalorder %s10, 1
    %p139 = por %p137, %p138
    %p140 = scmp.ne.s32.totalorder %s132, %s135
    %p141 = scmp.eq.s32.totalorder %s10, 0
    %p142 = por %p140, %p141
    %p143 = scmp.ne.s32.totalorder %s132, %s135
    %p144 = scmp.eq.s32.totalorder %s15, 1
    %p145 = por %p143, %p144
    %p146 = scmp.ne.s32.totalorder %s135, %s136
    %p147 = scmp.eq.s32.totalorder %s15, 0
    %p148 = por %p146, %p147
    %p149 = scmp.ne.s32.totalorder %s135, %s136
    %p150 = scmp.eq.s32.totalorder %s16, 1
    %p151 = por %p149, %p150
    %p153 = scmp.ne.s32.totalorder %s136, %s152
    %p154 = scmp.eq.s32.totalorder %s16, 0
    %p155 = por %p153, %p154
    %p156 = scmp.le.s32.totalorder 1, %s10
    %p157 = scmp.lt.s32.totalorder %s10, 3
    %p158 = pnand %p156, %p157
    %p159 = pneg %p158
    // Predicated region
    $region9: #{_lambda_.27} parent=5 // pred_check
      _
    $region10: #{_lambda_.27} parent=5 // pred_check_branch
      %161 = sbr.rel (%p158) target = $region12
    $region11: #{_lambda_.27} parent=5 // pred_region
      %s162 = ssub.s32 %s10, 1
      // Predicated region
      $region13: #{_lambda_.27} parent=11 // pred_check
        %p163 = pneg %p71
      $region14: #{_lambda_.27} parent=11 // pred_check_branch
        %165 = sbr.rel (%p163) target = $region16
      $region15: #{_lambda_.27} parent=11 // pred_region
        _
      $region16: #{_lambda_.27} parent=11 // pred_fallthru
        _
      // Predicated region
      $region17: #{_lambda_.27} parent=11 // pred_check
        %p166 = pneg %p92
      $region18: #{_lambda_.27} parent=11 // pred_check_branch
        %168 = sbr.rel (%p166) target = $region20
      $region19: #{_lambda_.27} parent=11 // pred_region
        _
      $region20: #{_lambda_.27} parent=11 // pred_fallthru
        _
    $region12: #{_lambda_.27} parent=5 // pred_fallthru
      _
    %p169 = scmp.lt.s32.totalorder %s10, 2
    // Predicated region
    $region21: #{_lambda_.27} parent=5 // pred_check
      %p170 = pneg %p169
    $region22: #{_lambda_.27} parent=5 // pred_check_branch
      %172 = sbr.rel (%p170) target = $region24
    $region23: #{_lambda_.27} parent=5 // pred_region
      // Predicated region
      $region25: #{_lambda_.27} parent=23 // pred_check
        %p173 = pneg %p44
      $region26: #{_lambda_.27} parent=23 // pred_check_branch
        %175 = sbr.rel (%p173) target = $region28
      $region27: #{_lambda_.27} parent=23 // pred_region
        %p176 = scmp.lt.s32.totalorder %s17, 1
        %s177 = scalar_select %p176, %s17, 1
        %p178 = scmp.lt.s32.totalorder %s18, 0
        %s179 = scalar_select %p178, %s18, 0
        %s180 = smul.addr %s179, 10
        %s181 = smul.addr %s177, 10
        %s182 = sadd.s32 %s180, %s181
        %s183 = smul.addr %s182, 4
        %s184 = scalar_lea.vmem %s0, %s183
      $region28: #{_lambda_.27} parent=23 // pred_fallthru
        _
      // Predicated region
      $region29: #{_lambda_.27} parent=23 // pred_check
        %p185 = pneg %p114
      $region30: #{_lambda_.27} parent=23 // pred_check_branch
        %187 = sbr.rel (%p185) target = $region32
      $region31: #{_lambda_.27} parent=23 // pred_region
        %s188 = smul.u32 4, %s18
        %p189 = scmp.lt.s32.totalorder %s17, 1
        %s190 = scalar_select %p189, %s17, 1
        %p191 = scmp.lt.s32.totalorder %s188, 3
        %s192 = scalar_select %p191, %s188, 3
        %s193 = smul.addr %s190, 8
        %s194 = sadd.s32 %s192, %s193
        %s195 = smul.addr %s194, 4
        %s196 = scalar_lea.vmem %s3, %s195
        %s197 = smul.u32 4, %s18
      $region32: #{_lambda_.27} parent=23 // pred_fallthru
        _
    $region24: #{_lambda_.27} parent=5 // pred_fallthru
      _
    %p198 = scmp.le.s32.totalorder 1, %s10
    %p199 = scmp.lt.s32.totalorder %s10, 3
    %p200 = pnand %p198, %p199
    %p201 = pneg %p200
    // Predicated region
    $region33: #{_lambda_.27} parent=5 // pred_check
      _
    $region34: #{_lambda_.27} parent=5 // pred_check_branch
      %203 = sbr.rel (%p200) target = $region36
    $region35: #{_lambda_.27} parent=5 // pred_region
      %s204 = ssub.s32 %s10, 1
      %p205 = scmp.lt.s32.totalorder %s19, 1
      %s206 = scalar_select %p205, %s19, 1
      %p207 = scmp.lt.s32.totalorder %s20, 0
      %s208 = scalar_select %p207, %s20, 0
      %s209 = smul.addr %s208, 10
      %s210 = smul.addr %s206, 10
      %s211 = sadd.s32 %s209, %s210
      %s212 = smul.addr %s211, 4
      %s213 = scalar_lea.vmem %s0, %s212
      %p214 = pneg %p50
      %p215 = pneg %p47
      %p216 = pneg %p71
      %p217 = pneg %p68
      %p218 = pneg %p92
      %p219 = pneg %p89
      %s220 = smul.u32 4, %s20
      %p221 = scmp.lt.s32.totalorder %s19, 1
      %s222 = scalar_select %p221, %s19, 1
      %p223 = scmp.lt.s32.totalorder %s220, 3
      %s224 = scalar_select %p223, %s220, 3
      %s225 = smul.addr %s222, 8
      %s226 = sadd.s32 %s224, %s225
      %s227 = smul.addr %s226, 4
      %s228 = scalar_lea.vmem %s3, %s227
      %p229 = pneg %p120
      %p230 = pneg %p117
      %p231 = pneg %p148
      %p232 = pneg %p145
      %s233 = smul.u32 4, %s20
      %p234 = scmp.lt.s32.totalorder %s19, 1
      %s235 = scalar_select %p234, %s19, 1
      %p236 = scmp.lt.s32.totalorder %s233, 3
      %s237 = scalar_select %p236, %s233, 3
      %s238 = smul.addr %s235, 8
      %s239 = sadd.s32 %s237, %s238
      %s240 = smul.addr %s239, 4
      %s241 = scalar_lea.vmem %s4, %s240
      %p242 = scmp.lt.s32.totalorder %s19, 1
      %s243 = scalar_select %p242, %s19, 1
      %p244 = scmp.lt.s32.totalorder %s20, 0
      %s245 = scalar_select %p244, %s20, 0
      %s246 = smul.addr %s245, 10
      %s247 = smul.addr %s243, 10
      %s248 = sadd.s32 %s246, %s247
      %s249 = smul.addr %s248, 4
      %s250 = scalar_lea.vmem %s0, %s249
      %s251 = smul.u32 4, %s20
      %p252 = scmp.lt.s32.totalorder %s19, 1
      %s253 = scalar_select %p252, %s19, 1
      %p254 = scmp.lt.s32.totalorder %s251, 3
      %s255 = scalar_select %p254, %s251, 3
      %s256 = smul.addr %s253, 8
      %s257 = sadd.s32 %s255, %s256
      %s258 = smul.addr %s257, 4
      %s259 = scalar_lea.vmem %s3, %s258
      %s260 = smul.u32 4, %s20
      %s261 = smul.u32 4, %s20
      %p262 = scmp.lt.s32.totalorder %s19, 1
      %s263 = scalar_select %p262, %s19, 1
      %p264 = scmp.lt.s32.totalorder %s261, 3
      %s265 = scalar_select %p264, %s261, 3
      %s266 = smul.addr %s263, 8
      %s267 = sadd.s32 %s265, %s266
      %s268 = smul.addr %s267, 4
      %s269 = scalar_lea.vmem %s4, %s268
      %s270 = smul.u32 4, %s20
      %v272 = vld [vmem:[%s250] sm:$0xff]
      %v273 = vld [vmem:[%s250 + $0x8] sm:$0xff]
      %v274 = vld [vmem:[%s250 + $0x10] sm:$0xf]
      %v275 = vld [vmem:[%s250 + $0x14] sm:$0xff]
      %v276 = vld [vmem:[%s250 + $0x1c] sm:$0xff]
      %v277 = vld [vmem:[%s250 + $0x24] sm:$0xf]
      %v278 = vunpack.c.l.bf16 %v272
      %v279 = vunpack.c.h.bf16 %v272
      %v280 = vunpack.c.l.bf16 %v273
      %v281 = vunpack.c.h.bf16 %v273
      %v282 = vunpack.c.l.bf16 %v274
      %v283 = vunpack.c.l.bf16 %v275
      %v284 = vunpack.c.h.bf16 %v275
      %v285 = vunpack.c.l.bf16 %v276
      %v286 = vunpack.c.h.bf16 %v276
      %v287 = vunpack.c.l.bf16 %v277
      %vm288 = vcmp.ge.f32.partialorder %v278, 0.0
      %vm289 = vcmp.ge.f32.partialorder %v279, 0.0
      %vm290 = vcmp.ge.f32.partialorder %v280, 0.0
      %vm291 = vcmp.ge.f32.partialorder %v281, 0.0
      %vm292 = vcmp.ge.f32.partialorder %v282, 0.0
      %vm293 = vcmp.ge.f32.partialorder %v283, 0.0
      %vm294 = vcmp.ge.f32.partialorder %v284, 0.0
      %vm295 = vcmp.ge.f32.partialorder %v285, 0.0
      %vm296 = vcmp.ge.f32.partialorder %v286, 0.0
      %vm297 = vcmp.ge.f32.partialorder %v287, 0.0
      %v298 = vmul.f32 %v278, 0.01
      %v299 = vmul.f32 %v279, 0.01
      %v300 = vmul.f32 %v280, 0.01
      %v301 = vmul.f32 %v281, 0.01
      %v302 = vmul.f32 %v282, 0.01
      %v303 = vmul.f32 %v283, 0.01
      %v304 = vmul.f32 %v284, 0.01
      %v305 = vmul.f32 %v285, 0.01
      %v306 = vmul.f32 %v286, 0.01
      %v307 = vmul.f32 %v287, 0.01
      %v308 = vsel %vm288, %v278, %v298
      %v309 = vsel %vm289, %v279, %v299
      %v310 = vsel %vm290, %v280, %v300
      %v311 = vsel %vm291, %v281, %v301
      %v312 = vsel %vm292, %v282, %v302
      %v313 = vsel %vm293, %v283, %v303
      %v314 = vsel %vm294, %v284, %v304
      %v315 = vsel %vm295, %v285, %v305
      %v316 = vsel %vm296, %v286, %v306
      %v317 = vsel %vm297, %v287, %v307
      %328 = vrot.lane.b32.xlu0 %v308, 127
      %v329 = vpop.permute.xlu0 %328
      %330 = vrot.lane.b32.xlu0 %v309, 127
      %v331 = vpop.permute.xlu0 %330
      %332 = vrot.lane.b32.xlu0 %v310, 127
      %v333 = vpop.permute.xlu0 %332
      %334 = vrot.lane.b32.xlu0 %v311, 127
      %v335 = vpop.permute.xlu0 %334
      %336 = vrot.lane.b32.xlu0 %v312, 127
      %v337 = vpop.permute.xlu0 %336
      %338 = vrot.lane.b32.xlu0 %v313, 127
      %v339 = vpop.permute.xlu0 %338
      %340 = vrot.lane.b32.xlu0 %v314, 127
      %v341 = vpop.permute.xlu0 %340
      %342 = vrot.lane.b32.xlu0 %v315, 127
      %v343 = vpop.permute.xlu0 %342
      %344 = vrot.lane.b32.xlu0 %v316, 127
      %v345 = vpop.permute.xlu0 %344
      %346 = vrot.lane.b32.xlu0 %v317, 127
      %v347 = vpop.permute.xlu0 %346
      %vm348 = vcmask 1039360
      %v349 = vsel %vm348, %v329, %v331
      %v350 = vsel %vm348, %v331, %v333
      %v351 = vsel %vm348, %v333, %v335
      %v352 = vsel %vm348, %v335, %v337
      %v353 = vsel %vm348, %v339, %v341
      %v354 = vsel %vm348, %v341, %v343
      %v355 = vsel %vm348, %v343, %v345
      %v356 = vsel %vm348, %v345, %v347
      %365 = vrot.lane.b32.xlu0 %v308, 126
      %v366 = vpop.permute.xlu0 %365
      %367 = vrot.lane.b32.xlu0 %v309, 126
      %v368 = vpop.permute.xlu0 %367
      %369 = vrot.lane.b32.xlu0 %v310, 126
      %v370 = vpop.permute.xlu0 %369
      %371 = vrot.lane.b32.xlu0 %v311, 126
      %v372 = vpop.permute.xlu0 %371
      %373 = vrot.lane.b32.xlu0 %v312, 126
      %v374 = vpop.permute.xlu0 %373
      %375 = vrot.lane.b32.xlu0 %v313, 126
      %v376 = vpop.permute.xlu0 %375
      %377 = vrot.lane.b32.xlu0 %v314, 126
      %v378 = vpop.permute.xlu0 %377
      %379 = vrot.lane.b32.xlu0 %v315, 126
      %v380 = vpop.permute.xlu0 %379
      %381 = vrot.lane.b32.xlu0 %v316, 126
      %v382 = vpop.permute.xlu0 %381
      %383 = vrot.lane.b32.xlu0 %v317, 126
      %v384 = vpop.permute.xlu0 %383
      %vm385 = vcmask 1031168
      %v386 = vsel %vm385, %v366, %v368
      %v387 = vsel %vm385, %v368, %v370
      %v388 = vsel %vm385, %v370, %v372
      %v389 = vsel %vm385, %v372, %v374
      %v390 = vsel %vm385, %v376, %v378
      %v391 = vsel %vm385, %v378, %v380
      %v392 = vsel %vm385, %v380, %v382
      %v393 = vsel %vm385, %v382, %v384
      %402 = vrot.lane.b32.xlu0 %v308, 125
      %v403 = vpop.permute.xlu0 %402
      %404 = vrot.lane.b32.xlu0 %v309, 125
      %v405 = vpop.permute.xlu0 %404
      %406 = vrot.lane.b32.xlu0 %v310, 125
      %v407 = vpop.permute.xlu0 %406
      %408 = vrot.lane.b32.xlu0 %v311, 125
      %v409 = vpop.permute.xlu0 %408
      %410 = vrot.lane.b32.xlu0 %v312, 125
      %v411 = vpop.permute.xlu0 %410
      %412 = vrot.lane.b32.xlu0 %v313, 125
      %v413 = vpop.permute.xlu0 %412
      %414 = vrot.lane.b32.xlu0 %v314, 125
      %v415 = vpop.permute.xlu0 %414
      %416 = vrot.lane.b32.xlu0 %v315, 125
      %v417 = vpop.permute.xlu0 %416
      %418 = vrot.lane.b32.xlu0 %v316, 125
      %v419 = vpop.permute.xlu0 %418
      %420 = vrot.lane.b32.xlu0 %v317, 125
      %v421 = vpop.permute.xlu0 %420
      %vm422 = vcmask 1022976
      %v423 = vsel %vm422, %v403, %v405
      %v424 = vsel %vm422, %v405, %v407
      %v425 = vsel %vm422, %v407, %v409
      %v426 = vsel %vm422, %v409, %v411
      %v427 = vsel %vm422, %v413, %v415
      %v428 = vsel %vm422, %v415, %v417
      %v429 = vsel %vm422, %v417, %v419
      %v430 = vsel %vm422, %v419, %v421
      %439 = vrot.lane.b32.xlu0 %v308, 124
      %v440 = vpop.permute.xlu0 %439
      %441 = vrot.lane.b32.xlu0 %v309, 124
      %v442 = vpop.permute.xlu0 %441
      %443 = vrot.lane.b32.xlu0 %v310, 124
      %v444 = vpop.permute.xlu0 %443
      %445 = vrot.lane.b32.xlu0 %v311, 124
      %v446 = vpop.permute.xlu0 %445
      %447 = vrot.lane.b32.xlu0 %v312, 124
      %v448 = vpop.permute.xlu0 %447
      %449 = vrot.lane.b32.xlu0 %v313, 124
      %v450 = vpop.permute.xlu0 %449
      %451 = vrot.lane.b32.xlu0 %v314, 124
      %v452 = vpop.permute.xlu0 %451
      %453 = vrot.lane.b32.xlu0 %v315, 124
      %v454 = vpop.permute.xlu0 %453
      %455 = vrot.lane.b32.xlu0 %v316, 124
      %v456 = vpop.permute.xlu0 %455
      %457 = vrot.lane.b32.xlu0 %v317, 124
      %v458 = vpop.permute.xlu0 %457
      %vm459 = vcmask 1014784
      %v460 = vsel %vm459, %v440, %v442
      %v461 = vsel %vm459, %v442, %v444
      %v462 = vsel %vm459, %v444, %v446
      %v463 = vsel %vm459, %v446, %v448
      %v464 = vsel %vm459, %v450, %v452
      %v465 = vsel %vm459, %v452, %v454
      %v466 = vsel %vm459, %v454, %v456
      %v467 = vsel %vm459, %v456, %v458
      %v476 = vld [vmem:[%s1] sm:$0xf]
      %v477 = vld [vmem:[%s1 + $0x4] sm:$0xf]
      %v478 = vpack.c.bf16 %v313, %v308
      %v479 = vpack.c.bf16 %v314, %v309
      %v480 = vpack.c.bf16 %v315, %v310
      %v481 = vpack.c.bf16 %v316, %v311
      %v482 = vpack.c.bf16 %v353, %v349
      %v483 = vpack.c.bf16 %v354, %v350
      %v484 = vpack.c.bf16 %v355, %v351
      %v485 = vpack.c.bf16 %v356, %v352
      %v486 = vpack.c.bf16 %v390, %v386
      %v487 = vpack.c.bf16 %v391, %v387
      %v488 = vpack.c.bf16 %v392, %v388
      %v489 = vpack.c.bf16 %v393, %v389
      %v490 = vpack.c.bf16 %v427, %v423
      %v491 = vpack.c.bf16 %v428, %v424
      %v492 = vpack.c.bf16 %v429, %v425
      %v493 = vpack.c.bf16 %v430, %v426
      %v494 = vpack.c.bf16 %v464, %v460
      %v495 = vpack.c.bf16 %v465, %v461
      %v496 = vpack.c.bf16 %v466, %v462
      %v497 = vpack.c.bf16 %v467, %v463
      %v498 = vld [vmem:[%s2] sm:$0xff]
      %v499 = vld [vmem:[%s2 + $0x8] sm:$0xff]
      %501 = vset.pattern.permute.xlu0 0
      %502 = vperm.xlu0 %501, %v498
      %v503 = vpop.permute.xlu0 %502
      %506 = vset.pattern.permute.xlu0 0
      %507 = vperm.xlu0 %506, %v499
      %v508 = vpop.permute.xlu0 %507
      %v512 = vunpack.c.l.b16 %v476
      %v513 = vunpack.c.l.b16 %v477
      %v514 = vpack.c.b16 %v513, %v512
      %vm515 = vcmask 654336
      %v517 = vsel %vm515, %v514, 0
      %519 = vmatprep.subr.bf16.mxu0 0
      %520 = vmatpush1.bf16.msra.mxu0 0
      %521 = vmatprep.subr.bf16.mxu0 0
      %522 = vmatpush1.bf16.msra.mxu0 0
      %523 = vmatprep.subr.bf16.mxu0 0
      %524 = vmatpush1.bf16.msra.mxu0 0
      %525 = vmatprep.subr.bf16.mxu0 %v495
      %526 = vmatpush1.bf16.msra.mxu0 %v494
      %527 = vmatprep.subr.bf16.mxu0 %v491
      %528 = vmatpush1.bf16.msra.mxu0 %v490
      %529 = vmatprep.subr.bf16.mxu0 %v487
      %530 = vmatpush1.bf16.msra.mxu0 %v486
      %531 = vmatprep.subr.bf16.mxu0 %v483
      %532 = vmatpush1.bf16.msra.mxu0 %v482
      %533 = vmatprep.subr.bf16.mxu0 %v479
      %534 = vmatpush1.bf16.msra.mxu0 %v478
      %535 = vmatprep.subr.bf16.mxu0 0
      %536 = vmatpush2.bf16.msra.mxu0 0
      %537 = vmatprep.subr.bf16.mxu0 0
      %538 = vmatpush2.bf16.msra.mxu0 0
      %539 = vmatprep.subr.bf16.mxu0 0
      %540 = vmatpush2.bf16.msra.mxu0 0
      %541 = vmatprep.subr.bf16.mxu0 0
      %542 = vmatpush2.bf16.msra.mxu0 0
      %543 = vmatprep.subr.bf16.mxu0 0
      %544 = vmatpush2.bf16.msra.mxu0 0
      %545 = vmatprep.subr.bf16.mxu0 0
      %546 = vmatpush2.bf16.msra.mxu0 0
      %547 = vmatprep.subr.bf16.mxu0 0
      %548 = vmatpush2.bf16.msra.mxu0 0
      %549 = vmatprep.subr.bf16.mxu0 0
      %550 = vmatpush2.bf16.msra.mxu0 0
      %551 = vmatprep.mubr.bf16.mxu0 0
      %552 = vmatmul.mubr.bf16.gmra.mxu0 %v517
      %v553 = vpop.f32.mrf.mxu0
      %v554 = vadd.f32 %v503, %v553
      %v555 = vpop.f32.mrf.mxu0
      %v556 = vadd.f32 %v503, %v555
      %v557 = vpop.f32.mrf.mxu0
      %v558 = vadd.f32 %v508, %v557
      %v559 = vpop.f32.mrf.mxu0
      %v560 = vadd.f32 %v508, %v559
      %561 = vdwg.mxu0
      %562 = vmatprep.subr.bf16.mxu0 0
      %563 = vmatpush1.bf16.msra.mxu0 0
      %564 = vmatprep.subr.bf16.mxu0 0
      %565 = vmatpush1.bf16.msra.mxu0 0
      %566 = vmatprep.subr.bf16.mxu0 0
      %567 = vmatpush1.bf16.msra.mxu0 0
      %568 = vmatprep.subr.bf16.mxu0 %v497
      %569 = vmatpush1.bf16.msra.mxu0 %v496
      %570 = vmatprep.subr.bf16.mxu0 %v493
      %571 = vmatpush1.bf16.msra.mxu0 %v492
      %572 = vmatprep.subr.bf16.mxu0 %v489
      %573 = vmatpush1.bf16.msra.mxu0 %v488
      %574 = vmatprep.subr.bf16.mxu0 %v485
      %575 = vmatpush1.bf16.msra.mxu0 %v484
      %576 = vmatprep.subr.bf16.mxu0 %v481
      %577 = vmatpush1.bf16.msra.mxu0 %v480
      %578 = vmatprep.subr.bf16.mxu0 0
      %579 = vmatpush2.bf16.msra.mxu0 0
      %580 = vmatprep.subr.bf16.mxu0 0
      %581 = vmatpush2.bf16.msra.mxu0 0
      %582 = vmatprep.subr.bf16.mxu0 0
      %583 = vmatpush2.bf16.msra.mxu0 0
      %584 = vmatprep.subr.bf16.mxu0 0
      %585 = vmatpush2.bf16.msra.mxu0 0
      %586 = vmatprep.subr.bf16.mxu0 0
      %587 = vmatpush2.bf16.msra.mxu0 0
      %588 = vmatprep.subr.bf16.mxu0 0
      %589 = vmatpush2.bf16.msra.mxu0 0
      %590 = vmatprep.subr.bf16.mxu0 0
      %591 = vmatpush2.bf16.msra.mxu0 0
      %592 = vmatprep.subr.bf16.mxu0 0
      %593 = vmatpush2.bf16.msra.mxu0 0
      %594 = vmatprep.mubr.bf16.mxu0 0
      %595 = vmatmul.mubr.bf16.gmra.mxu0 %v517
      %v596 = vpop.f32.mrf.mxu0
      %v597 = vadd.f32 %v503, %v596
      %v598 = vpop.f32.mrf.mxu0
      %v599 = vadd.f32 %v503, %v598
      %v600 = vpop.f32.mrf.mxu0
      %v601 = vadd.f32 %v508, %v600
      %v602 = vpop.f32.mrf.mxu0
      %v603 = vadd.f32 %v508, %v602
      %604 = vdwg.mxu0
      %v605 = vld [vmem:[%s259] sm:$0xff]
      %v606 = vld [vmem:[%s259 + $0x8] sm:$0xff]
      %v607 = vld [vmem:[%s259 + $0x10] sm:$0xff]
      %v608 = vld [vmem:[%s259 + $0x18] sm:$0xff]
      %v609 = vunpack.c.l.bf16 %v605
      %v610 = vunpack.c.h.bf16 %v605
      %v611 = vunpack.c.l.bf16 %v606
      %v612 = vunpack.c.h.bf16 %v606
      %v613 = vunpack.c.l.bf16 %v607
      %v614 = vunpack.c.h.bf16 %v607
      %v615 = vunpack.c.l.bf16 %v608
      %v616 = vunpack.c.h.bf16 %v608
      %v617 = vadd.f32 %v554, %v609
      %v618 = vadd.f32 %v556, %v610
      %v619 = vadd.f32 %v597, %v611
      %v620 = vadd.f32 %v599, %v612
      %v621 = vadd.f32 %v558, %v613
      %v622 = vadd.f32 %v560, %v614
      %v623 = vadd.f32 %v601, %v615
      %v624 = vadd.f32 %v603, %v616
      %v625 = vpack.c.bf16 %v621, %v617
      %v626 = vpack.c.bf16 %v622, %v618
      %v627 = vpack.c.bf16 %v623, %v619
      %v628 = vpack.c.bf16 %v624, %v620
      %v633 = vunpack.c.l.b16 %v625
      %v634 = vunpack.c.l.b16 %v626
      %v635 = vunpack.c.l.b16 %v627
      %v636 = vunpack.c.l.b16 %v628
      %v637 = vunpack.c.h.b16 %v625
      %v638 = vunpack.c.h.b16 %v626
      %v639 = vunpack.c.h.b16 %v627
      %v640 = vunpack.c.h.b16 %v628
      %v641 = vpack.c.b16 %v634, %v633
      %v642 = vpack.c.b16 %v636, %v635
      %v643 = vpack.c.b16 %v638, %v637
      %v644 = vpack.c.b16 %v640, %v639
      %649 = vst [vmem:[%s269] sm:$0xff] %v641
      %650 = vst [vmem:[%s269 + $0x8] sm:$0xff] %v642
      %651 = vst [vmem:[%s269 + $0x10] sm:$0xff] %v643
      %652 = vst [vmem:[%s269 + $0x18] sm:$0xff] %v644
      %s653 = smul.u32 4, %s20
      %p654 = scmp.lt.s32.totalorder %s19, 1
      %s655 = scalar_select %p654, %s19, 1
      %p656 = scmp.lt.s32.totalorder %s653, 3
      %s657 = scalar_select %p656, %s653, 3
      %s658 = smul.addr %s655, 8
      %s659 = sadd.s32 %s657, %s658
      %s660 = smul.addr %s659, 4
      %s661 = scalar_lea.vmem %s4, %s660
      // Predicated region
      $region37: #{_lambda_.27} parent=35 // pred_check
        %p662 = pneg %p145
      $region38: #{_lambda_.27} parent=35 // pred_check_branch
        %664 = sbr.rel (%p662) target = $region40
      $region39: #{_lambda_.27} parent=35 // pred_region
        %s665 = smul.u32 4, %s20
      $region40: #{_lambda_.27} parent=35 // pred_fallthru
        _
    $region36: #{_lambda_.27} parent=5 // pred_fallthru
      _
    %p666 = scmp.le.s32.totalorder 2, %s10
    // Predicated region
    $region41: #{_lambda_.27} parent=5 // pred_check
      %p667 = pneg %p666
    $region42: #{_lambda_.27} parent=5 // pred_check_branch
      %669 = sbr.rel (%p667) target = $region44
    $region43: #{_lambda_.27} parent=5 // pred_region
      %s670 = ssub.s32 %s10, 2
      // Predicated region
      $region45: #{_lambda_.27} parent=43 // pred_check
        %p671 = pneg %p151
      $region46: #{_lambda_.27} parent=43 // pred_check_branch
        %673 = sbr.rel (%p671) target = $region48
      $region47: #{_lambda_.27} parent=43 // pred_region
        %s674 = smul.u32 4, %s22
        %p675 = scmp.lt.s32.totalorder %s21, 1
        %s676 = scalar_select %p675, %s21, 1
        %p677 = scmp.lt.s32.totalorder %s674, 3
        %s678 = scalar_select %p677, %s674, 3
        %s679 = smul.addr %s676, 8
        %s680 = sadd.s32 %s678, %s679
        %s681 = smul.addr %s680, 4
        %s682 = scalar_lea.vmem %s4, %s681
      $region48: #{_lambda_.27} parent=43 // pred_fallthru
        _
    $region44: #{_lambda_.27} parent=5 // pred_fallthru
      _
  $region6: #{_lambda_.27} parent=0 // loop_footer
    %s14 = sadd.s32 1, %s10
  $region7: #{_lambda_.27} parent=0 // loop_footer_branch
    %9 = sbr.rel target = $region3
  $region8: #{_lambda_.27} parent=0 // loop_exit
    _

// kernel: _lambda_.28
$region0: #{_lambda_.28}
  #allocation0 [shape = 'u32[]', space=smem, size = 0x4, offset = 0x4, fixed_abs, tag = 'smem constant byte address 0x4 - core index']
  #allocation1 [shape = 'u32[144,128]{1,0:T(1,128)}', space=vmem, size = 0x12000, scoped, tag = 'internal scratch']
  %s0 = inlined_call_operand.vmem [shape: bf16[2,1,16,524], index: 0, kind: input, shape index: {}]
  %s1 = inlined_call_operand.vmem [shape: bf16[16,80], index: 1, kind: input, shape index: {}]
  %s2 = inlined_call_operand.vmem [shape: f32[16,1], index: 2, kind: input, shape index: {}]
  %s3 = inlined_call_operand.vmem [shape: bf16[2,16,512], index: 3, kind: output, shape index: {}]
  %s4 = sld [smem:[#allocation0]]
  $region45: #{_lambda_.28} parent=0
    _
  %s6 = ssub.s32 1, %s4
  %s7 = scalar_select 0, %s6, %s4
  loop: start=0, step=1, limit=4
  $region2: #{_lambda_.28} parent=0 // loop_pre_header
    _
  $region3: #{_lambda_.28} parent=0 // loop_header
    %s9 = sphi 0, %s13
    %p10 = scmp.ge.s32.totalorder %s9, 4
    %s16 = sphi 0, %s28
    %s17 = sphi 0, %s24
    %s18 = sphi 0, %s16
    %s19 = sphi 0, %s17
    %s20 = sphi 0, %s18
    %s21 = sphi 0, %s19
    %s33 = sphi 0, %s35
    %s36 = sphi 0, %s33
    %s37 = sphi 0, %s36
    %s53 = sphi 0, %s37
    %s57 = sphi 0, %s57
    %s59 = sphi 0, %s57
    %s60 = sphi 0, %s59
    %s74 = sphi 0, %s60
    %s78 = sphi 0, %s78
    %s80 = sphi 0, %s78
    %s81 = sphi 0, %s80
    %s95 = sphi 0, %s81
    %s103 = sphi 0, %s105
    %s106 = sphi 0, %s103
    %s107 = sphi 0, %s106
    %s123 = sphi 0, %s107
  $region4: #{_lambda_.28} parent=0 // loop_header_branch
    %12 = sbr.rel (%p10) target = $region8
  $region5: #{_lambda_.28} parent=0 // loop_body
    %s14 = ssub.s32 %s9, 1
    %s15 = ssub.s32 %s9, 2
    %s22 = sadd.s32 1, %s17
    %p23 = scmp.ge.s32.totalorder %s22, 1
    %s24 = scalar_select %p23, 0, %s22
    %s25 = sadd.s32 1, %s16
    %s26 = scalar_select %p23, %s25, %s16
    %p27 = scmp.ge.s32.totalorder %s26, 2
    %s28 = scalar_select %p27, 0, %s26
    %s29 = ssub.s32 %s16, %s28
    %s30 = ssub.s32 %s17, %s24
    %s31 = sor.u32 %s29, %s30
    %p32 = scmp.eq.s32.totalorder %s31, 0
    %s34 = sadd.s32 %s33, 1
    %s35 = scalar_select %p32, %s33, %s34
    %p38 = pneg %p32
    %p39 = scmp.eq.s32.totalorder %s9, 1
    %p40 = por %p38, %p39
    %p41 = scmp.ne.s32.totalorder %s33, %s36
    %p42 = scmp.eq.s32.totalorder %s9, 0
    %p43 = por %p41, %p42
    %p44 = scmp.ne.s32.totalorder %s33, %s36
    %p45 = scmp.eq.s32.totalorder %s14, 1
    %p46 = por %p44, %p45
    %p47 = scmp.ne.s32.totalorder %s36, %s37
    %p48 = scmp.eq.s32.totalorder %s14, 0
    %p49 = por %p47, %p48
    %p50 = scmp.ne.s32.totalorder %s36, %s37
    %p51 = scmp.eq.s32.totalorder %s15, 1
    %p52 = por %p50, %p51
    %p54 = scmp.ne.s32.totalorder %s37, %s53
    %p55 = scmp.eq.s32.totalorder %s15, 0
    %p56 = por %p54, %p55
    %s58 = sadd.s32 %s57, 1
    %p61 = scmp.eq.s32.totalorder %s9, 1
    %p62 = scmp.ne.s32.totalorder %s57, %s59
    %p63 = scmp.eq.s32.totalorder %s9, 0
    %p64 = por %p62, %p63
    %p65 = scmp.ne.s32.totalorder %s57, %s59
    %p66 = scmp.eq.s32.totalorder %s14, 1
    %p67 = por %p65, %p66
    %p68 = scmp.ne.s32.totalorder %s59, %s60
    %p69 = scmp.eq.s32.totalorder %s14, 0
    %p70 = por %p68, %p69
    %p71 = scmp.ne.s32.totalorder %s59, %s60
    %p72 = scmp.eq.s32.totalorder %s15, 1
    %p73 = por %p71, %p72
    %p75 = scmp.ne.s32.totalorder %s60, %s74
    %p76 = scmp.eq.s32.totalorder %s15, 0
    %p77 = por %p75, %p76
    %s79 = sadd.s32 %s78, 1
    %p82 = scmp.eq.s32.totalorder %s9, 1
    %p83 = scmp.ne.s32.totalorder %s78, %s80
    %p84 = scmp.eq.s32.totalorder %s9, 0
    %p85 = por %p83, %p84
    %p86 = scmp.ne.s32.totalorder %s78, %s80
    %p87 = scmp.eq.s32.totalorder %s14, 1
    %p88 = por %p86, %p87
    %p89 = scmp.ne.s32.totalorder %s80, %s81
    %p90 = scmp.eq.s32.totalorder %s14, 0
    %p91 = por %p89, %p90
    %p92 = scmp.ne.s32.totalorder %s80, %s81
    %p93 = scmp.eq.s32.totalorder %s15, 1
    %p94 = por %p92, %p93
    %p96 = scmp.ne.s32.totalorder %s81, %s95
    %p97 = scmp.eq.s32.totalorder %s15, 0
    %p98 = por %p96, %p97
    %s99 = ssub.s32 %s16, %s28
    %s100 = ssub.s32 %s17, %s24
    %s101 = sor.u32 %s99, %s100
    %p102 = scmp.eq.s32.totalorder %s101, 0
    %s104 = sadd.s32 %s103, 1
    %s105 = scalar_select %p102, %s103, %s104
    %p108 = pneg %p102
    %p109 = scmp.eq.s32.totalorder %s9, 1
    %p110 = por %p108, %p109
    %p111 = scmp.ne.s32.totalorder %s103, %s106
    %p112 = scmp.eq.s32.totalorder %s9, 0
    %p113 = por %p111, %p112
    %p114 = scmp.ne.s32.totalorder %s103, %s106
    %p115 = scmp.eq.s32.totalorder %s14, 1
    %p116 = por %p114, %p115
    %p117 = scmp.ne.s32.totalorder %s106, %s107
    %p118 = scmp.eq.s32.totalorder %s14, 0
    %p119 = por %p117, %p118
    %p120 = scmp.ne.s32.totalorder %s106, %s107
    %p121 = scmp.eq.s32.totalorder %s15, 1
    %p122 = por %p120, %p121
    %p124 = scmp.ne.s32.totalorder %s107, %s123
    %p125 = scmp.eq.s32.totalorder %s15, 0
    %p126 = por %p124, %p125
    %p127 = scmp.le.s32.totalorder 1, %s9
    %p128 = scmp.lt.s32.totalorder %s9, 3
    %p129 = pnand %p127, %p128
    %p130 = pneg %p129
    // Predicated region
    $region9: #{_lambda_.28} parent=5 // pred_check
      _
    $region10: #{_lambda_.28} parent=5 // pred_check_branch
      %132 = sbr.rel (%p129) target = $region12
    $region11: #{_lambda_.28} parent=5 // pred_region
      %s133 = ssub.s32 %s9, 1
      // Predicated region
      $region13: #{_lambda_.28} parent=11 // pred_check
        %p134 = pneg %p70
      $region14: #{_lambda_.28} parent=11 // pred_check_branch
        %136 = sbr.rel (%p134) target = $region16
      $region15: #{_lambda_.28} parent=11 // pred_region
        _
      $region16: #{_lambda_.28} parent=11 // pred_fallthru
        _
      // Predicated region
      $region17: #{_lambda_.28} parent=11 // pred_check
        %p137 = pneg %p91
      $region18: #{_lambda_.28} parent=11 // pred_check_branch
        %139 = sbr.rel (%p137) target = $region20
      $region19: #{_lambda_.28} parent=11 // pred_region
        _
      $region20: #{_lambda_.28} parent=11 // pred_fallthru
        _
    $region12: #{_lambda_.28} parent=5 // pred_fallthru
      _
    %p140 = scmp.lt.s32.totalorder %s9, 2
    // Predicated region
    $region21: #{_lambda_.28} parent=5 // pred_check
      %p141 = pneg %p140
    $region22: #{_lambda_.28} parent=5 // pred_check_branch
      %143 = sbr.rel (%p141) target = $region24
    $region23: #{_lambda_.28} parent=5 // pred_region
      // Predicated region
      $region25: #{_lambda_.28} parent=23 // pred_check
        %p144 = pneg %p43
      $region26: #{_lambda_.28} parent=23 // pred_check_branch
        %146 = sbr.rel (%p144) target = $region28
      $region27: #{_lambda_.28} parent=23 // pred_region
        %p147 = scmp.lt.s32.totalorder %s16, 1
        %s148 = scalar_select %p147, %s16, 1
        %p149 = scmp.lt.s32.totalorder %s17, 0
        %s150 = scalar_select %p149, %s17, 0
        %s151 = smul.addr %s150, 10
        %s152 = smul.addr %s148, 10
        %s153 = sadd.s32 %s151, %s152
        %s154 = smul.addr %s153, 4
        %s155 = scalar_lea.vmem %s0, %s154
      $region28: #{_lambda_.28} parent=23 // pred_fallthru
        _
    $region24: #{_lambda_.28} parent=5 // pred_fallthru
      _
    %p156 = scmp.le.s32.totalorder 1, %s9
    %p157 = scmp.lt.s32.totalorder %s9, 3
    %p158 = pnand %p156, %p157
    %p159 = pneg %p158
    // Predicated region
    $region29: #{_lambda_.28} parent=5 // pred_check
      _
    $region30: #{_lambda_.28} parent=5 // pred_check_branch
      %161 = sbr.rel (%p158) target = $region32
    $region31: #{_lambda_.28} parent=5 // pred_region
      %s162 = ssub.s32 %s9, 1
      %p163 = scmp.lt.s32.totalorder %s18, 1
      %s164 = scalar_select %p163, %s18, 1
      %p165 = scmp.lt.s32.totalorder %s19, 0
      %s166 = scalar_select %p165, %s19, 0
      %s167 = smul.addr %s166, 10
      %s168 = smul.addr %s164, 10
      %s169 = sadd.s32 %s167, %s168
      %s170 = smul.addr %s169, 4
      %s171 = scalar_lea.vmem %s0, %s170
      %p172 = pneg %p49
      %p173 = pneg %p46
      %p174 = pneg %p70
      %p175 = pneg %p67
      %p176 = pneg %p91
      %p177 = pneg %p88
      %p178 = pneg %p119
      %p179 = pneg %p116
      %s180 = smul.u32 4, %s19
      %p181 = scmp.lt.s32.totalorder %s18, 1
      %s182 = scalar_select %p181, %s18, 1
      %p183 = scmp.lt.s32.totalorder %s180, 3
      %s184 = scalar_select %p183, %s180, 3
      %s185 = smul.addr %s182, 8
      %s186 = sadd.s32 %s184, %s185
      %s187 = smul.addr %s186, 4
      %s188 = scalar_lea.vmem %s3, %s187
      %p189 = scmp.lt.s32.totalorder %s18, 1
      %s190 = scalar_select %p189, %s18, 1
      %p191 = scmp.lt.s32.totalorder %s19, 0
      %s192 = scalar_select %p191, %s19, 0
      %s193 = smul.addr %s192, 10
      %s194 = smul.addr %s190, 10
      %s195 = sadd.s32 %s193, %s194
      %s196 = smul.addr %s195, 4
      %s197 = scalar_lea.vmem %s0, %s196
      %s198 = smul.u32 4, %s19
      %p199 = scmp.lt.s32.totalorder %s18, 1
      %s200 = scalar_select %p199, %s18, 1
      %p201 = scmp.lt.s32.totalorder %s198, 3
      %s202 = scalar_select %p201, %s198, 3
      %s203 = smul.addr %s200, 8
      %s204 = sadd.s32 %s202, %s203
      %s205 = smul.addr %s204, 4
      %s206 = scalar_lea.vmem %s3, %s205
      %s207 = smul.u32 4, %s19
      %v209 = vld [vmem:[%s197] sm:$0xff]
      %v210 = vld [vmem:[%s197 + $0x8] sm:$0xff]
      %v211 = vld [vmem:[%s197 + $0x10] sm:$0xf]
      %v212 = vld [vmem:[%s197 + $0x14] sm:$0xff]
      %v213 = vld [vmem:[%s197 + $0x1c] sm:$0xff]
      %v214 = vld [vmem:[%s197 + $0x24] sm:$0xf]
      %v215 = vunpack.c.l.bf16 %v209
      %v216 = vunpack.c.h.bf16 %v209
      %v217 = vunpack.c.l.bf16 %v210
      %v218 = vunpack.c.h.bf16 %v210
      %v219 = vunpack.c.l.bf16 %v211
      %v220 = vunpack.c.l.bf16 %v212
      %v221 = vunpack.c.h.bf16 %v212
      %v222 = vunpack.c.l.bf16 %v213
      %v223 = vunpack.c.h.bf16 %v213
      %v224 = vunpack.c.l.bf16 %v214
      %vm225 = vcmp.ge.f32.partialorder %v215, 0.0
      %vm226 = vcmp.ge.f32.partialorder %v216, 0.0
      %vm227 = vcmp.ge.f32.partialorder %v217, 0.0
      %vm228 = vcmp.ge.f32.partialorder %v218, 0.0
      %vm229 = vcmp.ge.f32.partialorder %v219, 0.0
      %vm230 = vcmp.ge.f32.partialorder %v220, 0.0
      %vm231 = vcmp.ge.f32.partialorder %v221, 0.0
      %vm232 = vcmp.ge.f32.partialorder %v222, 0.0
      %vm233 = vcmp.ge.f32.partialorder %v223, 0.0
      %vm234 = vcmp.ge.f32.partialorder %v224, 0.0
      %v235 = vmul.f32 %v215, 0.01
      %v236 = vmul.f32 %v216, 0.01
      %v237 = vmul.f32 %v217, 0.01
      %v238 = vmul.f32 %v218, 0.01
      %v239 = vmul.f32 %v219, 0.01
      %v240 = vmul.f32 %v220, 0.01
      %v241 = vmul.f32 %v221, 0.01
      %v242 = vmul.f32 %v222, 0.01
      %v243 = vmul.f32 %v223, 0.01
      %v244 = vmul.f32 %v224, 0.01
      %v245 = vsel %vm225, %v215, %v235
      %v246 = vsel %vm226, %v216, %v236
      %v247 = vsel %vm227, %v217, %v237
      %v248 = vsel %vm228, %v218, %v238
      %v249 = vsel %vm229, %v219, %v239
      %v250 = vsel %vm230, %v220, %v240
      %v251 = vsel %vm231, %v221, %v241
      %v252 = vsel %vm232, %v222, %v242
      %v253 = vsel %vm233, %v223, %v243
      %v254 = vsel %vm234, %v224, %v244
      %265 = vrot.lane.b32.xlu0 %v245, 125
      %v266 = vpop.permute.xlu0 %265
      %267 = vrot.lane.b32.xlu0 %v246, 125
      %v268 = vpop.permute.xlu0 %267
      %269 = vrot.lane.b32.xlu0 %v247, 125
      %v270 = vpop.permute.xlu0 %269
      %271 = vrot.lane.b32.xlu0 %v248, 125
      %v272 = vpop.permute.xlu0 %271
      %273 = vrot.lane.b32.xlu0 %v249, 125
      %v274 = vpop.permute.xlu0 %273
      %275 = vrot.lane.b32.xlu0 %v250, 125
      %v276 = vpop.permute.xlu0 %275
      %277 = vrot.lane.b32.xlu0 %v251, 125
      %v278 = vpop.permute.xlu0 %277
      %279 = vrot.lane.b32.xlu0 %v252, 125
      %v280 = vpop.permute.xlu0 %279
      %281 = vrot.lane.b32.xlu0 %v253, 125
      %v282 = vpop.permute.xlu0 %281
      %283 = vrot.lane.b32.xlu0 %v254, 125
      %v284 = vpop.permute.xlu0 %283
      %vm285 = vcmask 1022976
      %v286 = vsel %vm285, %v266, %v268
      %v287 = vsel %vm285, %v268, %v270
      %v288 = vsel %vm285, %v270, %v272
      %v289 = vsel %vm285, %v272, %v274
      %v290 = vsel %vm285, %v276, %v278
      %v291 = vsel %vm285, %v278, %v280
      %v292 = vsel %vm285, %v280, %v282
      %v293 = vsel %vm285, %v282, %v284
      %302 = vrot.lane.b32.xlu0 %v245, 122
      %v303 = vpop.permute.xlu0 %302
      %304 = vrot.lane.b32.xlu0 %v246, 122
      %v305 = vpop.permute.xlu0 %304
      %306 = vrot.lane.b32.xlu0 %v247, 122
      %v307 = vpop.permute.xlu0 %306
      %308 = vrot.lane.b32.xlu0 %v248, 122
      %v309 = vpop.permute.xlu0 %308
      %310 = vrot.lane.b32.xlu0 %v249, 122
      %v311 = vpop.permute.xlu0 %310
      %312 = vrot.lane.b32.xlu0 %v250, 122
      %v313 = vpop.permute.xlu0 %312
      %314 = vrot.lane.b32.xlu0 %v251, 122
      %v315 = vpop.permute.xlu0 %314
      %316 = vrot.lane.b32.xlu0 %v252, 122
      %v317 = vpop.permute.xlu0 %316
      %318 = vrot.lane.b32.xlu0 %v253, 122
      %v319 = vpop.permute.xlu0 %318
      %320 = vrot.lane.b32.xlu0 %v254, 122
      %v321 = vpop.permute.xlu0 %320
      %vm322 = vcmask 998400
      %v323 = vsel %vm322, %v303, %v305
      %v324 = vsel %vm322, %v305, %v307
      %v325 = vsel %vm322, %v307, %v309
      %v326 = vsel %vm322, %v309, %v311
      %v327 = vsel %vm322, %v313, %v315
      %v328 = vsel %vm322, %v315, %v317
      %v329 = vsel %vm322, %v317, %v319
      %v330 = vsel %vm322, %v319, %v321
      %339 = vrot.lane.b32.xlu0 %v245, 119
      %v340 = vpop.permute.xlu0 %339
      %341 = vrot.lane.b32.xlu0 %v246, 119
      %v342 = vpop.permute.xlu0 %341
      %343 = vrot.lane.b32.xlu0 %v247, 119
      %v344 = vpop.permute.xlu0 %343
      %345 = vrot.lane.b32.xlu0 %v248, 119
      %v346 = vpop.permute.xlu0 %345
      %347 = vrot.lane.b32.xlu0 %v249, 119
      %v348 = vpop.permute.xlu0 %347
      %349 = vrot.lane.b32.xlu0 %v250, 119
      %v350 = vpop.permute.xlu0 %349
      %351 = vrot.lane.b32.xlu0 %v251, 119
      %v352 = vpop.permute.xlu0 %351
      %353 = vrot.lane.b32.xlu0 %v252, 119
      %v354 = vpop.permute.xlu0 %353
      %355 = vrot.lane.b32.xlu0 %v253, 119
      %v356 = vpop.permute.xlu0 %355
      %357 = vrot.lane.b32.xlu0 %v254, 119
      %v358 = vpop.permute.xlu0 %357
      %vm359 = vcmask 973824
      %v360 = vsel %vm359, %v340, %v342
      %v361 = vsel %vm359, %v342, %v344
      %v362 = vsel %vm359, %v344, %v346
      %v363 = vsel %vm359, %v346, %v348
      %v364 = vsel %vm359, %v350, %v352
      %v365 = vsel %vm359, %v352, %v354
      %v366 = vsel %vm359, %v354, %v356
      %v367 = vsel %vm359, %v356, %v358
      %376 = vrot.lane.b32.xlu0 %v245, 116
      %v377 = vpop.permute.xlu0 %376
      %378 = vrot.lane.b32.xlu0 %v246, 116
      %v379 = vpop.permute.xlu0 %378
      %380 = vrot.lane.b32.xlu0 %v247, 116
      %v381 = vpop.permute.xlu0 %380
      %382 = vrot.lane.b32.xlu0 %v248, 116
      %v383 = vpop.permute.xlu0 %382
      %384 = vrot.lane.b32.xlu0 %v249, 116
      %v385 = vpop.permute.xlu0 %384
      %386 = vrot.lane.b32.xlu0 %v250, 116
      %v387 = vpop.permute.xlu0 %386
      %388 = vrot.lane.b32.xlu0 %v251, 116
      %v389 = vpop.permute.xlu0 %388
      %390 = vrot.lane.b32.xlu0 %v252, 116
      %v391 = vpop.permute.xlu0 %390
      %392 = vrot.lane.b32.xlu0 %v253, 116
      %v393 = vpop.permute.xlu0 %392
      %394 = vrot.lane.b32.xlu0 %v254, 116
      %v395 = vpop.permute.xlu0 %394
      %vm396 = vcmask 949248
      %v397 = vsel %vm396, %v377, %v379
      %v398 = vsel %vm396, %v379, %v381
      %v399 = vsel %vm396, %v381, %v383
      %v400 = vsel %vm396, %v383, %v385
      %v401 = vsel %vm396, %v387, %v389
      %v402 = vsel %vm396, %v389, %v391
      %v403 = vsel %vm396, %v391, %v393
      %v404 = vsel %vm396, %v393, %v395
      %v413 = vld [vmem:[%s1] sm:$0xf]
      %v414 = vld [vmem:[%s1 + $0x4] sm:$0xf]
      %v415 = vpack.c.bf16 %v250, %v245
      %v416 = vpack.c.bf16 %v251, %v246
      %v417 = vpack.c.bf16 %v252, %v247
      %v418 = vpack.c.bf16 %v253, %v248
      %v419 = vpack.c.bf16 %v290, %v286
      %v420 = vpack.c.bf16 %v291, %v287
      %v421 = vpack.c.bf16 %v292, %v288
      %v422 = vpack.c.bf16 %v293, %v289
      %v423 = vpack.c.bf16 %v327, %v323
      %v424 = vpack.c.bf16 %v328, %v324
      %v425 = vpack.c.bf16 %v329, %v325
      %v426 = vpack.c.bf16 %v330, %v326
      %v427 = vpack.c.bf16 %v364, %v360
      %v428 = vpack.c.bf16 %v365, %v361
      %v429 = vpack.c.bf16 %v366, %v362
      %v430 = vpack.c.bf16 %v367, %v363
      %v431 = vpack.c.bf16 %v401, %v397
      %v432 = vpack.c.bf16 %v402, %v398
      %v433 = vpack.c.bf16 %v403, %v399
      %v434 = vpack.c.bf16 %v404, %v400
      %v435 = vld [vmem:[%s2] sm:$0xff]
      %v436 = vld [vmem:[%s2 + $0x8] sm:$0xff]
      %438 = vset.pattern.permute.xlu0 0
      %439 = vperm.xlu0 %438, %v435
      %v440 = vpop.permute.xlu0 %439
      %443 = vset.pattern.permute.xlu0 0
      %444 = vperm.xlu0 %443, %v436
      %v445 = vpop.permute.xlu0 %444
      %v449 = vunpack.c.l.b16 %v413
      %v450 = vunpack.c.l.b16 %v414
      %v451 = vpack.c.b16 %v450, %v449
      %vm452 = vcmask 654336
      %v454 = vsel %vm452, %v451, 0
      %456 = vmatprep.subr.bf16.mxu0 0
      %457 = vmatpush1.bf16.msra.mxu0 0
      %458 = vmatprep.subr.bf16.mxu0 0
      %459 = vmatpush1.bf16.msra.mxu0 0
      %460 = vmatprep.subr.bf16.mxu0 0
      %461 = vmatpush1.bf16.msra.mxu0 0
      %462 = vmatprep.subr.bf16.mxu0 %v432
      %463 = vmatpush1.bf16.msra.mxu0 %v431
      %464 = vmatprep.subr.bf16.mxu0 %v428
      %465 = vmatpush1.bf16.msra.mxu0 %v427
      %466 = vmatprep.subr.bf16.mxu0 %v424
      %467 = vmatpush1.bf16.msra.mxu0 %v423
      %468 = vmatprep.subr.bf16.mxu0 %v420
      %469 = vmatpush1.bf16.msra.mxu0 %v419
      %470 = vmatprep.subr.bf16.mxu0 %v416
      %471 = vmatpush1.bf16.msra.mxu0 %v415
      %472 = vmatprep.subr.bf16.mxu0 0
      %473 = vmatpush2.bf16.msra.mxu0 0
      %474 = vmatprep.subr.bf16.mxu0 0
      %475 = vmatpush2.bf16.msra.mxu0 0
      %476 = vmatprep.subr.bf16.mxu0 0
      %477 = vmatpush2.bf16.msra.mxu0 0
      %478 = vmatprep.subr.bf16.mxu0 0
      %479 = vmatpush2.bf16.msra.mxu0 0
      %480 = vmatprep.subr.bf16.mxu0 0
      %481 = vmatpush2.bf16.msra.mxu0 0
      %482 = vmatprep.subr.bf16.mxu0 0
      %483 = vmatpush2.bf16.msra.mxu0 0
      %484 = vmatprep.subr.bf16.mxu0 0
      %485 = vmatpush2.bf16.msra.mxu0 0
      %486 = vmatprep.subr.bf16.mxu0 0
      %487 = vmatpush2.bf16.msra.mxu0 0
      %488 = vmatprep.mubr.bf16.mxu0 0
      %489 = vmatmul.mubr.bf16.gmra.mxu0 %v454
      %v490 = vpop.f32.mrf.mxu0
      %v491 = vadd.f32 %v440, %v490
      %v492 = vpop.f32.mrf.mxu0
      %v493 = vadd.f32 %v440, %v492
      %v494 = vpop.f32.mrf.mxu0
      %v495 = vadd.f32 %v445, %v494
      %v496 = vpop.f32.mrf.mxu0
      %v497 = vadd.f32 %v445, %v496
      %498 = vdwg.mxu0
      %499 = vmatprep.subr.bf16.mxu0 0
      %500 = vmatpush1.bf16.msra.mxu0 0
      %501 = vmatprep.subr.bf16.mxu0 0
      %502 = vmatpush1.bf16.msra.mxu0 0
      %503 = vmatprep.subr.bf16.mxu0 0
      %504 = vmatpush1.bf16.msra.mxu0 0
      %505 = vmatprep.subr.bf16.mxu0 %v434
      %506 = vmatpush1.bf16.msra.mxu0 %v433
      %507 = vmatprep.subr.bf16.mxu0 %v430
      %508 = vmatpush1.bf16.msra.mxu0 %v429
      %509 = vmatprep.subr.bf16.mxu0 %v426
      %510 = vmatpush1.bf16.msra.mxu0 %v425
      %511 = vmatprep.subr.bf16.mxu0 %v422
      %512 = vmatpush1.bf16.msra.mxu0 %v421
      %513 = vmatprep.subr.bf16.mxu0 %v418
      %514 = vmatpush1.bf16.msra.mxu0 %v417
      %515 = vmatprep.subr.bf16.mxu0 0
      %516 = vmatpush2.bf16.msra.mxu0 0
      %517 = vmatprep.subr.bf16.mxu0 0
      %518 = vmatpush2.bf16.msra.mxu0 0
      %519 = vmatprep.subr.bf16.mxu0 0
      %520 = vmatpush2.bf16.msra.mxu0 0
      %521 = vmatprep.subr.bf16.mxu0 0
      %522 = vmatpush2.bf16.msra.mxu0 0
      %523 = vmatprep.subr.bf16.mxu0 0
      %524 = vmatpush2.bf16.msra.mxu0 0
      %525 = vmatprep.subr.bf16.mxu0 0
      %526 = vmatpush2.bf16.msra.mxu0 0
      %527 = vmatprep.subr.bf16.mxu0 0
      %528 = vmatpush2.bf16.msra.mxu0 0
      %529 = vmatprep.subr.bf16.mxu0 0
      %530 = vmatpush2.bf16.msra.mxu0 0
      %531 = vmatprep.mubr.bf16.mxu0 0
      %532 = vmatmul.mubr.bf16.gmra.mxu0 %v454
      %v533 = vpop.f32.mrf.mxu0
      %v534 = vadd.f32 %v440, %v533
      %v535 = vpop.f32.mrf.mxu0
      %v536 = vadd.f32 %v440, %v535
      %v537 = vpop.f32.mrf.mxu0
      %v538 = vadd.f32 %v445, %v537
      %v539 = vpop.f32.mrf.mxu0
      %v540 = vadd.f32 %v445, %v539
      %541 = vdwg.mxu0
      %v542 = vpack.c.bf16 %v495, %v491
      %v543 = vpack.c.bf16 %v497, %v493
      %v544 = vpack.c.bf16 %v538, %v534
      %v545 = vpack.c.bf16 %v540, %v536
      %v550 = vunpack.c.l.b16 %v542
      %v551 = vunpack.c.l.b16 %v543
      %v552 = vunpack.c.l.b16 %v544
      %v553 = vunpack.c.l.b16 %v545
      %v554 = vunpack.c.h.b16 %v542
      %v555 = vunpack.c.h.b16 %v543
      %v556 = vunpack.c.h.b16 %v544
      %v557 = vunpack.c.h.b16 %v545
      %v558 = vpack.c.b16 %v551, %v550
      %v559 = vpack.c.b16 %v553, %v552
      %v560 = vpack.c.b16 %v555, %v554
      %v561 = vpack.c.b16 %v557, %v556
      %566 = vst [vmem:[%s206] sm:$0xff] %v558
      %567 = vst [vmem:[%s206 + $0x8] sm:$0xff] %v559
      %568 = vst [vmem:[%s206 + $0x10] sm:$0xff] %v560
      %569 = vst [vmem:[%s206 + $0x18] sm:$0xff] %v561
      %s570 = smul.u32 4, %s19
      %p571 = scmp.lt.s32.totalorder %s18, 1
      %s572 = scalar_select %p571, %s18, 1
      %p573 = scmp.lt.s32.totalorder %s570, 3
      %s574 = scalar_select %p573, %s570, 3
      %s575 = smul.addr %s572, 8
      %s576 = sadd.s32 %s574, %s575
      %s577 = smul.addr %s576, 4
      %s578 = scalar_lea.vmem %s3, %s577
      // Predicated region
      $region33: #{_lambda_.28} parent=31 // pred_check
        %p579 = pneg %p116
      $region34: #{_lambda_.28} parent=31 // pred_check_branch
        %581 = sbr.rel (%p579) target = $region36
      $region35: #{_lambda_.28} parent=31 // pred_region
        %s582 = smul.u32 4, %s19
      $region36: #{_lambda_.28} parent=31 // pred_fallthru
        _
    $region32: #{_lambda_.28} parent=5 // pred_fallthru
      _
    %p583 = scmp.le.s32.totalorder 2, %s9
    // Predicated region
    $region37: #{_lambda_.28} parent=5 // pred_check
      %p584 = pneg %p583
    $region38: #{_lambda_.28} parent=5 // pred_check_branch
      %586 = sbr.rel (%p584) target = $region40
    $region39: #{_lambda_.28} parent=5 // pred_region
      %s587 = ssub.s32 %s9, 2
      // Predicated region
      $region41: #{_lambda_.28} parent=39 // pred_check
        %p588 = pneg %p122
      $region42: #{_lambda_.28} parent=39 // pred_check_branch
        %590 = sbr.rel (%p588) target = $region44
      $region43: #{_lambda_.28} parent=39 // pred_region
        %s591 = smul.u32 4, %s21
        %p592 = scmp.lt.s32.totalorder %s20, 1
        %s593 = scalar_select %p592, %s20, 1
        %p594 = scmp.lt.s32.totalorder %s591, 3
        %s595 = scalar_select %p594, %s591, 3
        %s596 = smul.addr %s593, 8
        %s597 = sadd.s32 %s595, %s596
        %s598 = smul.addr %s597, 4
        %s599 = scalar_lea.vmem %s3, %s598
      $region44: #{_lambda_.28} parent=39 // pred_fallthru
        _
    $region40: #{_lambda_.28} parent=5 // pred_fallthru
      _
  $region6: #{_lambda_.28} parent=0 // loop_footer
    %s13 = sadd.s32 1, %s9
  $region7: #{_lambda_.28} parent=0 // loop_footer_branch
    %8 = sbr.rel target = $region3
  $region8: #{_lambda_.28} parent=0 // loop_exit
    _

// kernel: _lambda_.22
$region0: #{_lambda_.22}
  #allocation0 [shape = 'u32[]', space=smem, size = 0x4, offset = 0x4, fixed_abs, tag = 'smem constant byte address 0x4 - core index']
  #allocation1 [shape = 'u32[144,128]{1,0:T(1,128)}', space=vmem, size = 0x12000, scoped, tag = 'internal scratch']
  %s0 = inlined_call_operand.vmem [shape: bf16[2,1,16,514], index: 0, kind: input, shape index: {}]
  %s1 = inlined_call_operand.vmem [shape: bf16[16,48], index: 1, kind: input, shape index: {}]
  %s2 = inlined_call_operand.vmem [shape: f32[16,1], index: 2, kind: input, shape index: {}]
  %s3 = inlined_call_operand.vmem [shape: bf16[2,16,512], index: 3, kind: output, shape index: {}]
  %s4 = sld [smem:[#allocation0]]
  $region45: #{_lambda_.22} parent=0
    _
  %s6 = ssub.s32 1, %s4
  %s7 = scalar_select 0, %s6, %s4
  loop: start=0, step=1, limit=4
  $region2: #{_lambda_.22} parent=0 // loop_pre_header
    _
  $region3: #{_lambda_.22} parent=0 // loop_header
    %s9 = sphi 0, %s13
    %p10 = scmp.ge.s32.totalorder %s9, 4
    %s16 = sphi 0, %s28
    %s17 = sphi 0, %s24
    %s18 = sphi 0, %s16
    %s19 = sphi 0, %s17
    %s20 = sphi 0, %s18
    %s21 = sphi 0, %s19
    %s33 = sphi 0, %s35
    %s36 = sphi 0, %s33
    %s37 = sphi 0, %s36
    %s53 = sphi 0, %s37
    %s57 = sphi 0, %s57
    %s59 = sphi 0, %s57
    %s60 = sphi 0, %s59
    %s74 = sphi 0, %s60
    %s78 = sphi 0, %s78
    %s80 = sphi 0, %s78
    %s81 = sphi 0, %s80
    %s95 = sphi 0, %s81
    %s103 = sphi 0, %s105
    %s106 = sphi 0, %s103
    %s107 = sphi 0, %s106
    %s123 = sphi 0, %s107
  $region4: #{_lambda_.22} parent=0 // loop_header_branch
    %12 = sbr.rel (%p10) target = $region8
  $region5: #{_lambda_.22} parent=0 // loop_body
    %s14 = ssub.s32 %s9, 1
    %s15 = ssub.s32 %s9, 2
    %s22 = sadd.s32 1, %s17
    %p23 = scmp.ge.s32.totalorder %s22, 1
    %s24 = scalar_select %p23, 0, %s22
    %s25 = sadd.s32 1, %s16
    %s26 = scalar_select %p23, %s25, %s16
    %p27 = scmp.ge.s32.totalorder %s26, 2
    %s28 = scalar_select %p27, 0, %s26
    %s29 = ssub.s32 %s16, %s28
    %s30 = ssub.s32 %s17, %s24
    %s31 = sor.u32 %s29, %s30
    %p32 = scmp.eq.s32.totalorder %s31, 0
    %s34 = sadd.s32 %s33, 1
    %s35 = scalar_select %p32, %s33, %s34
    %p38 = pneg %p32
    %p39 = scmp.eq.s32.totalorder %s9, 1
    %p40 = por %p38, %p39
    %p41 = scmp.ne.s32.totalorder %s33, %s36
    %p42 = scmp.eq.s32.totalorder %s9, 0
    %p43 = por %p41, %p42
    %p44 = scmp.ne.s32.totalorder %s33, %s36
    %p45 = scmp.eq.s32.totalorder %s14, 1
    %p46 = por %p44, %p45
    %p47 = scmp.ne.s32.totalorder %s36, %s37
    %p48 = scmp.eq.s32.totalorder %s14, 0
    %p49 = por %p47, %p48
    %p50 = scmp.ne.s32.totalorder %s36, %s37
    %p51 = scmp.eq.s32.totalorder %s15, 1
    %p52 = por %p50, %p51
    %p54 = scmp.ne.s32.totalorder %s37, %s53
    %p55 = scmp.eq.s32.totalorder %s15, 0
    %p56 = por %p54, %p55
    %s58 = sadd.s32 %s57, 1
    %p61 = scmp.eq.s32.totalorder %s9, 1
    %p62 = scmp.ne.s32.totalorder %s57, %s59
    %p63 = scmp.eq.s32.totalorder %s9, 0
    %p64 = por %p62, %p63
    %p65 = scmp.ne.s32.totalorder %s57, %s59
    %p66 = scmp.eq.s32.totalorder %s14, 1
    %p67 = por %p65, %p66
    %p68 = scmp.ne.s32.totalorder %s59, %s60
    %p69 = scmp.eq.s32.totalorder %s14, 0
    %p70 = por %p68, %p69
    %p71 = scmp.ne.s32.totalorder %s59, %s60
    %p72 = scmp.eq.s32.totalorder %s15, 1
    %p73 = por %p71, %p72
    %p75 = scmp.ne.s32.totalorder %s60, %s74
    %p76 = scmp.eq.s32.totalorder %s15, 0
    %p77 = por %p75, %p76
    %s79 = sadd.s32 %s78, 1
    %p82 = scmp.eq.s32.totalorder %s9, 1
    %p83 = scmp.ne.s32.totalorder %s78, %s80
    %p84 = scmp.eq.s32.totalorder %s9, 0
    %p85 = por %p83, %p84
    %p86 = scmp.ne.s32.totalorder %s78, %s80
    %p87 = scmp.eq.s32.totalorder %s14, 1
    %p88 = por %p86, %p87
    %p89 = scmp.ne.s32.totalorder %s80, %s81
    %p90 = scmp.eq.s32.totalorder %s14, 0
    %p91 = por %p89, %p90
    %p92 = scmp.ne.s32.totalorder %s80, %s81
    %p93 = scmp.eq.s32.totalorder %s15, 1
    %p94 = por %p92, %p93
    %p96 = scmp.ne.s32.totalorder %s81, %s95
    %p97 = scmp.eq.s32.totalorder %s15, 0
    %p98 = por %p96, %p97
    %s99 = ssub.s32 %s16, %s28
    %s100 = ssub.s32 %s17, %s24
    %s101 = sor.u32 %s99, %s100
    %p102 = scmp.eq.s32.totalorder %s101, 0
    %s104 = sadd.s32 %s103, 1
    %s105 = scalar_select %p102, %s103, %s104
    %p108 = pneg %p102
    %p109 = scmp.eq.s32.totalorder %s9, 1
    %p110 = por %p108, %p109
    %p111 = scmp.ne.s32.totalorder %s103, %s106
    %p112 = scmp.eq.s32.totalorder %s9, 0
    %p113 = por %p111, %p112
    %p114 = scmp.ne.s32.totalorder %s103, %s106
    %p115 = scmp.eq.s32.totalorder %s14, 1
    %p116 = por %p114, %p115
    %p117 = scmp.ne.s32.totalorder %s106, %s107
    %p118 = scmp.eq.s32.totalorder %s14, 0
    %p119 = por %p117, %p118
    %p120 = scmp.ne.s32.totalorder %s106, %s107
    %p121 = scmp.eq.s32.totalorder %s15, 1
    %p122 = por %p120, %p121
    %p124 = scmp.ne.s32.totalorder %s107, %s123
    %p125 = scmp.eq.s32.totalorder %s15, 0
    %p126 = por %p124, %p125
    %p127 = scmp.le.s32.totalorder 1, %s9
    %p128 = scmp.lt.s32.totalorder %s9, 3
    %p129 = pnand %p127, %p128
    %p130 = pneg %p129
    // Predicated region
    $region9: #{_lambda_.22} parent=5 // pred_check
      _
    $region10: #{_lambda_.22} parent=5 // pred_check_branch
      %132 = sbr.rel (%p129) target = $region12
    $region11: #{_lambda_.22} parent=5 // pred_region
      %s133 = ssub.s32 %s9, 1
      // Predicated region
      $region13: #{_lambda_.22} parent=11 // pred_check
        %p134 = pneg %p70
      $region14: #{_lambda_.22} parent=11 // pred_check_branch
        %136 = sbr.rel (%p134) target = $region16
      $region15: #{_lambda_.22} parent=11 // pred_region
        _
      $region16: #{_lambda_.22} parent=11 // pred_fallthru
        _
      // Predicated region
      $region17: #{_lambda_.22} parent=11 // pred_check
        %p137 = pneg %p91
      $region18: #{_lambda_.22} parent=11 // pred_check_branch
        %139 = sbr.rel (%p137) target = $region20
      $region19: #{_lambda_.22} parent=11 // pred_region
        _
      $region20: #{_lambda_.22} parent=11 // pred_fallthru
        _
    $region12: #{_lambda_.22} parent=5 // pred_fallthru
      _
    %p140 = scmp.lt.s32.totalorder %s9, 2
    // Predicated region
    $region21: #{_lambda_.22} parent=5 // pred_check
      %p141 = pneg %p140
    $region22: #{_lambda_.22} parent=5 // pred_check_branch
      %143 = sbr.rel (%p141) target = $region24
    $region23: #{_lambda_.22} parent=5 // pred_region
      // Predicated region
      $region25: #{_lambda_.22} parent=23 // pred_check
        %p144 = pneg %p43
      $region26: #{_lambda_.22} parent=23 // pred_check_branch
        %146 = sbr.rel (%p144) target = $region28
      $region27: #{_lambda_.22} parent=23 // pred_region
        %p147 = scmp.lt.s32.totalorder %s16, 1
        %s148 = scalar_select %p147, %s16, 1
        %p149 = scmp.lt.s32.totalorder %s17, 0
        %s150 = scalar_select %p149, %s17, 0
        %s151 = smul.addr %s150, 10
        %s152 = smul.addr %s148, 10
        %s153 = sadd.s32 %s151, %s152
        %s154 = smul.addr %s153, 4
        %s155 = scalar_lea.vmem %s0, %s154
      $region28: #{_lambda_.22} parent=23 // pred_fallthru
        _
    $region24: #{_lambda_.22} parent=5 // pred_fallthru
      _
    %p156 = scmp.le.s32.totalorder 1, %s9
    %p157 = scmp.lt.s32.totalorder %s9, 3
    %p158 = pnand %p156, %p157
    %p159 = pneg %p158
    // Predicated region
    $region29: #{_lambda_.22} parent=5 // pred_check
      _
    $region30: #{_lambda_.22} parent=5 // pred_check_branch
      %161 = sbr.rel (%p158) target = $region32
    $region31: #{_lambda_.22} parent=5 // pred_region
      %s162 = ssub.s32 %s9, 1
      %p163 = scmp.lt.s32.totalorder %s18, 1
      %s164 = scalar_select %p163, %s18, 1
      %p165 = scmp.lt.s32.totalorder %s19, 0
      %s166 = scalar_select %p165, %s19, 0
      %s167 = smul.addr %s166, 10
      %s168 = smul.addr %s164, 10
      %s169 = sadd.s32 %s167, %s168
      %s170 = smul.addr %s169, 4
      %s171 = scalar_lea.vmem %s0, %s170
      %p172 = pneg %p49
      %p173 = pneg %p46
      %p174 = pneg %p70
      %p175 = pneg %p67
      %p176 = pneg %p91
      %p177 = pneg %p88
      %p178 = pneg %p119
      %p179 = pneg %p116
      %s180 = smul.u32 4, %s19
      %p181 = scmp.lt.s32.totalorder %s18, 1
      %s182 = scalar_select %p181, %s18, 1
      %p183 = scmp.lt.s32.totalorder %s180, 3
      %s184 = scalar_select %p183, %s180, 3
      %s185 = smul.addr %s182, 8
      %s186 = sadd.s32 %s184, %s185
      %s187 = smul.addr %s186, 4
      %s188 = scalar_lea.vmem %s3, %s187
      %p189 = scmp.lt.s32.totalorder %s18, 1
      %s190 = scalar_select %p189, %s18, 1
      %p191 = scmp.lt.s32.totalorder %s19, 0
      %s192 = scalar_select %p191, %s19, 0
      %s193 = smul.addr %s192, 10
      %s194 = smul.addr %s190, 10
      %s195 = sadd.s32 %s193, %s194
      %s196 = smul.addr %s195, 4
      %s197 = scalar_lea.vmem %s0, %s196
      %s198 = smul.u32 4, %s19
      %p199 = scmp.lt.s32.totalorder %s18, 1
      %s200 = scalar_select %p199, %s18, 1
      %p201 = scmp.lt.s32.totalorder %s198, 3
      %s202 = scalar_select %p201, %s198, 3
      %s203 = smul.addr %s200, 8
      %s204 = sadd.s32 %s202, %s203
      %s205 = smul.addr %s204, 4
      %s206 = scalar_lea.vmem %s3, %s205
      %s207 = smul.u32 4, %s19
      %v209 = vld [vmem:[%s197] sm:$0xff]
      %v210 = vld [vmem:[%s197 + $0x8] sm:$0xff]
      %v211 = vld [vmem:[%s197 + $0x10] sm:$0xf]
      %v212 = vld [vmem:[%s197 + $0x14] sm:$0xff]
      %v213 = vld [vmem:[%s197 + $0x1c] sm:$0xff]
      %v214 = vld [vmem:[%s197 + $0x24] sm:$0xf]
      %v215 = vunpack.c.l.bf16 %v209
      %v216 = vunpack.c.h.bf16 %v209
      %v217 = vunpack.c.l.bf16 %v210
      %v218 = vunpack.c.h.bf16 %v210
      %v219 = vunpack.c.l.bf16 %v211
      %v220 = vunpack.c.l.bf16 %v212
      %v221 = vunpack.c.h.bf16 %v212
      %v222 = vunpack.c.l.bf16 %v213
      %v223 = vunpack.c.h.bf16 %v213
      %v224 = vunpack.c.l.bf16 %v214
      %vm225 = vcmp.ge.f32.partialorder %v215, 0.0
      %vm226 = vcmp.ge.f32.partialorder %v216, 0.0
      %vm227 = vcmp.ge.f32.partialorder %v217, 0.0
      %vm228 = vcmp.ge.f32.partialorder %v218, 0.0
      %vm229 = vcmp.ge.f32.partialorder %v219, 0.0
      %vm230 = vcmp.ge.f32.partialorder %v220, 0.0
      %vm231 = vcmp.ge.f32.partialorder %v221, 0.0
      %vm232 = vcmp.ge.f32.partialorder %v222, 0.0
      %vm233 = vcmp.ge.f32.partialorder %v223, 0.0
      %vm234 = vcmp.ge.f32.partialorder %v224, 0.0
      %v235 = vmul.f32 %v215, 0.01
      %v236 = vmul.f32 %v216, 0.01
      %v237 = vmul.f32 %v217, 0.01
      %v238 = vmul.f32 %v218, 0.01
      %v239 = vmul.f32 %v219, 0.01
      %v240 = vmul.f32 %v220, 0.01
      %v241 = vmul.f32 %v221, 0.01
      %v242 = vmul.f32 %v222, 0.01
      %v243 = vmul.f32 %v223, 0.01
      %v244 = vmul.f32 %v224, 0.01
      %v245 = vsel %vm225, %v215, %v235
      %v246 = vsel %vm226, %v216, %v236
      %v247 = vsel %vm227, %v217, %v237
      %v248 = vsel %vm228, %v218, %v238
      %v249 = vsel %vm229, %v219, %v239
      %v250 = vsel %vm230, %v220, %v240
      %v251 = vsel %vm231, %v221, %v241
      %v252 = vsel %vm232, %v222, %v242
      %v253 = vsel %vm233, %v223, %v243
      %v254 = vsel %vm234, %v224, %v244
      %265 = vrot.lane.b32.xlu0 %v245, 127
      %v266 = vpop.permute.xlu0 %265
      %267 = vrot.lane.b32.xlu0 %v246, 127
      %v268 = vpop.permute.xlu0 %267
      %269 = vrot.lane.b32.xlu0 %v247, 127
      %v270 = vpop.permute.xlu0 %269
      %271 = vrot.lane.b32.xlu0 %v248, 127
      %v272 = vpop.permute.xlu0 %271
      %273 = vrot.lane.b32.xlu0 %v249, 127
      %v274 = vpop.permute.xlu0 %273
      %275 = vrot.lane.b32.xlu0 %v250, 127
      %v276 = vpop.permute.xlu0 %275
      %277 = vrot.lane.b32.xlu0 %v251, 127
      %v278 = vpop.permute.xlu0 %277
      %279 = vrot.lane.b32.xlu0 %v252, 127
      %v280 = vpop.permute.xlu0 %279
      %281 = vrot.lane.b32.xlu0 %v253, 127
      %v282 = vpop.permute.xlu0 %281
      %283 = vrot.lane.b32.xlu0 %v254, 127
      %v284 = vpop.permute.xlu0 %283
      %vm285 = vcmask 1039360
      %v286 = vsel %vm285, %v266, %v268
      %v287 = vsel %vm285, %v268, %v270
      %v288 = vsel %vm285, %v270, %v272
      %v289 = vsel %vm285, %v272, %v274
      %v290 = vsel %vm285, %v276, %v278
      %v291 = vsel %vm285, %v278, %v280
      %v292 = vsel %vm285, %v280, %v282
      %v293 = vsel %vm285, %v282, %v284
      %302 = vrot.lane.b32.xlu0 %v245, 126
      %v303 = vpop.permute.xlu0 %302
      %304 = vrot.lane.b32.xlu0 %v246, 126
      %v305 = vpop.permute.xlu0 %304
      %306 = vrot.lane.b32.xlu0 %v247, 126
      %v307 = vpop.permute.xlu0 %306
      %308 = vrot.lane.b32.xlu0 %v248, 126
      %v309 = vpop.permute.xlu0 %308
      %310 = vrot.lane.b32.xlu0 %v249, 126
      %v311 = vpop.permute.xlu0 %310
      %312 = vrot.lane.b32.xlu0 %v250, 126
      %v313 = vpop.permute.xlu0 %312
      %314 = vrot.lane.b32.xlu0 %v251, 126
      %v315 = vpop.permute.xlu0 %314
      %316 = vrot.lane.b32.xlu0 %v252, 126
      %v317 = vpop.permute.xlu0 %316
      %318 = vrot.lane.b32.xlu0 %v253, 126
      %v319 = vpop.permute.xlu0 %318
      %320 = vrot.lane.b32.xlu0 %v254, 126
      %v321 = vpop.permute.xlu0 %320
      %vm322 = vcmask 1031168
      %v323 = vsel %vm322, %v303, %v305
      %v324 = vsel %vm322, %v305, %v307
      %v325 = vsel %vm322, %v307, %v309
      %v326 = vsel %vm322, %v309, %v311
      %v327 = vsel %vm322, %v313, %v315
      %v328 = vsel %vm322, %v315, %v317
      %v329 = vsel %vm322, %v317, %v319
      %v330 = vsel %vm322, %v319, %v321
      %v339 = vld [vmem:[%s1] sm:$0xf]
      %v340 = vld [vmem:[%s1 + $0x4] sm:$0xf]
      %v341 = vpack.c.bf16 %v250, %v245
      %v342 = vpack.c.bf16 %v251, %v246
      %v343 = vpack.c.bf16 %v252, %v247
      %v344 = vpack.c.bf16 %v253, %v248
      %v345 = vpack.c.bf16 %v290, %v286
      %v346 = vpack.c.bf16 %v291, %v287
      %v347 = vpack.c.bf16 %v292, %v288
      %v348 = vpack.c.bf16 %v293, %v289
      %v349 = vpack.c.bf16 %v327, %v323
      %v350 = vpack.c.bf16 %v328, %v324
      %v351 = vpack.c.bf16 %v329, %v325
      %v352 = vpack.c.bf16 %v330, %v326
      %v353 = vld [vmem:[%s2] sm:$0xff]
      %v354 = vld [vmem:[%s2 + $0x8] sm:$0xff]
      %356 = vset.pattern.permute.xlu0 0
      %357 = vperm.xlu0 %356, %v353
      %v358 = vpop.permute.xlu0 %357
      %361 = vset.pattern.permute.xlu0 0
      %362 = vperm.xlu0 %361, %v354
      %v363 = vpop.permute.xlu0 %362
      %v367 = vunpack.c.l.b16 %v339
      %v368 = vunpack.c.l.b16 %v340
      %v369 = vpack.c.b16 %v368, %v367
      %vm370 = vcmask 392192
      %v372 = vsel %vm370, %v369, 0
      %374 = vmatprep.subr.bf16.mxu0 0
      %375 = vmatpush1.bf16.msra.mxu0 0
      %376 = vmatprep.subr.bf16.mxu0 0
      %377 = vmatpush1.bf16.msra.mxu0 0
      %378 = vmatprep.subr.bf16.mxu0 0
      %379 = vmatpush1.bf16.msra.mxu0 0
      %380 = vmatprep.subr.bf16.mxu0 0
      %381 = vmatpush1.bf16.msra.mxu0 0
      %382 = vmatprep.subr.bf16.mxu0 0
      %383 = vmatpush1.bf16.msra.mxu0 0
      %384 = vmatprep.subr.bf16.mxu0 %v350
      %385 = vmatpush1.bf16.msra.mxu0 %v349
      %386 = vmatprep.subr.bf16.mxu0 %v346
      %387 = vmatpush1.bf16.msra.mxu0 %v345
      %388 = vmatprep.subr.bf16.mxu0 %v342
      %389 = vmatpush1.bf16.msra.mxu0 %v341
      %390 = vmatprep.subr.bf16.mxu0 0
      %391 = vmatpush2.bf16.msra.mxu0 0
      %392 = vmatprep.subr.bf16.mxu0 0
      %393 = vmatpush2.bf16.msra.mxu0 0
      %394 = vmatprep.subr.bf16.mxu0 0
      %395 = vmatpush2.bf16.msra.mxu0 0
      %396 = vmatprep.subr.bf16.mxu0 0
      %397 = vmatpush2.bf16.msra.mxu0 0
      %398 = vmatprep.subr.bf16.mxu0 0
      %399 = vmatpush2.bf16.msra.mxu0 0
      %400 = vmatprep.subr.bf16.mxu0 0
      %401 = vmatpush2.bf16.msra.mxu0 0
      %402 = vmatprep.subr.bf16.mxu0 0
      %403 = vmatpush2.bf16.msra.mxu0 0
      %404 = vmatprep.subr.bf16.mxu0 0
      %405 = vmatpush2.bf16.msra.mxu0 0
      %406 = vmatprep.mubr.bf16.mxu0 0
      %407 = vmatmul.mubr.bf16.gmra.mxu0 %v372
      %v408 = vpop.f32.mrf.mxu0
      %v409 = vadd.f32 %v358, %v408
      %v410 = vpop.f32.mrf.mxu0
      %v411 = vadd.f32 %v358, %v410
      %v412 = vpop.f32.mrf.mxu0
      %v413 = vadd.f32 %v363, %v412
      %v414 = vpop.f32.mrf.mxu0
      %v415 = vadd.f32 %v363, %v414
      %416 = vdwg.mxu0
      %417 = vmatprep.subr.bf16.mxu0 0
      %418 = vmatpush1.bf16.msra.mxu0 0
      %419 = vmatprep.subr.bf16.mxu0 0
      %420 = vmatpush1.bf16.msra.mxu0 0
      %421 = vmatprep.subr.bf16.mxu0 0
      %422 = vmatpush1.bf16.msra.mxu0 0
      %423 = vmatprep.subr.bf16.mxu0 0
      %424 = vmatpush1.bf16.msra.mxu0 0
      %425 = vmatprep.subr.bf16.mxu0 0
      %426 = vmatpush1.bf16.msra.mxu0 0
      %427 = vmatprep.subr.bf16.mxu0 %v352
      %428 = vmatpush1.bf16.msra.mxu0 %v351
      %429 = vmatprep.subr.bf16.mxu0 %v348
      %430 = vmatpush1.bf16.msra.mxu0 %v347
      %431 = vmatprep.subr.bf16.mxu0 %v344
      %432 = vmatpush1.bf16.msra.mxu0 %v343
      %433 = vmatprep.subr.bf16.mxu0 0
      %434 = vmatpush2.bf16.msra.mxu0 0
      %435 = vmatprep.subr.bf16.mxu0 0
      %436 = vmatpush2.bf16.msra.mxu0 0
      %437 = vmatprep.subr.bf16.mxu0 0
      %438 = vmatpush2.bf16.msra.mxu0 0
      %439 = vmatprep.subr.bf16.mxu0 0
      %440 = vmatpush2.bf16.msra.mxu0 0
      %441 = vmatprep.subr.bf16.mxu0 0
      %442 = vmatpush2.bf16.msra.mxu0 0
      %443 = vmatprep.subr.bf16.mxu0 0
      %444 = vmatpush2.bf16.msra.mxu0 0
      %445 = vmatprep.subr.bf16.mxu0 0
      %446 = vmatpush2.bf16.msra.mxu0 0
      %447 = vmatprep.subr.bf16.mxu0 0
      %448 = vmatpush2.bf16.msra.mxu0 0
      %449 = vmatprep.mubr.bf16.mxu0 0
      %450 = vmatmul.mubr.bf16.gmra.mxu0 %v372
      %v451 = vpop.f32.mrf.mxu0
      %v452 = vadd.f32 %v358, %v451
      %v453 = vpop.f32.mrf.mxu0
      %v454 = vadd.f32 %v358, %v453
      %v455 = vpop.f32.mrf.mxu0
      %v456 = vadd.f32 %v363, %v455
      %v457 = vpop.f32.mrf.mxu0
      %v458 = vadd.f32 %v363, %v457
      %459 = vdwg.mxu0
      %v460 = vpack.c.bf16 %v413, %v409
      %v461 = vpack.c.bf16 %v415, %v411
      %v462 = vpack.c.bf16 %v456, %v452
      %v463 = vpack.c.bf16 %v458, %v454
      %v468 = vunpack.c.l.b16 %v460
      %v469 = vunpack.c.l.b16 %v461
      %v470 = vunpack.c.l.b16 %v462
      %v471 = vunpack.c.l.b16 %v463
      %v472 = vunpack.c.h.b16 %v460
      %v473 = vunpack.c.h.b16 %v461
      %v474 = vunpack.c.h.b16 %v462
      %v475 = vunpack.c.h.b16 %v463
      %v476 = vpack.c.b16 %v469, %v468
      %v477 = vpack.c.b16 %v471, %v470
      %v478 = vpack.c.b16 %v473, %v472
      %v479 = vpack.c.b16 %v475, %v474
      %484 = vst [vmem:[%s206] sm:$0xff] %v476
      %485 = vst [vmem:[%s206 + $0x8] sm:$0xff] %v477
      %486 = vst [vmem:[%s206 + $0x10] sm:$0xff] %v478
      %487 = vst [vmem:[%s206 + $0x18] sm:$0xff] %v479
      %s488 = smul.u32 4, %s19
      %p489 = scmp.lt.s32.totalorder %s18, 1
      %s490 = scalar_select %p489, %s18, 1
      %p491 = scmp.lt.s32.totalorder %s488, 3
      %s492 = scalar_select %p491, %s488, 3
      %s493 = smul.addr %s490, 8
      %s494 = sadd.s32 %s492, %s493
      %s495 = smul.addr %s494, 4
      %s496 = scalar_lea.vmem %s3, %s495
      // Predicated region
      $region33: #{_lambda_.22} parent=31 // pred_check
        %p497 = pneg %p116
      $region34: #{_lambda_.22} parent=31 // pred_check_branch
        %499 = sbr.rel (%p497) target = $region36
      $region35: #{_lambda_.22} parent=31 // pred_region
        %s500 = smul.u32 4, %s19
      $region36: #{_lambda_.22} parent=31 // pred_fallthru
        _
    $region32: #{_lambda_.22} parent=5 // pred_fallthru
      _
    %p501 = scmp.le.s32.totalorder 2, %s9
    // Predicated region
    $region37: #{_lambda_.22} parent=5 // pred_check
      %p502 = pneg %p501
    $region38: #{_lambda_.22} parent=5 // pred_check_branch
      %504 = sbr.rel (%p502) target = $region40
    $region39: #{_lambda_.22} parent=5 // pred_region
      %s505 = ssub.s32 %s9, 2
      // Predicated region
      $region41: #{_lambda_.22} parent=39 // pred_check
        %p506 = pneg %p122
      $region42: #{_lambda_.22} parent=39 // pred_check_branch
        %508 = sbr.rel (%p506) target = $region44
      $region43: #{_lambda_.22} parent=39 // pred_region
        %s509 = smul.u32 4, %s21
        %p510 = scmp.lt.s32.totalorder %s20, 1
        %s511 = scalar_select %p510, %s20, 1
        %p512 = scmp.lt.s32.totalorder %s509, 3
        %s513 = scalar_select %p512, %s509, 3
        %s514 = smul.addr %s511, 8
        %s515 = sadd.s32 %s513, %s514
        %s516 = smul.addr %s515, 4
        %s517 = scalar_lea.vmem %s3, %s516
      $region44: #{_lambda_.22} parent=39 // pred_fallthru
        _
    $region40: #{_lambda_.22} parent=5 // pred_fallthru
      _
  $region6: #{_lambda_.22} parent=0 // loop_footer
    %s13 = sadd.s32 1, %s9
  $region7: #{_lambda_.22} parent=0 // loop_footer_branch
    %8 = sbr.rel target = $region3
  $region8: #{_lambda_.22} parent=0 // loop_exit
    _

// kernel: _lambda_.23
$region0: #{_lambda_.23}
  #allocation0 [shape = 'u32[]', space=smem, size = 0x4, offset = 0x4, fixed_abs, tag = 'smem constant byte address 0x4 - core index']
  #allocation1 [shape = 'u32[144,128]{1,0:T(1,128)}', space=vmem, size = 0x12000, scoped, tag = 'internal scratch']
  %s0 = inlined_call_operand.vmem [shape: bf16[2,1,16,514], index: 0, kind: input, shape index: {}]
  %s1 = inlined_call_operand.vmem [shape: bf16[16,48], index: 1, kind: input, shape index: {}]
  %s2 = inlined_call_operand.vmem [shape: f32[16,1], index: 2, kind: input, shape index: {}]
  %s3 = inlined_call_operand.vmem [shape: bf16[2,16,512], index: 3, kind: input, shape index: {}]
  %s4 = inlined_call_operand.vmem [shape: bf16[2,16,512], index: 4, kind: output, shape index: {}]
  %s5 = sld [smem:[#allocation0]]
  $region49: #{_lambda_.23} parent=0
    _
  %s7 = ssub.s32 1, %s5
  %s8 = scalar_select 0, %s7, %s5
  loop: start=0, step=1, limit=4
  $region2: #{_lambda_.23} parent=0 // loop_pre_header
    _
  $region3: #{_lambda_.23} parent=0 // loop_header
    %s10 = sphi 0, %s14
    %p11 = scmp.ge.s32.totalorder %s10, 4
    %s17 = sphi 0, %s29
    %s18 = sphi 0, %s25
    %s19 = sphi 0, %s17
    %s20 = sphi 0, %s18
    %s21 = sphi 0, %s19
    %s22 = sphi 0, %s20
    %s34 = sphi 0, %s36
    %s37 = sphi 0, %s34
    %s38 = sphi 0, %s37
    %s54 = sphi 0, %s38
    %s58 = sphi 0, %s58
    %s60 = sphi 0, %s58
    %s61 = sphi 0, %s60
    %s75 = sphi 0, %s61
    %s79 = sphi 0, %s79
    %s81 = sphi 0, %s79
    %s82 = sphi 0, %s81
    %s96 = sphi 0, %s82
    %s104 = sphi 0, %s106
    %s107 = sphi 0, %s104
    %s108 = sphi 0, %s107
    %s124 = sphi 0, %s108
    %s132 = sphi 0, %s134
    %s135 = sphi 0, %s132
    %s136 = sphi 0, %s135
    %s152 = sphi 0, %s136
  $region4: #{_lambda_.23} parent=0 // loop_header_branch
    %13 = sbr.rel (%p11) target = $region8
  $region5: #{_lambda_.23} parent=0 // loop_body
    %s15 = ssub.s32 %s10, 1
    %s16 = ssub.s32 %s10, 2
    %s23 = sadd.s32 1, %s18
    %p24 = scmp.ge.s32.totalorder %s23, 1
    %s25 = scalar_select %p24, 0, %s23
    %s26 = sadd.s32 1, %s17
    %s27 = scalar_select %p24, %s26, %s17
    %p28 = scmp.ge.s32.totalorder %s27, 2
    %s29 = scalar_select %p28, 0, %s27
    %s30 = ssub.s32 %s17, %s29
    %s31 = ssub.s32 %s18, %s25
    %s32 = sor.u32 %s30, %s31
    %p33 = scmp.eq.s32.totalorder %s32, 0
    %s35 = sadd.s32 %s34, 1
    %s36 = scalar_select %p33, %s34, %s35
    %p39 = pneg %p33
    %p40 = scmp.eq.s32.totalorder %s10, 1
    %p41 = por %p39, %p40
    %p42 = scmp.ne.s32.totalorder %s34, %s37
    %p43 = scmp.eq.s32.totalorder %s10, 0
    %p44 = por %p42, %p43
    %p45 = scmp.ne.s32.totalorder %s34, %s37
    %p46 = scmp.eq.s32.totalorder %s15, 1
    %p47 = por %p45, %p46
    %p48 = scmp.ne.s32.totalorder %s37, %s38
    %p49 = scmp.eq.s32.totalorder %s15, 0
    %p50 = por %p48, %p49
    %p51 = scmp.ne.s32.totalorder %s37, %s38
    %p52 = scmp.eq.s32.totalorder %s16, 1
    %p53 = por %p51, %p52
    %p55 = scmp.ne.s32.totalorder %s38, %s54
    %p56 = scmp.eq.s32.totalorder %s16, 0
    %p57 = por %p55, %p56
    %s59 = sadd.s32 %s58, 1
    %p62 = scmp.eq.s32.totalorder %s10, 1
    %p63 = scmp.ne.s32.totalorder %s58, %s60
    %p64 = scmp.eq.s32.totalorder %s10, 0
    %p65 = por %p63, %p64
    %p66 = scmp.ne.s32.totalorder %s58, %s60
    %p67 = scmp.eq.s32.totalorder %s15, 1
    %p68 = por %p66, %p67
    %p69 = scmp.ne.s32.totalorder %s60, %s61
    %p70 = scmp.eq.s32.totalorder %s15, 0
    %p71 = por %p69, %p70
    %p72 = scmp.ne.s32.totalorder %s60, %s61
    %p73 = scmp.eq.s32.totalorder %s16, 1
    %p74 = por %p72, %p73
    %p76 = scmp.ne.s32.totalorder %s61, %s75
    %p77 = scmp.eq.s32.totalorder %s16, 0
    %p78 = por %p76, %p77
    %s80 = sadd.s32 %s79, 1
    %p83 = scmp.eq.s32.totalorder %s10, 1
    %p84 = scmp.ne.s32.totalorder %s79, %s81
    %p85 = scmp.eq.s32.totalorder %s10, 0
    %p86 = por %p84, %p85
    %p87 = scmp.ne.s32.totalorder %s79, %s81
    %p88 = scmp.eq.s32.totalorder %s15, 1
    %p89 = por %p87, %p88
    %p90 = scmp.ne.s32.totalorder %s81, %s82
    %p91 = scmp.eq.s32.totalorder %s15, 0
    %p92 = por %p90, %p91
    %p93 = scmp.ne.s32.totalorder %s81, %s82
    %p94 = scmp.eq.s32.totalorder %s16, 1
    %p95 = por %p93, %p94
    %p97 = scmp.ne.s32.totalorder %s82, %s96
    %p98 = scmp.eq.s32.totalorder %s16, 0
    %p99 = por %p97, %p98
    %s100 = ssub.s32 %s17, %s29
    %s101 = ssub.s32 %s18, %s25
    %s102 = sor.u32 %s100, %s101
    %p103 = scmp.eq.s32.totalorder %s102, 0
    %s105 = sadd.s32 %s104, 1
    %s106 = scalar_select %p103, %s104, %s105
    %p109 = pneg %p103
    %p110 = scmp.eq.s32.totalorder %s10, 1
    %p111 = por %p109, %p110
    %p112 = scmp.ne.s32.totalorder %s104, %s107
    %p113 = scmp.eq.s32.totalorder %s10, 0
    %p114 = por %p112, %p113
    %p115 = scmp.ne.s32.totalorder %s104, %s107
    %p116 = scmp.eq.s32.totalorder %s15, 1
    %p117 = por %p115, %p116
    %p118 = scmp.ne.s32.totalorder %s107, %s108
    %p119 = scmp.eq.s32.totalorder %s15, 0
    %p120 = por %p118, %p119
    %p121 = scmp.ne.s32.totalorder %s107, %s108
    %p122 = scmp.eq.s32.totalorder %s16, 1
    %p123 = por %p121, %p122
    %p125 = scmp.ne.s32.totalorder %s108, %s124
    %p126 = scmp.eq.s32.totalorder %s16, 0
    %p127 = por %p125, %p126
    %s128 = ssub.s32 %s17, %s29
    %s129 = ssub.s32 %s18, %s25
    %s130 = sor.u32 %s128, %s129
    %p131 = scmp.eq.s32.totalorder %s130, 0
    %s133 = sadd.s32 %s132, 1
    %s134 = scalar_select %p131, %s132, %s133
    %p137 = pneg %p131
    %p138 = scmp.eq.s32.totalorder %s10, 1
    %p139 = por %p137, %p138
    %p140 = scmp.ne.s32.totalorder %s132, %s135
    %p141 = scmp.eq.s32.totalorder %s10, 0
    %p142 = por %p140, %p141
    %p143 = scmp.ne.s32.totalorder %s132, %s135
    %p144 = scmp.eq.s32.totalorder %s15, 1
    %p145 = por %p143, %p144
    %p146 = scmp.ne.s32.totalorder %s135, %s136
    %p147 = scmp.eq.s32.totalorder %s15, 0
    %p148 = por %p146, %p147
    %p149 = scmp.ne.s32.totalorder %s135, %s136
    %p150 = scmp.eq.s32.totalorder %s16, 1
    %p151 = por %p149, %p150
    %p153 = scmp.ne.s32.totalorder %s136, %s152
    %p154 = scmp.eq.s32.totalorder %s16, 0
    %p155 = por %p153, %p154
    %p156 = scmp.le.s32.totalorder 1, %s10
    %p157 = scmp.lt.s32.totalorder %s10, 3
    %p158 = pnand %p156, %p157
    %p159 = pneg %p158
    // Predicated region
    $region9: #{_lambda_.23} parent=5 // pred_check
      _
    $region10: #{_lambda_.23} parent=5 // pred_check_branch
      %161 = sbr.rel (%p158) target = $region12
    $region11: #{_lambda_.23} parent=5 // pred_region
      %s162 = ssub.s32 %s10, 1
      // Predicated region
      $region13: #{_lambda_.23} parent=11 // pred_check
        %p163 = pneg %p71
      $region14: #{_lambda_.23} parent=11 // pred_check_branch
        %165 = sbr.rel (%p163) target = $region16
      $region15: #{_lambda_.23} parent=11 // pred_region
        _
      $region16: #{_lambda_.23} parent=11 // pred_fallthru
        _
      // Predicated region
      $region17: #{_lambda_.23} parent=11 // pred_check
        %p166 = pneg %p92
      $region18: #{_lambda_.23} parent=11 // pred_check_branch
        %168 = sbr.rel (%p166) target = $region20
      $region19: #{_lambda_.23} parent=11 // pred_region
        _
      $region20: #{_lambda_.23} parent=11 // pred_fallthru
        _
    $region12: #{_lambda_.23} parent=5 // pred_fallthru
      _
    %p169 = scmp.lt.s32.totalorder %s10, 2
    // Predicated region
    $region21: #{_lambda_.23} parent=5 // pred_check
      %p170 = pneg %p169
    $region22: #{_lambda_.23} parent=5 // pred_check_branch
      %172 = sbr.rel (%p170) target = $region24
    $region23: #{_lambda_.23} parent=5 // pred_region
      // Predicated region
      $region25: #{_lambda_.23} parent=23 // pred_check
        %p173 = pneg %p44
      $region26: #{_lambda_.23} parent=23 // pred_check_branch
        %175 = sbr.rel (%p173) target = $region28
      $region27: #{_lambda_.23} parent=23 // pred_region
        %p176 = scmp.lt.s32.totalorder %s17, 1
        %s177 = scalar_select %p176, %s17, 1
        %p178 = scmp.lt.s32.totalorder %s18, 0
        %s179 = scalar_select %p178, %s18, 0
        %s180 = smul.addr %s179, 10
        %s181 = smul.addr %s177, 10
        %s182 = sadd.s32 %s180, %s181
        %s183 = smul.addr %s182, 4
        %s184 = scalar_lea.vmem %s0, %s183
      $region28: #{_lambda_.23} parent=23 // pred_fallthru
        _
      // Predicated region
      $region29: #{_lambda_.23} parent=23 // pred_check
        %p185 = pneg %p114
      $region30: #{_lambda_.23} parent=23 // pred_check_branch
        %187 = sbr.rel (%p185) target = $region32
      $region31: #{_lambda_.23} parent=23 // pred_region
        %s188 = smul.u32 4, %s18
        %p189 = scmp.lt.s32.totalorder %s17, 1
        %s190 = scalar_select %p189, %s17, 1
        %p191 = scmp.lt.s32.totalorder %s188, 3
        %s192 = scalar_select %p191, %s188, 3
        %s193 = smul.addr %s190, 8
        %s194 = sadd.s32 %s192, %s193
        %s195 = smul.addr %s194, 4
        %s196 = scalar_lea.vmem %s3, %s195
        %s197 = smul.u32 4, %s18
      $region32: #{_lambda_.23} parent=23 // pred_fallthru
        _
    $region24: #{_lambda_.23} parent=5 // pred_fallthru
      _
    %p198 = scmp.le.s32.totalorder 1, %s10
    %p199 = scmp.lt.s32.totalorder %s10, 3
    %p200 = pnand %p198, %p199
    %p201 = pneg %p200
    // Predicated region
    $region33: #{_lambda_.23} parent=5 // pred_check
      _
    $region34: #{_lambda_.23} parent=5 // pred_check_branch
      %203 = sbr.rel (%p200) target = $region36
    $region35: #{_lambda_.23} parent=5 // pred_region
      %s204 = ssub.s32 %s10, 1
      %p205 = scmp.lt.s32.totalorder %s19, 1
      %s206 = scalar_select %p205, %s19, 1
      %p207 = scmp.lt.s32.totalorder %s20, 0
      %s208 = scalar_select %p207, %s20, 0
      %s209 = smul.addr %s208, 10
      %s210 = smul.addr %s206, 10
      %s211 = sadd.s32 %s209, %s210
      %s212 = smul.addr %s211, 4
      %s213 = scalar_lea.vmem %s0, %s212
      %p214 = pneg %p50
      %p215 = pneg %p47
      %p216 = pneg %p71
      %p217 = pneg %p68
      %p218 = pneg %p92
      %p219 = pneg %p89
      %s220 = smul.u32 4, %s20
      %p221 = scmp.lt.s32.totalorder %s19, 1
      %s222 = scalar_select %p221, %s19, 1
      %p223 = scmp.lt.s32.totalorder %s220, 3
      %s224 = scalar_select %p223, %s220, 3
      %s225 = smul.addr %s222, 8
      %s226 = sadd.s32 %s224, %s225
      %s227 = smul.addr %s226, 4
      %s228 = scalar_lea.vmem %s3, %s227
      %p229 = pneg %p120
      %p230 = pneg %p117
      %p231 = pneg %p148
      %p232 = pneg %p145
      %s233 = smul.u32 4, %s20
      %p234 = scmp.lt.s32.totalorder %s19, 1
      %s235 = scalar_select %p234, %s19, 1
      %p236 = scmp.lt.s32.totalorder %s233, 3
      %s237 = scalar_select %p236, %s233, 3
      %s238 = smul.addr %s235, 8
      %s239 = sadd.s32 %s237, %s238
      %s240 = smul.addr %s239, 4
      %s241 = scalar_lea.vmem %s4, %s240
      %p242 = scmp.lt.s32.totalorder %s19, 1
      %s243 = scalar_select %p242, %s19, 1
      %p244 = scmp.lt.s32.totalorder %s20, 0
      %s245 = scalar_select %p244, %s20, 0
      %s246 = smul.addr %s245, 10
      %s247 = smul.addr %s243, 10
      %s248 = sadd.s32 %s246, %s247
      %s249 = smul.addr %s248, 4
      %s250 = scalar_lea.vmem %s0, %s249
      %s251 = smul.u32 4, %s20
      %p252 = scmp.lt.s32.totalorder %s19, 1
      %s253 = scalar_select %p252, %s19, 1
      %p254 = scmp.lt.s32.totalorder %s251, 3
      %s255 = scalar_select %p254, %s251, 3
      %s256 = smul.addr %s253, 8
      %s257 = sadd.s32 %s255, %s256
      %s258 = smul.addr %s257, 4
      %s259 = scalar_lea.vmem %s3, %s258
      %s260 = smul.u32 4, %s20
      %s261 = smul.u32 4, %s20
      %p262 = scmp.lt.s32.totalorder %s19, 1
      %s263 = scalar_select %p262, %s19, 1
      %p264 = scmp.lt.s32.totalorder %s261, 3
      %s265 = scalar_select %p264, %s261, 3
      %s266 = smul.addr %s263, 8
      %s267 = sadd.s32 %s265, %s266
      %s268 = smul.addr %s267, 4
      %s269 = scalar_lea.vmem %s4, %s268
      %s270 = smul.u32 4, %s20
      %v272 = vld [vmem:[%s250] sm:$0xff]
      %v273 = vld [vmem:[%s250 + $0x8] sm:$0xff]
      %v274 = vld [vmem:[%s250 + $0x10] sm:$0xf]
      %v275 = vld [vmem:[%s250 + $0x14] sm:$0xff]
      %v276 = vld [vmem:[%s250 + $0x1c] sm:$0xff]
      %v277 = vld [vmem:[%s250 + $0x24] sm:$0xf]
      %v278 = vunpack.c.l.bf16 %v272
      %v279 = vunpack.c.h.bf16 %v272
      %v280 = vunpack.c.l.bf16 %v273
      %v281 = vunpack.c.h.bf16 %v273
      %v282 = vunpack.c.l.bf16 %v274
      %v283 = vunpack.c.l.bf16 %v275
      %v284 = vunpack.c.h.bf16 %v275
      %v285 = vunpack.c.l.bf16 %v276
      %v286 = vunpack.c.h.bf16 %v276
      %v287 = vunpack.c.l.bf16 %v277
      %vm288 = vcmp.ge.f32.partialorder %v278, 0.0
      %vm289 = vcmp.ge.f32.partialorder %v279, 0.0
      %vm290 = vcmp.ge.f32.partialorder %v280, 0.0
      %vm291 = vcmp.ge.f32.partialorder %v281, 0.0
      %vm292 = vcmp.ge.f32.partialorder %v282, 0.0
      %vm293 = vcmp.ge.f32.partialorder %v283, 0.0
      %vm294 = vcmp.ge.f32.partialorder %v284, 0.0
      %vm295 = vcmp.ge.f32.partialorder %v285, 0.0
      %vm296 = vcmp.ge.f32.partialorder %v286, 0.0
      %vm297 = vcmp.ge.f32.partialorder %v287, 0.0
      %v298 = vmul.f32 %v278, 0.01
      %v299 = vmul.f32 %v279, 0.01
      %v300 = vmul.f32 %v280, 0.01
      %v301 = vmul.f32 %v281, 0.01
      %v302 = vmul.f32 %v282, 0.01
      %v303 = vmul.f32 %v283, 0.01
      %v304 = vmul.f32 %v284, 0.01
      %v305 = vmul.f32 %v285, 0.01
      %v306 = vmul.f32 %v286, 0.01
      %v307 = vmul.f32 %v287, 0.01
      %v308 = vsel %vm288, %v278, %v298
      %v309 = vsel %vm289, %v279, %v299
      %v310 = vsel %vm290, %v280, %v300
      %v311 = vsel %vm291, %v281, %v301
      %v312 = vsel %vm292, %v282, %v302
      %v313 = vsel %vm293, %v283, %v303
      %v314 = vsel %vm294, %v284, %v304
      %v315 = vsel %vm295, %v285, %v305
      %v316 = vsel %vm296, %v286, %v306
      %v317 = vsel %vm297, %v287, %v307
      %328 = vrot.lane.b32.xlu0 %v308, 127
      %v329 = vpop.permute.xlu0 %328
      %330 = vrot.lane.b32.xlu0 %v309, 127
      %v331 = vpop.permute.xlu0 %330
      %332 = vrot.lane.b32.xlu0 %v310, 127
      %v333 = vpop.permute.xlu0 %332
      %334 = vrot.lane.b32.xlu0 %v311, 127
      %v335 = vpop.permute.xlu0 %334
      %336 = vrot.lane.b32.xlu0 %v312, 127
      %v337 = vpop.permute.xlu0 %336
      %338 = vrot.lane.b32.xlu0 %v313, 127
      %v339 = vpop.permute.xlu0 %338
      %340 = vrot.lane.b32.xlu0 %v314, 127
      %v341 = vpop.permute.xlu0 %340
      %342 = vrot.lane.b32.xlu0 %v315, 127
      %v343 = vpop.permute.xlu0 %342
      %344 = vrot.lane.b32.xlu0 %v316, 127
      %v345 = vpop.permute.xlu0 %344
      %346 = vrot.lane.b32.xlu0 %v317, 127
      %v347 = vpop.permute.xlu0 %346
      %vm348 = vcmask 1039360
      %v349 = vsel %vm348, %v329, %v331
      %v350 = vsel %vm348, %v331, %v333
      %v351 = vsel %vm348, %v333, %v335
      %v352 = vsel %vm348, %v335, %v337
      %v353 = vsel %vm348, %v339, %v341
      %v354 = vsel %vm348, %v341, %v343
      %v355 = vsel %vm348, %v343, %v345
      %v356 = vsel %vm348, %v345, %v347
      %365 = vrot.lane.b32.xlu0 %v308, 126
      %v366 = vpop.permute.xlu0 %365
      %367 = vrot.lane.b32.xlu0 %v309, 126
      %v368 = vpop.permute.xlu0 %367
      %369 = vrot.lane.b32.xlu0 %v310, 126
      %v370 = vpop.permute.xlu0 %369
      %371 = vrot.lane.b32.xlu0 %v311, 126
      %v372 = vpop.permute.xlu0 %371
      %373 = vrot.lane.b32.xlu0 %v312, 126
      %v374 = vpop.permute.xlu0 %373
      %375 = vrot.lane.b32.xlu0 %v313, 126
      %v376 = vpop.permute.xlu0 %375
      %377 = vrot.lane.b32.xlu0 %v314, 126
      %v378 = vpop.permute.xlu0 %377
      %379 = vrot.lane.b32.xlu0 %v315, 126
      %v380 = vpop.permute.xlu0 %379
      %381 = vrot.lane.b32.xlu0 %v316, 126
      %v382 = vpop.permute.xlu0 %381
      %383 = vrot.lane.b32.xlu0 %v317, 126
      %v384 = vpop.permute.xlu0 %383
      %vm385 = vcmask 1031168
      %v386 = vsel %vm385, %v366, %v368
      %v387 = vsel %vm385, %v368, %v370
      %v388 = vsel %vm385, %v370, %v372
      %v389 = vsel %vm385, %v372, %v374
      %v390 = vsel %vm385, %v376, %v378
      %v391 = vsel %vm385, %v378, %v380
      %v392 = vsel %vm385, %v380, %v382
      %v393 = vsel %vm385, %v382, %v384
      %v402 = vld [vmem:[%s1] sm:$0xf]
      %v403 = vld [vmem:[%s1 + $0x4] sm:$0xf]
      %v404 = vpack.c.bf16 %v313, %v308
      %v405 = vpack.c.bf16 %v314, %v309
      %v406 = vpack.c.bf16 %v315, %v310
      %v407 = vpack.c.bf16 %v316, %v311
      %v408 = vpack.c.bf16 %v353, %v349
      %v409 = vpack.c.bf16 %v354, %v350
      %v410 = vpack.c.bf16 %v355, %v351
      %v411 = vpack.c.bf16 %v356, %v352
      %v412 = vpack.c.bf16 %v390, %v386
      %v413 = vpack.c.bf16 %v391, %v387
      %v414 = vpack.c.bf16 %v392, %v388
      %v415 = vpack.c.bf16 %v393, %v389
      %v416 = vld [vmem:[%s2] sm:$0xff]
      %v417 = vld [vmem:[%s2 + $0x8] sm:$0xff]
      %419 = vset.pattern.permute.xlu0 0
      %420 = vperm.xlu0 %419, %v416
      %v421 = vpop.permute.xlu0 %420
      %424 = vset.pattern.permute.xlu0 0
      %425 = vperm.xlu0 %424, %v417
      %v426 = vpop.permute.xlu0 %425
      %v430 = vunpack.c.l.b16 %v402
      %v431 = vunpack.c.l.b16 %v403
      %v432 = vpack.c.b16 %v431, %v430
      %vm433 = vcmask 392192
      %v435 = vsel %vm433, %v432, 0
      %437 = vmatprep.subr.bf16.mxu0 0
      %438 = vmatpush1.bf16.msra.mxu0 0
      %439 = vmatprep.subr.bf16.mxu0 0
      %440 = vmatpush1.bf16.msra.mxu0 0
      %441 = vmatprep.subr.bf16.mxu0 0
      %442 = vmatpush1.bf16.msra.mxu0 0
      %443 = vmatprep.subr.bf16.mxu0 0
      %444 = vmatpush1.bf16.msra.mxu0 0
      %445 = vmatprep.subr.bf16.mxu0 0
      %446 = vmatpush1.bf16.msra.mxu0 0
      %447 = vmatprep.subr.bf16.mxu0 %v413
      %448 = vmatpush1.bf16.msra.mxu0 %v412
      %449 = vmatprep.subr.bf16.mxu0 %v409
      %450 = vmatpush1.bf16.msra.mxu0 %v408
      %451 = vmatprep.subr.bf16.mxu0 %v405
      %452 = vmatpush1.bf16.msra.mxu0 %v404
      %453 = vmatprep.subr.bf16.mxu0 0
      %454 = vmatpush2.bf16.msra.mxu0 0
      %455 = vmatprep.subr.bf16.mxu0 0
      %456 = vmatpush2.bf16.msra.mxu0 0
      %457 = vmatprep.subr.bf16.mxu0 0
      %458 = vmatpush2.bf16.msra.mxu0 0
      %459 = vmatprep.subr.bf16.mxu0 0
      %460 = vmatpush2.bf16.msra.mxu0 0
      %461 = vmatprep.subr.bf16.mxu0 0
      %462 = vmatpush2.bf16.msra.mxu0 0
      %463 = vmatprep.subr.bf16.mxu0 0
      %464 = vmatpush2.bf16.msra.mxu0 0
      %465 = vmatprep.subr.bf16.mxu0 0
      %466 = vmatpush2.bf16.msra.mxu0 0
      %467 = vmatprep.subr.bf16.mxu0 0
      %468 = vmatpush2.bf16.msra.mxu0 0
      %469 = vmatprep.mubr.bf16.mxu0 0
      %470 = vmatmul.mubr.bf16.gmra.mxu0 %v435
      %v471 = vpop.f32.mrf.mxu0
      %v472 = vadd.f32 %v421, %v471
      %v473 = vpop.f32.mrf.mxu0
      %v474 = vadd.f32 %v421, %v473
      %v475 = vpop.f32.mrf.mxu0
      %v476 = vadd.f32 %v426, %v475
      %v477 = vpop.f32.mrf.mxu0
      %v478 = vadd.f32 %v426, %v477
      %479 = vdwg.mxu0
      %480 = vmatprep.subr.bf16.mxu0 0
      %481 = vmatpush1.bf16.msra.mxu0 0
      %482 = vmatprep.subr.bf16.mxu0 0
      %483 = vmatpush1.bf16.msra.mxu0 0
      %484 = vmatprep.subr.bf16.mxu0 0
      %485 = vmatpush1.bf16.msra.mxu0 0
      %486 = vmatprep.subr.bf16.mxu0 0
      %487 = vmatpush1.bf16.msra.mxu0 0
      %488 = vmatprep.subr.bf16.mxu0 0
      %489 = vmatpush1.bf16.msra.mxu0 0
      %490 = vmatprep.subr.bf16.mxu0 %v415
      %491 = vmatpush1.bf16.msra.mxu0 %v414
      %492 = vmatprep.subr.bf16.mxu0 %v411
      %493 = vmatpush1.bf16.msra.mxu0 %v410
      %494 = vmatprep.subr.bf16.mxu0 %v407
      %495 = vmatpush1.bf16.msra.mxu0 %v406
      %496 = vmatprep.subr.bf16.mxu0 0
      %497 = vmatpush2.bf16.msra.mxu0 0
      %498 = vmatprep.subr.bf16.mxu0 0
      %499 = vmatpush2.bf16.msra.mxu0 0
      %500 = vmatprep.subr.bf16.mxu0 0
      %501 = vmatpush2.bf16.msra.mxu0 0
      %502 = vmatprep.subr.bf16.mxu0 0
      %503 = vmatpush2.bf16.msra.mxu0 0
      %504 = vmatprep.subr.bf16.mxu0 0
      %505 = vmatpush2.bf16.msra.mxu0 0
      %506 = vmatprep.subr.bf16.mxu0 0
      %507 = vmatpush2.bf16.msra.mxu0 0
      %508 = vmatprep.subr.bf16.mxu0 0
      %509 = vmatpush2.bf16.msra.mxu0 0
      %510 = vmatprep.subr.bf16.mxu0 0
      %511 = vmatpush2.bf16.msra.mxu0 0
      %512 = vmatprep.mubr.bf16.mxu0 0
      %513 = vmatmul.mubr.bf16.gmra.mxu0 %v435
      %v514 = vpop.f32.mrf.mxu0
      %v515 = vadd.f32 %v421, %v514
      %v516 = vpop.f32.mrf.mxu0
      %v517 = vadd.f32 %v421, %v516
      %v518 = vpop.f32.mrf.mxu0
      %v519 = vadd.f32 %v426, %v518
      %v520 = vpop.f32.mrf.mxu0
      %v521 = vadd.f32 %v426, %v520
      %522 = vdwg.mxu0
      %v523 = vld [vmem:[%s259] sm:$0xff]
      %v524 = vld [vmem:[%s259 + $0x8] sm:$0xff]
      %v525 = vld [vmem:[%s259 + $0x10] sm:$0xff]
      %v526 = vld [vmem:[%s259 + $0x18] sm:$0xff]
      %v527 = vunpack.c.l.bf16 %v523
      %v528 = vunpack.c.h.bf16 %v523
      %v529 = vunpack.c.l.bf16 %v524
      %v530 = vunpack.c.h.bf16 %v524
      %v531 = vunpack.c.l.bf16 %v525
      %v532 = vunpack.c.h.bf16 %v525
      %v533 = vunpack.c.l.bf16 %v526
      %v534 = vunpack.c.h.bf16 %v526
      %v535 = vadd.f32 %v472, %v527
      %v536 = vadd.f32 %v474, %v528
      %v537 = vadd.f32 %v515, %v529
      %v538 = vadd.f32 %v517, %v530
      %v539 = vadd.f32 %v476, %v531
      %v540 = vadd.f32 %v478, %v532
      %v541 = vadd.f32 %v519, %v533
      %v542 = vadd.f32 %v521, %v534
      %v543 = vpack.c.bf16 %v539, %v535
      %v544 = vpack.c.bf16 %v540, %v536
      %v545 = vpack.c.bf16 %v541, %v537
      %v546 = vpack.c.bf16 %v542, %v538
      %v551 = vunpack.c.l.b16 %v543
      %v552 = vunpack.c.l.b16 %v544
      %v553 = vunpack.c.l.b16 %v545
      %v554 = vunpack.c.l.b16 %v546
      %v555 = vunpack.c.h.b16 %v543
      %v556 = vunpack.c.h.b16 %v544
      %v557 = vunpack.c.h.b16 %v545
      %v558 = vunpack.c.h.b16 %v546
      %v559 = vpack.c.b16 %v552, %v551
      %v560 = vpack.c.b16 %v554, %v553
      %v561 = vpack.c.b16 %v556, %v555
      %v562 = vpack.c.b16 %v558, %v557
      %567 = vst [vmem:[%s269] sm:$0xff] %v559
      %568 = vst [vmem:[%s269 + $0x8] sm:$0xff] %v560
      %569 = vst [vmem:[%s269 + $0x10] sm:$0xff] %v561
      %570 = vst [vmem:[%s269 + $0x18] sm:$0xff] %v562
      %s571 = smul.u32 4, %s20
      %p572 = scmp.lt.s32.totalorder %s19, 1
      %s573 = scalar_select %p572, %s19, 1
      %p574 = scmp.lt.s32.totalorder %s571, 3
      %s575 = scalar_select %p574, %s571, 3
      %s576 = smul.addr %s573, 8
      %s577 = sadd.s32 %s575, %s576
      %s578 = smul.addr %s577, 4
      %s579 = scalar_lea.vmem %s4, %s578
      // Predicated region
      $region37: #{_lambda_.23} parent=35 // pred_check
        %p580 = pneg %p145
      $region38: #{_lambda_.23} parent=35 // pred_check_branch
        %582 = sbr.rel (%p580) target = $region40
      $region39: #{_lambda_.23} parent=35 // pred_region
        %s583 = smul.u32 4, %s20
      $region40: #{_lambda_.23} parent=35 // pred_fallthru
        _
    $region36: #{_lambda_.23} parent=5 // pred_fallthru
      _
    %p584 = scmp.le.s32.totalorder 2, %s10
    // Predicated region
    $region41: #{_lambda_.23} parent=5 // pred_check
      %p585 = pneg %p584
    $region42: #{_lambda_.23} parent=5 // pred_check_branch
      %587 = sbr.rel (%p585) target = $region44
    $region43: #{_lambda_.23} parent=5 // pred_region
      %s588 = ssub.s32 %s10, 2
      // Predicated region
      $region45: #{_lambda_.23} parent=43 // pred_check
        %p589 = pneg %p151
      $region46: #{_lambda_.23} parent=43 // pred_check_branch
        %591 = sbr.rel (%p589) target = $region48
      $region47: #{_lambda_.23} parent=43 // pred_region
        %s592 = smul.u32 4, %s22
        %p593 = scmp.lt.s32.totalorder %s21, 1
        %s594 = scalar_select %p593, %s21, 1
        %p595 = scmp.lt.s32.totalorder %s592, 3
        %s596 = scalar_select %p595, %s592, 3
        %s597 = smul.addr %s594, 8
        %s598 = sadd.s32 %s596, %s597
        %s599 = smul.addr %s598, 4
        %s600 = scalar_lea.vmem %s4, %s599
      $region48: #{_lambda_.23} parent=43 // pred_fallthru
        _
    $region44: #{_lambda_.23} parent=5 // pred_fallthru
      _
  $region6: #{_lambda_.23} parent=0 // loop_footer
    %s14 = sadd.s32 1, %s10
  $region7: #{_lambda_.23} parent=0 // loop_footer_branch
    %9 = sbr.rel target = $region3
  $region8: #{_lambda_.23} parent=0 // loop_exit
    _

// kernel: _lambda_.24
$region0: #{_lambda_.24}
  #allocation0 [shape = 'u32[]', space=smem, size = 0x4, offset = 0x4, fixed_abs, tag = 'smem constant byte address 0x4 - core index']
  #allocation1 [shape = 'u32[144,128]{1,0:T(1,128)}', space=vmem, size = 0x12000, scoped, tag = 'internal scratch']
  %s0 = inlined_call_operand.vmem [shape: bf16[2,1,16,518], index: 0, kind: input, shape index: {}]
  %s1 = inlined_call_operand.vmem [shape: bf16[16,48], index: 1, kind: input, shape index: {}]
  %s2 = inlined_call_operand.vmem [shape: f32[16,1], index: 2, kind: input, shape index: {}]
  %s3 = inlined_call_operand.vmem [shape: bf16[2,16,512], index: 3, kind: output, shape index: {}]
  %s4 = sld [smem:[#allocation0]]
  $region45: #{_lambda_.24} parent=0
    _
  %s6 = ssub.s32 1, %s4
  %s7 = scalar_select 0, %s6, %s4
  loop: start=0, step=1, limit=4
  $region2: #{_lambda_.24} parent=0 // loop_pre_header
    _
  $region3: #{_lambda_.24} parent=0 // loop_header
    %s9 = sphi 0, %s13
    %p10 = scmp.ge.s32.totalorder %s9, 4
    %s16 = sphi 0, %s28
    %s17 = sphi 0, %s24
    %s18 = sphi 0, %s16
    %s19 = sphi 0, %s17
    %s20 = sphi 0, %s18
    %s21 = sphi 0, %s19
    %s33 = sphi 0, %s35
    %s36 = sphi 0, %s33
    %s37 = sphi 0, %s36
    %s53 = sphi 0, %s37
    %s57 = sphi 0, %s57
    %s59 = sphi 0, %s57
    %s60 = sphi 0, %s59
    %s74 = sphi 0, %s60
    %s78 = sphi 0, %s78
    %s80 = sphi 0, %s78
    %s81 = sphi 0, %s80
    %s95 = sphi 0, %s81
    %s103 = sphi 0, %s105
    %s106 = sphi 0, %s103
    %s107 = sphi 0, %s106
    %s123 = sphi 0, %s107
  $region4: #{_lambda_.24} parent=0 // loop_header_branch
    %12 = sbr.rel (%p10) target = $region8
  $region5: #{_lambda_.24} parent=0 // loop_body
    %s14 = ssub.s32 %s9, 1
    %s15 = ssub.s32 %s9, 2
    %s22 = sadd.s32 1, %s17
    %p23 = scmp.ge.s32.totalorder %s22, 1
    %s24 = scalar_select %p23, 0, %s22
    %s25 = sadd.s32 1, %s16
    %s26 = scalar_select %p23, %s25, %s16
    %p27 = scmp.ge.s32.totalorder %s26, 2
    %s28 = scalar_select %p27, 0, %s26
    %s29 = ssub.s32 %s16, %s28
    %s30 = ssub.s32 %s17, %s24
    %s31 = sor.u32 %s29, %s30
    %p32 = scmp.eq.s32.totalorder %s31, 0
    %s34 = sadd.s32 %s33, 1
    %s35 = scalar_select %p32, %s33, %s34
    %p38 = pneg %p32
    %p39 = scmp.eq.s32.totalorder %s9, 1
    %p40 = por %p38, %p39
    %p41 = scmp.ne.s32.totalorder %s33, %s36
    %p42 = scmp.eq.s32.totalorder %s9, 0
    %p43 = por %p41, %p42
    %p44 = scmp.ne.s32.totalorder %s33, %s36
    %p45 = scmp.eq.s32.totalorder %s14, 1
    %p46 = por %p44, %p45
    %p47 = scmp.ne.s32.totalorder %s36, %s37
    %p48 = scmp.eq.s32.totalorder %s14, 0
    %p49 = por %p47, %p48
    %p50 = scmp.ne.s32.totalorder %s36, %s37
    %p51 = scmp.eq.s32.totalorder %s15, 1
    %p52 = por %p50, %p51
    %p54 = scmp.ne.s32.totalorder %s37, %s53
    %p55 = scmp.eq.s32.totalorder %s15, 0
    %p56 = por %p54, %p55
    %s58 = sadd.s32 %s57, 1
    %p61 = scmp.eq.s32.totalorder %s9, 1
    %p62 = scmp.ne.s32.totalorder %s57, %s59
    %p63 = scmp.eq.s32.totalorder %s9, 0
    %p64 = por %p62, %p63
    %p65 = scmp.ne.s32.totalorder %s57, %s59
    %p66 = scmp.eq.s32.totalorder %s14, 1
    %p67 = por %p65, %p66
    %p68 = scmp.ne.s32.totalorder %s59, %s60
    %p69 = scmp.eq.s32.totalorder %s14, 0
    %p70 = por %p68, %p69
    %p71 = scmp.ne.s32.totalorder %s59, %s60
    %p72 = scmp.eq.s32.totalorder %s15, 1
    %p73 = por %p71, %p72
    %p75 = scmp.ne.s32.totalorder %s60, %s74
    %p76 = scmp.eq.s32.totalorder %s15, 0
    %p77 = por %p75, %p76
    %s79 = sadd.s32 %s78, 1
    %p82 = scmp.eq.s32.totalorder %s9, 1
    %p83 = scmp.ne.s32.totalorder %s78, %s80
    %p84 = scmp.eq.s32.totalorder %s9, 0
    %p85 = por %p83, %p84
    %p86 = scmp.ne.s32.totalorder %s78, %s80
    %p87 = scmp.eq.s32.totalorder %s14, 1
    %p88 = por %p86, %p87
    %p89 = scmp.ne.s32.totalorder %s80, %s81
    %p90 = scmp.eq.s32.totalorder %s14, 0
    %p91 = por %p89, %p90
    %p92 = scmp.ne.s32.totalorder %s80, %s81
    %p93 = scmp.eq.s32.totalorder %s15, 1
    %p94 = por %p92, %p93
    %p96 = scmp.ne.s32.totalorder %s81, %s95
    %p97 = scmp.eq.s32.totalorder %s15, 0
    %p98 = por %p96, %p97
    %s99 = ssub.s32 %s16, %s28
    %s100 = ssub.s32 %s17, %s24
    %s101 = sor.u32 %s99, %s100
    %p102 = scmp.eq.s32.totalorder %s101, 0
    %s104 = sadd.s32 %s103, 1
    %s105 = scalar_select %p102, %s103, %s104
    %p108 = pneg %p102
    %p109 = scmp.eq.s32.totalorder %s9, 1
    %p110 = por %p108, %p109
    %p111 = scmp.ne.s32.totalorder %s103, %s106
    %p112 = scmp.eq.s32.totalorder %s9, 0
    %p113 = por %p111, %p112
    %p114 = scmp.ne.s32.totalorder %s103, %s106
    %p115 = scmp.eq.s32.totalorder %s14, 1
    %p116 = por %p114, %p115
    %p117 = scmp.ne.s32.totalorder %s106, %s107
    %p118 = scmp.eq.s32.totalorder %s14, 0
    %p119 = por %p117, %p118
    %p120 = scmp.ne.s32.totalorder %s106, %s107
    %p121 = scmp.eq.s32.totalorder %s15, 1
    %p122 = por %p120, %p121
    %p124 = scmp.ne.s32.totalorder %s107, %s123
    %p125 = scmp.eq.s32.totalorder %s15, 0
    %p126 = por %p124, %p125
    %p127 = scmp.le.s32.totalorder 1, %s9
    %p128 = scmp.lt.s32.totalorder %s9, 3
    %p129 = pnand %p127, %p128
    %p130 = pneg %p129
    // Predicated region
    $region9: #{_lambda_.24} parent=5 // pred_check
      _
    $region10: #{_lambda_.24} parent=5 // pred_check_branch
      %132 = sbr.rel (%p129) target = $region12
    $region11: #{_lambda_.24} parent=5 // pred_region
      %s133 = ssub.s32 %s9, 1
      // Predicated region
      $region13: #{_lambda_.24} parent=11 // pred_check
        %p134 = pneg %p70
      $region14: #{_lambda_.24} parent=11 // pred_check_branch
        %136 = sbr.rel (%p134) target = $region16
      $region15: #{_lambda_.24} parent=11 // pred_region
        _
      $region16: #{_lambda_.24} parent=11 // pred_fallthru
        _
      // Predicated region
      $region17: #{_lambda_.24} parent=11 // pred_check
        %p137 = pneg %p91
      $region18: #{_lambda_.24} parent=11 // pred_check_branch
        %139 = sbr.rel (%p137) target = $region20
      $region19: #{_lambda_.24} parent=11 // pred_region
        _
      $region20: #{_lambda_.24} parent=11 // pred_fallthru
        _
    $region12: #{_lambda_.24} parent=5 // pred_fallthru
      _
    %p140 = scmp.lt.s32.totalorder %s9, 2
    // Predicated region
    $region21: #{_lambda_.24} parent=5 // pred_check
      %p141 = pneg %p140
    $region22: #{_lambda_.24} parent=5 // pred_check_branch
      %143 = sbr.rel (%p141) target = $region24
    $region23: #{_lambda_.24} parent=5 // pred_region
      // Predicated region
      $region25: #{_lambda_.24} parent=23 // pred_check
        %p144 = pneg %p43
      $region26: #{_lambda_.24} parent=23 // pred_check_branch
        %146 = sbr.rel (%p144) target = $region28
      $region27: #{_lambda_.24} parent=23 // pred_region
        %p147 = scmp.lt.s32.totalorder %s16, 1
        %s148 = scalar_select %p147, %s16, 1
        %p149 = scmp.lt.s32.totalorder %s17, 0
        %s150 = scalar_select %p149, %s17, 0
        %s151 = smul.addr %s150, 10
        %s152 = smul.addr %s148, 10
        %s153 = sadd.s32 %s151, %s152
        %s154 = smul.addr %s153, 4
        %s155 = scalar_lea.vmem %s0, %s154
      $region28: #{_lambda_.24} parent=23 // pred_fallthru
        _
    $region24: #{_lambda_.24} parent=5 // pred_fallthru
      _
    %p156 = scmp.le.s32.totalorder 1, %s9
    %p157 = scmp.lt.s32.totalorder %s9, 3
    %p158 = pnand %p156, %p157
    %p159 = pneg %p158
    // Predicated region
    $region29: #{_lambda_.24} parent=5 // pred_check
      _
    $region30: #{_lambda_.24} parent=5 // pred_check_branch
      %161 = sbr.rel (%p158) target = $region32
    $region31: #{_lambda_.24} parent=5 // pred_region
      %s162 = ssub.s32 %s9, 1
      %p163 = scmp.lt.s32.totalorder %s18, 1
      %s164 = scalar_select %p163, %s18, 1
      %p165 = scmp.lt.s32.totalorder %s19, 0
      %s166 = scalar_select %p165, %s19, 0
      %s167 = smul.addr %s166, 10
      %s168 = smul.addr %s164, 10
      %s169 = sadd.s32 %s167, %s168
      %s170 = smul.addr %s169, 4
      %s171 = scalar_lea.vmem %s0, %s170
      %p172 = pneg %p49
      %p173 = pneg %p46
      %p174 = pneg %p70
      %p175 = pneg %p67
      %p176 = pneg %p91
      %p177 = pneg %p88
      %p178 = pneg %p119
      %p179 = pneg %p116
      %s180 = smul.u32 4, %s19
      %p181 = scmp.lt.s32.totalorder %s18, 1
      %s182 = scalar_select %p181, %s18, 1
      %p183 = scmp.lt.s32.totalorder %s180, 3
      %s184 = scalar_select %p183, %s180, 3
      %s185 = smul.addr %s182, 8
      %s186 = sadd.s32 %s184, %s185
      %s187 = smul.addr %s186, 4
      %s188 = scalar_lea.vmem %s3, %s187
      %p189 = scmp.lt.s32.totalorder %s18, 1
      %s190 = scalar_select %p189, %s18, 1
      %p191 = scmp.lt.s32.totalorder %s19, 0
      %s192 = scalar_select %p191, %s19, 0
      %s193 = smul.addr %s192, 10
      %s194 = smul.addr %s190, 10
      %s195 = sadd.s32 %s193, %s194
      %s196 = smul.addr %s195, 4
      %s197 = scalar_lea.vmem %s0, %s196
      %s198 = smul.u32 4, %s19
      %p199 = scmp.lt.s32.totalorder %s18, 1
      %s200 = scalar_select %p199, %s18, 1
      %p201 = scmp.lt.s32.totalorder %s198, 3
      %s202 = scalar_select %p201, %s198, 3
      %s203 = smul.addr %s200, 8
      %s204 = sadd.s32 %s202, %s203
      %s205 = smul.addr %s204, 4
      %s206 = scalar_lea.vmem %s3, %s205
      %s207 = smul.u32 4, %s19
      %v209 = vld [vmem:[%s197] sm:$0xff]
      %v210 = vld [vmem:[%s197 + $0x8] sm:$0xff]
      %v211 = vld [vmem:[%s197 + $0x10] sm:$0xf]
      %v212 = vld [vmem:[%s197 + $0x14] sm:$0xff]
      %v213 = vld [vmem:[%s197 + $0x1c] sm:$0xff]
      %v214 = vld [vmem:[%s197 + $0x24] sm:$0xf]
      %v215 = vunpack.c.l.bf16 %v209
      %v216 = vunpack.c.h.bf16 %v209
      %v217 = vunpack.c.l.bf16 %v210
      %v218 = vunpack.c.h.bf16 %v210
      %v219 = vunpack.c.l.bf16 %v211
      %v220 = vunpack.c.l.bf16 %v212
      %v221 = vunpack.c.h.bf16 %v212
      %v222 = vunpack.c.l.bf16 %v213
      %v223 = vunpack.c.h.bf16 %v213
      %v224 = vunpack.c.l.bf16 %v214
      %vm225 = vcmp.ge.f32.partialorder %v215, 0.0
      %vm226 = vcmp.ge.f32.partialorder %v216, 0.0
      %vm227 = vcmp.ge.f32.partialorder %v217, 0.0
      %vm228 = vcmp.ge.f32.partialorder %v218, 0.0
      %vm229 = vcmp.ge.f32.partialorder %v219, 0.0
      %vm230 = vcmp.ge.f32.partialorder %v220, 0.0
      %vm231 = vcmp.ge.f32.partialorder %v221, 0.0
      %vm232 = vcmp.ge.f32.partialorder %v222, 0.0
      %vm233 = vcmp.ge.f32.partialorder %v223, 0.0
      %vm234 = vcmp.ge.f32.partialorder %v224, 0.0
      %v235 = vmul.f32 %v215, 0.01
      %v236 = vmul.f32 %v216, 0.01
      %v237 = vmul.f32 %v217, 0.01
      %v238 = vmul.f32 %v218, 0.01
      %v239 = vmul.f32 %v219, 0.01
      %v240 = vmul.f32 %v220, 0.01
      %v241 = vmul.f32 %v221, 0.01
      %v242 = vmul.f32 %v222, 0.01
      %v243 = vmul.f32 %v223, 0.01
      %v244 = vmul.f32 %v224, 0.01
      %v245 = vsel %vm225, %v215, %v235
      %v246 = vsel %vm226, %v216, %v236
      %v247 = vsel %vm227, %v217, %v237
      %v248 = vsel %vm228, %v218, %v238
      %v249 = vsel %vm229, %v219, %v239
      %v250 = vsel %vm230, %v220, %v240
      %v251 = vsel %vm231, %v221, %v241
      %v252 = vsel %vm232, %v222, %v242
      %v253 = vsel %vm233, %v223, %v243
      %v254 = vsel %vm234, %v224, %v244
      %265 = vrot.lane.b32.xlu0 %v245, 125
      %v266 = vpop.permute.xlu0 %265
      %267 = vrot.lane.b32.xlu0 %v246, 125
      %v268 = vpop.permute.xlu0 %267
      %269 = vrot.lane.b32.xlu0 %v247, 125
      %v270 = vpop.permute.xlu0 %269
      %271 = vrot.lane.b32.xlu0 %v248, 125
      %v272 = vpop.permute.xlu0 %271
      %273 = vrot.lane.b32.xlu0 %v249, 125
      %v274 = vpop.permute.xlu0 %273
      %275 = vrot.lane.b32.xlu0 %v250, 125
      %v276 = vpop.permute.xlu0 %275
      %277 = vrot.lane.b32.xlu0 %v251, 125
      %v278 = vpop.permute.xlu0 %277
      %279 = vrot.lane.b32.xlu0 %v252, 125
      %v280 = vpop.permute.xlu0 %279
      %281 = vrot.lane.b32.xlu0 %v253, 125
      %v282 = vpop.permute.xlu0 %281
      %283 = vrot.lane.b32.xlu0 %v254, 125
      %v284 = vpop.permute.xlu0 %283
      %vm285 = vcmask 1022976
      %v286 = vsel %vm285, %v266, %v268
      %v287 = vsel %vm285, %v268, %v270
      %v288 = vsel %vm285, %v270, %v272
      %v289 = vsel %vm285, %v272, %v274
      %v290 = vsel %vm285, %v276, %v278
      %v291 = vsel %vm285, %v278, %v280
      %v292 = vsel %vm285, %v280, %v282
      %v293 = vsel %vm285, %v282, %v284
      %302 = vrot.lane.b32.xlu0 %v245, 122
      %v303 = vpop.permute.xlu0 %302
      %304 = vrot.lane.b32.xlu0 %v246, 122
      %v305 = vpop.permute.xlu0 %304
      %306 = vrot.lane.b32.xlu0 %v247, 122
      %v307 = vpop.permute.xlu0 %306
      %308 = vrot.lane.b32.xlu0 %v248, 122
      %v309 = vpop.permute.xlu0 %308
      %310 = vrot.lane.b32.xlu0 %v249, 122
      %v311 = vpop.permute.xlu0 %310
      %312 = vrot.lane.b32.xlu0 %v250, 122
      %v313 = vpop.permute.xlu0 %312
      %314 = vrot.lane.b32.xlu0 %v251, 122
      %v315 = vpop.permute.xlu0 %314
      %316 = vrot.lane.b32.xlu0 %v252, 122
      %v317 = vpop.permute.xlu0 %316
      %318 = vrot.lane.b32.xlu0 %v253, 122
      %v319 = vpop.permute.xlu0 %318
      %320 = vrot.lane.b32.xlu0 %v254, 122
      %v321 = vpop.permute.xlu0 %320
      %vm322 = vcmask 998400
      %v323 = vsel %vm322, %v303, %v305
      %v324 = vsel %vm322, %v305, %v307
      %v325 = vsel %vm322, %v307, %v309
      %v326 = vsel %vm322, %v309, %v311
      %v327 = vsel %vm322, %v313, %v315
      %v328 = vsel %vm322, %v315, %v317
      %v329 = vsel %vm322, %v317, %v319
      %v330 = vsel %vm322, %v319, %v321
      %v339 = vld [vmem:[%s1] sm:$0xf]
      %v340 = vld [vmem:[%s1 + $0x4] sm:$0xf]
      %v341 = vpack.c.bf16 %v250, %v245
      %v342 = vpack.c.bf16 %v251, %v246
      %v343 = vpack.c.bf16 %v252, %v247
      %v344 = vpack.c.bf16 %v253, %v248
      %v345 = vpack.c.bf16 %v290, %v286
      %v346 = vpack.c.bf16 %v291, %v287
      %v347 = vpack.c.bf16 %v292, %v288
      %v348 = vpack.c.bf16 %v293, %v289
      %v349 = vpack.c.bf16 %v327, %v323
      %v350 = vpack.c.bf16 %v328, %v324
      %v351 = vpack.c.bf16 %v329, %v325
      %v352 = vpack.c.bf16 %v330, %v326
      %v353 = vld [vmem:[%s2] sm:$0xff]
      %v354 = vld [vmem:[%s2 + $0x8] sm:$0xff]
      %356 = vset.pattern.permute.xlu0 0
      %357 = vperm.xlu0 %356, %v353
      %v358 = vpop.permute.xlu0 %357
      %361 = vset.pattern.permute.xlu0 0
      %362 = vperm.xlu0 %361, %v354
      %v363 = vpop.permute.xlu0 %362
      %v367 = vunpack.c.l.b16 %v339
      %v368 = vunpack.c.l.b16 %v340
      %v369 = vpack.c.b16 %v368, %v367
      %vm370 = vcmask 392192
      %v372 = vsel %vm370, %v369, 0
      %374 = vmatprep.subr.bf16.mxu0 0
      %375 = vmatpush1.bf16.msra.mxu0 0
      %376 = vmatprep.subr.bf16.mxu0 0
      %377 = vmatpush1.bf16.msra.mxu0 0
      %378 = vmatprep.subr.bf16.mxu0 0
      %379 = vmatpush1.bf16.msra.mxu0 0
      %380 = vmatprep.subr.bf16.mxu0 0
      %381 = vmatpush1.bf16.msra.mxu0 0
      %382 = vmatprep.subr.bf16.mxu0 0
      %383 = vmatpush1.bf16.msra.mxu0 0
      %384 = vmatprep.subr.bf16.mxu0 %v350
      %385 = vmatpush1.bf16.msra.mxu0 %v349
      %386 = vmatprep.subr.bf16.mxu0 %v346
      %387 = vmatpush1.bf16.msra.mxu0 %v345
      %388 = vmatprep.subr.bf16.mxu0 %v342
      %389 = vmatpush1.bf16.msra.mxu0 %v341
      %390 = vmatprep.subr.bf16.mxu0 0
      %391 = vmatpush2.bf16.msra.mxu0 0
      %392 = vmatprep.subr.bf16.mxu0 0
      %393 = vmatpush2.bf16.msra.mxu0 0
      %394 = vmatprep.subr.bf16.mxu0 0
      %395 = vmatpush2.bf16.msra.mxu0 0
      %396 = vmatprep.subr.bf16.mxu0 0
      %397 = vmatpush2.bf16.msra.mxu0 0
      %398 = vmatprep.subr.bf16.mxu0 0
      %399 = vmatpush2.bf16.msra.mxu0 0
      %400 = vmatprep.subr.bf16.mxu0 0
      %401 = vmatpush2.bf16.msra.mxu0 0
      %402 = vmatprep.subr.bf16.mxu0 0
      %403 = vmatpush2.bf16.msra.mxu0 0
      %404 = vmatprep.subr.bf16.mxu0 0
      %405 = vmatpush2.bf16.msra.mxu0 0
      %406 = vmatprep.mubr.bf16.mxu0 0
      %407 = vmatmul.mubr.bf16.gmra.mxu0 %v372
      %v408 = vpop.f32.mrf.mxu0
      %v409 = vadd.f32 %v358, %v408
      %v410 = vpop.f32.mrf.mxu0
      %v411 = vadd.f32 %v358, %v410
      %v412 = vpop.f32.mrf.mxu0
      %v413 = vadd.f32 %v363, %v412
      %v414 = vpop.f32.mrf.mxu0
      %v415 = vadd.f32 %v363, %v414
      %416 = vdwg.mxu0
      %417 = vmatprep.subr.bf16.mxu0 0
      %418 = vmatpush1.bf16.msra.mxu0 0
      %419 = vmatprep.subr.bf16.mxu0 0
      %420 = vmatpush1.bf16.msra.mxu0 0
      %421 = vmatprep.subr.bf16.mxu0 0
      %422 = vmatpush1.bf16.msra.mxu0 0
      %423 = vmatprep.subr.bf16.mxu0 0
      %424 = vmatpush1.bf16.msra.mxu0 0
      %425 = vmatprep.subr.bf16.mxu0 0
      %426 = vmatpush1.bf16.msra.mxu0 0
      %427 = vmatprep.subr.bf16.mxu0 %v352
      %428 = vmatpush1.bf16.msra.mxu0 %v351
      %429 = vmatprep.subr.bf16.mxu0 %v348
      %430 = vmatpush1.bf16.msra.mxu0 %v347
      %431 = vmatprep.subr.bf16.mxu0 %v344
      %432 = vmatpush1.bf16.msra.mxu0 %v343
      %433 = vmatprep.subr.bf16.mxu0 0
      %434 = vmatpush2.bf16.msra.mxu0 0
      %435 = vmatprep.subr.bf16.mxu0 0
      %436 = vmatpush2.bf16.msra.mxu0 0
      %437 = vmatprep.subr.bf16.mxu0 0
      %438 = vmatpush2.bf16.msra.mxu0 0
      %439 = vmatprep.subr.bf16.mxu0 0
      %440 = vmatpush2.bf16.msra.mxu0 0
      %441 = vmatprep.subr.bf16.mxu0 0
      %442 = vmatpush2.bf16.msra.mxu0 0
      %443 = vmatprep.subr.bf16.mxu0 0
      %444 = vmatpush2.bf16.msra.mxu0 0
      %445 = vmatprep.subr.bf16.mxu0 0
      %446 = vmatpush2.bf16.msra.mxu0 0
      %447 = vmatprep.subr.bf16.mxu0 0
      %448 = vmatpush2.bf16.msra.mxu0 0
      %449 = vmatprep.mubr.bf16.mxu0 0
      %450 = vmatmul.mubr.bf16.gmra.mxu0 %v372
      %v451 = vpop.f32.mrf.mxu0
      %v452 = vadd.f32 %v358, %v451
      %v453 = vpop.f32.mrf.mxu0
      %v454 = vadd.f32 %v358, %v453
      %v455 = vpop.f32.mrf.mxu0
      %v456 = vadd.f32 %v363, %v455
      %v457 = vpop.f32.mrf.mxu0
      %v458 = vadd.f32 %v363, %v457
      %459 = vdwg.mxu0
      %v460 = vpack.c.bf16 %v413, %v409
      %v461 = vpack.c.bf16 %v415, %v411
      %v462 = vpack.c.bf16 %v456, %v452
      %v463 = vpack.c.bf16 %v458, %v454
      %v468 = vunpack.c.l.b16 %v460
      %v469 = vunpack.c.l.b16 %v461
      %v470 = vunpack.c.l.b16 %v462
      %v471 = vunpack.c.l.b16 %v463
      %v472 = vunpack.c.h.b16 %v460
      %v473 = vunpack.c.h.b16 %v461
      %v474 = vunpack.c.h.b16 %v462
      %v475 = vunpack.c.h.b16 %v463
      %v476 = vpack.c.b16 %v469, %v468
      %v477 = vpack.c.b16 %v471, %v470
      %v478 = vpack.c.b16 %v473, %v472
      %v479 = vpack.c.b16 %v475, %v474
      %484 = vst [vmem:[%s206] sm:$0xff] %v476
      %485 = vst [vmem:[%s206 + $0x8] sm:$0xff] %v477
      %486 = vst [vmem:[%s206 + $0x10] sm:$0xff] %v478
      %487 = vst [vmem:[%s206 + $0x18] sm:$0xff] %v479
      %s488 = smul.u32 4, %s19
      %p489 = scmp.lt.s32.totalorder %s18, 1
      %s490 = scalar_select %p489, %s18, 1
      %p491 = scmp.lt.s32.totalorder %s488, 3
      %s492 = scalar_select %p491, %s488, 3
      %s493 = smul.addr %s490, 8
      %s494 = sadd.s32 %s492, %s493
      %s495 = smul.addr %s494, 4
      %s496 = scalar_lea.vmem %s3, %s495
      // Predicated region
      $region33: #{_lambda_.24} parent=31 // pred_check
        %p497 = pneg %p116
      $region34: #{_lambda_.24} parent=31 // pred_check_branch
        %499 = sbr.rel (%p497) target = $region36
      $region35: #{_lambda_.24} parent=31 // pred_region
        %s500 = smul.u32 4, %s19
      $region36: #{_lambda_.24} parent=31 // pred_fallthru
        _
    $region32: #{_lambda_.24} parent=5 // pred_fallthru
      _
    %p501 = scmp.le.s32.totalorder 2, %s9
    // Predicated region
    $region37: #{_lambda_.24} parent=5 // pred_check
      %p502 = pneg %p501
    $region38: #{_lambda_.24} parent=5 // pred_check_branch
      %504 = sbr.rel (%p502) target = $region40
    $region39: #{_lambda_.24} parent=5 // pred_region
      %s505 = ssub.s32 %s9, 2
      // Predicated region
      $region41: #{_lambda_.24} parent=39 // pred_check
        %p506 = pneg %p122
      $region42: #{_lambda_.24} parent=39 // pred_check_branch
        %508 = sbr.rel (%p506) target = $region44
      $region43: #{_lambda_.24} parent=39 // pred_region
        %s509 = smul.u32 4, %s21
        %p510 = scmp.lt.s32.totalorder %s20, 1
        %s511 = scalar_select %p510, %s20, 1
        %p512 = scmp.lt.s32.totalorder %s509, 3
        %s513 = scalar_select %p512, %s509, 3
        %s514 = smul.addr %s511, 8
        %s515 = sadd.s32 %s513, %s514
        %s516 = smul.addr %s515, 4
        %s517 = scalar_lea.vmem %s3, %s516
      $region44: #{_lambda_.24} parent=39 // pred_fallthru
        _
    $region40: #{_lambda_.24} parent=5 // pred_fallthru
      _
  $region6: #{_lambda_.24} parent=0 // loop_footer
    %s13 = sadd.s32 1, %s9
  $region7: #{_lambda_.24} parent=0 // loop_footer_branch
    %8 = sbr.rel target = $region3
  $region8: #{_lambda_.24} parent=0 // loop_exit
    _

// kernel: _lambda_.36
$region0: #{_lambda_.36}
  #allocation0 [shape = 'u32[]', space=smem, size = 0x4, offset = 0x4, fixed_abs, tag = 'smem constant byte address 0x4 - core index']
  #allocation1 [shape = 'u32[144,128]{1,0:T(1,128)}', space=vmem, size = 0x12000, scoped, tag = 'internal scratch']
  %s0 = inlined_call_operand.vmem [shape: bf16[2,2,8,516], index: 0, kind: input, shape index: {}]
  %s1 = inlined_call_operand.vmem [shape: bf16[8,40], index: 1, kind: input, shape index: {}]
  %s2 = inlined_call_operand.vmem [shape: f32[8,1], index: 2, kind: input, shape index: {}]
  %s3 = inlined_call_operand.vmem [shape: bf16[2,8,1024], index: 3, kind: input, shape index: {}]
  %s4 = inlined_call_operand.vmem [shape: bf16[2,8,1024], index: 4, kind: output, shape index: {}]
  %s5 = sld [smem:[#allocation0]]
  $region49: #{_lambda_.36} parent=0
    _
  %s7 = ssub.s32 1, %s5
  %s8 = scalar_select 0, %s7, %s5
  loop: start=0, step=1, limit=6
  $region2: #{_lambda_.36} parent=0 // loop_pre_header
    _
  $region3: #{_lambda_.36} parent=0 // loop_header
    %s10 = sphi 0, %s14
    %p11 = scmp.ge.s32.totalorder %s10, 6
    %s17 = sphi 0, %s29
    %s18 = sphi 0, %s25
    %s19 = sphi 0, %s17
    %s20 = sphi 0, %s18
    %s21 = sphi 0, %s19
    %s22 = sphi 0, %s20
    %s34 = sphi 0, %s36
    %s37 = sphi 0, %s34
    %s38 = sphi 0, %s37
    %s54 = sphi 0, %s38
    %s58 = sphi 0, %s58
    %s60 = sphi 0, %s58
    %s61 = sphi 0, %s60
    %s75 = sphi 0, %s61
    %s79 = sphi 0, %s79
    %s81 = sphi 0, %s79
    %s82 = sphi 0, %s81
    %s96 = sphi 0, %s82
    %s104 = sphi 0, %s106
    %s107 = sphi 0, %s104
    %s108 = sphi 0, %s107
    %s124 = sphi 0, %s108
    %s132 = sphi 0, %s134
    %s135 = sphi 0, %s132
    %s136 = sphi 0, %s135
    %s152 = sphi 0, %s136
  $region4: #{_lambda_.36} parent=0 // loop_header_branch
    %13 = sbr.rel (%p11) target = $region8
  $region5: #{_lambda_.36} parent=0 // loop_body
    %s15 = ssub.s32 %s10, 1
    %s16 = ssub.s32 %s10, 2
    %s23 = sadd.s32 1, %s18
    %p24 = scmp.ge.s32.totalorder %s23, 2
    %s25 = scalar_select %p24, 0, %s23
    %s26 = sadd.s32 1, %s17
    %s27 = scalar_select %p24, %s26, %s17
    %p28 = scmp.ge.s32.totalorder %s27, 2
    %s29 = scalar_select %p28, 0, %s27
    %s30 = ssub.s32 %s17, %s29
    %s31 = ssub.s32 %s18, %s25
    %s32 = sor.u32 %s30, %s31
    %p33 = scmp.eq.s32.totalorder %s32, 0
    %s35 = sadd.s32 %s34, 1
    %s36 = scalar_select %p33, %s34, %s35
    %p39 = pneg %p33
    %p40 = scmp.eq.s32.totalorder %s10, 3
    %p41 = por %p39, %p40
    %p42 = scmp.ne.s32.totalorder %s34, %s37
    %p43 = scmp.eq.s32.totalorder %s10, 0
    %p44 = por %p42, %p43
    %p45 = scmp.ne.s32.totalorder %s34, %s37
    %p46 = scmp.eq.s32.totalorder %s15, 3
    %p47 = por %p45, %p46
    %p48 = scmp.ne.s32.totalorder %s37, %s38
    %p49 = scmp.eq.s32.totalorder %s15, 0
    %p50 = por %p48, %p49
    %p51 = scmp.ne.s32.totalorder %s37, %s38
    %p52 = scmp.eq.s32.totalorder %s16, 3
    %p53 = por %p51, %p52
    %p55 = scmp.ne.s32.totalorder %s38, %s54
    %p56 = scmp.eq.s32.totalorder %s16, 0
    %p57 = por %p55, %p56
    %s59 = sadd.s32 %s58, 1
    %p62 = scmp.eq.s32.totalorder %s10, 3
    %p63 = scmp.ne.s32.totalorder %s58, %s60
    %p64 = scmp.eq.s32.totalorder %s10, 0
    %p65 = por %p63, %p64
    %p66 = scmp.ne.s32.totalorder %s58, %s60
    %p67 = scmp.eq.s32.totalorder %s15, 3
    %p68 = por %p66, %p67
    %p69 = scmp.ne.s32.totalorder %s60, %s61
    %p70 = scmp.eq.s32.totalorder %s15, 0
    %p71 = por %p69, %p70
    %p72 = scmp.ne.s32.totalorder %s60, %s61
    %p73 = scmp.eq.s32.totalorder %s16, 3
    %p74 = por %p72, %p73
    %p76 = scmp.ne.s32.totalorder %s61, %s75
    %p77 = scmp.eq.s32.totalorder %s16, 0
    %p78 = por %p76, %p77
    %s80 = sadd.s32 %s79, 1
    %p83 = scmp.eq.s32.totalorder %s10, 3
    %p84 = scmp.ne.s32.totalorder %s79, %s81
    %p85 = scmp.eq.s32.totalorder %s10, 0
    %p86 = por %p84, %p85
    %p87 = scmp.ne.s32.totalorder %s79, %s81
    %p88 = scmp.eq.s32.totalorder %s15, 3
    %p89 = por %p87, %p88
    %p90 = scmp.ne.s32.totalorder %s81, %s82
    %p91 = scmp.eq.s32.totalorder %s15, 0
    %p92 = por %p90, %p91
    %p93 = scmp.ne.s32.totalorder %s81, %s82
    %p94 = scmp.eq.s32.totalorder %s16, 3
    %p95 = por %p93, %p94
    %p97 = scmp.ne.s32.totalorder %s82, %s96
    %p98 = scmp.eq.s32.totalorder %s16, 0
    %p99 = por %p97, %p98
    %s100 = ssub.s32 %s17, %s29
    %s101 = ssub.s32 %s18, %s25
    %s102 = sor.u32 %s100, %s101
    %p103 = scmp.eq.s32.totalorder %s102, 0
    %s105 = sadd.s32 %s104, 1
    %s106 = scalar_select %p103, %s104, %s105
    %p109 = pneg %p103
    %p110 = scmp.eq.s32.totalorder %s10, 3
    %p111 = por %p109, %p110
    %p112 = scmp.ne.s32.totalorder %s104, %s107
    %p113 = scmp.eq.s32.totalorder %s10, 0
    %p114 = por %p112, %p113
    %p115 = scmp.ne.s32.totalorder %s104, %s107
    %p116 = scmp.eq.s32.totalorder %s15, 3
    %p117 = por %p115, %p116
    %p118 = scmp.ne.s32.totalorder %s107, %s108
    %p119 = scmp.eq.s32.totalorder %s15, 0
    %p120 = por %p118, %p119
    %p121 = scmp.ne.s32.totalorder %s107, %s108
    %p122 = scmp.eq.s32.totalorder %s16, 3
    %p123 = por %p121, %p122
    %p125 = scmp.ne.s32.totalorder %s108, %s124
    %p126 = scmp.eq.s32.totalorder %s16, 0
    %p127 = por %p125, %p126
    %s128 = ssub.s32 %s17, %s29
    %s129 = ssub.s32 %s18, %s25
    %s130 = sor.u32 %s128, %s129
    %p131 = scmp.eq.s32.totalorder %s130, 0
    %s133 = sadd.s32 %s132, 1
    %s134 = scalar_select %p131, %s132, %s133
    %p137 = pneg %p131
    %p138 = scmp.eq.s32.totalorder %s10, 3
    %p139 = por %p137, %p138
    %p140 = scmp.ne.s32.totalorder %s132, %s135
    %p141 = scmp.eq.s32.totalorder %s10, 0
    %p142 = por %p140, %p141
    %p143 = scmp.ne.s32.totalorder %s132, %s135
    %p144 = scmp.eq.s32.totalorder %s15, 3
    %p145 = por %p143, %p144
    %p146 = scmp.ne.s32.totalorder %s135, %s136
    %p147 = scmp.eq.s32.totalorder %s15, 0
    %p148 = por %p146, %p147
    %p149 = scmp.ne.s32.totalorder %s135, %s136
    %p150 = scmp.eq.s32.totalorder %s16, 3
    %p151 = por %p149, %p150
    %p153 = scmp.ne.s32.totalorder %s136, %s152
    %p154 = scmp.eq.s32.totalorder %s16, 0
    %p155 = por %p153, %p154
    %p156 = scmp.le.s32.totalorder 1, %s10
    %p157 = scmp.lt.s32.totalorder %s10, 5
    %p158 = pnand %p156, %p157
    %p159 = pneg %p158
    // Predicated region
    $region9: #{_lambda_.36} parent=5 // pred_check
      _
    $region10: #{_lambda_.36} parent=5 // pred_check_branch
      %161 = sbr.rel (%p158) target = $region12
    $region11: #{_lambda_.36} parent=5 // pred_region
      %s162 = ssub.s32 %s10, 1
      // Predicated region
      $region13: #{_lambda_.36} parent=11 // pred_check
        %p163 = pneg %p71
      $region14: #{_lambda_.36} parent=11 // pred_check_branch
        %165 = sbr.rel (%p163) target = $region16
      $region15: #{_lambda_.36} parent=11 // pred_region
        _
      $region16: #{_lambda_.36} parent=11 // pred_fallthru
        _
      // Predicated region
      $region17: #{_lambda_.36} parent=11 // pred_check
        %p166 = pneg %p92
      $region18: #{_lambda_.36} parent=11 // pred_check_branch
        %168 = sbr.rel (%p166) target = $region20
      $region19: #{_lambda_.36} parent=11 // pred_region
        _
      $region20: #{_lambda_.36} parent=11 // pred_fallthru
        _
    $region12: #{_lambda_.36} parent=5 // pred_fallthru
      _
    %p169 = scmp.lt.s32.totalorder %s10, 4
    // Predicated region
    $region21: #{_lambda_.36} parent=5 // pred_check
      %p170 = pneg %p169
    $region22: #{_lambda_.36} parent=5 // pred_check_branch
      %172 = sbr.rel (%p170) target = $region24
    $region23: #{_lambda_.36} parent=5 // pred_region
      // Predicated region
      $region25: #{_lambda_.36} parent=23 // pred_check
        %p173 = pneg %p44
      $region26: #{_lambda_.36} parent=23 // pred_check_branch
        %175 = sbr.rel (%p173) target = $region28
      $region27: #{_lambda_.36} parent=23 // pred_region
        %p176 = scmp.lt.s32.totalorder %s17, 1
        %s177 = scalar_select %p176, %s17, 1
        %p178 = scmp.lt.s32.totalorder %s18, 1
        %s179 = scalar_select %p178, %s18, 1
        %s180 = smul.addr %s179, 5
        %s181 = smul.addr %s177, 10
        %s182 = sadd.s32 %s180, %s181
        %s183 = smul.addr %s182, 4
        %s184 = scalar_lea.vmem %s0, %s183
      $region28: #{_lambda_.36} parent=23 // pred_fallthru
        _
      // Predicated region
      $region29: #{_lambda_.36} parent=23 // pred_check
        %p185 = pneg %p114
      $region30: #{_lambda_.36} parent=23 // pred_check_branch
        %187 = sbr.rel (%p185) target = $region32
      $region31: #{_lambda_.36} parent=23 // pred_region
        %s188 = smul.u32 4, %s18
        %p189 = scmp.lt.s32.totalorder %s17, 1
        %s190 = scalar_select %p189, %s17, 1
        %p191 = scmp.lt.s32.totalorder %s188, 7
        %s192 = scalar_select %p191, %s188, 7
        %s193 = smul.addr %s190, 8
        %s194 = sadd.s32 %s192, %s193
        %s195 = smul.addr %s194, 4
        %s196 = scalar_lea.vmem %s3, %s195
        %s197 = smul.u32 4, %s18
      $region32: #{_lambda_.36} parent=23 // pred_fallthru
        _
    $region24: #{_lambda_.36} parent=5 // pred_fallthru
      _
    %p198 = scmp.le.s32.totalorder 1, %s10
    %p199 = scmp.lt.s32.totalorder %s10, 5
    %p200 = pnand %p198, %p199
    %p201 = pneg %p200
    // Predicated region
    $region33: #{_lambda_.36} parent=5 // pred_check
      _
    $region34: #{_lambda_.36} parent=5 // pred_check_branch
      %203 = sbr.rel (%p200) target = $region36
    $region35: #{_lambda_.36} parent=5 // pred_region
      %s204 = ssub.s32 %s10, 1
      %p205 = scmp.lt.s32.totalorder %s19, 1
      %s206 = scalar_select %p205, %s19, 1
      %p207 = scmp.lt.s32.totalorder %s20, 1
      %s208 = scalar_select %p207, %s20, 1
      %s209 = smul.addr %s208, 5
      %s210 = smul.addr %s206, 10
      %s211 = sadd.s32 %s209, %s210
      %s212 = smul.addr %s211, 4
      %s213 = scalar_lea.vmem %s0, %s212
      %p214 = pneg %p50
      %p215 = pneg %p47
      %p216 = pneg %p71
      %p217 = pneg %p68
      %p218 = pneg %p92
      %p219 = pneg %p89
      %s220 = smul.u32 4, %s20
      %p221 = scmp.lt.s32.totalorder %s19, 1
      %s222 = scalar_select %p221, %s19, 1
      %p223 = scmp.lt.s32.totalorder %s220, 7
      %s224 = scalar_select %p223, %s220, 7
      %s225 = smul.addr %s222, 8
      %s226 = sadd.s32 %s224, %s225
      %s227 = smul.addr %s226, 4
      %s228 = scalar_lea.vmem %s3, %s227
      %p229 = pneg %p120
      %p230 = pneg %p117
      %p231 = pneg %p148
      %p232 = pneg %p145
      %s233 = smul.u32 4, %s20
      %p234 = scmp.lt.s32.totalorder %s19, 1
      %s235 = scalar_select %p234, %s19, 1
      %p236 = scmp.lt.s32.totalorder %s233, 7
      %s237 = scalar_select %p236, %s233, 7
      %s238 = smul.addr %s235, 8
      %s239 = sadd.s32 %s237, %s238
      %s240 = smul.addr %s239, 4
      %s241 = scalar_lea.vmem %s4, %s240
      %p242 = scmp.lt.s32.totalorder %s19, 1
      %s243 = scalar_select %p242, %s19, 1
      %p244 = scmp.lt.s32.totalorder %s20, 1
      %s245 = scalar_select %p244, %s20, 1
      %s246 = smul.addr %s245, 5
      %s247 = smul.addr %s243, 10
      %s248 = sadd.s32 %s246, %s247
      %s249 = smul.addr %s248, 4
      %s250 = scalar_lea.vmem %s0, %s249
      %s251 = smul.u32 4, %s20
      %p252 = scmp.lt.s32.totalorder %s19, 1
      %s253 = scalar_select %p252, %s19, 1
      %p254 = scmp.lt.s32.totalorder %s251, 7
      %s255 = scalar_select %p254, %s251, 7
      %s256 = smul.addr %s253, 8
      %s257 = sadd.s32 %s255, %s256
      %s258 = smul.addr %s257, 4
      %s259 = scalar_lea.vmem %s3, %s258
      %s260 = smul.u32 4, %s20
      %s261 = smul.u32 4, %s20
      %p262 = scmp.lt.s32.totalorder %s19, 1
      %s263 = scalar_select %p262, %s19, 1
      %p264 = scmp.lt.s32.totalorder %s261, 7
      %s265 = scalar_select %p264, %s261, 7
      %s266 = smul.addr %s263, 8
      %s267 = sadd.s32 %s265, %s266
      %s268 = smul.addr %s267, 4
      %s269 = scalar_lea.vmem %s4, %s268
      %s270 = smul.u32 4, %s20
      %v272 = vld [vmem:[%s250] sm:$0xff]
      %v273 = vld [vmem:[%s250 + $0x8] sm:$0xff]
      %v274 = vld [vmem:[%s250 + $0x10] sm:$0xf]
      %v275 = vunpack.c.l.bf16 %v272
      %v276 = vunpack.c.h.bf16 %v272
      %v277 = vunpack.c.l.bf16 %v273
      %v278 = vunpack.c.h.bf16 %v273
      %v279 = vunpack.c.l.bf16 %v274
      %vm280 = vcmp.ge.f32.partialorder %v275, 0.0
      %vm281 = vcmp.ge.f32.partialorder %v276, 0.0
      %vm282 = vcmp.ge.f32.partialorder %v277, 0.0
      %vm283 = vcmp.ge.f32.partialorder %v278, 0.0
      %vm284 = vcmp.ge.f32.partialorder %v279, 0.0
      %v285 = vmul.f32 %v275, 0.01
      %v286 = vmul.f32 %v276, 0.01
      %v287 = vmul.f32 %v277, 0.01
      %v288 = vmul.f32 %v278, 0.01
      %v289 = vmul.f32 %v279, 0.01
      %v290 = vsel %vm280, %v275, %v285
      %v291 = vsel %vm281, %v276, %v286
      %v292 = vsel %vm282, %v277, %v287
      %v293 = vsel %vm283, %v278, %v288
      %v294 = vsel %vm284, %v279, %v289
      %300 = vrot.lane.b32.xlu0 %v290, 127
      %v301 = vpop.permute.xlu0 %300
      %302 = vrot.lane.b32.xlu0 %v291, 127
      %v303 = vpop.permute.xlu0 %302
      %304 = vrot.lane.b32.xlu0 %v292, 127
      %v305 = vpop.permute.xlu0 %304
      %306 = vrot.lane.b32.xlu0 %v293, 127
      %v307 = vpop.permute.xlu0 %306
      %308 = vrot.lane.b32.xlu0 %v294, 127
      %v309 = vpop.permute.xlu0 %308
      %vm310 = vcmask 1039360
      %v311 = vsel %vm310, %v301, %v303
      %v312 = vsel %vm310, %v303, %v305
      %v313 = vsel %vm310, %v305, %v307
      %v314 = vsel %vm310, %v307, %v309
      %319 = vrot.lane.b32.xlu0 %v290, 126
      %v320 = vpop.permute.xlu0 %319
      %321 = vrot.lane.b32.xlu0 %v291, 126
      %v322 = vpop.permute.xlu0 %321
      %323 = vrot.lane.b32.xlu0 %v292, 126
      %v324 = vpop.permute.xlu0 %323
      %325 = vrot.lane.b32.xlu0 %v293, 126
      %v326 = vpop.permute.xlu0 %325
      %327 = vrot.lane.b32.xlu0 %v294, 126
      %v328 = vpop.permute.xlu0 %327
      %vm329 = vcmask 1031168
      %v330 = vsel %vm329, %v320, %v322
      %v331 = vsel %vm329, %v322, %v324
      %v332 = vsel %vm329, %v324, %v326
      %v333 = vsel %vm329, %v326, %v328
      %338 = vrot.lane.b32.xlu0 %v290, 125
      %v339 = vpop.permute.xlu0 %338
      %340 = vrot.lane.b32.xlu0 %v291, 125
      %v341 = vpop.permute.xlu0 %340
      %342 = vrot.lane.b32.xlu0 %v292, 125
      %v343 = vpop.permute.xlu0 %342
      %344 = vrot.lane.b32.xlu0 %v293, 125
      %v345 = vpop.permute.xlu0 %344
      %346 = vrot.lane.b32.xlu0 %v294, 125
      %v347 = vpop.permute.xlu0 %346
      %vm348 = vcmask 1022976
      %v349 = vsel %vm348, %v339, %v341
      %v350 = vsel %vm348, %v341, %v343
      %v351 = vsel %vm348, %v343, %v345
      %v352 = vsel %vm348, %v345, %v347
      %357 = vrot.lane.b32.xlu0 %v290, 124
      %v358 = vpop.permute.xlu0 %357
      %359 = vrot.lane.b32.xlu0 %v291, 124
      %v360 = vpop.permute.xlu0 %359
      %361 = vrot.lane.b32.xlu0 %v292, 124
      %v362 = vpop.permute.xlu0 %361
      %363 = vrot.lane.b32.xlu0 %v293, 124
      %v364 = vpop.permute.xlu0 %363
      %365 = vrot.lane.b32.xlu0 %v294, 124
      %v366 = vpop.permute.xlu0 %365
      %vm367 = vcmask 1014784
      %v368 = vsel %vm367, %v358, %v360
      %v369 = vsel %vm367, %v360, %v362
      %v370 = vsel %vm367, %v362, %v364
      %v371 = vsel %vm367, %v364, %v366
      %v376 = vld [vmem:[%s1] sm:$0xf]
      %v377 = vpack.c.bf16 %v311, %v290
      %v378 = vpack.c.bf16 %v312, %v291
      %v379 = vpack.c.bf16 %v313, %v292
      %v380 = vpack.c.bf16 %v314, %v293
      %v381 = vpack.c.bf16 %v349, %v330
      %v382 = vpack.c.bf16 %v350, %v331
      %v383 = vpack.c.bf16 %v351, %v332
      %v384 = vpack.c.bf16 %v352, %v333
      %v385 = vpack.c.bf16 %v368, %v368
      %v386 = vpack.c.bf16 %v369, %v369
      %v387 = vpack.c.bf16 %v370, %v370
      %v388 = vpack.c.bf16 %v371, %v371
      %v389 = vld [vmem:[%s2] sm:$0xff]
      %391 = vset.pattern.permute.xlu0 0
      %392 = vperm.xlu0 %391, %v389
      %v393 = vpop.permute.xlu0 %392
      %vm395 = vcmask 326656
      %v397 = vsel %vm395, %v376, 0
      %vm399 = vcmask 1043456
      %v401 = vsel %vm399, %v385, 0
      %v404 = vsel %vm399, %v386, 0
      %v407 = vsel %vm399, %v387, 0
      %v410 = vsel %vm399, %v388, 0
      %412 = vmatprep.subr.bf16.mxu0 0
      %413 = vmatpush1.bf16.msra.mxu0 0
      %414 = vmatprep.subr.bf16.mxu0 0
      %415 = vmatpush1.bf16.msra.mxu0 0
      %416 = vmatprep.subr.bf16.mxu0 0
      %417 = vmatpush1.bf16.msra.mxu0 0
      %418 = vmatprep.subr.bf16.mxu0 0
      %419 = vmatpush1.bf16.msra.mxu0 0
      %420 = vmatprep.subr.bf16.mxu0 0
      %421 = vmatpush1.bf16.msra.mxu0 0
      %422 = vmatprep.subr.bf16.mxu0 %v404
      %423 = vmatpush1.bf16.msra.mxu0 %v401
      %424 = vmatprep.subr.bf16.mxu0 %v382
      %425 = vmatpush1.bf16.msra.mxu0 %v381
      %426 = vmatprep.subr.bf16.mxu0 %v378
      %427 = vmatpush1.bf16.msra.mxu0 %v377
      %428 = vmatprep.subr.bf16.mxu0 0
      %429 = vmatpush2.bf16.msra.mxu0 0
      %430 = vmatprep.subr.bf16.mxu0 0
      %431 = vmatpush2.bf16.msra.mxu0 0
      %432 = vmatprep.subr.bf16.mxu0 0
      %433 = vmatpush2.bf16.msra.mxu0 0
      %434 = vmatprep.subr.bf16.mxu0 0
      %435 = vmatpush2.bf16.msra.mxu0 0
      %436 = vmatprep.subr.bf16.mxu0 0
      %437 = vmatpush2.bf16.msra.mxu0 0
      %438 = vmatprep.subr.bf16.mxu0 0
      %439 = vmatpush2.bf16.msra.mxu0 0
      %440 = vmatprep.subr.bf16.mxu0 0
      %441 = vmatpush2.bf16.msra.mxu0 0
      %442 = vmatprep.subr.bf16.mxu0 0
      %443 = vmatpush2.bf16.msra.mxu0 0
      %444 = vmatprep.mubr.bf16.mxu0 0
      %445 = vmatmul.mubr.bf16.gmra.mxu0 %v397
      %v446 = vpop.f32.mrf.mxu0
      %v447 = vadd.f32 %v393, %v446
      %v448 = vpop.f32.mrf.mxu0
      %v449 = vadd.f32 %v393, %v448
      %v450 = vpop.f32.mrf.mxu0
      %v451 = vpop.f32.mrf.mxu0
      %452 = vdwg.mxu0
      %453 = vmatprep.subr.bf16.mxu0 0
      %454 = vmatpush1.bf16.msra.mxu0 0
      %455 = vmatprep.subr.bf16.mxu0 0
      %456 = vmatpush1.bf16.msra.mxu0 0
      %457 = vmatprep.subr.bf16.mxu0 0
      %458 = vmatpush1.bf16.msra.mxu0 0
      %459 = vmatprep.subr.bf16.mxu0 0
      %460 = vmatpush1.bf16.msra.mxu0 0
      %461 = vmatprep.subr.bf16.mxu0 0
      %462 = vmatpush1.bf16.msra.mxu0 0
      %463 = vmatprep.subr.bf16.mxu0 %v410
      %464 = vmatpush1.bf16.msra.mxu0 %v407
      %465 = vmatprep.subr.bf16.mxu0 %v384
      %466 = vmatpush1.bf16.msra.mxu0 %v383
      %467 = vmatprep.subr.bf16.mxu0 %v380
      %468 = vmatpush1.bf16.msra.mxu0 %v379
      %469 = vmatprep.subr.bf16.mxu0 0
      %470 = vmatpush2.bf16.msra.mxu0 0
      %471 = vmatprep.subr.bf16.mxu0 0
      %472 = vmatpush2.bf16.msra.mxu0 0
      %473 = vmatprep.subr.bf16.mxu0 0
      %474 = vmatpush2.bf16.msra.mxu0 0
      %475 = vmatprep.subr.bf16.mxu0 0
      %476 = vmatpush2.bf16.msra.mxu0 0
      %477 = vmatprep.subr.bf16.mxu0 0
      %478 = vmatpush2.bf16.msra.mxu0 0
      %479 = vmatprep.subr.bf16.mxu0 0
      %480 = vmatpush2.bf16.msra.mxu0 0
      %481 = vmatprep.subr.bf16.mxu0 0
      %482 = vmatpush2.bf16.msra.mxu0 0
      %483 = vmatprep.subr.bf16.mxu0 0
      %484 = vmatpush2.bf16.msra.mxu0 0
      %485 = vmatprep.mubr.bf16.mxu0 0
      %486 = vmatmul.mubr.bf16.gmra.mxu0 %v397
      %v487 = vpop.f32.mrf.mxu0
      %v488 = vadd.f32 %v393, %v487
      %v489 = vpop.f32.mrf.mxu0
      %v490 = vadd.f32 %v393, %v489
      %v491 = vpop.f32.mrf.mxu0
      %v492 = vpop.f32.mrf.mxu0
      %493 = vdwg.mxu0
      %v494 = vld [vmem:[%s259] sm:$0xff]
      %v495 = vld [vmem:[%s259 + $0x8] sm:$0xff]
      %v496 = vunpack.c.l.bf16 %v494
      %v497 = vunpack.c.h.bf16 %v494
      %v498 = vunpack.c.l.bf16 %v495
      %v499 = vunpack.c.h.bf16 %v495
      %v500 = vadd.f32 %v447, %v496
      %v501 = vadd.f32 %v449, %v497
      %v502 = vadd.f32 %v488, %v498
      %v503 = vadd.f32 %v490, %v499
      %v504 = vpack.c.bf16 %v500, %v500
      %v505 = vpack.c.bf16 %v501, %v501
      %v506 = vpack.c.bf16 %v502, %v502
      %v507 = vpack.c.bf16 %v503, %v503
      %v512 = vunpack.c.l.b16 %v504
      %v513 = vunpack.c.l.b16 %v505
      %v514 = vunpack.c.l.b16 %v506
      %v515 = vunpack.c.l.b16 %v507
      %v516 = vpack.c.b16 %v513, %v512
      %v517 = vpack.c.b16 %v515, %v514
      %520 = vst [vmem:[%s269] sm:$0xff] %v516
      %521 = vst [vmem:[%s269 + $0x8] sm:$0xff] %v517
      %s522 = smul.u32 4, %s20
      %p523 = scmp.lt.s32.totalorder %s19, 1
      %s524 = scalar_select %p523, %s19, 1
      %p525 = scmp.lt.s32.totalorder %s522, 7
      %s526 = scalar_select %p525, %s522, 7
      %s527 = smul.addr %s524, 8
      %s528 = sadd.s32 %s526, %s527
      %s529 = smul.addr %s528, 4
      %s530 = scalar_lea.vmem %s4, %s529
      // Predicated region
      $region37: #{_lambda_.36} parent=35 // pred_check
        %p531 = pneg %p145
      $region38: #{_lambda_.36} parent=35 // pred_check_branch
        %533 = sbr.rel (%p531) target = $region40
      $region39: #{_lambda_.36} parent=35 // pred_region
        %s534 = smul.u32 4, %s20
      $region40: #{_lambda_.36} parent=35 // pred_fallthru
        _
    $region36: #{_lambda_.36} parent=5 // pred_fallthru
      _
    %p535 = scmp.le.s32.totalorder 2, %s10
    // Predicated region
    $region41: #{_lambda_.36} parent=5 // pred_check
      %p536 = pneg %p535
    $region42: #{_lambda_.36} parent=5 // pred_check_branch
      %538 = sbr.rel (%p536) target = $region44
    $region43: #{_lambda_.36} parent=5 // pred_region
      %s539 = ssub.s32 %s10, 2
      // Predicated region
      $region45: #{_lambda_.36} parent=43 // pred_check
        %p540 = pneg %p151
      $region46: #{_lambda_.36} parent=43 // pred_check_branch
        %542 = sbr.rel (%p540) target = $region48
      $region47: #{_lambda_.36} parent=43 // pred_region
        %s543 = smul.u32 4, %s22
        %p544 = scmp.lt.s32.totalorder %s21, 1
        %s545 = scalar_select %p544, %s21, 1
        %p546 = scmp.lt.s32.totalorder %s543, 7
        %s547 = scalar_select %p546, %s543, 7
        %s548 = smul.addr %s545, 8
        %s549 = sadd.s32 %s547, %s548
        %s550 = smul.addr %s549, 4
        %s551 = scalar_lea.vmem %s4, %s550
      $region48: #{_lambda_.36} parent=43 // pred_fallthru
        _
    $region44: #{_lambda_.36} parent=5 // pred_fallthru
      _
  $region6: #{_lambda_.36} parent=0 // loop_footer
    %s14 = sadd.s32 1, %s10
  $region7: #{_lambda_.36} parent=0 // loop_footer_branch
    %9 = sbr.rel target = $region3
  $region8: #{_lambda_.36} parent=0 // loop_exit
    _

// kernel: _lambda_.35
$region0: #{_lambda_.35}
  #allocation0 [shape = 'u32[]', space=smem, size = 0x4, offset = 0x4, fixed_abs, tag = 'smem constant byte address 0x4 - core index']
  #allocation1 [shape = 'u32[144,128]{1,0:T(1,128)}', space=vmem, size = 0x12000, scoped, tag = 'internal scratch']
  %s0 = inlined_call_operand.vmem [shape: bf16[2,2,8,516], index: 0, kind: input, shape index: {}]
  %s1 = inlined_call_operand.vmem [shape: bf16[8,40], index: 1, kind: input, shape index: {}]
  %s2 = inlined_call_operand.vmem [shape: f32[8,1], index: 2, kind: input, shape index: {}]
  %s3 = inlined_call_operand.vmem [shape: bf16[2,8,1024], index: 3, kind: output, shape index: {}]
  %s4 = sld [smem:[#allocation0]]
  $region45: #{_lambda_.35} parent=0
    _
  %s6 = ssub.s32 1, %s4
  %s7 = scalar_select 0, %s6, %s4
  loop: start=0, step=1, limit=6
  $region2: #{_lambda_.35} parent=0 // loop_pre_header
    _
  $region3: #{_lambda_.35} parent=0 // loop_header
    %s9 = sphi 0, %s13
    %p10 = scmp.ge.s32.totalorder %s9, 6
    %s16 = sphi 0, %s28
    %s17 = sphi 0, %s24
    %s18 = sphi 0, %s16
    %s19 = sphi 0, %s17
    %s20 = sphi 0, %s18
    %s21 = sphi 0, %s19
    %s33 = sphi 0, %s35
    %s36 = sphi 0, %s33
    %s37 = sphi 0, %s36
    %s53 = sphi 0, %s37
    %s57 = sphi 0, %s57
    %s59 = sphi 0, %s57
    %s60 = sphi 0, %s59
    %s74 = sphi 0, %s60
    %s78 = sphi 0, %s78
    %s80 = sphi 0, %s78
    %s81 = sphi 0, %s80
    %s95 = sphi 0, %s81
    %s103 = sphi 0, %s105
    %s106 = sphi 0, %s103
    %s107 = sphi 0, %s106
    %s123 = sphi 0, %s107
  $region4: #{_lambda_.35} parent=0 // loop_header_branch
    %12 = sbr.rel (%p10) target = $region8
  $region5: #{_lambda_.35} parent=0 // loop_body
    %s14 = ssub.s32 %s9, 1
    %s15 = ssub.s32 %s9, 2
    %s22 = sadd.s32 1, %s17
    %p23 = scmp.ge.s32.totalorder %s22, 2
    %s24 = scalar_select %p23, 0, %s22
    %s25 = sadd.s32 1, %s16
    %s26 = scalar_select %p23, %s25, %s16
    %p27 = scmp.ge.s32.totalorder %s26, 2
    %s28 = scalar_select %p27, 0, %s26
    %s29 = ssub.s32 %s16, %s28
    %s30 = ssub.s32 %s17, %s24
    %s31 = sor.u32 %s29, %s30
    %p32 = scmp.eq.s32.totalorder %s31, 0
    %s34 = sadd.s32 %s33, 1
    %s35 = scalar_select %p32, %s33, %s34
    %p38 = pneg %p32
    %p39 = scmp.eq.s32.totalorder %s9, 3
    %p40 = por %p38, %p39
    %p41 = scmp.ne.s32.totalorder %s33, %s36
    %p42 = scmp.eq.s32.totalorder %s9, 0
    %p43 = por %p41, %p42
    %p44 = scmp.ne.s32.totalorder %s33, %s36
    %p45 = scmp.eq.s32.totalorder %s14, 3
    %p46 = por %p44, %p45
    %p47 = scmp.ne.s32.totalorder %s36, %s37
    %p48 = scmp.eq.s32.totalorder %s14, 0
    %p49 = por %p47, %p48
    %p50 = scmp.ne.s32.totalorder %s36, %s37
    %p51 = scmp.eq.s32.totalorder %s15, 3
    %p52 = por %p50, %p51
    %p54 = scmp.ne.s32.totalorder %s37, %s53
    %p55 = scmp.eq.s32.totalorder %s15, 0
    %p56 = por %p54, %p55
    %s58 = sadd.s32 %s57, 1
    %p61 = scmp.eq.s32.totalorder %s9, 3
    %p62 = scmp.ne.s32.totalorder %s57, %s59
    %p63 = scmp.eq.s32.totalorder %s9, 0
    %p64 = por %p62, %p63
    %p65 = scmp.ne.s32.totalorder %s57, %s59
    %p66 = scmp.eq.s32.totalorder %s14, 3
    %p67 = por %p65, %p66
    %p68 = scmp.ne.s32.totalorder %s59, %s60
    %p69 = scmp.eq.s32.totalorder %s14, 0
    %p70 = por %p68, %p69
    %p71 = scmp.ne.s32.totalorder %s59, %s60
    %p72 = scmp.eq.s32.totalorder %s15, 3
    %p73 = por %p71, %p72
    %p75 = scmp.ne.s32.totalorder %s60, %s74
    %p76 = scmp.eq.s32.totalorder %s15, 0
    %p77 = por %p75, %p76
    %s79 = sadd.s32 %s78, 1
    %p82 = scmp.eq.s32.totalorder %s9, 3
    %p83 = scmp.ne.s32.totalorder %s78, %s80
    %p84 = scmp.eq.s32.totalorder %s9, 0
    %p85 = por %p83, %p84
    %p86 = scmp.ne.s32.totalorder %s78, %s80
    %p87 = scmp.eq.s32.totalorder %s14, 3
    %p88 = por %p86, %p87
    %p89 = scmp.ne.s32.totalorder %s80, %s81
    %p90 = scmp.eq.s32.totalorder %s14, 0
    %p91 = por %p89, %p90
    %p92 = scmp.ne.s32.totalorder %s80, %s81
    %p93 = scmp.eq.s32.totalorder %s15, 3
    %p94 = por %p92, %p93
    %p96 = scmp.ne.s32.totalorder %s81, %s95
    %p97 = scmp.eq.s32.totalorder %s15, 0
    %p98 = por %p96, %p97
    %s99 = ssub.s32 %s16, %s28
    %s100 = ssub.s32 %s17, %s24
    %s101 = sor.u32 %s99, %s100
    %p102 = scmp.eq.s32.totalorder %s101, 0
    %s104 = sadd.s32 %s103, 1
    %s105 = scalar_select %p102, %s103, %s104
    %p108 = pneg %p102
    %p109 = scmp.eq.s32.totalorder %s9, 3
    %p110 = por %p108, %p109
    %p111 = scmp.ne.s32.totalorder %s103, %s106
    %p112 = scmp.eq.s32.totalorder %s9, 0
    %p113 = por %p111, %p112
    %p114 = scmp.ne.s32.totalorder %s103, %s106
    %p115 = scmp.eq.s32.totalorder %s14, 3
    %p116 = por %p114, %p115
    %p117 = scmp.ne.s32.totalorder %s106, %s107
    %p118 = scmp.eq.s32.totalorder %s14, 0
    %p119 = por %p117, %p118
    %p120 = scmp.ne.s32.totalorder %s106, %s107
    %p121 = scmp.eq.s32.totalorder %s15, 3
    %p122 = por %p120, %p121
    %p124 = scmp.ne.s32.totalorder %s107, %s123
    %p125 = scmp.eq.s32.totalorder %s15, 0
    %p126 = por %p124, %p125
    %p127 = scmp.le.s32.totalorder 1, %s9
    %p128 = scmp.lt.s32.totalorder %s9, 5
    %p129 = pnand %p127, %p128
    %p130 = pneg %p129
    // Predicated region
    $region9: #{_lambda_.35} parent=5 // pred_check
      _
    $region10: #{_lambda_.35} parent=5 // pred_check_branch
      %132 = sbr.rel (%p129) target = $region12
    $region11: #{_lambda_.35} parent=5 // pred_region
      %s133 = ssub.s32 %s9, 1
      // Predicated region
      $region13: #{_lambda_.35} parent=11 // pred_check
        %p134 = pneg %p70
      $region14: #{_lambda_.35} parent=11 // pred_check_branch
        %136 = sbr.rel (%p134) target = $region16
      $region15: #{_lambda_.35} parent=11 // pred_region
        _
      $region16: #{_lambda_.35} parent=11 // pred_fallthru
        _
      // Predicated region
      $region17: #{_lambda_.35} parent=11 // pred_check
        %p137 = pneg %p91
      $region18: #{_lambda_.35} parent=11 // pred_check_branch
        %139 = sbr.rel (%p137) target = $region20
      $region19: #{_lambda_.35} parent=11 // pred_region
        _
      $region20: #{_lambda_.35} parent=11 // pred_fallthru
        _
    $region12: #{_lambda_.35} parent=5 // pred_fallthru
      _
    %p140 = scmp.lt.s32.totalorder %s9, 4
    // Predicated region
    $region21: #{_lambda_.35} parent=5 // pred_check
      %p141 = pneg %p140
    $region22: #{_lambda_.35} parent=5 // pred_check_branch
      %143 = sbr.rel (%p141) target = $region24
    $region23: #{_lambda_.35} parent=5 // pred_region
      // Predicated region
      $region25: #{_lambda_.35} parent=23 // pred_check
        %p144 = pneg %p43
      $region26: #{_lambda_.35} parent=23 // pred_check_branch
        %146 = sbr.rel (%p144) target = $region28
      $region27: #{_lambda_.35} parent=23 // pred_region
        %p147 = scmp.lt.s32.totalorder %s16, 1
        %s148 = scalar_select %p147, %s16, 1
        %p149 = scmp.lt.s32.totalorder %s17, 1
        %s150 = scalar_select %p149, %s17, 1
        %s151 = smul.addr %s150, 5
        %s152 = smul.addr %s148, 10
        %s153 = sadd.s32 %s151, %s152
        %s154 = smul.addr %s153, 4
        %s155 = scalar_lea.vmem %s0, %s154
      $region28: #{_lambda_.35} parent=23 // pred_fallthru
        _
    $region24: #{_lambda_.35} parent=5 // pred_fallthru
      _
    %p156 = scmp.le.s32.totalorder 1, %s9
    %p157 = scmp.lt.s32.totalorder %s9, 5
    %p158 = pnand %p156, %p157
    %p159 = pneg %p158
    // Predicated region
    $region29: #{_lambda_.35} parent=5 // pred_check
      _
    $region30: #{_lambda_.35} parent=5 // pred_check_branch
      %161 = sbr.rel (%p158) target = $region32
    $region31: #{_lambda_.35} parent=5 // pred_region
      %s162 = ssub.s32 %s9, 1
      %p163 = scmp.lt.s32.totalorder %s18, 1
      %s164 = scalar_select %p163, %s18, 1
      %p165 = scmp.lt.s32.totalorder %s19, 1
      %s166 = scalar_select %p165, %s19, 1
      %s167 = smul.addr %s166, 5
      %s168 = smul.addr %s164, 10
      %s169 = sadd.s32 %s167, %s168
      %s170 = smul.addr %s169, 4
      %s171 = scalar_lea.vmem %s0, %s170
      %p172 = pneg %p49
      %p173 = pneg %p46
      %p174 = pneg %p70
      %p175 = pneg %p67
      %p176 = pneg %p91
      %p177 = pneg %p88
      %p178 = pneg %p119
      %p179 = pneg %p116
      %s180 = smul.u32 4, %s19
      %p181 = scmp.lt.s32.totalorder %s18, 1
      %s182 = scalar_select %p181, %s18, 1
      %p183 = scmp.lt.s32.totalorder %s180, 7
      %s184 = scalar_select %p183, %s180, 7
      %s185 = smul.addr %s182, 8
      %s186 = sadd.s32 %s184, %s185
      %s187 = smul.addr %s186, 4
      %s188 = scalar_lea.vmem %s3, %s187
      %p189 = scmp.lt.s32.totalorder %s18, 1
      %s190 = scalar_select %p189, %s18, 1
      %p191 = scmp.lt.s32.totalorder %s19, 1
      %s192 = scalar_select %p191, %s19, 1
      %s193 = smul.addr %s192, 5
      %s194 = smul.addr %s190, 10
      %s195 = sadd.s32 %s193, %s194
      %s196 = smul.addr %s195, 4
      %s197 = scalar_lea.vmem %s0, %s196
      %s198 = smul.u32 4, %s19
      %p199 = scmp.lt.s32.totalorder %s18, 1
      %s200 = scalar_select %p199, %s18, 1
      %p201 = scmp.lt.s32.totalorder %s198, 7
      %s202 = scalar_select %p201, %s198, 7
      %s203 = smul.addr %s200, 8
      %s204 = sadd.s32 %s202, %s203
      %s205 = smul.addr %s204, 4
      %s206 = scalar_lea.vmem %s3, %s205
      %s207 = smul.u32 4, %s19
      %v209 = vld [vmem:[%s197] sm:$0xff]
      %v210 = vld [vmem:[%s197 + $0x8] sm:$0xff]
      %v211 = vld [vmem:[%s197 + $0x10] sm:$0xf]
      %v212 = vunpack.c.l.bf16 %v209
      %v213 = vunpack.c.h.bf16 %v209
      %v214 = vunpack.c.l.bf16 %v210
      %v215 = vunpack.c.h.bf16 %v210
      %v216 = vunpack.c.l.bf16 %v211
      %vm217 = vcmp.ge.f32.partialorder %v212, 0.0
      %vm218 = vcmp.ge.f32.partialorder %v213, 0.0
      %vm219 = vcmp.ge.f32.partialorder %v214, 0.0
      %vm220 = vcmp.ge.f32.partialorder %v215, 0.0
      %vm221 = vcmp.ge.f32.partialorder %v216, 0.0
      %v222 = vmul.f32 %v212, 0.01
      %v223 = vmul.f32 %v213, 0.01
      %v224 = vmul.f32 %v214, 0.01
      %v225 = vmul.f32 %v215, 0.01
      %v226 = vmul.f32 %v216, 0.01
      %v227 = vsel %vm217, %v212, %v222
      %v228 = vsel %vm218, %v213, %v223
      %v229 = vsel %vm219, %v214, %v224
      %v230 = vsel %vm220, %v215, %v225
      %v231 = vsel %vm221, %v216, %v226
      %237 = vrot.lane.b32.xlu0 %v227, 127
      %v238 = vpop.permute.xlu0 %237
      %239 = vrot.lane.b32.xlu0 %v228, 127
      %v240 = vpop.permute.xlu0 %239
      %241 = vrot.lane.b32.xlu0 %v229, 127
      %v242 = vpop.permute.xlu0 %241
      %243 = vrot.lane.b32.xlu0 %v230, 127
      %v244 = vpop.permute.xlu0 %243
      %245 = vrot.lane.b32.xlu0 %v231, 127
      %v246 = vpop.permute.xlu0 %245
      %vm247 = vcmask 1039360
      %v248 = vsel %vm247, %v238, %v240
      %v249 = vsel %vm247, %v240, %v242
      %v250 = vsel %vm247, %v242, %v244
      %v251 = vsel %vm247, %v244, %v246
      %256 = vrot.lane.b32.xlu0 %v227, 126
      %v257 = vpop.permute.xlu0 %256
      %258 = vrot.lane.b32.xlu0 %v228, 126
      %v259 = vpop.permute.xlu0 %258
      %260 = vrot.lane.b32.xlu0 %v229, 126
      %v261 = vpop.permute.xlu0 %260
      %262 = vrot.lane.b32.xlu0 %v230, 126
      %v263 = vpop.permute.xlu0 %262
      %264 = vrot.lane.b32.xlu0 %v231, 126
      %v265 = vpop.permute.xlu0 %264
      %vm266 = vcmask 1031168
      %v267 = vsel %vm266, %v257, %v259
      %v268 = vsel %vm266, %v259, %v261
      %v269 = vsel %vm266, %v261, %v263
      %v270 = vsel %vm266, %v263, %v265
      %275 = vrot.lane.b32.xlu0 %v227, 125
      %v276 = vpop.permute.xlu0 %275
      %277 = vrot.lane.b32.xlu0 %v228, 125
      %v278 = vpop.permute.xlu0 %277
      %279 = vrot.lane.b32.xlu0 %v229, 125
      %v280 = vpop.permute.xlu0 %279
      %281 = vrot.lane.b32.xlu0 %v230, 125
      %v282 = vpop.permute.xlu0 %281
      %283 = vrot.lane.b32.xlu0 %v231, 125
      %v284 = vpop.permute.xlu0 %283
      %vm285 = vcmask 1022976
      %v286 = vsel %vm285, %v276, %v278
      %v287 = vsel %vm285, %v278, %v280
      %v288 = vsel %vm285, %v280, %v282
      %v289 = vsel %vm285, %v282, %v284
      %294 = vrot.lane.b32.xlu0 %v227, 124
      %v295 = vpop.permute.xlu0 %294
      %296 = vrot.lane.b32.xlu0 %v228, 124
      %v297 = vpop.permute.xlu0 %296
      %298 = vrot.lane.b32.xlu0 %v229, 124
      %v299 = vpop.permute.xlu0 %298
      %300 = vrot.lane.b32.xlu0 %v230, 124
      %v301 = vpop.permute.xlu0 %300
      %302 = vrot.lane.b32.xlu0 %v231, 124
      %v303 = vpop.permute.xlu0 %302
      %vm304 = vcmask 1014784
      %v305 = vsel %vm304, %v295, %v297
      %v306 = vsel %vm304, %v297, %v299
      %v307 = vsel %vm304, %v299, %v301
      %v308 = vsel %vm304, %v301, %v303
      %v313 = vld [vmem:[%s1] sm:$0xf]
      %v314 = vpack.c.bf16 %v248, %v227
      %v315 = vpack.c.bf16 %v249, %v228
      %v316 = vpack.c.bf16 %v250, %v229
      %v317 = vpack.c.bf16 %v251, %v230
      %v318 = vpack.c.bf16 %v286, %v267
      %v319 = vpack.c.bf16 %v287, %v268
      %v320 = vpack.c.bf16 %v288, %v269
      %v321 = vpack.c.bf16 %v289, %v270
      %v322 = vpack.c.bf16 %v305, %v305
      %v323 = vpack.c.bf16 %v306, %v306
      %v324 = vpack.c.bf16 %v307, %v307
      %v325 = vpack.c.bf16 %v308, %v308
      %v326 = vld [vmem:[%s2] sm:$0xff]
      %328 = vset.pattern.permute.xlu0 0
      %329 = vperm.xlu0 %328, %v326
      %v330 = vpop.permute.xlu0 %329
      %vm332 = vcmask 326656
      %v334 = vsel %vm332, %v313, 0
      %vm336 = vcmask 1043456
      %v338 = vsel %vm336, %v322, 0
      %v341 = vsel %vm336, %v323, 0
      %v344 = vsel %vm336, %v324, 0
      %v347 = vsel %vm336, %v325, 0
      %349 = vmatprep.subr.bf16.mxu0 0
      %350 = vmatpush1.bf16.msra.mxu0 0
      %351 = vmatprep.subr.bf16.mxu0 0
      %352 = vmatpush1.bf16.msra.mxu0 0
      %353 = vmatprep.subr.bf16.mxu0 0
      %354 = vmatpush1.bf16.msra.mxu0 0
      %355 = vmatprep.subr.bf16.mxu0 0
      %356 = vmatpush1.bf16.msra.mxu0 0
      %357 = vmatprep.subr.bf16.mxu0 0
      %358 = vmatpush1.bf16.msra.mxu0 0
      %359 = vmatprep.subr.bf16.mxu0 %v341
      %360 = vmatpush1.bf16.msra.mxu0 %v338
      %361 = vmatprep.subr.bf16.mxu0 %v319
      %362 = vmatpush1.bf16.msra.mxu0 %v318
      %363 = vmatprep.subr.bf16.mxu0 %v315
      %364 = vmatpush1.bf16.msra.mxu0 %v314
      %365 = vmatprep.subr.bf16.mxu0 0
      %366 = vmatpush2.bf16.msra.mxu0 0
      %367 = vmatprep.subr.bf16.mxu0 0
      %368 = vmatpush2.bf16.msra.mxu0 0
      %369 = vmatprep.subr.bf16.mxu0 0
      %370 = vmatpush2.bf16.msra.mxu0 0
      %371 = vmatprep.subr.bf16.mxu0 0
      %372 = vmatpush2.bf16.msra.mxu0 0
      %373 = vmatprep.subr.bf16.mxu0 0
      %374 = vmatpush2.bf16.msra.mxu0 0
      %375 = vmatprep.subr.bf16.mxu0 0
      %376 = vmatpush2.bf16.msra.mxu0 0
      %377 = vmatprep.subr.bf16.mxu0 0
      %378 = vmatpush2.bf16.msra.mxu0 0
      %379 = vmatprep.subr.bf16.mxu0 0
      %380 = vmatpush2.bf16.msra.mxu0 0
      %381 = vmatprep.mubr.bf16.mxu0 0
      %382 = vmatmul.mubr.bf16.gmra.mxu0 %v334
      %v383 = vpop.f32.mrf.mxu0
      %v384 = vadd.f32 %v330, %v383
      %v385 = vpop.f32.mrf.mxu0
      %v386 = vadd.f32 %v330, %v385
      %v387 = vpop.f32.mrf.mxu0
      %v388 = vpop.f32.mrf.mxu0
      %389 = vdwg.mxu0
      %390 = vmatprep.subr.bf16.mxu0 0
      %391 = vmatpush1.bf16.msra.mxu0 0
      %392 = vmatprep.subr.bf16.mxu0 0
      %393 = vmatpush1.bf16.msra.mxu0 0
      %394 = vmatprep.subr.bf16.mxu0 0
      %395 = vmatpush1.bf16.msra.mxu0 0
      %396 = vmatprep.subr.bf16.mxu0 0
      %397 = vmatpush1.bf16.msra.mxu0 0
      %398 = vmatprep.subr.bf16.mxu0 0
      %399 = vmatpush1.bf16.msra.mxu0 0
      %400 = vmatprep.subr.bf16.mxu0 %v347
      %401 = vmatpush1.bf16.msra.mxu0 %v344
      %402 = vmatprep.subr.bf16.mxu0 %v321
      %403 = vmatpush1.bf16.msra.mxu0 %v320
      %404 = vmatprep.subr.bf16.mxu0 %v317
      %405 = vmatpush1.bf16.msra.mxu0 %v316
      %406 = vmatprep.subr.bf16.mxu0 0
      %407 = vmatpush2.bf16.msra.mxu0 0
      %408 = vmatprep.subr.bf16.mxu0 0
      %409 = vmatpush2.bf16.msra.mxu0 0
      %410 = vmatprep.subr.bf16.mxu0 0
      %411 = vmatpush2.bf16.msra.mxu0 0
      %412 = vmatprep.subr.bf16.mxu0 0
      %413 = vmatpush2.bf16.msra.mxu0 0
      %414 = vmatprep.subr.bf16.mxu0 0
      %415 = vmatpush2.bf16.msra.mxu0 0
      %416 = vmatprep.subr.bf16.mxu0 0
      %417 = vmatpush2.bf16.msra.mxu0 0
      %418 = vmatprep.subr.bf16.mxu0 0
      %419 = vmatpush2.bf16.msra.mxu0 0
      %420 = vmatprep.subr.bf16.mxu0 0
      %421 = vmatpush2.bf16.msra.mxu0 0
      %422 = vmatprep.mubr.bf16.mxu0 0
      %423 = vmatmul.mubr.bf16.gmra.mxu0 %v334
      %v424 = vpop.f32.mrf.mxu0
      %v425 = vadd.f32 %v330, %v424
      %v426 = vpop.f32.mrf.mxu0
      %v427 = vadd.f32 %v330, %v426
      %v428 = vpop.f32.mrf.mxu0
      %v429 = vpop.f32.mrf.mxu0
      %430 = vdwg.mxu0
      %v431 = vpack.c.bf16 %v384, %v384
      %v432 = vpack.c.bf16 %v386, %v386
      %v433 = vpack.c.bf16 %v425, %v425
      %v434 = vpack.c.bf16 %v427, %v427
      %v439 = vunpack.c.l.b16 %v431
      %v440 = vunpack.c.l.b16 %v432
      %v441 = vunpack.c.l.b16 %v433
      %v442 = vunpack.c.l.b16 %v434
      %v443 = vpack.c.b16 %v440, %v439
      %v444 = vpack.c.b16 %v442, %v441
      %447 = vst [vmem:[%s206] sm:$0xff] %v443
      %448 = vst [vmem:[%s206 + $0x8] sm:$0xff] %v444
      %s449 = smul.u32 4, %s19
      %p450 = scmp.lt.s32.totalorder %s18, 1
      %s451 = scalar_select %p450, %s18, 1
      %p452 = scmp.lt.s32.totalorder %s449, 7
      %s453 = scalar_select %p452, %s449, 7
      %s454 = smul.addr %s451, 8
      %s455 = sadd.s32 %s453, %s454
      %s456 = smul.addr %s455, 4
      %s457 = scalar_lea.vmem %s3, %s456
      // Predicated region
      $region33: #{_lambda_.35} parent=31 // pred_check
        %p458 = pneg %p116
      $region34: #{_lambda_.35} parent=31 // pred_check_branch
        %460 = sbr.rel (%p458) target = $region36
      $region35: #{_lambda_.35} parent=31 // pred_region
        %s461 = smul.u32 4, %s19
      $region36: #{_lambda_.35} parent=31 // pred_fallthru
        _
    $region32: #{_lambda_.35} parent=5 // pred_fallthru
      _
    %p462 = scmp.le.s32.totalorder 2, %s9
    // Predicated region
    $region37: #{_lambda_.35} parent=5 // pred_check
      %p463 = pneg %p462
    $region38: #{_lambda_.35} parent=5 // pred_check_branch
      %465 = sbr.rel (%p463) target = $region40
    $region39: #{_lambda_.35} parent=5 // pred_region
      %s466 = ssub.s32 %s9, 2
      // Predicated region
      $region41: #{_lambda_.35} parent=39 // pred_check
        %p467 = pneg %p122
      $region42: #{_lambda_.35} parent=39 // pred_check_branch
        %469 = sbr.rel (%p467) target = $region44
      $region43: #{_lambda_.35} parent=39 // pred_region
        %s470 = smul.u32 4, %s21
        %p471 = scmp.lt.s32.totalorder %s20, 1
        %s472 = scalar_select %p471, %s20, 1
        %p473 = scmp.lt.s32.totalorder %s470, 7
        %s474 = scalar_select %p473, %s470, 7
        %s475 = smul.addr %s472, 8
        %s476 = sadd.s32 %s474, %s475
        %s477 = smul.addr %s476, 4
        %s478 = scalar_lea.vmem %s3, %s477
      $region44: #{_lambda_.35} parent=39 // pred_fallthru
        _
    $region40: #{_lambda_.35} parent=5 // pred_fallthru
      _
  $region6: #{_lambda_.35} parent=0 // loop_footer
    %s13 = sadd.s32 1, %s9
  $region7: #{_lambda_.35} parent=0 // loop_footer_branch
    %8 = sbr.rel target = $region3
  $region8: #{_lambda_.35} parent=0 // loop_exit
    _

// kernel: _lambda_.37
$region0: #{_lambda_.37}
  #allocation0 [shape = 'u32[]', space=smem, size = 0x4, offset = 0x4, fixed_abs, tag = 'smem constant byte address 0x4 - core index']
  #allocation1 [shape = 'u32[144,128]{1,0:T(1,128)}', space=vmem, size = 0x12000, scoped, tag = 'internal scratch']
  %s0 = inlined_call_operand.vmem [shape: bf16[2,2,8,524], index: 0, kind: input, shape index: {}]
  %s1 = inlined_call_operand.vmem [shape: bf16[8,40], index: 1, kind: input, shape index: {}]
  %s2 = inlined_call_operand.vmem [shape: f32[8,1], index: 2, kind: input, shape index: {}]
  %s3 = inlined_call_operand.vmem [shape: bf16[2,8,1024], index: 3, kind: output, shape index: {}]
  %s4 = sld [smem:[#allocation0]]
  $region45: #{_lambda_.37} parent=0
    _
  %s6 = ssub.s32 1, %s4
  %s7 = scalar_select 0, %s6, %s4
  loop: start=0, step=1, limit=6
  $region2: #{_lambda_.37} parent=0 // loop_pre_header
    _
  $region3: #{_lambda_.37} parent=0 // loop_header
    %s9 = sphi 0, %s13
    %p10 = scmp.ge.s32.totalorder %s9, 6
    %s16 = sphi 0, %s28
    %s17 = sphi 0, %s24
    %s18 = sphi 0, %s16
    %s19 = sphi 0, %s17
    %s20 = sphi 0, %s18
    %s21 = sphi 0, %s19
    %s33 = sphi 0, %s35
    %s36 = sphi 0, %s33
    %s37 = sphi 0, %s36
    %s53 = sphi 0, %s37
    %s57 = sphi 0, %s57
    %s59 = sphi 0, %s57
    %s60 = sphi 0, %s59
    %s74 = sphi 0, %s60
    %s78 = sphi 0, %s78
    %s80 = sphi 0, %s78
    %s81 = sphi 0, %s80
    %s95 = sphi 0, %s81
    %s103 = sphi 0, %s105
    %s106 = sphi 0, %s103
    %s107 = sphi 0, %s106
    %s123 = sphi 0, %s107
  $region4: #{_lambda_.37} parent=0 // loop_header_branch
    %12 = sbr.rel (%p10) target = $region8
  $region5: #{_lambda_.37} parent=0 // loop_body
    %s14 = ssub.s32 %s9, 1
    %s15 = ssub.s32 %s9, 2
    %s22 = sadd.s32 1, %s17
    %p23 = scmp.ge.s32.totalorder %s22, 2
    %s24 = scalar_select %p23, 0, %s22
    %s25 = sadd.s32 1, %s16
    %s26 = scalar_select %p23, %s25, %s16
    %p27 = scmp.ge.s32.totalorder %s26, 2
    %s28 = scalar_select %p27, 0, %s26
    %s29 = ssub.s32 %s16, %s28
    %s30 = ssub.s32 %s17, %s24
    %s31 = sor.u32 %s29, %s30
    %p32 = scmp.eq.s32.totalorder %s31, 0
    %s34 = sadd.s32 %s33, 1
    %s35 = scalar_select %p32, %s33, %s34
    %p38 = pneg %p32
    %p39 = scmp.eq.s32.totalorder %s9, 3
    %p40 = por %p38, %p39
    %p41 = scmp.ne.s32.totalorder %s33, %s36
    %p42 = scmp.eq.s32.totalorder %s9, 0
    %p43 = por %p41, %p42
    %p44 = scmp.ne.s32.totalorder %s33, %s36
    %p45 = scmp.eq.s32.totalorder %s14, 3
    %p46 = por %p44, %p45
    %p47 = scmp.ne.s32.totalorder %s36, %s37
    %p48 = scmp.eq.s32.totalorder %s14, 0
    %p49 = por %p47, %p48
    %p50 = scmp.ne.s32.totalorder %s36, %s37
    %p51 = scmp.eq.s32.totalorder %s15, 3
    %p52 = por %p50, %p51
    %p54 = scmp.ne.s32.totalorder %s37, %s53
    %p55 = scmp.eq.s32.totalorder %s15, 0
    %p56 = por %p54, %p55
    %s58 = sadd.s32 %s57, 1
    %p61 = scmp.eq.s32.totalorder %s9, 3
    %p62 = scmp.ne.s32.totalorder %s57, %s59
    %p63 = scmp.eq.s32.totalorder %s9, 0
    %p64 = por %p62, %p63
    %p65 = scmp.ne.s32.totalorder %s57, %s59
    %p66 = scmp.eq.s32.totalorder %s14, 3
    %p67 = por %p65, %p66
    %p68 = scmp.ne.s32.totalorder %s59, %s60
    %p69 = scmp.eq.s32.totalorder %s14, 0
    %p70 = por %p68, %p69
    %p71 = scmp.ne.s32.totalorder %s59, %s60
    %p72 = scmp.eq.s32.totalorder %s15, 3
    %p73 = por %p71, %p72
    %p75 = scmp.ne.s32.totalorder %s60, %s74
    %p76 = scmp.eq.s32.totalorder %s15, 0
    %p77 = por %p75, %p76
    %s79 = sadd.s32 %s78, 1
    %p82 = scmp.eq.s32.totalorder %s9, 3
    %p83 = scmp.ne.s32.totalorder %s78, %s80
    %p84 = scmp.eq.s32.totalorder %s9, 0
    %p85 = por %p83, %p84
    %p86 = scmp.ne.s32.totalorder %s78, %s80
    %p87 = scmp.eq.s32.totalorder %s14, 3
    %p88 = por %p86, %p87
    %p89 = scmp.ne.s32.totalorder %s80, %s81
    %p90 = scmp.eq.s32.totalorder %s14, 0
    %p91 = por %p89, %p90
    %p92 = scmp.ne.s32.totalorder %s80, %s81
    %p93 = scmp.eq.s32.totalorder %s15, 3
    %p94 = por %p92, %p93
    %p96 = scmp.ne.s32.totalorder %s81, %s95
    %p97 = scmp.eq.s32.totalorder %s15, 0
    %p98 = por %p96, %p97
    %s99 = ssub.s32 %s16, %s28
    %s100 = ssub.s32 %s17, %s24
    %s101 = sor.u32 %s99, %s100
    %p102 = scmp.eq.s32.totalorder %s101, 0
    %s104 = sadd.s32 %s103, 1
    %s105 = scalar_select %p102, %s103, %s104
    %p108 = pneg %p102
    %p109 = scmp.eq.s32.totalorder %s9, 3
    %p110 = por %p108, %p109
    %p111 = scmp.ne.s32.totalorder %s103, %s106
    %p112 = scmp.eq.s32.totalorder %s9, 0
    %p113 = por %p111, %p112
    %p114 = scmp.ne.s32.totalorder %s103, %s106
    %p115 = scmp.eq.s32.totalorder %s14, 3
    %p116 = por %p114, %p115
    %p117 = scmp.ne.s32.totalorder %s106, %s107
    %p118 = scmp.eq.s32.totalorder %s14, 0
    %p119 = por %p117, %p118
    %p120 = scmp.ne.s32.totalorder %s106, %s107
    %p121 = scmp.eq.s32.totalorder %s15, 3
    %p122 = por %p120, %p121
    %p124 = scmp.ne.s32.totalorder %s107, %s123
    %p125 = scmp.eq.s32.totalorder %s15, 0
    %p126 = por %p124, %p125
    %p127 = scmp.le.s32.totalorder 1, %s9
    %p128 = scmp.lt.s32.totalorder %s9, 5
    %p129 = pnand %p127, %p128
    %p130 = pneg %p129
    // Predicated region
    $region9: #{_lambda_.37} parent=5 // pred_check
      _
    $region10: #{_lambda_.37} parent=5 // pred_check_branch
      %132 = sbr.rel (%p129) target = $region12
    $region11: #{_lambda_.37} parent=5 // pred_region
      %s133 = ssub.s32 %s9, 1
      // Predicated region
      $region13: #{_lambda_.37} parent=11 // pred_check
        %p134 = pneg %p70
      $region14: #{_lambda_.37} parent=11 // pred_check_branch
        %136 = sbr.rel (%p134) target = $region16
      $region15: #{_lambda_.37} parent=11 // pred_region
        _
      $region16: #{_lambda_.37} parent=11 // pred_fallthru
        _
      // Predicated region
      $region17: #{_lambda_.37} parent=11 // pred_check
        %p137 = pneg %p91
      $region18: #{_lambda_.37} parent=11 // pred_check_branch
        %139 = sbr.rel (%p137) target = $region20
      $region19: #{_lambda_.37} parent=11 // pred_region
        _
      $region20: #{_lambda_.37} parent=11 // pred_fallthru
        _
    $region12: #{_lambda_.37} parent=5 // pred_fallthru
      _
    %p140 = scmp.lt.s32.totalorder %s9, 4
    // Predicated region
    $region21: #{_lambda_.37} parent=5 // pred_check
      %p141 = pneg %p140
    $region22: #{_lambda_.37} parent=5 // pred_check_branch
      %143 = sbr.rel (%p141) target = $region24
    $region23: #{_lambda_.37} parent=5 // pred_region
      // Predicated region
      $region25: #{_lambda_.37} parent=23 // pred_check
        %p144 = pneg %p43
      $region26: #{_lambda_.37} parent=23 // pred_check_branch
        %146 = sbr.rel (%p144) target = $region28
      $region27: #{_lambda_.37} parent=23 // pred_region
        %p147 = scmp.lt.s32.totalorder %s16, 1
        %s148 = scalar_select %p147, %s16, 1
        %p149 = scmp.lt.s32.totalorder %s17, 1
        %s150 = scalar_select %p149, %s17, 1
        %s151 = smul.addr %s150, 5
        %s152 = smul.addr %s148, 10
        %s153 = sadd.s32 %s151, %s152
        %s154 = smul.addr %s153, 4
        %s155 = scalar_lea.vmem %s0, %s154
      $region28: #{_lambda_.37} parent=23 // pred_fallthru
        _
    $region24: #{_lambda_.37} parent=5 // pred_fallthru
      _
    %p156 = scmp.le.s32.totalorder 1, %s9
    %p157 = scmp.lt.s32.totalorder %s9, 5
    %p158 = pnand %p156, %p157
    %p159 = pneg %p158
    // Predicated region
    $region29: #{_lambda_.37} parent=5 // pred_check
      _
    $region30: #{_lambda_.37} parent=5 // pred_check_branch
      %161 = sbr.rel (%p158) target = $region32
    $region31: #{_lambda_.37} parent=5 // pred_region
      %s162 = ssub.s32 %s9, 1
      %p163 = scmp.lt.s32.totalorder %s18, 1
      %s164 = scalar_select %p163, %s18, 1
      %p165 = scmp.lt.s32.totalorder %s19, 1
      %s166 = scalar_select %p165, %s19, 1
      %s167 = smul.addr %s166, 5
      %s168 = smul.addr %s164, 10
      %s169 = sadd.s32 %s167, %s168
      %s170 = smul.addr %s169, 4
      %s171 = scalar_lea.vmem %s0, %s170
      %p172 = pneg %p49
      %p173 = pneg %p46
      %p174 = pneg %p70
      %p175 = pneg %p67
      %p176 = pneg %p91
      %p177 = pneg %p88
      %p178 = pneg %p119
      %p179 = pneg %p116
      %s180 = smul.u32 4, %s19
      %p181 = scmp.lt.s32.totalorder %s18, 1
      %s182 = scalar_select %p181, %s18, 1
      %p183 = scmp.lt.s32.totalorder %s180, 7
      %s184 = scalar_select %p183, %s180, 7
      %s185 = smul.addr %s182, 8
      %s186 = sadd.s32 %s184, %s185
      %s187 = smul.addr %s186, 4
      %s188 = scalar_lea.vmem %s3, %s187
      %p189 = scmp.lt.s32.totalorder %s18, 1
      %s190 = scalar_select %p189, %s18, 1
      %p191 = scmp.lt.s32.totalorder %s19, 1
      %s192 = scalar_select %p191, %s19, 1
      %s193 = smul.addr %s192, 5
      %s194 = smul.addr %s190, 10
      %s195 = sadd.s32 %s193, %s194
      %s196 = smul.addr %s195, 4
      %s197 = scalar_lea.vmem %s0, %s196
      %s198 = smul.u32 4, %s19
      %p199 = scmp.lt.s32.totalorder %s18, 1
      %s200 = scalar_select %p199, %s18, 1
      %p201 = scmp.lt.s32.totalorder %s198, 7
      %s202 = scalar_select %p201, %s198, 7
      %s203 = smul.addr %s200, 8
      %s204 = sadd.s32 %s202, %s203
      %s205 = smul.addr %s204, 4
      %s206 = scalar_lea.vmem %s3, %s205
      %s207 = smul.u32 4, %s19
      %v209 = vld [vmem:[%s197] sm:$0xff]
      %v210 = vld [vmem:[%s197 + $0x8] sm:$0xff]
      %v211 = vld [vmem:[%s197 + $0x10] sm:$0xf]
      %v212 = vunpack.c.l.bf16 %v209
      %v213 = vunpack.c.h.bf16 %v209
      %v214 = vunpack.c.l.bf16 %v210
      %v215 = vunpack.c.h.bf16 %v210
      %v216 = vunpack.c.l.bf16 %v211
      %vm217 = vcmp.ge.f32.partialorder %v212, 0.0
      %vm218 = vcmp.ge.f32.partialorder %v213, 0.0
      %vm219 = vcmp.ge.f32.partialorder %v214, 0.0
      %vm220 = vcmp.ge.f32.partialorder %v215, 0.0
      %vm221 = vcmp.ge.f32.partialorder %v216, 0.0
      %v222 = vmul.f32 %v212, 0.01
      %v223 = vmul.f32 %v213, 0.01
      %v224 = vmul.f32 %v214, 0.01
      %v225 = vmul.f32 %v215, 0.01
      %v226 = vmul.f32 %v216, 0.01
      %v227 = vsel %vm217, %v212, %v222
      %v228 = vsel %vm218, %v213, %v223
      %v229 = vsel %vm219, %v214, %v224
      %v230 = vsel %vm220, %v215, %v225
      %v231 = vsel %vm221, %v216, %v226
      %237 = vrot.lane.b32.xlu0 %v227, 125
      %v238 = vpop.permute.xlu0 %237
      %239 = vrot.lane.b32.xlu0 %v228, 125
      %v240 = vpop.permute.xlu0 %239
      %241 = vrot.lane.b32.xlu0 %v229, 125
      %v242 = vpop.permute.xlu0 %241
      %243 = vrot.lane.b32.xlu0 %v230, 125
      %v244 = vpop.permute.xlu0 %243
      %245 = vrot.lane.b32.xlu0 %v231, 125
      %v246 = vpop.permute.xlu0 %245
      %vm247 = vcmask 1022976
      %v248 = vsel %vm247, %v238, %v240
      %v249 = vsel %vm247, %v240, %v242
      %v250 = vsel %vm247, %v242, %v244
      %v251 = vsel %vm247, %v244, %v246
      %256 = vrot.lane.b32.xlu0 %v227, 122
      %v257 = vpop.permute.xlu0 %256
      %258 = vrot.lane.b32.xlu0 %v228, 122
      %v259 = vpop.permute.xlu0 %258
      %260 = vrot.lane.b32.xlu0 %v229, 122
      %v261 = vpop.permute.xlu0 %260
      %262 = vrot.lane.b32.xlu0 %v230, 122
      %v263 = vpop.permute.xlu0 %262
      %264 = vrot.lane.b32.xlu0 %v231, 122
      %v265 = vpop.permute.xlu0 %264
      %vm266 = vcmask 998400
      %v267 = vsel %vm266, %v257, %v259
      %v268 = vsel %vm266, %v259, %v261
      %v269 = vsel %vm266, %v261, %v263
      %v270 = vsel %vm266, %v263, %v265
      %275 = vrot.lane.b32.xlu0 %v227, 119
      %v276 = vpop.permute.xlu0 %275
      %277 = vrot.lane.b32.xlu0 %v228, 119
      %v278 = vpop.permute.xlu0 %277
      %279 = vrot.lane.b32.xlu0 %v229, 119
      %v280 = vpop.permute.xlu0 %279
      %281 = vrot.lane.b32.xlu0 %v230, 119
      %v282 = vpop.permute.xlu0 %281
      %283 = vrot.lane.b32.xlu0 %v231, 119
      %v284 = vpop.permute.xlu0 %283
      %vm285 = vcmask 973824
      %v286 = vsel %vm285, %v276, %v278
      %v287 = vsel %vm285, %v278, %v280
      %v288 = vsel %vm285, %v280, %v282
      %v289 = vsel %vm285, %v282, %v284
      %294 = vrot.lane.b32.xlu0 %v227, 116
      %v295 = vpop.permute.xlu0 %294
      %296 = vrot.lane.b32.xlu0 %v228, 116
      %v297 = vpop.permute.xlu0 %296
      %298 = vrot.lane.b32.xlu0 %v229, 116
      %v299 = vpop.permute.xlu0 %298
      %300 = vrot.lane.b32.xlu0 %v230, 116
      %v301 = vpop.permute.xlu0 %300
      %302 = vrot.lane.b32.xlu0 %v231, 116
      %v303 = vpop.permute.xlu0 %302
      %vm304 = vcmask 949248
      %v305 = vsel %vm304, %v295, %v297
      %v306 = vsel %vm304, %v297, %v299
      %v307 = vsel %vm304, %v299, %v301
      %v308 = vsel %vm304, %v301, %v303
      %v313 = vld [vmem:[%s1] sm:$0xf]
      %v314 = vpack.c.bf16 %v248, %v227
      %v315 = vpack.c.bf16 %v249, %v228
      %v316 = vpack.c.bf16 %v250, %v229
      %v317 = vpack.c.bf16 %v251, %v230
      %v318 = vpack.c.bf16 %v286, %v267
      %v319 = vpack.c.bf16 %v287, %v268
      %v320 = vpack.c.bf16 %v288, %v269
      %v321 = vpack.c.bf16 %v289, %v270
      %v322 = vpack.c.bf16 %v305, %v305
      %v323 = vpack.c.bf16 %v306, %v306
      %v324 = vpack.c.bf16 %v307, %v307
      %v325 = vpack.c.bf16 %v308, %v308
      %v326 = vld [vmem:[%s2] sm:$0xff]
      %328 = vset.pattern.permute.xlu0 0
      %329 = vperm.xlu0 %328, %v326
      %v330 = vpop.permute.xlu0 %329
      %vm332 = vcmask 326656
      %v334 = vsel %vm332, %v313, 0
      %vm336 = vcmask 1043456
      %v338 = vsel %vm336, %v322, 0
      %v341 = vsel %vm336, %v323, 0
      %v344 = vsel %vm336, %v324, 0
      %v347 = vsel %vm336, %v325, 0
      %349 = vmatprep.subr.bf16.mxu0 0
      %350 = vmatpush1.bf16.msra.mxu0 0
      %351 = vmatprep.subr.bf16.mxu0 0
      %352 = vmatpush1.bf16.msra.mxu0 0
      %353 = vmatprep.subr.bf16.mxu0 0
      %354 = vmatpush1.bf16.msra.mxu0 0
      %355 = vmatprep.subr.bf16.mxu0 0
      %356 = vmatpush1.bf16.msra.mxu0 0
      %357 = vmatprep.subr.bf16.mxu0 0
      %358 = vmatpush1.bf16.msra.mxu0 0
      %359 = vmatprep.subr.bf16.mxu0 %v341
      %360 = vmatpush1.bf16.msra.mxu0 %v338
      %361 = vmatprep.subr.bf16.mxu0 %v319
      %362 = vmatpush1.bf16.msra.mxu0 %v318
      %363 = vmatprep.subr.bf16.mxu0 %v315
      %364 = vmatpush1.bf16.msra.mxu0 %v314
      %365 = vmatprep.subr.bf16.mxu0 0
      %366 = vmatpush2.bf16.msra.mxu0 0
      %367 = vmatprep.subr.bf16.mxu0 0
      %368 = vmatpush2.bf16.msra.mxu0 0
      %369 = vmatprep.subr.bf16.mxu0 0
      %370 = vmatpush2.bf16.msra.mxu0 0
      %371 = vmatprep.subr.bf16.mxu0 0
      %372 = vmatpush2.bf16.msra.mxu0 0
      %373 = vmatprep.subr.bf16.mxu0 0
      %374 = vmatpush2.bf16.msra.mxu0 0
      %375 = vmatprep.subr.bf16.mxu0 0
      %376 = vmatpush2.bf16.msra.mxu0 0
      %377 = vmatprep.subr.bf16.mxu0 0
      %378 = vmatpush2.bf16.msra.mxu0 0
      %379 = vmatprep.subr.bf16.mxu0 0
      %380 = vmatpush2.bf16.msra.mxu0 0
      %381 = vmatprep.mubr.bf16.mxu0 0
      %382 = vmatmul.mubr.bf16.gmra.mxu0 %v334
      %v383 = vpop.f32.mrf.mxu0
      %v384 = vadd.f32 %v330, %v383
      %v385 = vpop.f32.mrf.mxu0
      %v386 = vadd.f32 %v330, %v385
      %v387 = vpop.f32.mrf.mxu0
      %v388 = vpop.f32.mrf.mxu0
      %389 = vdwg.mxu0
      %390 = vmatprep.subr.bf16.mxu0 0
      %391 = vmatpush1.bf16.msra.mxu0 0
      %392 = vmatprep.subr.bf16.mxu0 0
      %393 = vmatpush1.bf16.msra.mxu0 0
      %394 = vmatprep.subr.bf16.mxu0 0
      %395 = vmatpush1.bf16.msra.mxu0 0
      %396 = vmatprep.subr.bf16.mxu0 0
      %397 = vmatpush1.bf16.msra.mxu0 0
      %398 = vmatprep.subr.bf16.mxu0 0
      %399 = vmatpush1.bf16.msra.mxu0 0
      %400 = vmatprep.subr.bf16.mxu0 %v347
      %401 = vmatpush1.bf16.msra.mxu0 %v344
      %402 = vmatprep.subr.bf16.mxu0 %v321
      %403 = vmatpush1.bf16.msra.mxu0 %v320
      %404 = vmatprep.subr.bf16.mxu0 %v317
      %405 = vmatpush1.bf16.msra.mxu0 %v316
      %406 = vmatprep.subr.bf16.mxu0 0
      %407 = vmatpush2.bf16.msra.mxu0 0
      %408 = vmatprep.subr.bf16.mxu0 0
      %409 = vmatpush2.bf16.msra.mxu0 0
      %410 = vmatprep.subr.bf16.mxu0 0
      %411 = vmatpush2.bf16.msra.mxu0 0
      %412 = vmatprep.subr.bf16.mxu0 0
      %413 = vmatpush2.bf16.msra.mxu0 0
      %414 = vmatprep.subr.bf16.mxu0 0
      %415 = vmatpush2.bf16.msra.mxu0 0
      %416 = vmatprep.subr.bf16.mxu0 0
      %417 = vmatpush2.bf16.msra.mxu0 0
      %418 = vmatprep.subr.bf16.mxu0 0
      %419 = vmatpush2.bf16.msra.mxu0 0
      %420 = vmatprep.subr.bf16.mxu0 0
      %421 = vmatpush2.bf16.msra.mxu0 0
      %422 = vmatprep.mubr.bf16.mxu0 0
      %423 = vmatmul.mubr.bf16.gmra.mxu0 %v334
      %v424 = vpop.f32.mrf.mxu0
      %v425 = vadd.f32 %v330, %v424
      %v426 = vpop.f32.mrf.mxu0
      %v427 = vadd.f32 %v330, %v426
      %v428 = vpop.f32.mrf.mxu0
      %v429 = vpop.f32.mrf.mxu0
      %430 = vdwg.mxu0
      %v431 = vpack.c.bf16 %v384, %v384
      %v432 = vpack.c.bf16 %v386, %v386
      %v433 = vpack.c.bf16 %v425, %v425
      %v434 = vpack.c.bf16 %v427, %v427
      %v439 = vunpack.c.l.b16 %v431
      %v440 = vunpack.c.l.b16 %v432
      %v441 = vunpack.c.l.b16 %v433
      %v442 = vunpack.c.l.b16 %v434
      %v443 = vpack.c.b16 %v440, %v439
      %v444 = vpack.c.b16 %v442, %v441
      %447 = vst [vmem:[%s206] sm:$0xff] %v443
      %448 = vst [vmem:[%s206 + $0x8] sm:$0xff] %v444
      %s449 = smul.u32 4, %s19
      %p450 = scmp.lt.s32.totalorder %s18, 1
      %s451 = scalar_select %p450, %s18, 1
      %p452 = scmp.lt.s32.totalorder %s449, 7
      %s453 = scalar_select %p452, %s449, 7
      %s454 = smul.addr %s451, 8
      %s455 = sadd.s32 %s453, %s454
      %s456 = smul.addr %s455, 4
      %s457 = scalar_lea.vmem %s3, %s456
      // Predicated region
      $region33: #{_lambda_.37} parent=31 // pred_check
        %p458 = pneg %p116
      $region34: #{_lambda_.37} parent=31 // pred_check_branch
        %460 = sbr.rel (%p458) target = $region36
      $region35: #{_lambda_.37} parent=31 // pred_region
        %s461 = smul.u32 4, %s19
      $region36: #{_lambda_.37} parent=31 // pred_fallthru
        _
    $region32: #{_lambda_.37} parent=5 // pred_fallthru
      _
    %p462 = scmp.le.s32.totalorder 2, %s9
    // Predicated region
    $region37: #{_lambda_.37} parent=5 // pred_check
      %p463 = pneg %p462
    $region38: #{_lambda_.37} parent=5 // pred_check_branch
      %465 = sbr.rel (%p463) target = $region40
    $region39: #{_lambda_.37} parent=5 // pred_region
      %s466 = ssub.s32 %s9, 2
      // Predicated region
      $region41: #{_lambda_.37} parent=39 // pred_check
        %p467 = pneg %p122
      $region42: #{_lambda_.37} parent=39 // pred_check_branch
        %469 = sbr.rel (%p467) target = $region44
      $region43: #{_lambda_.37} parent=39 // pred_region
        %s470 = smul.u32 4, %s21
        %p471 = scmp.lt.s32.totalorder %s20, 1
        %s472 = scalar_select %p471, %s20, 1
        %p473 = scmp.lt.s32.totalorder %s470, 7
        %s474 = scalar_select %p473, %s470, 7
        %s475 = smul.addr %s472, 8
        %s476 = sadd.s32 %s474, %s475
        %s477 = smul.addr %s476, 4
        %s478 = scalar_lea.vmem %s3, %s477
      $region44: #{_lambda_.37} parent=39 // pred_fallthru
        _
    $region40: #{_lambda_.37} parent=5 // pred_fallthru
      _
  $region6: #{_lambda_.37} parent=0 // loop_footer
    %s13 = sadd.s32 1, %s9
  $region7: #{_lambda_.37} parent=0 // loop_footer_branch
    %8 = sbr.rel target = $region3
  $region8: #{_lambda_.37} parent=0 // loop_exit
    _

// kernel: _lambda_.31
$region0: #{_lambda_.31}
  #allocation0 [shape = 'u32[]', space=smem, size = 0x4, offset = 0x4, fixed_abs, tag = 'smem constant byte address 0x4 - core index']
  #allocation1 [shape = 'u32[144,128]{1,0:T(1,128)}', space=vmem, size = 0x12000, scoped, tag = 'internal scratch']
  %s0 = inlined_call_operand.vmem [shape: bf16[2,2,8,514], index: 0, kind: input, shape index: {}]
  %s1 = inlined_call_operand.vmem [shape: bf16[8,24], index: 1, kind: input, shape index: {}]
  %s2 = inlined_call_operand.vmem [shape: f32[8,1], index: 2, kind: input, shape index: {}]
  %s3 = inlined_call_operand.vmem [shape: bf16[2,8,1024], index: 3, kind: output, shape index: {}]
  %s4 = sld [smem:[#allocation0]]
  $region45: #{_lambda_.31} parent=0
    _
  %s6 = ssub.s32 1, %s4
  %s7 = scalar_select 0, %s6, %s4
  loop: start=0, step=1, limit=6
  $region2: #{_lambda_.31} parent=0 // loop_pre_header
    _
  $region3: #{_lambda_.31} parent=0 // loop_header
    %s9 = sphi 0, %s13
    %p10 = scmp.ge.s32.totalorder %s9, 6
    %s16 = sphi 0, %s28
    %s17 = sphi 0, %s24
    %s18 = sphi 0, %s16
    %s19 = sphi 0, %s17
    %s20 = sphi 0, %s18
    %s21 = sphi 0, %s19
    %s33 = sphi 0, %s35
    %s36 = sphi 0, %s33
    %s37 = sphi 0, %s36
    %s53 = sphi 0, %s37
    %s57 = sphi 0, %s57
    %s59 = sphi 0, %s57
    %s60 = sphi 0, %s59
    %s74 = sphi 0, %s60
    %s78 = sphi 0, %s78
    %s80 = sphi 0, %s78
    %s81 = sphi 0, %s80
    %s95 = sphi 0, %s81
    %s103 = sphi 0, %s105
    %s106 = sphi 0, %s103
    %s107 = sphi 0, %s106
    %s123 = sphi 0, %s107
  $region4: #{_lambda_.31} parent=0 // loop_header_branch
    %12 = sbr.rel (%p10) target = $region8
  $region5: #{_lambda_.31} parent=0 // loop_body
    %s14 = ssub.s32 %s9, 1
    %s15 = ssub.s32 %s9, 2
    %s22 = sadd.s32 1, %s17
    %p23 = scmp.ge.s32.totalorder %s22, 2
    %s24 = scalar_select %p23, 0, %s22
    %s25 = sadd.s32 1, %s16
    %s26 = scalar_select %p23, %s25, %s16
    %p27 = scmp.ge.s32.totalorder %s26, 2
    %s28 = scalar_select %p27, 0, %s26
    %s29 = ssub.s32 %s16, %s28
    %s30 = ssub.s32 %s17, %s24
    %s31 = sor.u32 %s29, %s30
    %p32 = scmp.eq.s32.totalorder %s31, 0
    %s34 = sadd.s32 %s33, 1
    %s35 = scalar_select %p32, %s33, %s34
    %p38 = pneg %p32
    %p39 = scmp.eq.s32.totalorder %s9, 3
    %p40 = por %p38, %p39
    %p41 = scmp.ne.s32.totalorder %s33, %s36
    %p42 = scmp.eq.s32.totalorder %s9, 0
    %p43 = por %p41, %p42
    %p44 = scmp.ne.s32.totalorder %s33, %s36
    %p45 = scmp.eq.s32.totalorder %s14, 3
    %p46 = por %p44, %p45
    %p47 = scmp.ne.s32.totalorder %s36, %s37
    %p48 = scmp.eq.s32.totalorder %s14, 0
    %p49 = por %p47, %p48
    %p50 = scmp.ne.s32.totalorder %s36, %s37
    %p51 = scmp.eq.s32.totalorder %s15, 3
    %p52 = por %p50, %p51
    %p54 = scmp.ne.s32.totalorder %s37, %s53
    %p55 = scmp.eq.s32.totalorder %s15, 0
    %p56 = por %p54, %p55
    %s58 = sadd.s32 %s57, 1
    %p61 = scmp.eq.s32.totalorder %s9, 3
    %p62 = scmp.ne.s32.totalorder %s57, %s59
    %p63 = scmp.eq.s32.totalorder %s9, 0
    %p64 = por %p62, %p63
    %p65 = scmp.ne.s32.totalorder %s57, %s59
    %p66 = scmp.eq.s32.totalorder %s14, 3
    %p67 = por %p65, %p66
    %p68 = scmp.ne.s32.totalorder %s59, %s60
    %p69 = scmp.eq.s32.totalorder %s14, 0
    %p70 = por %p68, %p69
    %p71 = scmp.ne.s32.totalorder %s59, %s60
    %p72 = scmp.eq.s32.totalorder %s15, 3
    %p73 = por %p71, %p72
    %p75 = scmp.ne.s32.totalorder %s60, %s74
    %p76 = scmp.eq.s32.totalorder %s15, 0
    %p77 = por %p75, %p76
    %s79 = sadd.s32 %s78, 1
    %p82 = scmp.eq.s32.totalorder %s9, 3
    %p83 = scmp.ne.s32.totalorder %s78, %s80
    %p84 = scmp.eq.s32.totalorder %s9, 0
    %p85 = por %p83, %p84
    %p86 = scmp.ne.s32.totalorder %s78, %s80
    %p87 = scmp.eq.s32.totalorder %s14, 3
    %p88 = por %p86, %p87
    %p89 = scmp.ne.s32.totalorder %s80, %s81
    %p90 = scmp.eq.s32.totalorder %s14, 0
    %p91 = por %p89, %p90
    %p92 = scmp.ne.s32.totalorder %s80, %s81
    %p93 = scmp.eq.s32.totalorder %s15, 3
    %p94 = por %p92, %p93
    %p96 = scmp.ne.s32.totalorder %s81, %s95
    %p97 = scmp.eq.s32.totalorder %s15, 0
    %p98 = por %p96, %p97
    %s99 = ssub.s32 %s16, %s28
    %s100 = ssub.s32 %s17, %s24
    %s101 = sor.u32 %s99, %s100
    %p102 = scmp.eq.s32.totalorder %s101, 0
    %s104 = sadd.s32 %s103, 1
    %s105 = scalar_select %p102, %s103, %s104
    %p108 = pneg %p102
    %p109 = scmp.eq.s32.totalorder %s9, 3
    %p110 = por %p108, %p109
    %p111 = scmp.ne.s32.totalorder %s103, %s106
    %p112 = scmp.eq.s32.totalorder %s9, 0
    %p113 = por %p111, %p112
    %p114 = scmp.ne.s32.totalorder %s103, %s106
    %p115 = scmp.eq.s32.totalorder %s14, 3
    %p116 = por %p114, %p115
    %p117 = scmp.ne.s32.totalorder %s106, %s107
    %p118 = scmp.eq.s32.totalorder %s14, 0
    %p119 = por %p117, %p118
    %p120 = scmp.ne.s32.totalorder %s106, %s107
    %p121 = scmp.eq.s32.totalorder %s15, 3
    %p122 = por %p120, %p121
    %p124 = scmp.ne.s32.totalorder %s107, %s123
    %p125 = scmp.eq.s32.totalorder %s15, 0
    %p126 = por %p124, %p125
    %p127 = scmp.le.s32.totalorder 1, %s9
    %p128 = scmp.lt.s32.totalorder %s9, 5
    %p129 = pnand %p127, %p128
    %p130 = pneg %p129
    // Predicated region
    $region9: #{_lambda_.31} parent=5 // pred_check
      _
    $region10: #{_lambda_.31} parent=5 // pred_check_branch
      %132 = sbr.rel (%p129) target = $region12
    $region11: #{_lambda_.31} parent=5 // pred_region
      %s133 = ssub.s32 %s9, 1
      // Predicated region
      $region13: #{_lambda_.31} parent=11 // pred_check
        %p134 = pneg %p70
      $region14: #{_lambda_.31} parent=11 // pred_check_branch
        %136 = sbr.rel (%p134) target = $region16
      $region15: #{_lambda_.31} parent=11 // pred_region
        _
      $region16: #{_lambda_.31} parent=11 // pred_fallthru
        _
      // Predicated region
      $region17: #{_lambda_.31} parent=11 // pred_check
        %p137 = pneg %p91
      $region18: #{_lambda_.31} parent=11 // pred_check_branch
        %139 = sbr.rel (%p137) target = $region20
      $region19: #{_lambda_.31} parent=11 // pred_region
        _
      $region20: #{_lambda_.31} parent=11 // pred_fallthru
        _
    $region12: #{_lambda_.31} parent=5 // pred_fallthru
      _
    %p140 = scmp.lt.s32.totalorder %s9, 4
    // Predicated region
    $region21: #{_lambda_.31} parent=5 // pred_check
      %p141 = pneg %p140
    $region22: #{_lambda_.31} parent=5 // pred_check_branch
      %143 = sbr.rel (%p141) target = $region24
    $region23: #{_lambda_.31} parent=5 // pred_region
      // Predicated region
      $region25: #{_lambda_.31} parent=23 // pred_check
        %p144 = pneg %p43
      $region26: #{_lambda_.31} parent=23 // pred_check_branch
        %146 = sbr.rel (%p144) target = $region28
      $region27: #{_lambda_.31} parent=23 // pred_region
        %p147 = scmp.lt.s32.totalorder %s16, 1
        %s148 = scalar_select %p147, %s16, 1
        %p149 = scmp.lt.s32.totalorder %s17, 1
        %s150 = scalar_select %p149, %s17, 1
        %s151 = smul.addr %s150, 5
        %s152 = smul.addr %s148, 10
        %s153 = sadd.s32 %s151, %s152
        %s154 = smul.addr %s153, 4
        %s155 = scalar_lea.vmem %s0, %s154
      $region28: #{_lambda_.31} parent=23 // pred_fallthru
        _
    $region24: #{_lambda_.31} parent=5 // pred_fallthru
      _
    %p156 = scmp.le.s32.totalorder 1, %s9
    %p157 = scmp.lt.s32.totalorder %s9, 5
    %p158 = pnand %p156, %p157
    %p159 = pneg %p158
    // Predicated region
    $region29: #{_lambda_.31} parent=5 // pred_check
      _
    $region30: #{_lambda_.31} parent=5 // pred_check_branch
      %161 = sbr.rel (%p158) target = $region32
    $region31: #{_lambda_.31} parent=5 // pred_region
      %s162 = ssub.s32 %s9, 1
      %p163 = scmp.lt.s32.totalorder %s18, 1
      %s164 = scalar_select %p163, %s18, 1
      %p165 = scmp.lt.s32.totalorder %s19, 1
      %s166 = scalar_select %p165, %s19, 1
      %s167 = smul.addr %s166, 5
      %s168 = smul.addr %s164, 10
      %s169 = sadd.s32 %s167, %s168
      %s170 = smul.addr %s169, 4
      %s171 = scalar_lea.vmem %s0, %s170
      %p172 = pneg %p49
      %p173 = pneg %p46
      %p174 = pneg %p70
      %p175 = pneg %p67
      %p176 = pneg %p91
      %p177 = pneg %p88
      %p178 = pneg %p119
      %p179 = pneg %p116
      %s180 = smul.u32 4, %s19
      %p181 = scmp.lt.s32.totalorder %s18, 1
      %s182 = scalar_select %p181, %s18, 1
      %p183 = scmp.lt.s32.totalorder %s180, 7
      %s184 = scalar_select %p183, %s180, 7
      %s185 = smul.addr %s182, 8
      %s186 = sadd.s32 %s184, %s185
      %s187 = smul.addr %s186, 4
      %s188 = scalar_lea.vmem %s3, %s187
      %p189 = scmp.lt.s32.totalorder %s18, 1
      %s190 = scalar_select %p189, %s18, 1
      %p191 = scmp.lt.s32.totalorder %s19, 1
      %s192 = scalar_select %p191, %s19, 1
      %s193 = smul.addr %s192, 5
      %s194 = smul.addr %s190, 10
      %s195 = sadd.s32 %s193, %s194
      %s196 = smul.addr %s195, 4
      %s197 = scalar_lea.vmem %s0, %s196
      %s198 = smul.u32 4, %s19
      %p199 = scmp.lt.s32.totalorder %s18, 1
      %s200 = scalar_select %p199, %s18, 1
      %p201 = scmp.lt.s32.totalorder %s198, 7
      %s202 = scalar_select %p201, %s198, 7
      %s203 = smul.addr %s200, 8
      %s204 = sadd.s32 %s202, %s203
      %s205 = smul.addr %s204, 4
      %s206 = scalar_lea.vmem %s3, %s205
      %s207 = smul.u32 4, %s19
      %v209 = vld [vmem:[%s197] sm:$0xff]
      %v210 = vld [vmem:[%s197 + $0x8] sm:$0xff]
      %v211 = vld [vmem:[%s197 + $0x10] sm:$0xf]
      %v212 = vunpack.c.l.bf16 %v209
      %v213 = vunpack.c.h.bf16 %v209
      %v214 = vunpack.c.l.bf16 %v210
      %v215 = vunpack.c.h.bf16 %v210
      %v216 = vunpack.c.l.bf16 %v211
      %vm217 = vcmp.ge.f32.partialorder %v212, 0.0
      %vm218 = vcmp.ge.f32.partialorder %v213, 0.0
      %vm219 = vcmp.ge.f32.partialorder %v214, 0.0
      %vm220 = vcmp.ge.f32.partialorder %v215, 0.0
      %vm221 = vcmp.ge.f32.partialorder %v216, 0.0
      %v222 = vmul.f32 %v212, 0.01
      %v223 = vmul.f32 %v213, 0.01
      %v224 = vmul.f32 %v214, 0.01
      %v225 = vmul.f32 %v215, 0.01
      %v226 = vmul.f32 %v216, 0.01
      %v227 = vsel %vm217, %v212, %v222
      %v228 = vsel %vm218, %v213, %v223
      %v229 = vsel %vm219, %v214, %v224
      %v230 = vsel %vm220, %v215, %v225
      %v231 = vsel %vm221, %v216, %v226
      %237 = vrot.lane.b32.xlu0 %v227, 127
      %v238 = vpop.permute.xlu0 %237
      %239 = vrot.lane.b32.xlu0 %v228, 127
      %v240 = vpop.permute.xlu0 %239
      %241 = vrot.lane.b32.xlu0 %v229, 127
      %v242 = vpop.permute.xlu0 %241
      %243 = vrot.lane.b32.xlu0 %v230, 127
      %v244 = vpop.permute.xlu0 %243
      %245 = vrot.lane.b32.xlu0 %v231, 127
      %v246 = vpop.permute.xlu0 %245
      %vm247 = vcmask 1039360
      %v248 = vsel %vm247, %v238, %v240
      %v249 = vsel %vm247, %v240, %v242
      %v250 = vsel %vm247, %v242, %v244
      %v251 = vsel %vm247, %v244, %v246
      %256 = vrot.lane.b32.xlu0 %v227, 126
      %v257 = vpop.permute.xlu0 %256
      %258 = vrot.lane.b32.xlu0 %v228, 126
      %v259 = vpop.permute.xlu0 %258
      %260 = vrot.lane.b32.xlu0 %v229, 126
      %v261 = vpop.permute.xlu0 %260
      %262 = vrot.lane.b32.xlu0 %v230, 126
      %v263 = vpop.permute.xlu0 %262
      %264 = vrot.lane.b32.xlu0 %v231, 126
      %v265 = vpop.permute.xlu0 %264
      %vm266 = vcmask 1031168
      %v267 = vsel %vm266, %v257, %v259
      %v268 = vsel %vm266, %v259, %v261
      %v269 = vsel %vm266, %v261, %v263
      %v270 = vsel %vm266, %v263, %v265
      %v275 = vld [vmem:[%s1] sm:$0xf]
      %v276 = vpack.c.bf16 %v248, %v227
      %v277 = vpack.c.bf16 %v249, %v228
      %v278 = vpack.c.bf16 %v250, %v229
      %v279 = vpack.c.bf16 %v251, %v230
      %v280 = vpack.c.bf16 %v267, %v267
      %v281 = vpack.c.bf16 %v268, %v268
      %v282 = vpack.c.bf16 %v269, %v269
      %v283 = vpack.c.bf16 %v270, %v270
      %v284 = vld [vmem:[%s2] sm:$0xff]
      %286 = vset.pattern.permute.xlu0 0
      %287 = vperm.xlu0 %286, %v284
      %v288 = vpop.permute.xlu0 %287
      %vm290 = vcmask 195584
      %v292 = vsel %vm290, %v275, 0
      %vm294 = vcmask 1043456
      %v296 = vsel %vm294, %v280, 0
      %v299 = vsel %vm294, %v281, 0
      %v302 = vsel %vm294, %v282, 0
      %v305 = vsel %vm294, %v283, 0
      %307 = vmatprep.subr.bf16.mxu0 0
      %308 = vmatpush1.bf16.msra.mxu0 0
      %309 = vmatprep.subr.bf16.mxu0 0
      %310 = vmatpush1.bf16.msra.mxu0 0
      %311 = vmatprep.subr.bf16.mxu0 0
      %312 = vmatpush1.bf16.msra.mxu0 0
      %313 = vmatprep.subr.bf16.mxu0 0
      %314 = vmatpush1.bf16.msra.mxu0 0
      %315 = vmatprep.subr.bf16.mxu0 0
      %316 = vmatpush1.bf16.msra.mxu0 0
      %317 = vmatprep.subr.bf16.mxu0 0
      %318 = vmatpush1.bf16.msra.mxu0 0
      %319 = vmatprep.subr.bf16.mxu0 %v299
      %320 = vmatpush1.bf16.msra.mxu0 %v296
      %321 = vmatprep.subr.bf16.mxu0 %v277
      %322 = vmatpush1.bf16.msra.mxu0 %v276
      %323 = vmatprep.subr.bf16.mxu0 0
      %324 = vmatpush2.bf16.msra.mxu0 0
      %325 = vmatprep.subr.bf16.mxu0 0
      %326 = vmatpush2.bf16.msra.mxu0 0
      %327 = vmatprep.subr.bf16.mxu0 0
      %328 = vmatpush2.bf16.msra.mxu0 0
      %329 = vmatprep.subr.bf16.mxu0 0
      %330 = vmatpush2.bf16.msra.mxu0 0
      %331 = vmatprep.subr.bf16.mxu0 0
      %332 = vmatpush2.bf16.msra.mxu0 0
      %333 = vmatprep.subr.bf16.mxu0 0
      %334 = vmatpush2.bf16.msra.mxu0 0
      %335 = vmatprep.subr.bf16.mxu0 0
      %336 = vmatpush2.bf16.msra.mxu0 0
      %337 = vmatprep.subr.bf16.mxu0 0
      %338 = vmatpush2.bf16.msra.mxu0 0
      %339 = vmatprep.mubr.bf16.mxu0 0
      %340 = vmatmul.mubr.bf16.gmra.mxu0 %v292
      %v341 = vpop.f32.mrf.mxu0
      %v342 = vadd.f32 %v288, %v341
      %v343 = vpop.f32.mrf.mxu0
      %v344 = vadd.f32 %v288, %v343
      %v345 = vpop.f32.mrf.mxu0
      %v346 = vpop.f32.mrf.mxu0
      %347 = vdwg.mxu0
      %348 = vmatprep.subr.bf16.mxu0 0
      %349 = vmatpush1.bf16.msra.mxu0 0
      %350 = vmatprep.subr.bf16.mxu0 0
      %351 = vmatpush1.bf16.msra.mxu0 0
      %352 = vmatprep.subr.bf16.mxu0 0
      %353 = vmatpush1.bf16.msra.mxu0 0
      %354 = vmatprep.subr.bf16.mxu0 0
      %355 = vmatpush1.bf16.msra.mxu0 0
      %356 = vmatprep.subr.bf16.mxu0 0
      %357 = vmatpush1.bf16.msra.mxu0 0
      %358 = vmatprep.subr.bf16.mxu0 0
      %359 = vmatpush1.bf16.msra.mxu0 0
      %360 = vmatprep.subr.bf16.mxu0 %v305
      %361 = vmatpush1.bf16.msra.mxu0 %v302
      %362 = vmatprep.subr.bf16.mxu0 %v279
      %363 = vmatpush1.bf16.msra.mxu0 %v278
      %364 = vmatprep.subr.bf16.mxu0 0
      %365 = vmatpush2.bf16.msra.mxu0 0
      %366 = vmatprep.subr.bf16.mxu0 0
      %367 = vmatpush2.bf16.msra.mxu0 0
      %368 = vmatprep.subr.bf16.mxu0 0
      %369 = vmatpush2.bf16.msra.mxu0 0
      %370 = vmatprep.subr.bf16.mxu0 0
      %371 = vmatpush2.bf16.msra.mxu0 0
      %372 = vmatprep.subr.bf16.mxu0 0
      %373 = vmatpush2.bf16.msra.mxu0 0
      %374 = vmatprep.subr.bf16.mxu0 0
      %375 = vmatpush2.bf16.msra.mxu0 0
      %376 = vmatprep.subr.bf16.mxu0 0
      %377 = vmatpush2.bf16.msra.mxu0 0
      %378 = vmatprep.subr.bf16.mxu0 0
      %379 = vmatpush2.bf16.msra.mxu0 0
      %380 = vmatprep.mubr.bf16.mxu0 0
      %381 = vmatmul.mubr.bf16.gmra.mxu0 %v292
      %v382 = vpop.f32.mrf.mxu0
      %v383 = vadd.f32 %v288, %v382
      %v384 = vpop.f32.mrf.mxu0
      %v385 = vadd.f32 %v288, %v384
      %v386 = vpop.f32.mrf.mxu0
      %v387 = vpop.f32.mrf.mxu0
      %388 = vdwg.mxu0
      %v389 = vpack.c.bf16 %v342, %v342
      %v390 = vpack.c.bf16 %v344, %v344
      %v391 = vpack.c.bf16 %v383, %v383
      %v392 = vpack.c.bf16 %v385, %v385
      %v397 = vunpack.c.l.b16 %v389
      %v398 = vunpack.c.l.b16 %v390
      %v399 = vunpack.c.l.b16 %v391
      %v400 = vunpack.c.l.b16 %v392
      %v401 = vpack.c.b16 %v398, %v397
      %v402 = vpack.c.b16 %v400, %v399
      %405 = vst [vmem:[%s206] sm:$0xff] %v401
      %406 = vst [vmem:[%s206 + $0x8] sm:$0xff] %v402
      %s407 = smul.u32 4, %s19
      %p408 = scmp.lt.s32.totalorder %s18, 1
      %s409 = scalar_select %p408, %s18, 1
      %p410 = scmp.lt.s32.totalorder %s407, 7
      %s411 = scalar_select %p410, %s407, 7
      %s412 = smul.addr %s409, 8
      %s413 = sadd.s32 %s411, %s412
      %s414 = smul.addr %s413, 4
      %s415 = scalar_lea.vmem %s3, %s414
      // Predicated region
      $region33: #{_lambda_.31} parent=31 // pred_check
        %p416 = pneg %p116
      $region34: #{_lambda_.31} parent=31 // pred_check_branch
        %418 = sbr.rel (%p416) target = $region36
      $region35: #{_lambda_.31} parent=31 // pred_region
        %s419 = smul.u32 4, %s19
      $region36: #{_lambda_.31} parent=31 // pred_fallthru
        _
    $region32: #{_lambda_.31} parent=5 // pred_fallthru
      _
    %p420 = scmp.le.s32.totalorder 2, %s9
    // Predicated region
    $region37: #{_lambda_.31} parent=5 // pred_check
      %p421 = pneg %p420
    $region38: #{_lambda_.31} parent=5 // pred_check_branch
      %423 = sbr.rel (%p421) target = $region40
    $region39: #{_lambda_.31} parent=5 // pred_region
      %s424 = ssub.s32 %s9, 2
      // Predicated region
      $region41: #{_lambda_.31} parent=39 // pred_check
        %p425 = pneg %p122
      $region42: #{_lambda_.31} parent=39 // pred_check_branch
        %427 = sbr.rel (%p425) target = $region44
      $region43: #{_lambda_.31} parent=39 // pred_region
        %s428 = smul.u32 4, %s21
        %p429 = scmp.lt.s32.totalorder %s20, 1
        %s430 = scalar_select %p429, %s20, 1
        %p431 = scmp.lt.s32.totalorder %s428, 7
        %s432 = scalar_select %p431, %s428, 7
        %s433 = smul.addr %s430, 8
        %s434 = sadd.s32 %s432, %s433
        %s435 = smul.addr %s434, 4
        %s436 = scalar_lea.vmem %s3, %s435
      $region44: #{_lambda_.31} parent=39 // pred_fallthru
        _
    $region40: #{_lambda_.31} parent=5 // pred_fallthru
      _
  $region6: #{_lambda_.31} parent=0 // loop_footer
    %s13 = sadd.s32 1, %s9
  $region7: #{_lambda_.31} parent=0 // loop_footer_branch
    %8 = sbr.rel target = $region3
  $region8: #{_lambda_.31} parent=0 // loop_exit
    _

// kernel: _lambda_.32
$region0: #{_lambda_.32}
  #allocation0 [shape = 'u32[]', space=smem, size = 0x4, offset = 0x4, fixed_abs, tag = 'smem constant byte address 0x4 - core index']
  #allocation1 [shape = 'u32[144,128]{1,0:T(1,128)}', space=vmem, size = 0x12000, scoped, tag = 'internal scratch']
  %s0 = inlined_call_operand.vmem [shape: bf16[2,2,8,514], index: 0, kind: input, shape index: {}]
  %s1 = inlined_call_operand.vmem [shape: bf16[8,24], index: 1, kind: input, shape index: {}]
  %s2 = inlined_call_operand.vmem [shape: f32[8,1], index: 2, kind: input, shape index: {}]
  %s3 = inlined_call_operand.vmem [shape: bf16[2,8,1024], index: 3, kind: input, shape index: {}]
  %s4 = inlined_call_operand.vmem [shape: bf16[2,8,1024], index: 4, kind: output, shape index: {}]
  %s5 = sld [smem:[#allocation0]]
  $region49: #{_lambda_.32} parent=0
    _
  %s7 = ssub.s32 1, %s5
  %s8 = scalar_select 0, %s7, %s5
  loop: start=0, step=1, limit=6
  $region2: #{_lambda_.32} parent=0 // loop_pre_header
    _
  $region3: #{_lambda_.32} parent=0 // loop_header
    %s10 = sphi 0, %s14
    %p11 = scmp.ge.s32.totalorder %s10, 6
    %s17 = sphi 0, %s29
    %s18 = sphi 0, %s25
    %s19 = sphi 0, %s17
    %s20 = sphi 0, %s18
    %s21 = sphi 0, %s19
    %s22 = sphi 0, %s20
    %s34 = sphi 0, %s36
    %s37 = sphi 0, %s34
    %s38 = sphi 0, %s37
    %s54 = sphi 0, %s38
    %s58 = sphi 0, %s58
    %s60 = sphi 0, %s58
    %s61 = sphi 0, %s60
    %s75 = sphi 0, %s61
    %s79 = sphi 0, %s79
    %s81 = sphi 0, %s79
    %s82 = sphi 0, %s81
    %s96 = sphi 0, %s82
    %s104 = sphi 0, %s106
    %s107 = sphi 0, %s104
    %s108 = sphi 0, %s107
    %s124 = sphi 0, %s108
    %s132 = sphi 0, %s134
    %s135 = sphi 0, %s132
    %s136 = sphi 0, %s135
    %s152 = sphi 0, %s136
  $region4: #{_lambda_.32} parent=0 // loop_header_branch
    %13 = sbr.rel (%p11) target = $region8
  $region5: #{_lambda_.32} parent=0 // loop_body
    %s15 = ssub.s32 %s10, 1
    %s16 = ssub.s32 %s10, 2
    %s23 = sadd.s32 1, %s18
    %p24 = scmp.ge.s32.totalorder %s23, 2
    %s25 = scalar_select %p24, 0, %s23
    %s26 = sadd.s32 1, %s17
    %s27 = scalar_select %p24, %s26, %s17
    %p28 = scmp.ge.s32.totalorder %s27, 2
    %s29 = scalar_select %p28, 0, %s27
    %s30 = ssub.s32 %s17, %s29
    %s31 = ssub.s32 %s18, %s25
    %s32 = sor.u32 %s30, %s31
    %p33 = scmp.eq.s32.totalorder %s32, 0
    %s35 = sadd.s32 %s34, 1
    %s36 = scalar_select %p33, %s34, %s35
    %p39 = pneg %p33
    %p40 = scmp.eq.s32.totalorder %s10, 3
    %p41 = por %p39, %p40
    %p42 = scmp.ne.s32.totalorder %s34, %s37
    %p43 = scmp.eq.s32.totalorder %s10, 0
    %p44 = por %p42, %p43
    %p45 = scmp.ne.s32.totalorder %s34, %s37
    %p46 = scmp.eq.s32.totalorder %s15, 3
    %p47 = por %p45, %p46
    %p48 = scmp.ne.s32.totalorder %s37, %s38
    %p49 = scmp.eq.s32.totalorder %s15, 0
    %p50 = por %p48, %p49
    %p51 = scmp.ne.s32.totalorder %s37, %s38
    %p52 = scmp.eq.s32.totalorder %s16, 3
    %p53 = por %p51, %p52
    %p55 = scmp.ne.s32.totalorder %s38, %s54
    %p56 = scmp.eq.s32.totalorder %s16, 0
    %p57 = por %p55, %p56
    %s59 = sadd.s32 %s58, 1
    %p62 = scmp.eq.s32.totalorder %s10, 3
    %p63 = scmp.ne.s32.totalorder %s58, %s60
    %p64 = scmp.eq.s32.totalorder %s10, 0
    %p65 = por %p63, %p64
    %p66 = scmp.ne.s32.totalorder %s58, %s60
    %p67 = scmp.eq.s32.totalorder %s15, 3
    %p68 = por %p66, %p67
    %p69 = scmp.ne.s32.totalorder %s60, %s61
    %p70 = scmp.eq.s32.totalorder %s15, 0
    %p71 = por %p69, %p70
    %p72 = scmp.ne.s32.totalorder %s60, %s61
    %p73 = scmp.eq.s32.totalorder %s16, 3
    %p74 = por %p72, %p73
    %p76 = scmp.ne.s32.totalorder %s61, %s75
    %p77 = scmp.eq.s32.totalorder %s16, 0
    %p78 = por %p76, %p77
    %s80 = sadd.s32 %s79, 1
    %p83 = scmp.eq.s32.totalorder %s10, 3
    %p84 = scmp.ne.s32.totalorder %s79, %s81
    %p85 = scmp.eq.s32.totalorder %s10, 0
    %p86 = por %p84, %p85
    %p87 = scmp.ne.s32.totalorder %s79, %s81
    %p88 = scmp.eq.s32.totalorder %s15, 3
    %p89 = por %p87, %p88
    %p90 = scmp.ne.s32.totalorder %s81, %s82
    %p91 = scmp.eq.s32.totalorder %s15, 0
    %p92 = por %p90, %p91
    %p93 = scmp.ne.s32.totalorder %s81, %s82
    %p94 = scmp.eq.s32.totalorder %s16, 3
    %p95 = por %p93, %p94
    %p97 = scmp.ne.s32.totalorder %s82, %s96
    %p98 = scmp.eq.s32.totalorder %s16, 0
    %p99 = por %p97, %p98
    %s100 = ssub.s32 %s17, %s29
    %s101 = ssub.s32 %s18, %s25
    %s102 = sor.u32 %s100, %s101
    %p103 = scmp.eq.s32.totalorder %s102, 0
    %s105 = sadd.s32 %s104, 1
    %s106 = scalar_select %p103, %s104, %s105
    %p109 = pneg %p103
    %p110 = scmp.eq.s32.totalorder %s10, 3
    %p111 = por %p109, %p110
    %p112 = scmp.ne.s32.totalorder %s104, %s107
    %p113 = scmp.eq.s32.totalorder %s10, 0
    %p114 = por %p112, %p113
    %p115 = scmp.ne.s32.totalorder %s104, %s107
    %p116 = scmp.eq.s32.totalorder %s15, 3
    %p117 = por %p115, %p116
    %p118 = scmp.ne.s32.totalorder %s107, %s108
    %p119 = scmp.eq.s32.totalorder %s15, 0
    %p120 = por %p118, %p119
    %p121 = scmp.ne.s32.totalorder %s107, %s108
    %p122 = scmp.eq.s32.totalorder %s16, 3
    %p123 = por %p121, %p122
    %p125 = scmp.ne.s32.totalorder %s108, %s124
    %p126 = scmp.eq.s32.totalorder %s16, 0
    %p127 = por %p125, %p126
    %s128 = ssub.s32 %s17, %s29
    %s129 = ssub.s32 %s18, %s25
    %s130 = sor.u32 %s128, %s129
    %p131 = scmp.eq.s32.totalorder %s130, 0
    %s133 = sadd.s32 %s132, 1
    %s134 = scalar_select %p131, %s132, %s133
    %p137 = pneg %p131
    %p138 = scmp.eq.s32.totalorder %s10, 3
    %p139 = por %p137, %p138
    %p140 = scmp.ne.s32.totalorder %s132, %s135
    %p141 = scmp.eq.s32.totalorder %s10, 0
    %p142 = por %p140, %p141
    %p143 = scmp.ne.s32.totalorder %s132, %s135
    %p144 = scmp.eq.s32.totalorder %s15, 3
    %p145 = por %p143, %p144
    %p146 = scmp.ne.s32.totalorder %s135, %s136
    %p147 = scmp.eq.s32.totalorder %s15, 0
    %p148 = por %p146, %p147
    %p149 = scmp.ne.s32.totalorder %s135, %s136
    %p150 = scmp.eq.s32.totalorder %s16, 3
    %p151 = por %p149, %p150
    %p153 = scmp.ne.s32.totalorder %s136, %s152
    %p154 = scmp.eq.s32.totalorder %s16, 0
    %p155 = por %p153, %p154
    %p156 = scmp.le.s32.totalorder 1, %s10
    %p157 = scmp.lt.s32.totalorder %s10, 5
    %p158 = pnand %p156, %p157
    %p159 = pneg %p158
    // Predicated region
    $region9: #{_lambda_.32} parent=5 // pred_check
      _
    $region10: #{_lambda_.32} parent=5 // pred_check_branch
      %161 = sbr.rel (%p158) target = $region12
    $region11: #{_lambda_.32} parent=5 // pred_region
      %s162 = ssub.s32 %s10, 1
      // Predicated region
      $region13: #{_lambda_.32} parent=11 // pred_check
        %p163 = pneg %p71
      $region14: #{_lambda_.32} parent=11 // pred_check_branch
        %165 = sbr.rel (%p163) target = $region16
      $region15: #{_lambda_.32} parent=11 // pred_region
        _
      $region16: #{_lambda_.32} parent=11 // pred_fallthru
        _
      // Predicated region
      $region17: #{_lambda_.32} parent=11 // pred_check
        %p166 = pneg %p92
      $region18: #{_lambda_.32} parent=11 // pred_check_branch
        %168 = sbr.rel (%p166) target = $region20
      $region19: #{_lambda_.32} parent=11 // pred_region
        _
      $region20: #{_lambda_.32} parent=11 // pred_fallthru
        _
    $region12: #{_lambda_.32} parent=5 // pred_fallthru
      _
    %p169 = scmp.lt.s32.totalorder %s10, 4
    // Predicated region
    $region21: #{_lambda_.32} parent=5 // pred_check
      %p170 = pneg %p169
    $region22: #{_lambda_.32} parent=5 // pred_check_branch
      %172 = sbr.rel (%p170) target = $region24
    $region23: #{_lambda_.32} parent=5 // pred_region
      // Predicated region
      $region25: #{_lambda_.32} parent=23 // pred_check
        %p173 = pneg %p44
      $region26: #{_lambda_.32} parent=23 // pred_check_branch
        %175 = sbr.rel (%p173) target = $region28
      $region27: #{_lambda_.32} parent=23 // pred_region
        %p176 = scmp.lt.s32.totalorder %s17, 1
        %s177 = scalar_select %p176, %s17, 1
        %p178 = scmp.lt.s32.totalorder %s18, 1
        %s179 = scalar_select %p178, %s18, 1
        %s180 = smul.addr %s179, 5
        %s181 = smul.addr %s177, 10
        %s182 = sadd.s32 %s180, %s181
        %s183 = smul.addr %s182, 4
        %s184 = scalar_lea.vmem %s0, %s183
      $region28: #{_lambda_.32} parent=23 // pred_fallthru
        _
      // Predicated region
      $region29: #{_lambda_.32} parent=23 // pred_check
        %p185 = pneg %p114
      $region30: #{_lambda_.32} parent=23 // pred_check_branch
        %187 = sbr.rel (%p185) target = $region32
      $region31: #{_lambda_.32} parent=23 // pred_region
        %s188 = smul.u32 4, %s18
        %p189 = scmp.lt.s32.totalorder %s17, 1
        %s190 = scalar_select %p189, %s17, 1
        %p191 = scmp.lt.s32.totalorder %s188, 7
        %s192 = scalar_select %p191, %s188, 7
        %s193 = smul.addr %s190, 8
        %s194 = sadd.s32 %s192, %s193
        %s195 = smul.addr %s194, 4
        %s196 = scalar_lea.vmem %s3, %s195
        %s197 = smul.u32 4, %s18
      $region32: #{_lambda_.32} parent=23 // pred_fallthru
        _
    $region24: #{_lambda_.32} parent=5 // pred_fallthru
      _
    %p198 = scmp.le.s32.totalorder 1, %s10
    %p199 = scmp.lt.s32.totalorder %s10, 5
    %p200 = pnand %p198, %p199
    %p201 = pneg %p200
    // Predicated region
    $region33: #{_lambda_.32} parent=5 // pred_check
      _
    $region34: #{_lambda_.32} parent=5 // pred_check_branch
      %203 = sbr.rel (%p200) target = $region36
    $region35: #{_lambda_.32} parent=5 // pred_region
      %s204 = ssub.s32 %s10, 1
      %p205 = scmp.lt.s32.totalorder %s19, 1
      %s206 = scalar_select %p205, %s19, 1
      %p207 = scmp.lt.s32.totalorder %s20, 1
      %s208 = scalar_select %p207, %s20, 1
      %s209 = smul.addr %s208, 5
      %s210 = smul.addr %s206, 10
      %s211 = sadd.s32 %s209, %s210
      %s212 = smul.addr %s211, 4
      %s213 = scalar_lea.vmem %s0, %s212
      %p214 = pneg %p50
      %p215 = pneg %p47
      %p216 = pneg %p71
      %p217 = pneg %p68
      %p218 = pneg %p92
      %p219 = pneg %p89
      %s220 = smul.u32 4, %s20
      %p221 = scmp.lt.s32.totalorder %s19, 1
      %s222 = scalar_select %p221, %s19, 1
      %p223 = scmp.lt.s32.totalorder %s220, 7
      %s224 = scalar_select %p223, %s220, 7
      %s225 = smul.addr %s222, 8
      %s226 = sadd.s32 %s224, %s225
      %s227 = smul.addr %s226, 4
      %s228 = scalar_lea.vmem %s3, %s227
      %p229 = pneg %p120
      %p230 = pneg %p117
      %p231 = pneg %p148
      %p232 = pneg %p145
      %s233 = smul.u32 4, %s20
      %p234 = scmp.lt.s32.totalorder %s19, 1
      %s235 = scalar_select %p234, %s19, 1
      %p236 = scmp.lt.s32.totalorder %s233, 7
      %s237 = scalar_select %p236, %s233, 7
      %s238 = smul.addr %s235, 8
      %s239 = sadd.s32 %s237, %s238
      %s240 = smul.addr %s239, 4
      %s241 = scalar_lea.vmem %s4, %s240
      %p242 = scmp.lt.s32.totalorder %s19, 1
      %s243 = scalar_select %p242, %s19, 1
      %p244 = scmp.lt.s32.totalorder %s20, 1
      %s245 = scalar_select %p244, %s20, 1
      %s246 = smul.addr %s245, 5
      %s247 = smul.addr %s243, 10
      %s248 = sadd.s32 %s246, %s247
      %s249 = smul.addr %s248, 4
      %s250 = scalar_lea.vmem %s0, %s249
      %s251 = smul.u32 4, %s20
      %p252 = scmp.lt.s32.totalorder %s19, 1
      %s253 = scalar_select %p252, %s19, 1
      %p254 = scmp.lt.s32.totalorder %s251, 7
      %s255 = scalar_select %p254, %s251, 7
      %s256 = smul.addr %s253, 8
      %s257 = sadd.s32 %s255, %s256
      %s258 = smul.addr %s257, 4
      %s259 = scalar_lea.vmem %s3, %s258
      %s260 = smul.u32 4, %s20
      %s261 = smul.u32 4, %s20
      %p262 = scmp.lt.s32.totalorder %s19, 1
      %s263 = scalar_select %p262, %s19, 1
      %p264 = scmp.lt.s32.totalorder %s261, 7
      %s265 = scalar_select %p264, %s261, 7
      %s266 = smul.addr %s263, 8
      %s267 = sadd.s32 %s265, %s266
      %s268 = smul.addr %s267, 4
      %s269 = scalar_lea.vmem %s4, %s268
      %s270 = smul.u32 4, %s20
      %v272 = vld [vmem:[%s250] sm:$0xff]
      %v273 = vld [vmem:[%s250 + $0x8] sm:$0xff]
      %v274 = vld [vmem:[%s250 + $0x10] sm:$0xf]
      %v275 = vunpack.c.l.bf16 %v272
      %v276 = vunpack.c.h.bf16 %v272
      %v277 = vunpack.c.l.bf16 %v273
      %v278 = vunpack.c.h.bf16 %v273
      %v279 = vunpack.c.l.bf16 %v274
      %vm280 = vcmp.ge.f32.partialorder %v275, 0.0
      %vm281 = vcmp.ge.f32.partialorder %v276, 0.0
      %vm282 = vcmp.ge.f32.partialorder %v277, 0.0
      %vm283 = vcmp.ge.f32.partialorder %v278, 0.0
      %vm284 = vcmp.ge.f32.partialorder %v279, 0.0
      %v285 = vmul.f32 %v275, 0.01
      %v286 = vmul.f32 %v276, 0.01
      %v287 = vmul.f32 %v277, 0.01
      %v288 = vmul.f32 %v278, 0.01
      %v289 = vmul.f32 %v279, 0.01
      %v290 = vsel %vm280, %v275, %v285
      %v291 = vsel %vm281, %v276, %v286
      %v292 = vsel %vm282, %v277, %v287
      %v293 = vsel %vm283, %v278, %v288
      %v294 = vsel %vm284, %v279, %v289
      %300 = vrot.lane.b32.xlu0 %v290, 127
      %v301 = vpop.permute.xlu0 %300
      %302 = vrot.lane.b32.xlu0 %v291, 127
      %v303 = vpop.permute.xlu0 %302
      %304 = vrot.lane.b32.xlu0 %v292, 127
      %v305 = vpop.permute.xlu0 %304
      %306 = vrot.lane.b32.xlu0 %v293, 127
      %v307 = vpop.permute.xlu0 %306
      %308 = vrot.lane.b32.xlu0 %v294, 127
      %v309 = vpop.permute.xlu0 %308
      %vm310 = vcmask 1039360
      %v311 = vsel %vm310, %v301, %v303
      %v312 = vsel %vm310, %v303, %v305
      %v313 = vsel %vm310, %v305, %v307
      %v314 = vsel %vm310, %v307, %v309
      %319 = vrot.lane.b32.xlu0 %v290, 126
      %v320 = vpop.permute.xlu0 %319
      %321 = vrot.lane.b32.xlu0 %v291, 126
      %v322 = vpop.permute.xlu0 %321
      %323 = vrot.lane.b32.xlu0 %v292, 126
      %v324 = vpop.permute.xlu0 %323
      %325 = vrot.lane.b32.xlu0 %v293, 126
      %v326 = vpop.permute.xlu0 %325
      %327 = vrot.lane.b32.xlu0 %v294, 126
      %v328 = vpop.permute.xlu0 %327
      %vm329 = vcmask 1031168
      %v330 = vsel %vm329, %v320, %v322
      %v331 = vsel %vm329, %v322, %v324
      %v332 = vsel %vm329, %v324, %v326
      %v333 = vsel %vm329, %v326, %v328
      %v338 = vld [vmem:[%s1] sm:$0xf]
      %v339 = vpack.c.bf16 %v311, %v290
      %v340 = vpack.c.bf16 %v312, %v291
      %v341 = vpack.c.bf16 %v313, %v292
      %v342 = vpack.c.bf16 %v314, %v293
      %v343 = vpack.c.bf16 %v330, %v330
      %v344 = vpack.c.bf16 %v331, %v331
      %v345 = vpack.c.bf16 %v332, %v332
      %v346 = vpack.c.bf16 %v333, %v333
      %v347 = vld [vmem:[%s2] sm:$0xff]
      %349 = vset.pattern.permute.xlu0 0
      %350 = vperm.xlu0 %349, %v347
      %v351 = vpop.permute.xlu0 %350
      %vm353 = vcmask 195584
      %v355 = vsel %vm353, %v338, 0
      %vm357 = vcmask 1043456
      %v359 = vsel %vm357, %v343, 0
      %v362 = vsel %vm357, %v344, 0
      %v365 = vsel %vm357, %v345, 0
      %v368 = vsel %vm357, %v346, 0
      %370 = vmatprep.subr.bf16.mxu0 0
      %371 = vmatpush1.bf16.msra.mxu0 0
      %372 = vmatprep.subr.bf16.mxu0 0
      %373 = vmatpush1.bf16.msra.mxu0 0
      %374 = vmatprep.subr.bf16.mxu0 0
      %375 = vmatpush1.bf16.msra.mxu0 0
      %376 = vmatprep.subr.bf16.mxu0 0
      %377 = vmatpush1.bf16.msra.mxu0 0
      %378 = vmatprep.subr.bf16.mxu0 0
      %379 = vmatpush1.bf16.msra.mxu0 0
      %380 = vmatprep.subr.bf16.mxu0 0
      %381 = vmatpush1.bf16.msra.mxu0 0
      %382 = vmatprep.subr.bf16.mxu0 %v362
      %383 = vmatpush1.bf16.msra.mxu0 %v359
      %384 = vmatprep.subr.bf16.mxu0 %v340
      %385 = vmatpush1.bf16.msra.mxu0 %v339
      %386 = vmatprep.subr.bf16.mxu0 0
      %387 = vmatpush2.bf16.msra.mxu0 0
      %388 = vmatprep.subr.bf16.mxu0 0
      %389 = vmatpush2.bf16.msra.mxu0 0
      %390 = vmatprep.subr.bf16.mxu0 0
      %391 = vmatpush2.bf16.msra.mxu0 0
      %392 = vmatprep.subr.bf16.mxu0 0
      %393 = vmatpush2.bf16.msra.mxu0 0
      %394 = vmatprep.subr.bf16.mxu0 0
      %395 = vmatpush2.bf16.msra.mxu0 0
      %396 = vmatprep.subr.bf16.mxu0 0
      %397 = vmatpush2.bf16.msra.mxu0 0
      %398 = vmatprep.subr.bf16.mxu0 0
      %399 = vmatpush2.bf16.msra.mxu0 0
      %400 = vmatprep.subr.bf16.mxu0 0
      %401 = vmatpush2.bf16.msra.mxu0 0
      %402 = vmatprep.mubr.bf16.mxu0 0
      %403 = vmatmul.mubr.bf16.gmra.mxu0 %v355
      %v404 = vpop.f32.mrf.mxu0
      %v405 = vadd.f32 %v351, %v404
      %v406 = vpop.f32.mrf.mxu0
      %v407 = vadd.f32 %v351, %v406
      %v408 = vpop.f32.mrf.mxu0
      %v409 = vpop.f32.mrf.mxu0
      %410 = vdwg.mxu0
      %411 = vmatprep.subr.bf16.mxu0 0
      %412 = vmatpush1.bf16.msra.mxu0 0
      %413 = vmatprep.subr.bf16.mxu0 0
      %414 = vmatpush1.bf16.msra.mxu0 0
      %415 = vmatprep.subr.bf16.mxu0 0
      %416 = vmatpush1.bf16.msra.mxu0 0
      %417 = vmatprep.subr.bf16.mxu0 0
      %418 = vmatpush1.bf16.msra.mxu0 0
      %419 = vmatprep.subr.bf16.mxu0 0
      %420 = vmatpush1.bf16.msra.mxu0 0
      %421 = vmatprep.subr.bf16.mxu0 0
      %422 = vmatpush1.bf16.msra.mxu0 0
      %423 = vmatprep.subr.bf16.mxu0 %v368
      %424 = vmatpush1.bf16.msra.mxu0 %v365
      %425 = vmatprep.subr.bf16.mxu0 %v342
      %426 = vmatpush1.bf16.msra.mxu0 %v341
      %427 = vmatprep.subr.bf16.mxu0 0
      %428 = vmatpush2.bf16.msra.mxu0 0
      %429 = vmatprep.subr.bf16.mxu0 0
      %430 = vmatpush2.bf16.msra.mxu0 0
      %431 = vmatprep.subr.bf16.mxu0 0
      %432 = vmatpush2.bf16.msra.mxu0 0
      %433 = vmatprep.subr.bf16.mxu0 0
      %434 = vmatpush2.bf16.msra.mxu0 0
      %435 = vmatprep.subr.bf16.mxu0 0
      %436 = vmatpush2.bf16.msra.mxu0 0
      %437 = vmatprep.subr.bf16.mxu0 0
      %438 = vmatpush2.bf16.msra.mxu0 0
      %439 = vmatprep.subr.bf16.mxu0 0
      %440 = vmatpush2.bf16.msra.mxu0 0
      %441 = vmatprep.subr.bf16.mxu0 0
      %442 = vmatpush2.bf16.msra.mxu0 0
      %443 = vmatprep.mubr.bf16.mxu0 0
      %444 = vmatmul.mubr.bf16.gmra.mxu0 %v355
      %v445 = vpop.f32.mrf.mxu0
      %v446 = vadd.f32 %v351, %v445
      %v447 = vpop.f32.mrf.mxu0
      %v448 = vadd.f32 %v351, %v447
      %v449 = vpop.f32.mrf.mxu0
      %v450 = vpop.f32.mrf.mxu0
      %451 = vdwg.mxu0
      %v452 = vld [vmem:[%s259] sm:$0xff]
      %v453 = vld [vmem:[%s259 + $0x8] sm:$0xff]
      %v454 = vunpack.c.l.bf16 %v452
      %v455 = vunpack.c.h.bf16 %v452
      %v456 = vunpack.c.l.bf16 %v453
      %v457 = vunpack.c.h.bf16 %v453
      %v458 = vadd.f32 %v405, %v454
      %v459 = vadd.f32 %v407, %v455
      %v460 = vadd.f32 %v446, %v456
      %v461 = vadd.f32 %v448, %v457
      %v462 = vpack.c.bf16 %v458, %v458
      %v463 = vpack.c.bf16 %v459, %v459
      %v464 = vpack.c.bf16 %v460, %v460
      %v465 = vpack.c.bf16 %v461, %v461
      %v470 = vunpack.c.l.b16 %v462
      %v471 = vunpack.c.l.b16 %v463
      %v472 = vunpack.c.l.b16 %v464
      %v473 = vunpack.c.l.b16 %v465
      %v474 = vpack.c.b16 %v471, %v470
      %v475 = vpack.c.b16 %v473, %v472
      %478 = vst [vmem:[%s269] sm:$0xff] %v474
      %479 = vst [vmem:[%s269 + $0x8] sm:$0xff] %v475
      %s480 = smul.u32 4, %s20
      %p481 = scmp.lt.s32.totalorder %s19, 1
      %s482 = scalar_select %p481, %s19, 1
      %p483 = scmp.lt.s32.totalorder %s480, 7
      %s484 = scalar_select %p483, %s480, 7
      %s485 = smul.addr %s482, 8
      %s486 = sadd.s32 %s484, %s485
      %s487 = smul.addr %s486, 4
      %s488 = scalar_lea.vmem %s4, %s487
      // Predicated region
      $region37: #{_lambda_.32} parent=35 // pred_check
        %p489 = pneg %p145
      $region38: #{_lambda_.32} parent=35 // pred_check_branch
        %491 = sbr.rel (%p489) target = $region40
      $region39: #{_lambda_.32} parent=35 // pred_region
        %s492 = smul.u32 4, %s20
      $region40: #{_lambda_.32} parent=35 // pred_fallthru
        _
    $region36: #{_lambda_.32} parent=5 // pred_fallthru
      _
    %p493 = scmp.le.s32.totalorder 2, %s10
    // Predicated region
    $region41: #{_lambda_.32} parent=5 // pred_check
      %p494 = pneg %p493
    $region42: #{_lambda_.32} parent=5 // pred_check_branch
      %496 = sbr.rel (%p494) target = $region44
    $region43: #{_lambda_.32} parent=5 // pred_region
      %s497 = ssub.s32 %s10, 2
      // Predicated region
      $region45: #{_lambda_.32} parent=43 // pred_check
        %p498 = pneg %p151
      $region46: #{_lambda_.32} parent=43 // pred_check_branch
        %500 = sbr.rel (%p498) target = $region48
      $region47: #{_lambda_.32} parent=43 // pred_region
        %s501 = smul.u32 4, %s22
        %p502 = scmp.lt.s32.totalorder %s21, 1
        %s503 = scalar_select %p502, %s21, 1
        %p504 = scmp.lt.s32.totalorder %s501, 7
        %s505 = scalar_select %p504, %s501, 7
        %s506 = smul.addr %s503, 8
        %s507 = sadd.s32 %s505, %s506
        %s508 = smul.addr %s507, 4
        %s509 = scalar_lea.vmem %s4, %s508
      $region48: #{_lambda_.32} parent=43 // pred_fallthru
        _
    $region44: #{_lambda_.32} parent=5 // pred_fallthru
      _
  $region6: #{_lambda_.32} parent=0 // loop_footer
    %s14 = sadd.s32 1, %s10
  $region7: #{_lambda_.32} parent=0 // loop_footer_branch
    %9 = sbr.rel target = $region3
  $region8: #{_lambda_.32} parent=0 // loop_exit
    _

// kernel: _lambda_.33
$region0: #{_lambda_.33}
  #allocation0 [shape = 'u32[]', space=smem, size = 0x4, offset = 0x4, fixed_abs, tag = 'smem constant byte address 0x4 - core index']
  #allocation1 [shape = 'u32[144,128]{1,0:T(1,128)}', space=vmem, size = 0x12000, scoped, tag = 'internal scratch']
  %s0 = inlined_call_operand.vmem [shape: bf16[2,2,8,518], index: 0, kind: input, shape index: {}]
  %s1 = inlined_call_operand.vmem [shape: bf16[8,24], index: 1, kind: input, shape index: {}]
  %s2 = inlined_call_operand.vmem [shape: f32[8,1], index: 2, kind: input, shape index: {}]
  %s3 = inlined_call_operand.vmem [shape: bf16[2,8,1024], index: 3, kind: output, shape index: {}]
  %s4 = sld [smem:[#allocation0]]
  $region45: #{_lambda_.33} parent=0
    _
  %s6 = ssub.s32 1, %s4
  %s7 = scalar_select 0, %s6, %s4
  loop: start=0, step=1, limit=6
  $region2: #{_lambda_.33} parent=0 // loop_pre_header
    _
  $region3: #{_lambda_.33} parent=0 // loop_header
    %s9 = sphi 0, %s13
    %p10 = scmp.ge.s32.totalorder %s9, 6
    %s16 = sphi 0, %s28
    %s17 = sphi 0, %s24
    %s18 = sphi 0, %s16
    %s19 = sphi 0, %s17
    %s20 = sphi 0, %s18
    %s21 = sphi 0, %s19
    %s33 = sphi 0, %s35
    %s36 = sphi 0, %s33
    %s37 = sphi 0, %s36
    %s53 = sphi 0, %s37
    %s57 = sphi 0, %s57
    %s59 = sphi 0, %s57
    %s60 = sphi 0, %s59
    %s74 = sphi 0, %s60
    %s78 = sphi 0, %s78
    %s80 = sphi 0, %s78
    %s81 = sphi 0, %s80
    %s95 = sphi 0, %s81
    %s103 = sphi 0, %s105
    %s106 = sphi 0, %s103
    %s107 = sphi 0, %s106
    %s123 = sphi 0, %s107
  $region4: #{_lambda_.33} parent=0 // loop_header_branch
    %12 = sbr.rel (%p10) target = $region8
  $region5: #{_lambda_.33} parent=0 // loop_body
    %s14 = ssub.s32 %s9, 1
    %s15 = ssub.s32 %s9, 2
    %s22 = sadd.s32 1, %s17
    %p23 = scmp.ge.s32.totalorder %s22, 2
    %s24 = scalar_select %p23, 0, %s22
    %s25 = sadd.s32 1, %s16
    %s26 = scalar_select %p23, %s25, %s16
    %p27 = scmp.ge.s32.totalorder %s26, 2
    %s28 = scalar_select %p27, 0, %s26
    %s29 = ssub.s32 %s16, %s28
    %s30 = ssub.s32 %s17, %s24
    %s31 = sor.u32 %s29, %s30
    %p32 = scmp.eq.s32.totalorder %s31, 0
    %s34 = sadd.s32 %s33, 1
    %s35 = scalar_select %p32, %s33, %s34
    %p38 = pneg %p32
    %p39 = scmp.eq.s32.totalorder %s9, 3
    %p40 = por %p38, %p39
    %p41 = scmp.ne.s32.totalorder %s33, %s36
    %p42 = scmp.eq.s32.totalorder %s9, 0
    %p43 = por %p41, %p42
    %p44 = scmp.ne.s32.totalorder %s33, %s36
    %p45 = scmp.eq.s32.totalorder %s14, 3
    %p46 = por %p44, %p45
    %p47 = scmp.ne.s32.totalorder %s36, %s37
    %p48 = scmp.eq.s32.totalorder %s14, 0
    %p49 = por %p47, %p48
    %p50 = scmp.ne.s32.totalorder %s36, %s37
    %p51 = scmp.eq.s32.totalorder %s15, 3
    %p52 = por %p50, %p51
    %p54 = scmp.ne.s32.totalorder %s37, %s53
    %p55 = scmp.eq.s32.totalorder %s15, 0
    %p56 = por %p54, %p55
    %s58 = sadd.s32 %s57, 1
    %p61 = scmp.eq.s32.totalorder %s9, 3
    %p62 = scmp.ne.s32.totalorder %s57, %s59
    %p63 = scmp.eq.s32.totalorder %s9, 0
    %p64 = por %p62, %p63
    %p65 = scmp.ne.s32.totalorder %s57, %s59
    %p66 = scmp.eq.s32.totalorder %s14, 3
    %p67 = por %p65, %p66
    %p68 = scmp.ne.s32.totalorder %s59, %s60
    %p69 = scmp.eq.s32.totalorder %s14, 0
    %p70 = por %p68, %p69
    %p71 = scmp.ne.s32.totalorder %s59, %s60
    %p72 = scmp.eq.s32.totalorder %s15, 3
    %p73 = por %p71, %p72
    %p75 = scmp.ne.s32.totalorder %s60, %s74
    %p76 = scmp.eq.s32.totalorder %s15, 0
    %p77 = por %p75, %p76
    %s79 = sadd.s32 %s78, 1
    %p82 = scmp.eq.s32.totalorder %s9, 3
    %p83 = scmp.ne.s32.totalorder %s78, %s80
    %p84 = scmp.eq.s32.totalorder %s9, 0
    %p85 = por %p83, %p84
    %p86 = scmp.ne.s32.totalorder %s78, %s80
    %p87 = scmp.eq.s32.totalorder %s14, 3
    %p88 = por %p86, %p87
    %p89 = scmp.ne.s32.totalorder %s80, %s81
    %p90 = scmp.eq.s32.totalorder %s14, 0
    %p91 = por %p89, %p90
    %p92 = scmp.ne.s32.totalorder %s80, %s81
    %p93 = scmp.eq.s32.totalorder %s15, 3
    %p94 = por %p92, %p93
    %p96 = scmp.ne.s32.totalorder %s81, %s95
    %p97 = scmp.eq.s32.totalorder %s15, 0
    %p98 = por %p96, %p97
    %s99 = ssub.s32 %s16, %s28
    %s100 = ssub.s32 %s17, %s24
    %s101 = sor.u32 %s99, %s100
    %p102 = scmp.eq.s32.totalorder %s101, 0
    %s104 = sadd.s32 %s103, 1
    %s105 = scalar_select %p102, %s103, %s104
    %p108 = pneg %p102
    %p109 = scmp.eq.s32.totalorder %s9, 3
    %p110 = por %p108, %p109
    %p111 = scmp.ne.s32.totalorder %s103, %s106
    %p112 = scmp.eq.s32.totalorder %s9, 0
    %p113 = por %p111, %p112
    %p114 = scmp.ne.s32.totalorder %s103, %s106
    %p115 = scmp.eq.s32.totalorder %s14, 3
    %p116 = por %p114, %p115
    %p117 = scmp.ne.s32.totalorder %s106, %s107
    %p118 = scmp.eq.s32.totalorder %s14, 0
    %p119 = por %p117, %p118
    %p120 = scmp.ne.s32.totalorder %s106, %s107
    %p121 = scmp.eq.s32.totalorder %s15, 3
    %p122 = por %p120, %p121
    %p124 = scmp.ne.s32.totalorder %s107, %s123
    %p125 = scmp.eq.s32.totalorder %s15, 0
    %p126 = por %p124, %p125
    %p127 = scmp.le.s32.totalorder 1, %s9
    %p128 = scmp.lt.s32.totalorder %s9, 5
    %p129 = pnand %p127, %p128
    %p130 = pneg %p129
    // Predicated region
    $region9: #{_lambda_.33} parent=5 // pred_check
      _
    $region10: #{_lambda_.33} parent=5 // pred_check_branch
      %132 = sbr.rel (%p129) target = $region12
    $region11: #{_lambda_.33} parent=5 // pred_region
      %s133 = ssub.s32 %s9, 1
      // Predicated region
      $region13: #{_lambda_.33} parent=11 // pred_check
        %p134 = pneg %p70
      $region14: #{_lambda_.33} parent=11 // pred_check_branch
        %136 = sbr.rel (%p134) target = $region16
      $region15: #{_lambda_.33} parent=11 // pred_region
        _
      $region16: #{_lambda_.33} parent=11 // pred_fallthru
        _
      // Predicated region
      $region17: #{_lambda_.33} parent=11 // pred_check
        %p137 = pneg %p91
      $region18: #{_lambda_.33} parent=11 // pred_check_branch
        %139 = sbr.rel (%p137) target = $region20
      $region19: #{_lambda_.33} parent=11 // pred_region
        _
      $region20: #{_lambda_.33} parent=11 // pred_fallthru
        _
    $region12: #{_lambda_.33} parent=5 // pred_fallthru
      _
    %p140 = scmp.lt.s32.totalorder %s9, 4
    // Predicated region
    $region21: #{_lambda_.33} parent=5 // pred_check
      %p141 = pneg %p140
    $region22: #{_lambda_.33} parent=5 // pred_check_branch
      %143 = sbr.rel (%p141) target = $region24
    $region23: #{_lambda_.33} parent=5 // pred_region
      // Predicated region
      $region25: #{_lambda_.33} parent=23 // pred_check
        %p144 = pneg %p43
      $region26: #{_lambda_.33} parent=23 // pred_check_branch
        %146 = sbr.rel (%p144) target = $region28
      $region27: #{_lambda_.33} parent=23 // pred_region
        %p147 = scmp.lt.s32.totalorder %s16, 1
        %s148 = scalar_select %p147, %s16, 1
        %p149 = scmp.lt.s32.totalorder %s17, 1
        %s150 = scalar_select %p149, %s17, 1
        %s151 = smul.addr %s150, 5
        %s152 = smul.addr %s148, 10
        %s153 = sadd.s32 %s151, %s152
        %s154 = smul.addr %s153, 4
        %s155 = scalar_lea.vmem %s0, %s154
      $region28: #{_lambda_.33} parent=23 // pred_fallthru
        _
    $region24: #{_lambda_.33} parent=5 // pred_fallthru
      _
    %p156 = scmp.le.s32.totalorder 1, %s9
    %p157 = scmp.lt.s32.totalorder %s9, 5
    %p158 = pnand %p156, %p157
    %p159 = pneg %p158
    // Predicated region
    $region29: #{_lambda_.33} parent=5 // pred_check
      _
    $region30: #{_lambda_.33} parent=5 // pred_check_branch
      %161 = sbr.rel (%p158) target = $region32
    $region31: #{_lambda_.33} parent=5 // pred_region
      %s162 = ssub.s32 %s9, 1
      %p163 = scmp.lt.s32.totalorder %s18, 1
      %s164 = scalar_select %p163, %s18, 1
      %p165 = scmp.lt.s32.totalorder %s19, 1
      %s166 = scalar_select %p165, %s19, 1
      %s167 = smul.addr %s166, 5
      %s168 = smul.addr %s164, 10
      %s169 = sadd.s32 %s167, %s168
      %s170 = smul.addr %s169, 4
      %s171 = scalar_lea.vmem %s0, %s170
      %p172 = pneg %p49
      %p173 = pneg %p46
      %p174 = pneg %p70
      %p175 = pneg %p67
      %p176 = pneg %p91
      %p177 = pneg %p88
      %p178 = pneg %p119
      %p179 = pneg %p116
      %s180 = smul.u32 4, %s19
      %p181 = scmp.lt.s32.totalorder %s18, 1
      %s182 = scalar_select %p181, %s18, 1
      %p183 = scmp.lt.s32.totalorder %s180, 7
      %s184 = scalar_select %p183, %s180, 7
      %s185 = smul.addr %s182, 8
      %s186 = sadd.s32 %s184, %s185
      %s187 = smul.addr %s186, 4
      %s188 = scalar_lea.vmem %s3, %s187
      %p189 = scmp.lt.s32.totalorder %s18, 1
      %s190 = scalar_select %p189, %s18, 1
      %p191 = scmp.lt.s32.totalorder %s19, 1
      %s192 = scalar_select %p191, %s19, 1
      %s193 = smul.addr %s192, 5
      %s194 = smul.addr %s190, 10
      %s195 = sadd.s32 %s193, %s194
      %s196 = smul.addr %s195, 4
      %s197 = scalar_lea.vmem %s0, %s196
      %s198 = smul.u32 4, %s19
      %p199 = scmp.lt.s32.totalorder %s18, 1
      %s200 = scalar_select %p199, %s18, 1
      %p201 = scmp.lt.s32.totalorder %s198, 7
      %s202 = scalar_select %p201, %s198, 7
      %s203 = smul.addr %s200, 8
      %s204 = sadd.s32 %s202, %s203
      %s205 = smul.addr %s204, 4
      %s206 = scalar_lea.vmem %s3, %s205
      %s207 = smul.u32 4, %s19
      %v209 = vld [vmem:[%s197] sm:$0xff]
      %v210 = vld [vmem:[%s197 + $0x8] sm:$0xff]
      %v211 = vld [vmem:[%s197 + $0x10] sm:$0xf]
      %v212 = vunpack.c.l.bf16 %v209
      %v213 = vunpack.c.h.bf16 %v209
      %v214 = vunpack.c.l.bf16 %v210
      %v215 = vunpack.c.h.bf16 %v210
      %v216 = vunpack.c.l.bf16 %v211
      %vm217 = vcmp.ge.f32.partialorder %v212, 0.0
      %vm218 = vcmp.ge.f32.partialorder %v213, 0.0
      %vm219 = vcmp.ge.f32.partialorder %v214, 0.0
      %vm220 = vcmp.ge.f32.partialorder %v215, 0.0
      %vm221 = vcmp.ge.f32.partialorder %v216, 0.0
      %v222 = vmul.f32 %v212, 0.01
      %v223 = vmul.f32 %v213, 0.01
      %v224 = vmul.f32 %v214, 0.01
      %v225 = vmul.f32 %v215, 0.01
      %v226 = vmul.f32 %v216, 0.01
      %v227 = vsel %vm217, %v212, %v222
      %v228 = vsel %vm218, %v213, %v223
      %v229 = vsel %vm219, %v214, %v224
      %v230 = vsel %vm220, %v215, %v225
      %v231 = vsel %vm221, %v216, %v226
      %237 = vrot.lane.b32.xlu0 %v227, 125
      %v238 = vpop.permute.xlu0 %237
      %239 = vrot.lane.b32.xlu0 %v228, 125
      %v240 = vpop.permute.xlu0 %239
      %241 = vrot.lane.b32.xlu0 %v229, 125
      %v242 = vpop.permute.xlu0 %241
      %243 = vrot.lane.b32.xlu0 %v230, 125
      %v244 = vpop.permute.xlu0 %243
      %245 = vrot.lane.b32.xlu0 %v231, 125
      %v246 = vpop.permute.xlu0 %245
      %vm247 = vcmask 1022976
      %v248 = vsel %vm247, %v238, %v240
      %v249 = vsel %vm247, %v240, %v242
      %v250 = vsel %vm247, %v242, %v244
      %v251 = vsel %vm247, %v244, %v246
      %256 = vrot.lane.b32.xlu0 %v227, 122
      %v257 = vpop.permute.xlu0 %256
      %258 = vrot.lane.b32.xlu0 %v228, 122
      %v259 = vpop.permute.xlu0 %258
      %260 = vrot.lane.b32.xlu0 %v229, 122
      %v261 = vpop.permute.xlu0 %260
      %262 = vrot.lane.b32.xlu0 %v230, 122
      %v263 = vpop.permute.xlu0 %262
      %264 = vrot.lane.b32.xlu0 %v231, 122
      %v265 = vpop.permute.xlu0 %264
      %vm266 = vcmask 998400
      %v267 = vsel %vm266, %v257, %v259
      %v268 = vsel %vm266, %v259, %v261
      %v269 = vsel %vm266, %v261, %v263
      %v270 = vsel %vm266, %v263, %v265
      %v275 = vld [vmem:[%s1] sm:$0xf]
      %v276 = vpack.c.bf16 %v248, %v227
      %v277 = vpack.c.bf16 %v249, %v228
      %v278 = vpack.c.bf16 %v250, %v229
      %v279 = vpack.c.bf16 %v251, %v230
      %v280 = vpack.c.bf16 %v267, %v267
      %v281 = vpack.c.bf16 %v268, %v268
      %v282 = vpack.c.bf16 %v269, %v269
      %v283 = vpack.c.bf16 %v270, %v270
      %v284 = vld [vmem:[%s2] sm:$0xff]
      %286 = vset.pattern.permute.xlu0 0
      %287 = vperm.xlu0 %286, %v284
      %v288 = vpop.permute.xlu0 %287
      %vm290 = vcmask 195584
      %v292 = vsel %vm290, %v275, 0
      %vm294 = vcmask 1043456
      %v296 = vsel %vm294, %v280, 0
      %v299 = vsel %vm294, %v281, 0
      %v302 = vsel %vm294, %v282, 0
      %v305 = vsel %vm294, %v283, 0
      %307 = vmatprep.subr.bf16.mxu0 0
      %308 = vmatpush1.bf16.msra.mxu0 0
      %309 = vmatprep.subr.bf16.mxu0 0
      %310 = vmatpush1.bf16.msra.mxu0 0
      %311 = vmatprep.subr.bf16.mxu0 0
      %312 = vmatpush1.bf16.msra.mxu0 0
      %313 = vmatprep.subr.bf16.mxu0 0
      %314 = vmatpush1.bf16.msra.mxu0 0
      %315 = vmatprep.subr.bf16.mxu0 0
      %316 = vmatpush1.bf16.msra.mxu0 0
      %317 = vmatprep.subr.bf16.mxu0 0
      %318 = vmatpush1.bf16.msra.mxu0 0
      %319 = vmatprep.subr.bf16.mxu0 %v299
      %320 = vmatpush1.bf16.msra.mxu0 %v296
      %321 = vmatprep.subr.bf16.mxu0 %v277
      %322 = vmatpush1.bf16.msra.mxu0 %v276
      %323 = vmatprep.subr.bf16.mxu0 0
      %324 = vmatpush2.bf16.msra.mxu0 0
      %325 = vmatprep.subr.bf16.mxu0 0
      %326 = vmatpush2.bf16.msra.mxu0 0
      %327 = vmatprep.subr.bf16.mxu0 0
      %328 = vmatpush2.bf16.msra.mxu0 0
      %329 = vmatprep.subr.bf16.mxu0 0
      %330 = vmatpush2.bf16.msra.mxu0 0
      %331 = vmatprep.subr.bf16.mxu0 0
      %332 = vmatpush2.bf16.msra.mxu0 0
      %333 = vmatprep.subr.bf16.mxu0 0
      %334 = vmatpush2.bf16.msra.mxu0 0
      %335 = vmatprep.subr.bf16.mxu0 0
      %336 = vmatpush2.bf16.msra.mxu0 0
      %337 = vmatprep.subr.bf16.mxu0 0
      %338 = vmatpush2.bf16.msra.mxu0 0
      %339 = vmatprep.mubr.bf16.mxu0 0
      %340 = vmatmul.mubr.bf16.gmra.mxu0 %v292
      %v341 = vpop.f32.mrf.mxu0
      %v342 = vadd.f32 %v288, %v341
      %v343 = vpop.f32.mrf.mxu0
      %v344 = vadd.f32 %v288, %v343
      %v345 = vpop.f32.mrf.mxu0
      %v346 = vpop.f32.mrf.mxu0
      %347 = vdwg.mxu0
      %348 = vmatprep.subr.bf16.mxu0 0
      %349 = vmatpush1.bf16.msra.mxu0 0
      %350 = vmatprep.subr.bf16.mxu0 0
      %351 = vmatpush1.bf16.msra.mxu0 0
      %352 = vmatprep.subr.bf16.mxu0 0
      %353 = vmatpush1.bf16.msra.mxu0 0
      %354 = vmatprep.subr.bf16.mxu0 0
      %355 = vmatpush1.bf16.msra.mxu0 0
      %356 = vmatprep.subr.bf16.mxu0 0
      %357 = vmatpush1.bf16.msra.mxu0 0
      %358 = vmatprep.subr.bf16.mxu0 0
      %359 = vmatpush1.bf16.msra.mxu0 0
      %360 = vmatprep.subr.bf16.mxu0 %v305
      %361 = vmatpush1.bf16.msra.mxu0 %v302
      %362 = vmatprep.subr.bf16.mxu0 %v279
      %363 = vmatpush1.bf16.msra.mxu0 %v278
      %364 = vmatprep.subr.bf16.mxu0 0
      %365 = vmatpush2.bf16.msra.mxu0 0
      %366 = vmatprep.subr.bf16.mxu0 0
      %367 = vmatpush2.bf16.msra.mxu0 0
      %368 = vmatprep.subr.bf16.mxu0 0
      %369 = vmatpush2.bf16.msra.mxu0 0
      %370 = vmatprep.subr.bf16.mxu0 0
      %371 = vmatpush2.bf16.msra.mxu0 0
      %372 = vmatprep.subr.bf16.mxu0 0
      %373 = vmatpush2.bf16.msra.mxu0 0
      %374 = vmatprep.subr.bf16.mxu0 0
      %375 = vmatpush2.bf16.msra.mxu0 0
      %376 = vmatprep.subr.bf16.mxu0 0
      %377 = vmatpush2.bf16.msra.mxu0 0
      %378 = vmatprep.subr.bf16.mxu0 0
      %379 = vmatpush2.bf16.msra.mxu0 0
      %380 = vmatprep.mubr.bf16.mxu0 0
      %381 = vmatmul.mubr.bf16.gmra.mxu0 %v292
      %v382 = vpop.f32.mrf.mxu0
      %v383 = vadd.f32 %v288, %v382
      %v384 = vpop.f32.mrf.mxu0
      %v385 = vadd.f32 %v288, %v384
      %v386 = vpop.f32.mrf.mxu0
      %v387 = vpop.f32.mrf.mxu0
      %388 = vdwg.mxu0
      %v389 = vpack.c.bf16 %v342, %v342
      %v390 = vpack.c.bf16 %v344, %v344
      %v391 = vpack.c.bf16 %v383, %v383
      %v392 = vpack.c.bf16 %v385, %v385
      %v397 = vunpack.c.l.b16 %v389
      %v398 = vunpack.c.l.b16 %v390
      %v399 = vunpack.c.l.b16 %v391
      %v400 = vunpack.c.l.b16 %v392
      %v401 = vpack.c.b16 %v398, %v397
      %v402 = vpack.c.b16 %v400, %v399
      %405 = vst [vmem:[%s206] sm:$0xff] %v401
      %406 = vst [vmem:[%s206 + $0x8] sm:$0xff] %v402
      %s407 = smul.u32 4, %s19
      %p408 = scmp.lt.s32.totalorder %s18, 1
      %s409 = scalar_select %p408, %s18, 1
      %p410 = scmp.lt.s32.totalorder %s407, 7
      %s411 = scalar_select %p410, %s407, 7
      %s412 = smul.addr %s409, 8
      %s413 = sadd.s32 %s411, %s412
      %s414 = smul.addr %s413, 4
      %s415 = scalar_lea.vmem %s3, %s414
      // Predicated region
      $region33: #{_lambda_.33} parent=31 // pred_check
        %p416 = pneg %p116
      $region34: #{_lambda_.33} parent=31 // pred_check_branch
        %418 = sbr.rel (%p416) target = $region36
      $region35: #{_lambda_.33} parent=31 // pred_region
        %s419 = smul.u32 4, %s19
      $region36: #{_lambda_.33} parent=31 // pred_fallthru
        _
    $region32: #{_lambda_.33} parent=5 // pred_fallthru
      _
    %p420 = scmp.le.s32.totalorder 2, %s9
    // Predicated region
    $region37: #{_lambda_.33} parent=5 // pred_check
      %p421 = pneg %p420
    $region38: #{_lambda_.33} parent=5 // pred_check_branch
      %423 = sbr.rel (%p421) target = $region40
    $region39: #{_lambda_.33} parent=5 // pred_region
      %s424 = ssub.s32 %s9, 2
      // Predicated region
      $region41: #{_lambda_.33} parent=39 // pred_check
        %p425 = pneg %p122
      $region42: #{_lambda_.33} parent=39 // pred_check_branch
        %427 = sbr.rel (%p425) target = $region44
      $region43: #{_lambda_.33} parent=39 // pred_region
        %s428 = smul.u32 4, %s21
        %p429 = scmp.lt.s32.totalorder %s20, 1
        %s430 = scalar_select %p429, %s20, 1
        %p431 = scmp.lt.s32.totalorder %s428, 7
        %s432 = scalar_select %p431, %s428, 7
        %s433 = smul.addr %s430, 8
        %s434 = sadd.s32 %s432, %s433
        %s435 = smul.addr %s434, 4
        %s436 = scalar_lea.vmem %s3, %s435
      $region44: #{_lambda_.33} parent=39 // pred_fallthru
        _
    $region40: #{_lambda_.33} parent=5 // pred_fallthru
      _
  $region6: #{_lambda_.33} parent=0 // loop_footer
    %s13 = sadd.s32 1, %s9
  $region7: #{_lambda_.33} parent=0 // loop_footer_branch
    %8 = sbr.rel target = $region3
  $region8: #{_lambda_.33} parent=0 // loop_exit
    _

// kernel: _lambda_.39
$region0: #{_lambda_.39}
  #allocation0 [shape = 'u32[]', space=smem, size = 0x4, offset = 0x4, fixed_abs, tag = 'smem constant byte address 0x4 - core index']
  #allocation1 [shape = 'u32[144,128]{1,0:T(1,128)}', space=vmem, size = 0x12000, scoped, tag = 'internal scratch']
  #allocation2 [shape = 'f32[1,1]{1,0:T(1,128)S(1)}', space=vmem, size = 0x200, scoped, tag = 'scoped memory for _lambda_.39']
  %s0 = inlined_call_operand.vmem [shape: bf16[2,2,8,518], index: 0, kind: input, shape index: {}]
  %s1 = inlined_call_operand.vmem [shape: f32[56,1], index: 1, kind: input, shape index: {}]
  %s2 = inlined_call_operand.<no memory space> [shape: f32[1,1], index: 2, kind: input, shape index: {}]
  %s3 = inlined_call_operand.hbm [shape: f32[2,1,1024], index: 3, kind: output, shape index: {}]
  %s4 = sld [smem:[#allocation0]]
  $region45: #{_lambda_.39} parent=0
    _
  %s6 = ssub.s32 1, %s4
  %s7 = scalar_select 0, %s6, %s4
  %v8 = vstv %s2
  %9 = vst [vmem:[#allocation2] sm:$0x1] %v8
  $region1: #{_lambda_.39} parent=0
    #allocation3 [shape = 'u8[4096]{0}', space=vmem, size = 0x1000, scoped, tag = 'output window, operand 0']
    #allocation4 [shape = 's32[2]{0}', space=sflag, size = 0x8, scoped, tag = 'scoped memory for _lambda_.39']
    %10 = vsyncpa [#allocation4], 0
    %s11 = scalar_lea.sflag [#allocation4], 1
    %12 = vsyncpa %s11, 0
    loop: start=0, step=1, limit=6
    $region2: #{_lambda_.39} parent=1 // loop_pre_header
      _
    $region3: #{_lambda_.39} parent=1 // loop_header
      %s14 = sphi 0, %s18
      %p15 = scmp.ge.s32.totalorder %s14, 6
      %s21 = sphi 0, %s33
      %s22 = sphi 0, %s29
      %s23 = sphi 0, %s21
      %s24 = sphi 0, %s22
      %s25 = sphi 0, %s23
      %s26 = sphi 0, %s24
      %s38 = sphi 0, %s40
      %s41 = sphi 0, %s38
      %s42 = sphi 0, %s41
      %s58 = sphi 0, %s42
      %s62 = sphi 0, %s62
      %s64 = sphi 0, %s62
      %s65 = sphi 0, %s64
      %s79 = sphi 0, %s65
      %s83 = sphi 0, %s83
      %s85 = sphi 0, %s83
      %s86 = sphi 0, %s85
      %s100 = sphi 0, %s86
      %s108 = sphi 0, %s110
      %s111 = sphi 0, %s108
      %s112 = sphi 0, %s111
      %s128 = sphi 0, %s112
    $region4: #{_lambda_.39} parent=1 // loop_header_branch
      %17 = sbr.rel (%p15) target = $region8
    $region5: #{_lambda_.39} parent=1 // loop_body
      %s19 = ssub.s32 %s14, 1
      %s20 = ssub.s32 %s14, 2
      %s27 = sadd.s32 1, %s22
      %p28 = scmp.ge.s32.totalorder %s27, 2
      %s29 = scalar_select %p28, 0, %s27
      %s30 = sadd.s32 1, %s21
      %s31 = scalar_select %p28, %s30, %s21
      %p32 = scmp.ge.s32.totalorder %s31, 2
      %s33 = scalar_select %p32, 0, %s31
      %s34 = ssub.s32 %s21, %s33
      %s35 = ssub.s32 %s22, %s29
      %s36 = sor.u32 %s34, %s35
      %p37 = scmp.eq.s32.totalorder %s36, 0
      %s39 = sadd.s32 %s38, 1
      %s40 = scalar_select %p37, %s38, %s39
      %p43 = pneg %p37
      %p44 = scmp.eq.s32.totalorder %s14, 3
      %p45 = por %p43, %p44
      %p46 = scmp.ne.s32.totalorder %s38, %s41
      %p47 = scmp.eq.s32.totalorder %s14, 0
      %p48 = por %p46, %p47
      %p49 = scmp.ne.s32.totalorder %s38, %s41
      %p50 = scmp.eq.s32.totalorder %s19, 3
      %p51 = por %p49, %p50
      %p52 = scmp.ne.s32.totalorder %s41, %s42
      %p53 = scmp.eq.s32.totalorder %s19, 0
      %p54 = por %p52, %p53
      %p55 = scmp.ne.s32.totalorder %s41, %s42
      %p56 = scmp.eq.s32.totalorder %s20, 3
      %p57 = por %p55, %p56
      %p59 = scmp.ne.s32.totalorder %s42, %s58
      %p60 = scmp.eq.s32.totalorder %s20, 0
      %p61 = por %p59, %p60
      %s63 = sadd.s32 %s62, 1
      %p66 = scmp.eq.s32.totalorder %s14, 3
      %p67 = scmp.ne.s32.totalorder %s62, %s64
      %p68 = scmp.eq.s32.totalorder %s14, 0
      %p69 = por %p67, %p68
      %p70 = scmp.ne.s32.totalorder %s62, %s64
      %p71 = scmp.eq.s32.totalorder %s19, 3
      %p72 = por %p70, %p71
      %p73 = scmp.ne.s32.totalorder %s64, %s65
      %p74 = scmp.eq.s32.totalorder %s19, 0
      %p75 = por %p73, %p74
      %p76 = scmp.ne.s32.totalorder %s64, %s65
      %p77 = scmp.eq.s32.totalorder %s20, 3
      %p78 = por %p76, %p77
      %p80 = scmp.ne.s32.totalorder %s65, %s79
      %p81 = scmp.eq.s32.totalorder %s20, 0
      %p82 = por %p80, %p81
      %s84 = sadd.s32 %s83, 1
      %p87 = scmp.eq.s32.totalorder %s14, 3
      %p88 = scmp.ne.s32.totalorder %s83, %s85
      %p89 = scmp.eq.s32.totalorder %s14, 0
      %p90 = por %p88, %p89
      %p91 = scmp.ne.s32.totalorder %s83, %s85
      %p92 = scmp.eq.s32.totalorder %s19, 3
      %p93 = por %p91, %p92
      %p94 = scmp.ne.s32.totalorder %s85, %s86
      %p95 = scmp.eq.s32.totalorder %s19, 0
      %p96 = por %p94, %p95
      %p97 = scmp.ne.s32.totalorder %s85, %s86
      %p98 = scmp.eq.s32.totalorder %s20, 3
      %p99 = por %p97, %p98
      %p101 = scmp.ne.s32.totalorder %s86, %s100
      %p102 = scmp.eq.s32.totalorder %s20, 0
      %p103 = por %p101, %p102
      %s104 = ssub.s32 %s21, %s33
      %s105 = ssub.s32 %s22, %s29
      %s106 = sor.u32 %s104, %s105
      %p107 = scmp.eq.s32.totalorder %s106, 0
      %s109 = sadd.s32 %s108, 1
      %s110 = scalar_select %p107, %s108, %s109
      %p113 = pneg %p107
      %p114 = scmp.eq.s32.totalorder %s14, 3
      %p115 = por %p113, %p114
      %p116 = scmp.ne.s32.totalorder %s108, %s111
      %p117 = scmp.eq.s32.totalorder %s14, 0
      %p118 = por %p116, %p117
      %p119 = scmp.ne.s32.totalorder %s108, %s111
      %p120 = scmp.eq.s32.totalorder %s19, 3
      %p121 = por %p119, %p120
      %p122 = scmp.ne.s32.totalorder %s111, %s112
      %p123 = scmp.eq.s32.totalorder %s19, 0
      %p124 = por %p122, %p123
      %p125 = scmp.ne.s32.totalorder %s111, %s112
      %p126 = scmp.eq.s32.totalorder %s20, 3
      %p127 = por %p125, %p126
      %p129 = scmp.ne.s32.totalorder %s112, %s128
      %p130 = scmp.eq.s32.totalorder %s20, 0
      %p131 = por %p129, %p130
      %p132 = scmp.le.s32.totalorder 1, %s14
      %p133 = scmp.lt.s32.totalorder %s14, 5
      %p134 = pnand %p132, %p133
      %p135 = pneg %p134
      // Predicated region
      $region9: #{_lambda_.39} parent=5 // pred_check
        _
      $region10: #{_lambda_.39} parent=5 // pred_check_branch
        %137 = sbr.rel (%p134) target = $region12
      $region11: #{_lambda_.39} parent=5 // pred_region
        %s138 = ssub.s32 %s14, 1
        // Predicated region
        $region13: #{_lambda_.39} parent=11 // pred_check
          %p139 = pneg %p75
        $region14: #{_lambda_.39} parent=11 // pred_check_branch
          %141 = sbr.rel (%p139) target = $region16
        $region15: #{_lambda_.39} parent=11 // pred_region
          _
        $region16: #{_lambda_.39} parent=11 // pred_fallthru
          _
        // Predicated region
        $region17: #{_lambda_.39} parent=11 // pred_check
          %p142 = pneg %p96
        $region18: #{_lambda_.39} parent=11 // pred_check_branch
          %144 = sbr.rel (%p142) target = $region20
        $region19: #{_lambda_.39} parent=11 // pred_region
          _
        $region20: #{_lambda_.39} parent=11 // pred_fallthru
          _
      $region12: #{_lambda_.39} parent=5 // pred_fallthru
        _
      %p145 = scmp.lt.s32.totalorder %s14, 4
      // Predicated region
      $region21: #{_lambda_.39} parent=5 // pred_check
        %p146 = pneg %p145
      $region22: #{_lambda_.39} parent=5 // pred_check_branch
        %148 = sbr.rel (%p146) target = $region24
      $region23: #{_lambda_.39} parent=5 // pred_region
        // Predicated region
        $region25: #{_lambda_.39} parent=23 // pred_check
          %p149 = pneg %p48
        $region26: #{_lambda_.39} parent=23 // pred_check_branch
          %151 = sbr.rel (%p149) target = $region28
        $region27: #{_lambda_.39} parent=23 // pred_region
          %p152 = scmp.lt.s32.totalorder %s21, 1
          %s153 = scalar_select %p152, %s21, 1
          %p154 = scmp.lt.s32.totalorder %s22, 1
          %s155 = scalar_select %p154, %s22, 1
          %s156 = smul.addr %s155, 5
          %s157 = smul.addr %s153, 10
          %s158 = sadd.s32 %s156, %s157
          %s159 = smul.addr %s158, 4
          %s160 = scalar_lea.vmem %s0, %s159
        $region28: #{_lambda_.39} parent=23 // pred_fallthru
          _
      $region24: #{_lambda_.39} parent=5 // pred_fallthru
        _
      %p161 = scmp.le.s32.totalorder 1, %s14
      %p162 = scmp.lt.s32.totalorder %s14, 5
      %p163 = pnand %p161, %p162
      %p164 = pneg %p163
      // Predicated region
      $region29: #{_lambda_.39} parent=5 // pred_check
        _
      $region30: #{_lambda_.39} parent=5 // pred_check_branch
        %166 = sbr.rel (%p163) target = $region32
      $region31: #{_lambda_.39} parent=5 // pred_region
        %s167 = ssub.s32 %s14, 1
        %p168 = scmp.lt.s32.totalorder %s23, 1
        %s169 = scalar_select %p168, %s23, 1
        %p170 = scmp.lt.s32.totalorder %s24, 1
        %s171 = scalar_select %p170, %s24, 1
        %s172 = smul.addr %s171, 5
        %s173 = smul.addr %s169, 10
        %s174 = sadd.s32 %s172, %s173
        %s175 = smul.addr %s174, 4
        %s176 = scalar_lea.vmem %s0, %s175
        %p177 = pneg %p54
        %p178 = pneg %p51
        %p179 = pneg %p75
        %p180 = pneg %p72
        %p181 = pneg %p96
        %p182 = pneg %p93
        %p183 = pneg %p124
        %p184 = pneg %p121
        %s185 = sand.u32 %s111, 1
        %s186 = scalar_lea.sflag [#allocation4], %s185
        %s187 = sand.u32 %s111, 1
        %s188 = smul.addr %s187, 4
        %s189 = scalar_lea.vmem [#allocation3], %s188
        %p190 = scmp.lt.s32.totalorder %s23, 1
        %s191 = scalar_select %p190, %s23, 1
        %p192 = scmp.lt.s32.totalorder %s24, 1
        %s193 = scalar_select %p192, %s24, 1
        %s194 = smul.addr %s193, 5
        %s195 = smul.addr %s191, 10
        %s196 = sadd.s32 %s194, %s195
        %s197 = smul.addr %s196, 4
        %s198 = scalar_lea.vmem %s0, %s197
        %s199 = smul.u32 4, %s24
        %v200 = vld [vmem:[%s198] sm:$0xff]
        %v201 = vld [vmem:[%s198 + $0x8] sm:$0xff]
        %v202 = vld [vmem:[%s198 + $0x10] sm:$0xf]
        %v203 = vunpack.c.l.bf16 %v200
        %v204 = vunpack.c.h.bf16 %v200
        %v205 = vunpack.c.l.bf16 %v201
        %v206 = vunpack.c.h.bf16 %v201
        %v207 = vunpack.c.l.bf16 %v202
        %vm208 = vcmp.ge.f32.partialorder %v203, 0.0
        %vm209 = vcmp.ge.f32.partialorder %v204, 0.0
        %vm210 = vcmp.ge.f32.partialorder %v205, 0.0
        %vm211 = vcmp.ge.f32.partialorder %v206, 0.0
        %vm212 = vcmp.ge.f32.partialorder %v207, 0.0
        %v213 = vmul.f32 %v203, 0.01
        %v214 = vmul.f32 %v204, 0.01
        %v215 = vmul.f32 %v205, 0.01
        %v216 = vmul.f32 %v206, 0.01
        %v217 = vmul.f32 %v207, 0.01
        %v218 = vsel %vm208, %v203, %v213
        %v219 = vsel %vm209, %v204, %v214
        %v220 = vsel %vm210, %v205, %v215
        %v221 = vsel %vm211, %v206, %v216
        %v222 = vsel %vm212, %v207, %v217
        %228 = vrot.lane.b32.xlu0 %v218, 127
        %v229 = vpop.permute.xlu0 %228
        %230 = vrot.lane.b32.xlu0 %v219, 127
        %v231 = vpop.permute.xlu0 %230
        %232 = vrot.lane.b32.xlu0 %v220, 127
        %v233 = vpop.permute.xlu0 %232
        %234 = vrot.lane.b32.xlu0 %v221, 127
        %v235 = vpop.permute.xlu0 %234
        %236 = vrot.lane.b32.xlu0 %v222, 127
        %v237 = vpop.permute.xlu0 %236
        %vm238 = vcmask 1039360
        %v239 = vsel %vm238, %v229, %v231
        %v240 = vsel %vm238, %v231, %v233
        %v241 = vsel %vm238, %v233, %v235
        %v242 = vsel %vm238, %v235, %v237
        %247 = vrot.lane.b32.xlu0 %v218, 126
        %v248 = vpop.permute.xlu0 %247
        %249 = vrot.lane.b32.xlu0 %v219, 126
        %v250 = vpop.permute.xlu0 %249
        %251 = vrot.lane.b32.xlu0 %v220, 126
        %v252 = vpop.permute.xlu0 %251
        %253 = vrot.lane.b32.xlu0 %v221, 126
        %v254 = vpop.permute.xlu0 %253
        %255 = vrot.lane.b32.xlu0 %v222, 126
        %v256 = vpop.permute.xlu0 %255
        %vm257 = vcmask 1031168
        %v258 = vsel %vm257, %v248, %v250
        %v259 = vsel %vm257, %v250, %v252
        %v260 = vsel %vm257, %v252, %v254
        %v261 = vsel %vm257, %v254, %v256
        %266 = vrot.lane.b32.xlu0 %v218, 125
        %v267 = vpop.permute.xlu0 %266
        %268 = vrot.lane.b32.xlu0 %v219, 125
        %v269 = vpop.permute.xlu0 %268
        %270 = vrot.lane.b32.xlu0 %v220, 125
        %v271 = vpop.permute.xlu0 %270
        %272 = vrot.lane.b32.xlu0 %v221, 125
        %v273 = vpop.permute.xlu0 %272
        %274 = vrot.lane.b32.xlu0 %v222, 125
        %v275 = vpop.permute.xlu0 %274
        %vm276 = vcmask 1022976
        %v277 = vsel %vm276, %v267, %v269
        %v278 = vsel %vm276, %v269, %v271
        %v279 = vsel %vm276, %v271, %v273
        %v280 = vsel %vm276, %v273, %v275
        %285 = vrot.lane.b32.xlu0 %v218, 124
        %v286 = vpop.permute.xlu0 %285
        %287 = vrot.lane.b32.xlu0 %v219, 124
        %v288 = vpop.permute.xlu0 %287
        %289 = vrot.lane.b32.xlu0 %v220, 124
        %v290 = vpop.permute.xlu0 %289
        %291 = vrot.lane.b32.xlu0 %v221, 124
        %v292 = vpop.permute.xlu0 %291
        %293 = vrot.lane.b32.xlu0 %v222, 124
        %v294 = vpop.permute.xlu0 %293
        %vm295 = vcmask 1014784
        %v296 = vsel %vm295, %v286, %v288
        %v297 = vsel %vm295, %v288, %v290
        %v298 = vsel %vm295, %v290, %v292
        %v299 = vsel %vm295, %v292, %v294
        %304 = vrot.lane.b32.xlu0 %v218, 123
        %v305 = vpop.permute.xlu0 %304
        %306 = vrot.lane.b32.xlu0 %v219, 123
        %v307 = vpop.permute.xlu0 %306
        %308 = vrot.lane.b32.xlu0 %v220, 123
        %v309 = vpop.permute.xlu0 %308
        %310 = vrot.lane.b32.xlu0 %v221, 123
        %v311 = vpop.permute.xlu0 %310
        %312 = vrot.lane.b32.xlu0 %v222, 123
        %v313 = vpop.permute.xlu0 %312
        %vm314 = vcmask 1006592
        %v315 = vsel %vm314, %v305, %v307
        %v316 = vsel %vm314, %v307, %v309
        %v317 = vsel %vm314, %v309, %v311
        %v318 = vsel %vm314, %v311, %v313
        %323 = vrot.lane.b32.xlu0 %v218, 122
        %v324 = vpop.permute.xlu0 %323
        %325 = vrot.lane.b32.xlu0 %v219, 122
        %v326 = vpop.permute.xlu0 %325
        %327 = vrot.lane.b32.xlu0 %v220, 122
        %v328 = vpop.permute.xlu0 %327
        %329 = vrot.lane.b32.xlu0 %v221, 122
        %v330 = vpop.permute.xlu0 %329
        %331 = vrot.lane.b32.xlu0 %v222, 122
        %v332 = vpop.permute.xlu0 %331
        %vm333 = vcmask 998400
        %v334 = vsel %vm333, %v324, %v326
        %v335 = vsel %vm333, %v326, %v328
        %v336 = vsel %vm333, %v328, %v330
        %v337 = vsel %vm333, %v330, %v332
        %v342 = vld [vmem:[%s1] sm:$0xff]
        %v343 = vld [vmem:[%s1 + $0x8] sm:$0xff]
        %v344 = vld [vmem:[%s1 + $0x10] sm:$0xff]
        %v345 = vld [vmem:[%s1 + $0x18] sm:$0xff]
        %v346 = vld [vmem:[%s1 + $0x20] sm:$0xff]
        %v347 = vld [vmem:[%s1 + $0x28] sm:$0xff]
        %v348 = vld [vmem:[%s1 + $0x30] sm:$0xff]
        %350 = vset.pattern.permute.xlu0 0
        %351 = vperm.xlu0 %350, %v342
        %v352 = vpop.permute.xlu0 %351
        %355 = vset.pattern.permute.xlu0 0
        %356 = vperm.xlu0 %355, %v343
        %v357 = vpop.permute.xlu0 %356
        %360 = vset.pattern.permute.xlu0 0
        %361 = vperm.xlu0 %360, %v344
        %v362 = vpop.permute.xlu0 %361
        %365 = vset.pattern.permute.xlu0 0
        %366 = vperm.xlu0 %365, %v345
        %v367 = vpop.permute.xlu0 %366
        %370 = vset.pattern.permute.xlu0 0
        %371 = vperm.xlu0 %370, %v346
        %v372 = vpop.permute.xlu0 %371
        %375 = vset.pattern.permute.xlu0 0
        %376 = vperm.xlu0 %375, %v347
        %v377 = vpop.permute.xlu0 %376
        %380 = vset.pattern.permute.xlu0 0
        %381 = vperm.xlu0 %380, %v348
        %v382 = vpop.permute.xlu0 %381
        %v384 = vmul.f32 %v218, %v352
        %v385 = vmul.f32 %v219, %v352
        %v386 = vmul.f32 %v220, %v352
        %v387 = vmul.f32 %v221, %v352
        %v388 = vmul.f32 %v239, %v357
        %v389 = vmul.f32 %v240, %v357
        %v390 = vmul.f32 %v241, %v357
        %v391 = vmul.f32 %v242, %v357
        %v392 = vmul.f32 %v258, %v362
        %v393 = vmul.f32 %v259, %v362
        %v394 = vmul.f32 %v260, %v362
        %v395 = vmul.f32 %v261, %v362
        %v396 = vmul.f32 %v277, %v367
        %v397 = vmul.f32 %v278, %v367
        %v398 = vmul.f32 %v279, %v367
        %v399 = vmul.f32 %v280, %v367
        %v400 = vmul.f32 %v296, %v372
        %v401 = vmul.f32 %v297, %v372
        %v402 = vmul.f32 %v298, %v372
        %v403 = vmul.f32 %v299, %v372
        %v404 = vmul.f32 %v315, %v377
        %v405 = vmul.f32 %v316, %v377
        %v406 = vmul.f32 %v317, %v377
        %v407 = vmul.f32 %v318, %v377
        %v408 = vmul.f32 %v334, %v382
        %v409 = vmul.f32 %v335, %v382
        %v410 = vmul.f32 %v336, %v382
        %v411 = vmul.f32 %v337, %v382
        %v412 = vadd.f32 %v384, %v388
        %v413 = vadd.f32 %v412, %v392
        %v414 = vadd.f32 %v413, %v396
        %v415 = vadd.f32 %v414, %v400
        %v416 = vadd.f32 %v415, %v404
        %v417 = vadd.f32 %v416, %v408
        %v418 = vrot.slane %v417, 4
        %v419 = vadd.f32 %v417, %v418
        %v420 = vrot.slane %v419, 2
        %v421 = vadd.f32 %v419, %v420
        %v422 = vrot.slane %v421, 1
        %v423 = vadd.f32 %v421, %v422
        %v424 = vadd.f32 %v385, %v389
        %v425 = vadd.f32 %v424, %v393
        %v426 = vadd.f32 %v425, %v397
        %v427 = vadd.f32 %v426, %v401
        %v428 = vadd.f32 %v427, %v405
        %v429 = vadd.f32 %v428, %v409
        %v430 = vrot.slane %v429, 4
        %v431 = vadd.f32 %v429, %v430
        %v432 = vrot.slane %v431, 2
        %v433 = vadd.f32 %v431, %v432
        %v434 = vrot.slane %v433, 1
        %v435 = vadd.f32 %v433, %v434
        %v436 = vadd.f32 %v386, %v390
        %v437 = vadd.f32 %v436, %v394
        %v438 = vadd.f32 %v437, %v398
        %v439 = vadd.f32 %v438, %v402
        %v440 = vadd.f32 %v439, %v406
        %v441 = vadd.f32 %v440, %v410
        %v442 = vrot.slane %v441, 4
        %v443 = vadd.f32 %v441, %v442
        %v444 = vrot.slane %v443, 2
        %v445 = vadd.f32 %v443, %v444
        %v446 = vrot.slane %v445, 1
        %v447 = vadd.f32 %v445, %v446
        %v448 = vadd.f32 %v387, %v391
        %v449 = vadd.f32 %v448, %v395
        %v450 = vadd.f32 %v449, %v399
        %v451 = vadd.f32 %v450, %v403
        %v452 = vadd.f32 %v451, %v407
        %v453 = vadd.f32 %v452, %v411
        %v454 = vrot.slane %v453, 4
        %v455 = vadd.f32 %v453, %v454
        %v456 = vrot.slane %v455, 2
        %v457 = vadd.f32 %v455, %v456
        %v458 = vrot.slane %v457, 1
        %v459 = vadd.f32 %v457, %v458
        %v460 = vld [vmem:[#allocation2] sm:$0x1]
        %462 = vset.pattern.permute.xlu0 0
        %463 = vperm.xlu0 %462, %v460
        %v464 = vpop.permute.xlu0 %463
        %v466 = vlaneseq
        %v467 = vshrl.u32 %v466, 7
        %v468 = vsub.s32 0, %v467
        %v469 = vrot.slane %v464, %v468
        %v470 = vadd.f32 %v423, %v469
        %v471 = vadd.f32 %v435, %v469
        %v472 = vadd.f32 %v447, %v469
        %v473 = vadd.f32 %v459, %v469
        %v474 = vtanh.pop %v470
        %v475 = vtanh.pop %v471
        %v476 = vtanh.pop %v472
        %v477 = vtanh.pop %v473
        %v482 = vcombine.low %v474, %v475
        %v483 = vcombine.low %v476, %v477
        %v485 = vunpack.c.l.s4 1966171168
        %v486 = vunpack.c.0.s8 %v485
        %v487 = vlaneseq
        %v488 = vshrl.u32 %v487, 7
        %v489 = vsub.s32 %v486, %v488
        %v490 = vrot.slane %v482, %v489
        %v492 = vunpack.c.l.s4 1966171168
        %v493 = vunpack.c.0.s8 %v492
        %v494 = vlaneseq
        %v495 = vshrl.u32 %v494, 7
        %v496 = vsub.s32 %v493, %v495
        %v497 = vrot.slane %v483, %v496
        %v498 = vcombine.low %v490, %v497
        %v500 = vunpack.c.l.s4 1966171168
        %v501 = vunpack.c.0.s8 %v500
        %v502 = vlaneseq
        %v503 = vshrl.u32 %v502, 7
        %v504 = vsub.s32 %v501, %v503
        %v505 = vrot.slane %v498, %v504
        %v507 = vlaneseq
        %vm508 = vcmp.ge.s32.totalorder %v507, 0
        %vm509 = vcmp.lt.s32.totalorder %v507, 512
        %vm510 = vmand %vm508, %vm509
        %511 = vst.msk [vmem:[%s189] sm:$0xf] %vm510, %v505
        %s512 = sand.u32 %s111, 1
        %s513 = scalar_lea.sflag [#allocation4], %s512
        %s514 = sand.u32 %s111, 1
        %s515 = smul.addr %s514, 4
        %s516 = scalar_lea.vmem [#allocation3], %s515
        // Predicated region
        $region33: #{_lambda_.39} parent=31 // pred_check
          %p517 = pneg %p121
        $region34: #{_lambda_.39} parent=31 // pred_check_branch
          %519 = sbr.rel (%p517) target = $region36
        $region35: #{_lambda_.39} parent=31 // pred_region
          %s520 = smul.u32 4, %s24
          %s522 = ssub.s32 64, 64
          %523 = vsyncadd %s513, %s522
          %s524 = smul.addr %s23, 8
          %s525 = sadd.s32 %s520, %s524
          %s526 = smul.addr %s525, 16
          %s527 = scalar_lea.hbm %s3, %s526
          %s529 = sshll.u32 %s516, 4
          %s530 = int_to_ptr.vmem [resolvable:$true] %s529
          %532 = dma.vmem_to_hbm [thread:$0]  %s530, 64, %s527, %s513
        $region36: #{_lambda_.39} parent=31 // pred_fallthru
          _
      $region32: #{_lambda_.39} parent=5 // pred_fallthru
        _
      %p533 = scmp.le.s32.totalorder 2, %s14
      // Predicated region
      $region37: #{_lambda_.39} parent=5 // pred_check
        %p534 = pneg %p533
      $region38: #{_lambda_.39} parent=5 // pred_check_branch
        %536 = sbr.rel (%p534) target = $region40
      $region39: #{_lambda_.39} parent=5 // pred_region
        %s537 = ssub.s32 %s14, 2
        // Predicated region
        $region41: #{_lambda_.39} parent=39 // pred_check
          %p538 = pneg %p127
        $region42: #{_lambda_.39} parent=39 // pred_check_branch
          %540 = sbr.rel (%p538) target = $region44
        $region43: #{_lambda_.39} parent=39 // pred_region
          %s541 = sand.u32 %s112, 1
          %s542 = scalar_lea.sflag [#allocation4], %s541
          %s543 = sand.u32 %s112, 1
          %s544 = smul.addr %s543, 4
          %s545 = scalar_lea.vmem [#allocation3], %s544
          %546 = dma.done %s542, 64
        $region44: #{_lambda_.39} parent=39 // pred_fallthru
          _
      $region40: #{_lambda_.39} parent=5 // pred_fallthru
        _
    $region6: #{_lambda_.39} parent=1 // loop_footer
      %s18 = sadd.s32 1, %s14
    $region7: #{_lambda_.39} parent=1 // loop_footer_branch
      %13 = sbr.rel target = $region3
    $region8: #{_lambda_.39} parent=1 // loop_exit
      _
    %547 = vsyncpa [#allocation4], 1
    %s548 = scalar_lea.sflag [#allocation4], 1
    %549 = vsyncpa %s548, 1

</llo_original>
